<compile_context>
chip_gen: v6e
topology: v6e:2x2x1
jax: 0.10.0
libtpu: 0.0.40
codegen_flags: <defaults>
</compile_context>

<pallas_src>
import math
import functools

import jax
import jax.numpy as jnp
from jax import lax
from jax.experimental import pallas as pl


# TODO(synk): flip to jnp.bfloat16 on v6e/v7x for ~2x MXU throughput (accumulation
# stays f32 via preferred_element_type); keep f32 on v5e and for reference parity.
MXU_DTYPE = jnp.float32


# ----------------------------------------------------------------------------
# small in-kernel helpers
# ----------------------------------------------------------------------------
def _mm(a, b):
    """2-D matmul on the MXU with f32 accumulation."""
    return jnp.dot(a.astype(MXU_DTYPE), b.astype(MXU_DTYPE),
                   preferred_element_type=jnp.float32)


def _mm_nt(a, b):
    """a @ b.T (contraction on last dims) without materializing the transpose."""
    return lax.dot_general(a.astype(MXU_DTYPE), b.astype(MXU_DTYPE),
                           (((1,), (1,)), ((), ())),
                           preferred_element_type=jnp.float32)


def _erf(x):
    # Abramowitz & Stegun 7.1.26 polynomial, |err| < 1.5e-7 (f32-exact for inference).
    a1, a2, a3, a4, a5 = 0.254829592, -0.284496736, 1.421413741, -1.453152027, 1.061405429
    p = 0.3275911
    ax = jnp.abs(x)
    t = 1.0 / (1.0 + p * ax)
    poly = ((((a5 * t + a4) * t + a3) * t + a2) * t + a1) * t
    y = 1.0 - poly * jnp.exp(-ax * ax)
    return jnp.where(x >= 0, y, -y)


def _gelu(x):
    return 0.5 * x * (1.0 + _erf(x * (1.0 / math.sqrt(2.0))))


def _layernorm(x, gamma, beta, eps=1e-5):
    mu = jnp.mean(x, axis=-1, keepdims=True)
    var = jnp.mean((x - mu) ** 2, axis=-1, keepdims=True)
    return (x - mu) * lax.rsqrt(var + eps) * gamma + beta


def _gru_gates(gx, gh, h_prev, Hh):
    # PyTorch gate order (r, z, n); b_hn sits inside the r* term (it is in gh).
    r = jax.nn.sigmoid(gx[:, 0:Hh] + gh[:, 0:Hh])
    zg = jax.nn.sigmoid(gx[:, Hh:2 * Hh] + gh[:, Hh:2 * Hh])
    n = jnp.tanh(gx[:, 2 * Hh:3 * Hh] + r * gh[:, 2 * Hh:3 * Hh])
    return (1.0 - zg) * n + zg * h_prev


def _block_id(shape, axis, block, n_blocks):
    """Block index of the iota along `axis` (i.e. iota // block) built from
    compares+adds only (no vector integer division); traced ops, so no
    captured-constant error and no numpy arrays inside the kernel."""
    idx = lax.broadcasted_iota(jnp.int32, shape, axis)
    bid = jnp.zeros(shape, jnp.float32)
    for h in range(1, n_blocks):
        bid = bid + (idx >= h * block).astype(jnp.float32)
    return bid


# ----------------------------------------------------------------------------
# single fused kernel
# ----------------------------------------------------------------------------
def decoder_kernel(z_ref, lp_w_ref, vec_h_ref, gru_wih_ref, gru_whh_ref, gru_b_ref,
                   attn_win_ref, attn_bin_ref, attn_wout_ref,
                   out_w1_ref, out_w2_ref, out_b2_ref,
                   o_ref, *, n_heads):
    B, S, _ = o_ref.shape
    H = lp_w_ref.shape[1]
    Hh = gru_whh_ref.shape[1]
    hd = H // n_heads
    scale = 1.0 / math.sqrt(hd)

    # ---- unpack packed parameter buffers (static row slices) -----------------
    vec_h = vec_h_ref[...]                       # (7, H)
    lp_b, lp_g, lp_be = vec_h[0:1], vec_h[1:2], vec_h[2:3]
    attn_bout, out_b1, out_g, out_be = vec_h[3:4], vec_h[4:5], vec_h[5:6], vec_h[6:7]

    gru_b = gru_b_ref[...]                       # (8, 3*Hh)
    bih0_f, bih0_b, bhh0_f, bhh0_b = gru_b[0:1], gru_b[1:2], gru_b[2:3], gru_b[3:4]
    bih1_f, bih1_b, bhh1_f, bhh1_b = gru_b[4:5], gru_b[5:6], gru_b[6:7], gru_b[7:8]

    wih0_f, wih0_b, wih1_f, wih1_b = (gru_wih_ref[i] for i in range(4))   # (H, 3*Hh)
    whh0_f, whh0_b, whh1_f, whh1_b = (gru_whh_ref[i] for i in range(4))   # (Hh, 3*Hh)

    # ---- latent_proj: Linear -> LayerNorm -> GELU (Dropout == identity) ------
    hid = _mm(z_ref[...], lp_w_ref[...]) + lp_b
    hid = _gelu(_layernorm(hid, lp_g, lp_be))                              # (B, H)

    # ---- GRU layer 0: time-constant input => input projection done ONCE ------
    gx0_f = _mm(hid, wih0_f) + bih0_f                                      # (B, 3*Hh)
    gx0_b = _mm(hid, wih0_b) + bih0_b

    # Both directions advance in the SAME unrolled time loop: two independent
    # (B,Hh)@(Hh,3*Hh) chains interleave, so the serial critical path is S steps,
    # not 2*S.  No dynamic-index stores: hiddens are carried as traced values.
    # TODO(synk): for large S switch to lax.fori_loop(unroll=4) + VMEM scratch.
    zero_h = jnp.zeros((B, Hh), jnp.float32)
    h_f, h_b = zero_h, zero_h
    h0f, h0b_rev = [], []
    for _ in range(S):
        h_f = _gru_gates(gx0_f, _mm(h_f, whh0_f) + bhh0_f, h_f, Hh)
        h_b = _gru_gates(gx0_b, _mm(h_b, whh0_b) + bhh0_b, h_b, Hh)
        h0f.append(h_f)
        h0b_rev.append(h_b)
    h0b = h0b_rev[::-1]                                                     # time order

    # ---- GRU layer 1: input projection hoisted into full-sequence GEMMs ------
    x1 = jnp.concatenate(
        [jnp.concatenate([h0f[t], h0b[t]], axis=-1) for t in range(S)], axis=0)  # (S*B, H)
    gx1f = _mm(x1, wih1_f) + bih1_f                                         # (S*B, 3*Hh)
    gx1b = _mm(x1, wih1_b) + bih1_b

    h_f, h_b = zero_h, zero_h
    h1f, h1b_rev = [], []
    for t in range(S):
        tb = S - 1 - t
        h_f = _gru_gates(gx1f[t * B:(t + 1) * B], _mm(h_f, whh1_f) + bhh1_f, h_f, Hh)
        h_b = _gru_gates(gx1b[tb * B:(tb + 1) * B], _mm(h_b, whh1_b) + bhh1_b, h_b, Hh)
        h1f.append(h_f)
        h1b_rev.append(h_b)
    h1b = h1b_rev[::-1]

    # rnn_out in batch-major 2-D layout (B*S, H): row b*S + t.
    rnn_t = [jnp.concatenate([h1f[t], h1b[t]], axis=-1) for t in range(S)]  # (B, H) each
    rnn_bs = jnp.concatenate(
        [jnp.concatenate([rnn_t[t][b:b + 1, :] for t in range(S)], axis=0)
         for b in range(B)], axis=0)                                        # (B*S, H)

    # ---- multi-head self-attention (all heads folded into one matmul) --------
    # Block masks built in-kernel from iota (passing numpy consts is illegal):
    #   mask[h*S + j, c] = 1 iff feature column c belongs to head h
    #   seg [h*S + j, h'] = 1 iff h == h'
    nhS = n_heads * S
    mask = (_block_id((nhS, H), 0, S, n_heads) ==
            _block_id((nhS, H), 1, hd, n_heads)).astype(jnp.float32)        # (nh*S, H)
    seg = (_block_id((nhS, n_heads), 0, S, n_heads) ==
           lax.broadcasted_iota(jnp.int32, (nhS, n_heads), 1).astype(jnp.float32)
           ).astype(jnp.float32)                                            # (nh*S, nh)

    qkv = _mm(rnn_bs, attn_win_ref[...]) + attn_bin_ref[...]                # (B*S, 3H) one GEMM

    ctx_list = []
    for b in range(B):   # only score/ctx matmuls stay per-batch (B is tiny & static)
        q = qkv[b * S:(b + 1) * S, 0:H] * scale
        k = qkv[b * S:(b + 1) * S, H:2 * H]
        v = qkv[b * S:(b + 1) * S, 2 * H:3 * H]

        k_blk = jnp.concatenate([k] * n_heads, axis=0) * mask               # (nh*S, H)
        v_blk = jnp.concatenate([v] * n_heads, axis=0) * mask

        scores = _mm_nt(q, k_blk)                                           # (S, nh*S)
        # per-head max (robust even when heads have very different logit scales)
        m = jnp.concatenate(
            [jnp.max(scores[:, h * S:(h + 1) * S], axis=-1, keepdims=True)
             for h in range(n_heads)], axis=-1)                             # (S, nh)
        p = jnp.exp(scores - _mm_nt(m, seg))
        denom = _mm(p, seg)                                                 # (S, nh)
        inv = pl.reciprocal(denom, approx=True)                             # divide -> EUP
        p = p * _mm_nt(inv, seg)
        ctx_list.append(_mm(p, v_blk))                                      # (S, H)
    # TODO(synk): at real S/H replace the nh-replicated K/V fold with a batched
    # per-head dot_general / flash-style loop (nh x fewer MXU flops, less VMEM).

    ctx = jnp.concatenate(ctx_list, axis=0)                                 # (B*S, H)
    attn = _mm(ctx, attn_wout_ref[...]) + attn_bout                         # single out-proj GEMM

    # ---- residual + output_net (single (B*S, .) GEMMs) -----------------------
    res = rnn_bs + attn
    h1 = _gelu(_layernorm(_mm(res, out_w1_ref[...]) + out_b1, out_g, out_be))
    out = _mm(h1, out_w2_ref[...]) + out_b2_ref[...]                        # (B*S, out_dim)

    for b in range(B):
        o_ref[b] = out[b * S:(b + 1) * S, :]


# ----------------------------------------------------------------------------
# wrapper: one pallas_call, everything VMEM-resident (no grid, no HBM hops)
# ----------------------------------------------------------------------------
def attention_decoder_forward(z, seq_len, params, n_heads=8):
    B = z.shape[0]
    out_dim = params["out_w2"].shape[1]
    kernel = functools.partial(decoder_kernel, n_heads=n_heads)
    # TODO(synk): on v7x, if the GRU recurrence dominates at scale, split the two
    # directions across the 2 TensorCores with pl.core_map(create_tensorcore_mesh).
    return pl.pallas_call(
        kernel,
        out_shape=jax.ShapeDtypeStruct((B, seq_len, out_dim), jnp.float32),
    )(z, params["lp_w"], params["vec_h"], params["gru_wih"], params["gru_whh"],
      params["gru_b"], params["attn_win"], params["attn_bin"], params["attn_wout"],
      params["out_w1"], params["out_w2"], params["out_b2"])


# ----------------------------------------------------------------------------
# parameter init (deterministic, synthetic); packed layout
# ----------------------------------------------------------------------------
def init_params(key, latent_dim, hidden_dim, output_dim):
    H = hidden_dim
    Hh = H // 2
    G = 3 * Hh
    assert H % 2 == 0
    keys = iter(jax.random.split(key, 32))

    def xavier(k, shape):  # (fan_in, fan_out), stored pre-transposed
        bound = math.sqrt(6.0 / (shape[0] + shape[1]))
        return jax.random.uniform(k, shape, jnp.float32, -bound, bound)

    def gru_u(k, shape):
        bound = 1.0 / math.sqrt(Hh)
        return jax.random.uniform(k, shape, jnp.float32, -bound, bound)

    zeros_h = jnp.zeros((H,), jnp.float32)
    ones_h = jnp.ones((H,), jnp.float32)

    p = {}
    p["lp_w"] = xavier(next(keys), (latent_dim, H))
    # rows: [lp_b, lp_gamma, lp_beta, attn_bout, out_b1, out_gamma, out_beta]
    p["vec_h"] = jnp.stack([zeros_h, ones_h, zeros_h, zeros_h, zeros_h, ones_h, zeros_h])

    # GRU weights packed over (layer, direction): [l0_f, l0_b, l1_f, l1_b].
    # Layer-1 input width is 2*Hh == H, so all four wih share shape (H, 3*Hh).
    p["gru_wih"] = jnp.stack([gru_u(next(keys), (H, G)) for _ in range(4)])
    p["gru_whh"] = jnp.stack([gru_u(next(keys), (Hh, G)) for _ in range(4)])
    # rows: [bih0_f, bih0_b, bhh0_f, bhh0_b, bih1_f, bih1_b, bhh1_f, bhh1_b]
    p["gru_b"] = jnp.stack([gru_u(next(keys), (G,)) for _ in range(8)])

    p["attn_win"] = xavier(next(keys), (H, 3 * H))
    p["attn_bin"] = jnp.zeros((1, 3 * H), jnp.float32)
    p["attn_wout"] = xavier(next(keys), (H, H))

    p["out_w1"] = xavier(next(keys), (H, H))
    p["out_w2"] = xavier(next(keys), (H, output_dim))
    p["out_b2"] = jnp.zeros((1, output_dim), jnp.float32)
    return p


if __name__ == "__main__":
    B, LATENT, HIDDEN, OUT_DIM, SEQ, HEADS = 2, 16, 32, 8, 8, 8
    key = jax.random.PRNGKey(0)
    kz, kp = jax.random.split(key)
    z = jax.random.normal(kz, (B, LATENT), jnp.float32)
    params = init_params(kp, LATENT, HIDDEN, OUT_DIM)

    y = attention_decoder_forward(z, SEQ, params, n_heads=HEADS)
    y = jax.block_until_ready(y)
    assert y.shape == (B, SEQ, OUT_DIM), y.shape
    assert bool(jnp.all(jnp.isfinite(y)))
    print("KERNEL_OK")
</pallas_src>

<mosaic_0001>
module attributes {stable_mosaic.version = 11 : i64} {
  func.func @decoder_kernel(%arg0: memref<2x16xf32, #tpu.memory_space<vmem>>, %arg1: memref<16x32xf32, #tpu.memory_space<vmem>>, %arg2: memref<7x32xf32, #tpu.memory_space<vmem>>, %arg3: memref<4x32x48xf32, #tpu.memory_space<vmem>>, %arg4: memref<4x16x48xf32, #tpu.memory_space<vmem>>, %arg5: memref<8x48xf32, #tpu.memory_space<vmem>>, %arg6: memref<32x96xf32, #tpu.memory_space<vmem>>, %arg7: memref<1x96xf32, #tpu.memory_space<vmem>>, %arg8: memref<32x32xf32, #tpu.memory_space<vmem>>, %arg9: memref<32x32xf32, #tpu.memory_space<vmem>>, %arg10: memref<32x8xf32, #tpu.memory_space<vmem>>, %arg11: memref<1x8xf32, #tpu.memory_space<vmem>>, %arg12: memref<2x8x8xf32, #tpu.memory_space<vmem>>) attributes {dimension_semantics = [], scalar_prefetch = 0 : i64, scratch_operands = 0 : i64, tpu.core_type = #tpu.core_type<tc>} {
    %c0 = arith.constant 0 : index
    %c0_0 = arith.constant 0 : index
    %0 = vector.load %arg2[%c0, %c0_0] : memref<7x32xf32, #tpu.memory_space<vmem>>, vector<7x32xf32>
    %1 = vector.extract_strided_slice %0 {offsets = [0, 0], sizes = [1, 32], strides = [1, 1]} : vector<7x32xf32> to vector<1x32xf32>
    %2 = vector.extract_strided_slice %0 {offsets = [1, 0], sizes = [1, 32], strides = [1, 1]} : vector<7x32xf32> to vector<1x32xf32>
    %3 = vector.extract_strided_slice %0 {offsets = [2, 0], sizes = [1, 32], strides = [1, 1]} : vector<7x32xf32> to vector<1x32xf32>
    %4 = vector.extract_strided_slice %0 {offsets = [3, 0], sizes = [1, 32], strides = [1, 1]} : vector<7x32xf32> to vector<1x32xf32>
    %5 = vector.extract_strided_slice %0 {offsets = [4, 0], sizes = [1, 32], strides = [1, 1]} : vector<7x32xf32> to vector<1x32xf32>
    %6 = vector.extract_strided_slice %0 {offsets = [5, 0], sizes = [1, 32], strides = [1, 1]} : vector<7x32xf32> to vector<1x32xf32>
    %7 = vector.extract_strided_slice %0 {offsets = [6, 0], sizes = [1, 32], strides = [1, 1]} : vector<7x32xf32> to vector<1x32xf32>
    %c0_1 = arith.constant 0 : index
    %c0_2 = arith.constant 0 : index
    %8 = vector.load %arg5[%c0_1, %c0_2] : memref<8x48xf32, #tpu.memory_space<vmem>>, vector<8x48xf32>
    %9 = vector.extract_strided_slice %8 {offsets = [0, 0], sizes = [1, 48], strides = [1, 1]} : vector<8x48xf32> to vector<1x48xf32>
    %10 = vector.extract_strided_slice %8 {offsets = [1, 0], sizes = [1, 48], strides = [1, 1]} : vector<8x48xf32> to vector<1x48xf32>
    %11 = vector.extract_strided_slice %8 {offsets = [2, 0], sizes = [1, 48], strides = [1, 1]} : vector<8x48xf32> to vector<1x48xf32>
    %12 = vector.extract_strided_slice %8 {offsets = [3, 0], sizes = [1, 48], strides = [1, 1]} : vector<8x48xf32> to vector<1x48xf32>
    %13 = vector.extract_strided_slice %8 {offsets = [4, 0], sizes = [1, 48], strides = [1, 1]} : vector<8x48xf32> to vector<1x48xf32>
    %14 = vector.extract_strided_slice %8 {offsets = [5, 0], sizes = [1, 48], strides = [1, 1]} : vector<8x48xf32> to vector<1x48xf32>
    %15 = vector.extract_strided_slice %8 {offsets = [6, 0], sizes = [1, 48], strides = [1, 1]} : vector<8x48xf32> to vector<1x48xf32>
    %16 = vector.extract_strided_slice %8 {offsets = [7, 0], sizes = [1, 48], strides = [1, 1]} : vector<8x48xf32> to vector<1x48xf32>
    %c0_3 = arith.constant 0 : index
    %c0_4 = arith.constant 0 : index
    %c0_5 = arith.constant 0 : index
    %17 = vector.load %arg3[%c0_3, %c0_4, %c0_5] : memref<4x32x48xf32, #tpu.memory_space<vmem>>, vector<1x32x48xf32>
    %18 = vector.shape_cast %17 : vector<1x32x48xf32> to vector<32x48xf32>
    %c1 = arith.constant 1 : index
    %c0_6 = arith.constant 0 : index
    %c0_7 = arith.constant 0 : index
    %19 = vector.load %arg3[%c1, %c0_6, %c0_7] : memref<4x32x48xf32, #tpu.memory_space<vmem>>, vector<1x32x48xf32>
    %20 = vector.shape_cast %19 : vector<1x32x48xf32> to vector<32x48xf32>
    %c2 = arith.constant 2 : index
    %c0_8 = arith.constant 0 : index
    %c0_9 = arith.constant 0 : index
    %21 = vector.load %arg3[%c2, %c0_8, %c0_9] : memref<4x32x48xf32, #tpu.memory_space<vmem>>, vector<1x32x48xf32>
    %22 = vector.shape_cast %21 : vector<1x32x48xf32> to vector<32x48xf32>
    %c3 = arith.constant 3 : index
    %c0_10 = arith.constant 0 : index
    %c0_11 = arith.constant 0 : index
    %23 = vector.load %arg3[%c3, %c0_10, %c0_11] : memref<4x32x48xf32, #tpu.memory_space<vmem>>, vector<1x32x48xf32>
    %24 = vector.shape_cast %23 : vector<1x32x48xf32> to vector<32x48xf32>
    %c0_12 = arith.constant 0 : index
    %c0_13 = arith.constant 0 : index
    %c0_14 = arith.constant 0 : index
    %25 = vector.load %arg4[%c0_12, %c0_13, %c0_14] : memref<4x16x48xf32, #tpu.memory_space<vmem>>, vector<1x16x48xf32>
    %26 = vector.shape_cast %25 : vector<1x16x48xf32> to vector<16x48xf32>
    %c1_15 = arith.constant 1 : index
    %c0_16 = arith.constant 0 : index
    %c0_17 = arith.constant 0 : index
    %27 = vector.load %arg4[%c1_15, %c0_16, %c0_17] : memref<4x16x48xf32, #tpu.memory_space<vmem>>, vector<1x16x48xf32>
    %28 = vector.shape_cast %27 : vector<1x16x48xf32> to vector<16x48xf32>
    %c2_18 = arith.constant 2 : index
    %c0_19 = arith.constant 0 : index
    %c0_20 = arith.constant 0 : index
    %29 = vector.load %arg4[%c2_18, %c0_19, %c0_20] : memref<4x16x48xf32, #tpu.memory_space<vmem>>, vector<1x16x48xf32>
    %30 = vector.shape_cast %29 : vector<1x16x48xf32> to vector<16x48xf32>
    %c3_21 = arith.constant 3 : index
    %c0_22 = arith.constant 0 : index
    %c0_23 = arith.constant 0 : index
    %31 = vector.load %arg4[%c3_21, %c0_22, %c0_23] : memref<4x16x48xf32, #tpu.memory_space<vmem>>, vector<1x16x48xf32>
    %32 = vector.shape_cast %31 : vector<1x16x48xf32> to vector<16x48xf32>
    %c0_24 = arith.constant 0 : index
    %c0_25 = arith.constant 0 : index
    %33 = vector.load %arg0[%c0_24, %c0_25] : memref<2x16xf32, #tpu.memory_space<vmem>>, vector<2x16xf32>
    %c0_26 = arith.constant 0 : index
    %c0_27 = arith.constant 0 : index
    %34 = vector.load %arg1[%c0_26, %c0_27] : memref<16x32xf32, #tpu.memory_space<vmem>>, vector<16x32xf32>
    %cst = arith.constant dense<0.000000e+00> : vector<2x32xf32>
    %35 = tpu.matmul %33, %34, %cst {dimension_numbers = #tpu.dot_dimension_numbers<[1], [0], [0], [1], [0, 0, 1, 1], [], []>} : vector<2x16xf32>, vector<16x32xf32>, vector<2x32xf32> -> vector<2x32xf32>
    %36 = vector.broadcast %1 : vector<1x32xf32> to vector<2x32xf32>
    %37 = arith.addf %35, %36 : vector<2x32xf32>
    %cst_28 = arith.constant dense<0.000000e+00> : vector<2xf32>
    %38 = vector.multi_reduction <add>, %37, %cst_28 [1] : vector<2x32xf32> to vector<2xf32>
    %39 = vector.shape_cast %38 : vector<2xf32> to vector<2x1xf32>
    %cst_29 = arith.constant 3.200000e+01 : f32
    %40 = vector.broadcast %cst_29 : f32 to vector<2x1xf32>
    %41 = arith.divf %39, %40 : vector<2x1xf32>
    %42 = vector.broadcast %41 : vector<2x1xf32> to vector<2x32xf32>
    %43 = arith.subf %37, %42 : vector<2x32xf32>
    %44 = arith.mulf %43, %43 : vector<2x32xf32>
    %cst_30 = arith.constant dense<0.000000e+00> : vector<2xf32>
    %45 = vector.multi_reduction <add>, %44, %cst_30 [1] : vector<2x32xf32> to vector<2xf32>
    %46 = vector.shape_cast %45 : vector<2xf32> to vector<2x1xf32>
    %cst_31 = arith.constant 3.200000e+01 : f32
    %47 = vector.broadcast %cst_31 : f32 to vector<2x1xf32>
    %48 = arith.divf %46, %47 : vector<2x1xf32>
    %49 = vector.broadcast %41 : vector<2x1xf32> to vector<2x32xf32>
    %50 = arith.subf %37, %49 : vector<2x32xf32>
    %cst_32 = arith.constant 9.99999974E-6 : f32
    %51 = vector.broadcast %cst_32 : f32 to vector<2x1xf32>
    %52 = arith.addf %48, %51 : vector<2x1xf32>
    %53 = math.rsqrt %52 : vector<2x1xf32>
    %54 = vector.broadcast %53 : vector<2x1xf32> to vector<2x32xf32>
    %55 = arith.mulf %50, %54 : vector<2x32xf32>
    %56 = vector.broadcast %2 : vector<1x32xf32> to vector<2x32xf32>
    %57 = arith.mulf %55, %56 : vector<2x32xf32>
    %58 = vector.broadcast %3 : vector<1x32xf32> to vector<2x32xf32>
    %59 = arith.addf %57, %58 : vector<2x32xf32>
    %cst_33 = arith.constant 5.000000e-01 : f32
    %60 = vector.broadcast %cst_33 : f32 to vector<2x32xf32>
    %61 = arith.mulf %60, %59 : vector<2x32xf32>
    %cst_34 = arith.constant 0.707106769 : f32
    %62 = vector.broadcast %cst_34 : f32 to vector<2x32xf32>
    %63 = arith.mulf %59, %62 : vector<2x32xf32>
    %64 = math.absf %63 : vector<2x32xf32>
    %cst_35 = arith.constant 0.327591091 : f32
    %65 = vector.broadcast %cst_35 : f32 to vector<2x32xf32>
    %66 = arith.mulf %65, %64 : vector<2x32xf32>
    %cst_36 = arith.constant 1.000000e+00 : f32
    %67 = vector.broadcast %cst_36 : f32 to vector<2x32xf32>
    %68 = arith.addf %67, %66 : vector<2x32xf32>
    %cst_37 = arith.constant 1.000000e+00 : f32
    %69 = vector.broadcast %cst_37 : f32 to vector<2x32xf32>
    %70 = arith.divf %69, %68 : vector<2x32xf32>
    %cst_38 = arith.constant 1.06140542 : f32
    %71 = vector.broadcast %cst_38 : f32 to vector<2x32xf32>
    %72 = arith.mulf %71, %70 : vector<2x32xf32>
    %cst_39 = arith.constant -1.45315206 : f32
    %73 = vector.broadcast %cst_39 : f32 to vector<2x32xf32>
    %74 = arith.addf %72, %73 : vector<2x32xf32>
    %75 = arith.mulf %74, %70 : vector<2x32xf32>
    %cst_40 = arith.constant 1.42141378 : f32
    %76 = vector.broadcast %cst_40 : f32 to vector<2x32xf32>
    %77 = arith.addf %75, %76 : vector<2x32xf32>
    %78 = arith.mulf %77, %70 : vector<2x32xf32>
    %cst_41 = arith.constant -0.284496725 : f32
    %79 = vector.broadcast %cst_41 : f32 to vector<2x32xf32>
    %80 = arith.addf %78, %79 : vector<2x32xf32>
    %81 = arith.mulf %80, %70 : vector<2x32xf32>
    %cst_42 = arith.constant 0.254829586 : f32
    %82 = vector.broadcast %cst_42 : f32 to vector<2x32xf32>
    %83 = arith.addf %81, %82 : vector<2x32xf32>
    %84 = arith.mulf %83, %70 : vector<2x32xf32>
    %cst_43 = arith.constant 0.000000e+00 : f32
    %85 = vector.broadcast %cst_43 : f32 to vector<2x32xf32>
    %86 = arith.subf %85, %64 : vector<2x32xf32>
    %87 = arith.mulf %86, %64 : vector<2x32xf32>
    %88 = math.exp %87 : vector<2x32xf32>
    %89 = arith.mulf %84, %88 : vector<2x32xf32>
    %cst_44 = arith.constant 1.000000e+00 : f32
    %90 = vector.broadcast %cst_44 : f32 to vector<2x32xf32>
    %91 = arith.subf %90, %89 : vector<2x32xf32>
    %cst_45 = arith.constant 0.000000e+00 : f32
    %92 = vector.broadcast %cst_45 : f32 to vector<2x32xf32>
    %93 = arith.cmpf oge, %63, %92 : vector<2x32xf32>
    %cst_46 = arith.constant 0.000000e+00 : f32
    %94 = vector.broadcast %cst_46 : f32 to vector<2x32xf32>
    %95 = arith.subf %94, %91 : vector<2x32xf32>
    %96 = arith.select %93, %91, %95 : vector<2x32xi1>, vector<2x32xf32>
    %cst_47 = arith.constant 1.000000e+00 : f32
    %97 = vector.broadcast %cst_47 : f32 to vector<2x32xf32>
    %98 = arith.addf %97, %96 : vector<2x32xf32>
    %99 = arith.mulf %61, %98 : vector<2x32xf32>
    %cst_48 = arith.constant dense<0.000000e+00> : vector<2x48xf32>
    %100 = tpu.matmul %99, %18, %cst_48 {dimension_numbers = #tpu.dot_dimension_numbers<[1], [0], [0], [1], [0, 0, 1, 1], [], []>} : vector<2x32xf32>, vector<32x48xf32>, vector<2x48xf32> -> vector<2x48xf32>
    %101 = vector.broadcast %9 : vector<1x48xf32> to vector<2x48xf32>
    %102 = arith.addf %100, %101 : vector<2x48xf32>
    %cst_49 = arith.constant dense<0.000000e+00> : vector<2x48xf32>
    %103 = tpu.matmul %99, %20, %cst_49 {dimension_numbers = #tpu.dot_dimension_numbers<[1], [0], [0], [1], [0, 0, 1, 1], [], []>} : vector<2x32xf32>, vector<32x48xf32>, vector<2x48xf32> -> vector<2x48xf32>
    %104 = vector.broadcast %10 : vector<1x48xf32> to vector<2x48xf32>
    %105 = arith.addf %103, %104 : vector<2x48xf32>
    %cst_50 = arith.constant 0.000000e+00 : f32
    %106 = vector.broadcast %cst_50 : f32 to vector<2x16xf32>
    %cst_51 = arith.constant dense<0.000000e+00> : vector<2x48xf32>
    %107 = tpu.matmul %106, %26, %cst_51 {dimension_numbers = #tpu.dot_dimension_numbers<[1], [0], [0], [1], [0, 0, 1, 1], [], []>} : vector<2x16xf32>, vector<16x48xf32>, vector<2x48xf32> -> vector<2x48xf32>
    %108 = vector.broadcast %11 : vector<1x48xf32> to vector<2x48xf32>
    %109 = arith.addf %107, %108 : vector<2x48xf32>
    %110 = vector.extract_strided_slice %102 {offsets = [0, 0], sizes = [2, 16], strides = [1, 1]} : vector<2x48xf32> to vector<2x16xf32>
    %111 = vector.extract_strided_slice %109 {offsets = [0, 0], sizes = [2, 16], strides = [1, 1]} : vector<2x48xf32> to vector<2x16xf32>
    %112 = arith.addf %110, %111 : vector<2x16xf32>
    %113 = arith.negf %112 : vector<2x16xf32>
    %114 = math.exp %113 : vector<2x16xf32>
    %cst_52 = arith.constant 1.000000e+00 : f32
    %115 = vector.broadcast %cst_52 : f32 to vector<2x16xf32>
    %116 = arith.addf %115, %114 : vector<2x16xf32>
    %117 = arith.divf %115, %116 : vector<2x16xf32>
    %118 = vector.extract_strided_slice %102 {offsets = [0, 16], sizes = [2, 16], strides = [1, 1]} : vector<2x48xf32> to vector<2x16xf32>
    %119 = vector.extract_strided_slice %109 {offsets = [0, 16], sizes = [2, 16], strides = [1, 1]} : vector<2x48xf32> to vector<2x16xf32>
    %120 = arith.addf %118, %119 : vector<2x16xf32>
    %121 = arith.negf %120 : vector<2x16xf32>
    %122 = math.exp %121 : vector<2x16xf32>
    %cst_53 = arith.constant 1.000000e+00 : f32
    %123 = vector.broadcast %cst_53 : f32 to vector<2x16xf32>
    %124 = arith.addf %123, %122 : vector<2x16xf32>
    %125 = arith.divf %123, %124 : vector<2x16xf32>
    %126 = vector.extract_strided_slice %102 {offsets = [0, 32], sizes = [2, 16], strides = [1, 1]} : vector<2x48xf32> to vector<2x16xf32>
    %127 = vector.extract_strided_slice %109 {offsets = [0, 32], sizes = [2, 16], strides = [1, 1]} : vector<2x48xf32> to vector<2x16xf32>
    %128 = arith.mulf %117, %127 : vector<2x16xf32>
    %129 = arith.addf %126, %128 : vector<2x16xf32>
    %130 = math.tanh %129 : vector<2x16xf32>
    %cst_54 = arith.constant 1.000000e+00 : f32
    %131 = vector.broadcast %cst_54 : f32 to vector<2x16xf32>
    %132 = arith.subf %131, %125 : vector<2x16xf32>
    %133 = arith.mulf %132, %130 : vector<2x16xf32>
    %134 = arith.mulf %125, %106 : vector<2x16xf32>
    %135 = arith.addf %133, %134 : vector<2x16xf32>
    %cst_55 = arith.constant dense<0.000000e+00> : vector<2x48xf32>
    %136 = tpu.matmul %106, %28, %cst_55 {dimension_numbers = #tpu.dot_dimension_numbers<[1], [0], [0], [1], [0, 0, 1, 1], [], []>} : vector<2x16xf32>, vector<16x48xf32>, vector<2x48xf32> -> vector<2x48xf32>
    %137 = vector.broadcast %12 : vector<1x48xf32> to vector<2x48xf32>
    %138 = arith.addf %136, %137 : vector<2x48xf32>
    %139 = vector.extract_strided_slice %105 {offsets = [0, 0], sizes = [2, 16], strides = [1, 1]} : vector<2x48xf32> to vector<2x16xf32>
    %140 = vector.extract_strided_slice %138 {offsets = [0, 0], sizes = [2, 16], strides = [1, 1]} : vector<2x48xf32> to vector<2x16xf32>
    %141 = arith.addf %139, %140 : vector<2x16xf32>
    %142 = arith.negf %141 : vector<2x16xf32>
    %143 = math.exp %142 : vector<2x16xf32>
    %cst_56 = arith.constant 1.000000e+00 : f32
    %144 = vector.broadcast %cst_56 : f32 to vector<2x16xf32>
    %145 = arith.addf %144, %143 : vector<2x16xf32>
    %146 = arith.divf %144, %145 : vector<2x16xf32>
    %147 = vector.extract_strided_slice %105 {offsets = [0, 16], sizes = [2, 16], strides = [1, 1]} : vector<2x48xf32> to vector<2x16xf32>
    %148 = vector.extract_strided_slice %138 {offsets = [0, 16], sizes = [2, 16], strides = [1, 1]} : vector<2x48xf32> to vector<2x16xf32>
    %149 = arith.addf %147, %148 : vector<2x16xf32>
    %150 = arith.negf %149 : vector<2x16xf32>
    %151 = math.exp %150 : vector<2x16xf32>
    %cst_57 = arith.constant 1.000000e+00 : f32
    %152 = vector.broadcast %cst_57 : f32 to vector<2x16xf32>
    %153 = arith.addf %152, %151 : vector<2x16xf32>
    %154 = arith.divf %152, %153 : vector<2x16xf32>
    %155 = vector.extract_strided_slice %105 {offsets = [0, 32], sizes = [2, 16], strides = [1, 1]} : vector<2x48xf32> to vector<2x16xf32>
    %156 = vector.extract_strided_slice %138 {offsets = [0, 32], sizes = [2, 16], strides = [1, 1]} : vector<2x48xf32> to vector<2x16xf32>
    %157 = arith.mulf %146, %156 : vector<2x16xf32>
    %158 = arith.addf %155, %157 : vector<2x16xf32>
    %159 = math.tanh %158 : vector<2x16xf32>
    %cst_58 = arith.constant 1.000000e+00 : f32
    %160 = vector.broadcast %cst_58 : f32 to vector<2x16xf32>
    %161 = arith.subf %160, %154 : vector<2x16xf32>
    %162 = arith.mulf %161, %159 : vector<2x16xf32>
    %163 = arith.mulf %154, %106 : vector<2x16xf32>
    %164 = arith.addf %162, %163 : vector<2x16xf32>
    %cst_59 = arith.constant dense<0.000000e+00> : vector<2x48xf32>
    %165 = tpu.matmul %135, %26, %cst_59 {dimension_numbers = #tpu.dot_dimension_numbers<[1], [0], [0], [1], [0, 0, 1, 1], [], []>} : vector<2x16xf32>, vector<16x48xf32>, vector<2x48xf32> -> vector<2x48xf32>
    %166 = vector.broadcast %11 : vector<1x48xf32> to vector<2x48xf32>
    %167 = arith.addf %165, %166 : vector<2x48xf32>
    %168 = vector.extract_strided_slice %102 {offsets = [0, 0], sizes = [2, 16], strides = [1, 1]} : vector<2x48xf32> to vector<2x16xf32>
    %169 = vector.extract_strided_slice %167 {offsets = [0, 0], sizes = [2, 16], strides = [1, 1]} : vector<2x48xf32> to vector<2x16xf32>
    %170 = arith.addf %168, %169 : vector<2x16xf32>
    %171 = arith.negf %170 : vector<2x16xf32>
    %172 = math.exp %171 : vector<2x16xf32>
    %cst_60 = arith.constant 1.000000e+00 : f32
    %173 = vector.broadcast %cst_60 : f32 to vector<2x16xf32>
    %174 = arith.addf %173, %172 : vector<2x16xf32>
    %175 = arith.divf %173, %174 : vector<2x16xf32>
    %176 = vector.extract_strided_slice %102 {offsets = [0, 16], sizes = [2, 16], strides = [1, 1]} : vector<2x48xf32> to vector<2x16xf32>
    %177 = vector.extract_strided_slice %167 {offsets = [0, 16], sizes = [2, 16], strides = [1, 1]} : vector<2x48xf32> to vector<2x16xf32>
    %178 = arith.addf %176, %177 : vector<2x16xf32>
    %179 = arith.negf %178 : vector<2x16xf32>
    %180 = math.exp %179 : vector<2x16xf32>
    %cst_61 = arith.constant 1.000000e+00 : f32
    %181 = vector.broadcast %cst_61 : f32 to vector<2x16xf32>
    %182 = arith.addf %181, %180 : vector<2x16xf32>
    %183 = arith.divf %181, %182 : vector<2x16xf32>
    %184 = vector.extract_strided_slice %102 {offsets = [0, 32], sizes = [2, 16], strides = [1, 1]} : vector<2x48xf32> to vector<2x16xf32>
    %185 = vector.extract_strided_slice %167 {offsets = [0, 32], sizes = [2, 16], strides = [1, 1]} : vector<2x48xf32> to vector<2x16xf32>
    %186 = arith.mulf %175, %185 : vector<2x16xf32>
    %187 = arith.addf %184, %186 : vector<2x16xf32>
    %188 = math.tanh %187 : vector<2x16xf32>
    %cst_62 = arith.constant 1.000000e+00 : f32
    %189 = vector.broadcast %cst_62 : f32 to vector<2x16xf32>
    %190 = arith.subf %189, %183 : vector<2x16xf32>
    %191 = arith.mulf %190, %188 : vector<2x16xf32>
    %192 = arith.mulf %183, %135 : vector<2x16xf32>
    %193 = arith.addf %191, %192 : vector<2x16xf32>
    %cst_63 = arith.constant dense<0.000000e+00> : vector<2x48xf32>
    %194 = tpu.matmul %164, %28, %cst_63 {dimension_numbers = #tpu.dot_dimension_numbers<[1], [0], [0], [1], [0, 0, 1, 1], [], []>} : vector<2x16xf32>, vector<16x48xf32>, vector<2x48xf32> -> vector<2x48xf32>
    %195 = vector.broadcast %12 : vector<1x48xf32> to vector<2x48xf32>
    %196 = arith.addf %194, %195 : vector<2x48xf32>
    %197 = vector.extract_strided_slice %105 {offsets = [0, 0], sizes = [2, 16], strides = [1, 1]} : vector<2x48xf32> to vector<2x16xf32>
    %198 = vector.extract_strided_slice %196 {offsets = [0, 0], sizes = [2, 16], strides = [1, 1]} : vector<2x48xf32> to vector<2x16xf32>
    %199 = arith.addf %197, %198 : vector<2x16xf32>
    %200 = arith.negf %199 : vector<2x16xf32>
    %201 = math.exp %200 : vector<2x16xf32>
    %cst_64 = arith.constant 1.000000e+00 : f32
    %202 = vector.broadcast %cst_64 : f32 to vector<2x16xf32>
    %203 = arith.addf %202, %201 : vector<2x16xf32>
    %204 = arith.divf %202, %203 : vector<2x16xf32>
    %205 = vector.extract_strided_slice %105 {offsets = [0, 16], sizes = [2, 16], strides = [1, 1]} : vector<2x48xf32> to vector<2x16xf32>
    %206 = vector.extract_strided_slice %196 {offsets = [0, 16], sizes = [2, 16], strides = [1, 1]} : vector<2x48xf32> to vector<2x16xf32>
    %207 = arith.addf %205, %206 : vector<2x16xf32>
    %208 = arith.negf %207 : vector<2x16xf32>
    %209 = math.exp %208 : vector<2x16xf32>
    %cst_65 = arith.constant 1.000000e+00 : f32
    %210 = vector.broadcast %cst_65 : f32 to vector<2x16xf32>
    %211 = arith.addf %210, %209 : vector<2x16xf32>
    %212 = arith.divf %210, %211 : vector<2x16xf32>
    %213 = vector.extract_strided_slice %105 {offsets = [0, 32], sizes = [2, 16], strides = [1, 1]} : vector<2x48xf32> to vector<2x16xf32>
    %214 = vector.extract_strided_slice %196 {offsets = [0, 32], sizes = [2, 16], strides = [1, 1]} : vector<2x48xf32> to vector<2x16xf32>
    %215 = arith.mulf %204, %214 : vector<2x16xf32>
    %216 = arith.addf %213, %215 : vector<2x16xf32>
    %217 = math.tanh %216 : vector<2x16xf32>
    %cst_66 = arith.constant 1.000000e+00 : f32
    %218 = vector.broadcast %cst_66 : f32 to vector<2x16xf32>
    %219 = arith.subf %218, %212 : vector<2x16xf32>
    %220 = arith.mulf %219, %217 : vector<2x16xf32>
    %221 = arith.mulf %212, %164 : vector<2x16xf32>
    %222 = arith.addf %220, %221 : vector<2x16xf32>
    %cst_67 = arith.constant dense<0.000000e+00> : vector<2x48xf32>
    %223 = tpu.matmul %193, %26, %cst_67 {dimension_numbers = #tpu.dot_dimension_numbers<[1], [0], [0], [1], [0, 0, 1, 1], [], []>} : vector<2x16xf32>, vector<16x48xf32>, vector<2x48xf32> -> vector<2x48xf32>
    %224 = vector.broadcast %11 : vector<1x48xf32> to vector<2x48xf32>
    %225 = arith.addf %223, %224 : vector<2x48xf32>
    %226 = vector.extract_strided_slice %102 {offsets = [0, 0], sizes = [2, 16], strides = [1, 1]} : vector<2x48xf32> to vector<2x16xf32>
    %227 = vector.extract_strided_slice %225 {offsets = [0, 0], sizes = [2, 16], strides = [1, 1]} : vector<2x48xf32> to vector<2x16xf32>
    %228 = arith.addf %226, %227 : vector<2x16xf32>
    %229 = arith.negf %228 : vector<2x16xf32>
    %230 = math.exp %229 : vector<2x16xf32>
    %cst_68 = arith.constant 1.000000e+00 : f32
    %231 = vector.broadcast %cst_68 : f32 to vector<2x16xf32>
    %232 = arith.addf %231, %230 : vector<2x16xf32>
    %233 = arith.divf %231, %232 : vector<2x16xf32>
    %234 = vector.extract_strided_slice %102 {offsets = [0, 16], sizes = [2, 16], strides = [1, 1]} : vector<2x48xf32> to vector<2x16xf32>
    %235 = vector.extract_strided_slice %225 {offsets = [0, 16], sizes = [2, 16], strides = [1, 1]} : vector<2x48xf32> to vector<2x16xf32>
    %236 = arith.addf %234, %235 : vector<2x16xf32>
    %237 = arith.negf %236 : vector<2x16xf32>
    %238 = math.exp %237 : vector<2x16xf32>
    %cst_69 = arith.constant 1.000000e+00 : f32
    %239 = vector.broadcast %cst_69 : f32 to vector<2x16xf32>
    %240 = arith.addf %239, %238 : vector<2x16xf32>
    %241 = arith.divf %239, %240 : vector<2x16xf32>
    %242 = vector.extract_strided_slice %102 {offsets = [0, 32], sizes = [2, 16], strides = [1, 1]} : vector<2x48xf32> to vector<2x16xf32>
    %243 = vector.extract_strided_slice %225 {offsets = [0, 32], sizes = [2, 16], strides = [1, 1]} : vector<2x48xf32> to vector<2x16xf32>
    %244 = arith.mulf %233, %243 : vector<2x16xf32>
    %245 = arith.addf %242, %244 : vector<2x16xf32>
    %246 = math.tanh %245 : vector<2x16xf32>
    %cst_70 = arith.constant 1.000000e+00 : f32
    %247 = vector.broadcast %cst_70 : f32 to vector<2x16xf32>
    %248 = arith.subf %247, %241 : vector<2x16xf32>
    %249 = arith.mulf %248, %246 : vector<2x16xf32>
    %250 = arith.mulf %241, %193 : vector<2x16xf32>
    %251 = arith.addf %249, %250 : vector<2x16xf32>
    %cst_71 = arith.constant dense<0.000000e+00> : vector<2x48xf32>
    %252 = tpu.matmul %222, %28, %cst_71 {dimension_numbers = #tpu.dot_dimension_numbers<[1], [0], [0], [1], [0, 0, 1, 1], [], []>} : vector<2x16xf32>, vector<16x48xf32>, vector<2x48xf32> -> vector<2x48xf32>
    %253 = vector.broadcast %12 : vector<1x48xf32> to vector<2x48xf32>
    %254 = arith.addf %252, %253 : vector<2x48xf32>
    %255 = vector.extract_strided_slice %105 {offsets = [0, 0], sizes = [2, 16], strides = [1, 1]} : vector<2x48xf32> to vector<2x16xf32>
    %256 = vector.extract_strided_slice %254 {offsets = [0, 0], sizes = [2, 16], strides = [1, 1]} : vector<2x48xf32> to vector<2x16xf32>
    %257 = arith.addf %255, %256 : vector<2x16xf32>
    %258 = arith.negf %257 : vector<2x16xf32>
    %259 = math.exp %258 : vector<2x16xf32>
    %cst_72 = arith.constant 1.000000e+00 : f32
    %260 = vector.broadcast %cst_72 : f32 to vector<2x16xf32>
    %261 = arith.addf %260, %259 : vector<2x16xf32>
    %262 = arith.divf %260, %261 : vector<2x16xf32>
    %263 = vector.extract_strided_slice %105 {offsets = [0, 16], sizes = [2, 16], strides = [1, 1]} : vector<2x48xf32> to vector<2x16xf32>
    %264 = vector.extract_strided_slice %254 {offsets = [0, 16], sizes = [2, 16], strides = [1, 1]} : vector<2x48xf32> to vector<2x16xf32>
    %265 = arith.addf %263, %264 : vector<2x16xf32>
    %266 = arith.negf %265 : vector<2x16xf32>
    %267 = math.exp %266 : vector<2x16xf32>
    %cst_73 = arith.constant 1.000000e+00 : f32
    %268 = vector.broadcast %cst_73 : f32 to vector<2x16xf32>
    %269 = arith.addf %268, %267 : vector<2x16xf32>
    %270 = arith.divf %268, %269 : vector<2x16xf32>
    %271 = vector.extract_strided_slice %105 {offsets = [0, 32], sizes = [2, 16], strides = [1, 1]} : vector<2x48xf32> to vector<2x16xf32>
    %272 = vector.extract_strided_slice %254 {offsets = [0, 32], sizes = [2, 16], strides = [1, 1]} : vector<2x48xf32> to vector<2x16xf32>
    %273 = arith.mulf %262, %272 : vector<2x16xf32>
    %274 = arith.addf %271, %273 : vector<2x16xf32>
    %275 = math.tanh %274 : vector<2x16xf32>
    %cst_74 = arith.constant 1.000000e+00 : f32
    %276 = vector.broadcast %cst_74 : f32 to vector<2x16xf32>
    %277 = arith.subf %276, %270 : vector<2x16xf32>
    %278 = arith.mulf %277, %275 : vector<2x16xf32>
    %279 = arith.mulf %270, %222 : vector<2x16xf32>
    %280 = arith.addf %278, %279 : vector<2x16xf32>
    %cst_75 = arith.constant dense<0.000000e+00> : vector<2x48xf32>
    %281 = tpu.matmul %251, %26, %cst_75 {dimension_numbers = #tpu.dot_dimension_numbers<[1], [0], [0], [1], [0, 0, 1, 1], [], []>} : vector<2x16xf32>, vector<16x48xf32>, vector<2x48xf32> -> vector<2x48xf32>
    %282 = vector.broadcast %11 : vector<1x48xf32> to vector<2x48xf32>
    %283 = arith.addf %281, %282 : vector<2x48xf32>
    %284 = vector.extract_strided_slice %102 {offsets = [0, 0], sizes = [2, 16], strides = [1, 1]} : vector<2x48xf32> to vector<2x16xf32>
    %285 = vector.extract_strided_slice %283 {offsets = [0, 0], sizes = [2, 16], strides = [1, 1]} : vector<2x48xf32> to vector<2x16xf32>
    %286 = arith.addf %284, %285 : vector<2x16xf32>
    %287 = arith.negf %286 : vector<2x16xf32>
    %288 = math.exp %287 : vector<2x16xf32>
    %cst_76 = arith.constant 1.000000e+00 : f32
    %289 = vector.broadcast %cst_76 : f32 to vector<2x16xf32>
    %290 = arith.addf %289, %288 : vector<2x16xf32>
    %291 = arith.divf %289, %290 : vector<2x16xf32>
    %292 = vector.extract_strided_slice %102 {offsets = [0, 16], sizes = [2, 16], strides = [1, 1]} : vector<2x48xf32> to vector<2x16xf32>
    %293 = vector.extract_strided_slice %283 {offsets = [0, 16], sizes = [2, 16], strides = [1, 1]} : vector<2x48xf32> to vector<2x16xf32>
    %294 = arith.addf %292, %293 : vector<2x16xf32>
    %295 = arith.negf %294 : vector<2x16xf32>
    %296 = math.exp %295 : vector<2x16xf32>
    %cst_77 = arith.constant 1.000000e+00 : f32
    %297 = vector.broadcast %cst_77 : f32 to vector<2x16xf32>
    %298 = arith.addf %297, %296 : vector<2x16xf32>
    %299 = arith.divf %297, %298 : vector<2x16xf32>
    %300 = vector.extract_strided_slice %102 {offsets = [0, 32], sizes = [2, 16], strides = [1, 1]} : vector<2x48xf32> to vector<2x16xf32>
    %301 = vector.extract_strided_slice %283 {offsets = [0, 32], sizes = [2, 16], strides = [1, 1]} : vector<2x48xf32> to vector<2x16xf32>
    %302 = arith.mulf %291, %301 : vector<2x16xf32>
    %303 = arith.addf %300, %302 : vector<2x16xf32>
    %304 = math.tanh %303 : vector<2x16xf32>
    %cst_78 = arith.constant 1.000000e+00 : f32
    %305 = vector.broadcast %cst_78 : f32 to vector<2x16xf32>
    %306 = arith.subf %305, %299 : vector<2x16xf32>
    %307 = arith.mulf %306, %304 : vector<2x16xf32>
    %308 = arith.mulf %299, %251 : vector<2x16xf32>
    %309 = arith.addf %307, %308 : vector<2x16xf32>
    %cst_79 = arith.constant dense<0.000000e+00> : vector<2x48xf32>
    %310 = tpu.matmul %280, %28, %cst_79 {dimension_numbers = #tpu.dot_dimension_numbers<[1], [0], [0], [1], [0, 0, 1, 1], [], []>} : vector<2x16xf32>, vector<16x48xf32>, vector<2x48xf32> -> vector<2x48xf32>
    %311 = vector.broadcast %12 : vector<1x48xf32> to vector<2x48xf32>
    %312 = arith.addf %310, %311 : vector<2x48xf32>
    %313 = vector.extract_strided_slice %105 {offsets = [0, 0], sizes = [2, 16], strides = [1, 1]} : vector<2x48xf32> to vector<2x16xf32>
    %314 = vector.extract_strided_slice %312 {offsets = [0, 0], sizes = [2, 16], strides = [1, 1]} : vector<2x48xf32> to vector<2x16xf32>
    %315 = arith.addf %313, %314 : vector<2x16xf32>
    %316 = arith.negf %315 : vector<2x16xf32>
    %317 = math.exp %316 : vector<2x16xf32>
    %cst_80 = arith.constant 1.000000e+00 : f32
    %318 = vector.broadcast %cst_80 : f32 to vector<2x16xf32>
    %319 = arith.addf %318, %317 : vector<2x16xf32>
    %320 = arith.divf %318, %319 : vector<2x16xf32>
    %321 = vector.extract_strided_slice %105 {offsets = [0, 16], sizes = [2, 16], strides = [1, 1]} : vector<2x48xf32> to vector<2x16xf32>
    %322 = vector.extract_strided_slice %312 {offsets = [0, 16], sizes = [2, 16], strides = [1, 1]} : vector<2x48xf32> to vector<2x16xf32>
    %323 = arith.addf %321, %322 : vector<2x16xf32>
    %324 = arith.negf %323 : vector<2x16xf32>
    %325 = math.exp %324 : vector<2x16xf32>
    %cst_81 = arith.constant 1.000000e+00 : f32
    %326 = vector.broadcast %cst_81 : f32 to vector<2x16xf32>
    %327 = arith.addf %326, %325 : vector<2x16xf32>
    %328 = arith.divf %326, %327 : vector<2x16xf32>
    %329 = vector.extract_strided_slice %105 {offsets = [0, 32], sizes = [2, 16], strides = [1, 1]} : vector<2x48xf32> to vector<2x16xf32>
    %330 = vector.extract_strided_slice %312 {offsets = [0, 32], sizes = [2, 16], strides = [1, 1]} : vector<2x48xf32> to vector<2x16xf32>
    %331 = arith.mulf %320, %330 : vector<2x16xf32>
    %332 = arith.addf %329, %331 : vector<2x16xf32>
    %333 = math.tanh %332 : vector<2x16xf32>
    %cst_82 = arith.constant 1.000000e+00 : f32
    %334 = vector.broadcast %cst_82 : f32 to vector<2x16xf32>
    %335 = arith.subf %334, %328 : vector<2x16xf32>
    %336 = arith.mulf %335, %333 : vector<2x16xf32>
    %337 = arith.mulf %328, %280 : vector<2x16xf32>
    %338 = arith.addf %336, %337 : vector<2x16xf32>
    %cst_83 = arith.constant dense<0.000000e+00> : vector<2x48xf32>
    %339 = tpu.matmul %309, %26, %cst_83 {dimension_numbers = #tpu.dot_dimension_numbers<[1], [0], [0], [1], [0, 0, 1, 1], [], []>} : vector<2x16xf32>, vector<16x48xf32>, vector<2x48xf32> -> vector<2x48xf32>
    %340 = vector.broadcast %11 : vector<1x48xf32> to vector<2x48xf32>
    %341 = arith.addf %339, %340 : vector<2x48xf32>
    %342 = vector.extract_strided_slice %102 {offsets = [0, 0], sizes = [2, 16], strides = [1, 1]} : vector<2x48xf32> to vector<2x16xf32>
    %343 = vector.extract_strided_slice %341 {offsets = [0, 0], sizes = [2, 16], strides = [1, 1]} : vector<2x48xf32> to vector<2x16xf32>
    %344 = arith.addf %342, %343 : vector<2x16xf32>
    %345 = arith.negf %344 : vector<2x16xf32>
    %346 = math.exp %345 : vector<2x16xf32>
    %cst_84 = arith.constant 1.000000e+00 : f32
    %347 = vector.broadcast %cst_84 : f32 to vector<2x16xf32>
    %348 = arith.addf %347, %346 : vector<2x16xf32>
    %349 = arith.divf %347, %348 : vector<2x16xf32>
    %350 = vector.extract_strided_slice %102 {offsets = [0, 16], sizes = [2, 16], strides = [1, 1]} : vector<2x48xf32> to vector<2x16xf32>
    %351 = vector.extract_strided_slice %341 {offsets = [0, 16], sizes = [2, 16], strides = [1, 1]} : vector<2x48xf32> to vector<2x16xf32>
    %352 = arith.addf %350, %351 : vector<2x16xf32>
    %353 = arith.negf %352 : vector<2x16xf32>
    %354 = math.exp %353 : vector<2x16xf32>
    %cst_85 = arith.constant 1.000000e+00 : f32
    %355 = vector.broadcast %cst_85 : f32 to vector<2x16xf32>
    %356 = arith.addf %355, %354 : vector<2x16xf32>
    %357 = arith.divf %355, %356 : vector<2x16xf32>
    %358 = vector.extract_strided_slice %102 {offsets = [0, 32], sizes = [2, 16], strides = [1, 1]} : vector<2x48xf32> to vector<2x16xf32>
    %359 = vector.extract_strided_slice %341 {offsets = [0, 32], sizes = [2, 16], strides = [1, 1]} : vector<2x48xf32> to vector<2x16xf32>
    %360 = arith.mulf %349, %359 : vector<2x16xf32>
    %361 = arith.addf %358, %360 : vector<2x16xf32>
    %362 = math.tanh %361 : vector<2x16xf32>
    %cst_86 = arith.constant 1.000000e+00 : f32
    %363 = vector.broadcast %cst_86 : f32 to vector<2x16xf32>
    %364 = arith.subf %363, %357 : vector<2x16xf32>
    %365 = arith.mulf %364, %362 : vector<2x16xf32>
    %366 = arith.mulf %357, %309 : vector<2x16xf32>
    %367 = arith.addf %365, %366 : vector<2x16xf32>
    %cst_87 = arith.constant dense<0.000000e+00> : vector<2x48xf32>
    %368 = tpu.matmul %338, %28, %cst_87 {dimension_numbers = #tpu.dot_dimension_numbers<[1], [0], [0], [1], [0, 0, 1, 1], [], []>} : vector<2x16xf32>, vector<16x48xf32>, vector<2x48xf32> -> vector<2x48xf32>
    %369 = vector.broadcast %12 : vector<1x48xf32> to vector<2x48xf32>
    %370 = arith.addf %368, %369 : vector<2x48xf32>
    %371 = vector.extract_strided_slice %105 {offsets = [0, 0], sizes = [2, 16], strides = [1, 1]} : vector<2x48xf32> to vector<2x16xf32>
    %372 = vector.extract_strided_slice %370 {offsets = [0, 0], sizes = [2, 16], strides = [1, 1]} : vector<2x48xf32> to vector<2x16xf32>
    %373 = arith.addf %371, %372 : vector<2x16xf32>
    %374 = arith.negf %373 : vector<2x16xf32>
    %375 = math.exp %374 : vector<2x16xf32>
    %cst_88 = arith.constant 1.000000e+00 : f32
    %376 = vector.broadcast %cst_88 : f32 to vector<2x16xf32>
    %377 = arith.addf %376, %375 : vector<2x16xf32>
    %378 = arith.divf %376, %377 : vector<2x16xf32>
    %379 = vector.extract_strided_slice %105 {offsets = [0, 16], sizes = [2, 16], strides = [1, 1]} : vector<2x48xf32> to vector<2x16xf32>
    %380 = vector.extract_strided_slice %370 {offsets = [0, 16], sizes = [2, 16], strides = [1, 1]} : vector<2x48xf32> to vector<2x16xf32>
    %381 = arith.addf %379, %380 : vector<2x16xf32>
    %382 = arith.negf %381 : vector<2x16xf32>
    %383 = math.exp %382 : vector<2x16xf32>
    %cst_89 = arith.constant 1.000000e+00 : f32
    %384 = vector.broadcast %cst_89 : f32 to vector<2x16xf32>
    %385 = arith.addf %384, %383 : vector<2x16xf32>
    %386 = arith.divf %384, %385 : vector<2x16xf32>
    %387 = vector.extract_strided_slice %105 {offsets = [0, 32], sizes = [2, 16], strides = [1, 1]} : vector<2x48xf32> to vector<2x16xf32>
    %388 = vector.extract_strided_slice %370 {offsets = [0, 32], sizes = [2, 16], strides = [1, 1]} : vector<2x48xf32> to vector<2x16xf32>
    %389 = arith.mulf %378, %388 : vector<2x16xf32>
    %390 = arith.addf %387, %389 : vector<2x16xf32>
    %391 = math.tanh %390 : vector<2x16xf32>
    %cst_90 = arith.constant 1.000000e+00 : f32
    %392 = vector.broadcast %cst_90 : f32 to vector<2x16xf32>
    %393 = arith.subf %392, %386 : vector<2x16xf32>
    %394 = arith.mulf %393, %391 : vector<2x16xf32>
    %395 = arith.mulf %386, %338 : vector<2x16xf32>
    %396 = arith.addf %394, %395 : vector<2x16xf32>
    %cst_91 = arith.constant dense<0.000000e+00> : vector<2x48xf32>
    %397 = tpu.matmul %367, %26, %cst_91 {dimension_numbers = #tpu.dot_dimension_numbers<[1], [0], [0], [1], [0, 0, 1, 1], [], []>} : vector<2x16xf32>, vector<16x48xf32>, vector<2x48xf32> -> vector<2x48xf32>
    %398 = vector.broadcast %11 : vector<1x48xf32> to vector<2x48xf32>
    %399 = arith.addf %397, %398 : vector<2x48xf32>
    %400 = vector.extract_strided_slice %102 {offsets = [0, 0], sizes = [2, 16], strides = [1, 1]} : vector<2x48xf32> to vector<2x16xf32>
    %401 = vector.extract_strided_slice %399 {offsets = [0, 0], sizes = [2, 16], strides = [1, 1]} : vector<2x48xf32> to vector<2x16xf32>
    %402 = arith.addf %400, %401 : vector<2x16xf32>
    %403 = arith.negf %402 : vector<2x16xf32>
    %404 = math.exp %403 : vector<2x16xf32>
    %cst_92 = arith.constant 1.000000e+00 : f32
    %405 = vector.broadcast %cst_92 : f32 to vector<2x16xf32>
    %406 = arith.addf %405, %404 : vector<2x16xf32>
    %407 = arith.divf %405, %406 : vector<2x16xf32>
    %408 = vector.extract_strided_slice %102 {offsets = [0, 16], sizes = [2, 16], strides = [1, 1]} : vector<2x48xf32> to vector<2x16xf32>
    %409 = vector.extract_strided_slice %399 {offsets = [0, 16], sizes = [2, 16], strides = [1, 1]} : vector<2x48xf32> to vector<2x16xf32>
    %410 = arith.addf %408, %409 : vector<2x16xf32>
    %411 = arith.negf %410 : vector<2x16xf32>
    %412 = math.exp %411 : vector<2x16xf32>
    %cst_93 = arith.constant 1.000000e+00 : f32
    %413 = vector.broadcast %cst_93 : f32 to vector<2x16xf32>
    %414 = arith.addf %413, %412 : vector<2x16xf32>
    %415 = arith.divf %413, %414 : vector<2x16xf32>
    %416 = vector.extract_strided_slice %102 {offsets = [0, 32], sizes = [2, 16], strides = [1, 1]} : vector<2x48xf32> to vector<2x16xf32>
    %417 = vector.extract_strided_slice %399 {offsets = [0, 32], sizes = [2, 16], strides = [1, 1]} : vector<2x48xf32> to vector<2x16xf32>
    %418 = arith.mulf %407, %417 : vector<2x16xf32>
    %419 = arith.addf %416, %418 : vector<2x16xf32>
    %420 = math.tanh %419 : vector<2x16xf32>
    %cst_94 = arith.constant 1.000000e+00 : f32
    %421 = vector.broadcast %cst_94 : f32 to vector<2x16xf32>
    %422 = arith.subf %421, %415 : vector<2x16xf32>
    %423 = arith.mulf %422, %420 : vector<2x16xf32>
    %424 = arith.mulf %415, %367 : vector<2x16xf32>
    %425 = arith.addf %423, %424 : vector<2x16xf32>
    %cst_95 = arith.constant dense<0.000000e+00> : vector<2x48xf32>
    %426 = tpu.matmul %396, %28, %cst_95 {dimension_numbers = #tpu.dot_dimension_numbers<[1], [0], [0], [1], [0, 0, 1, 1], [], []>} : vector<2x16xf32>, vector<16x48xf32>, vector<2x48xf32> -> vector<2x48xf32>
    %427 = vector.broadcast %12 : vector<1x48xf32> to vector<2x48xf32>
    %428 = arith.addf %426, %427 : vector<2x48xf32>
    %429 = vector.extract_strided_slice %105 {offsets = [0, 0], sizes = [2, 16], strides = [1, 1]} : vector<2x48xf32> to vector<2x16xf32>
    %430 = vector.extract_strided_slice %428 {offsets = [0, 0], sizes = [2, 16], strides = [1, 1]} : vector<2x48xf32> to vector<2x16xf32>
    %431 = arith.addf %429, %430 : vector<2x16xf32>
    %432 = arith.negf %431 : vector<2x16xf32>
    %433 = math.exp %432 : vector<2x16xf32>
    %cst_96 = arith.constant 1.000000e+00 : f32
    %434 = vector.broadcast %cst_96 : f32 to vector<2x16xf32>
    %435 = arith.addf %434, %433 : vector<2x16xf32>
    %436 = arith.divf %434, %435 : vector<2x16xf32>
    %437 = vector.extract_strided_slice %105 {offsets = [0, 16], sizes = [2, 16], strides = [1, 1]} : vector<2x48xf32> to vector<2x16xf32>
    %438 = vector.extract_strided_slice %428 {offsets = [0, 16], sizes = [2, 16], strides = [1, 1]} : vector<2x48xf32> to vector<2x16xf32>
    %439 = arith.addf %437, %438 : vector<2x16xf32>
    %440 = arith.negf %439 : vector<2x16xf32>
    %441 = math.exp %440 : vector<2x16xf32>
    %cst_97 = arith.constant 1.000000e+00 : f32
    %442 = vector.broadcast %cst_97 : f32 to vector<2x16xf32>
    %443 = arith.addf %442, %441 : vector<2x16xf32>
    %444 = arith.divf %442, %443 : vector<2x16xf32>
    %445 = vector.extract_strided_slice %105 {offsets = [0, 32], sizes = [2, 16], strides = [1, 1]} : vector<2x48xf32> to vector<2x16xf32>
    %446 = vector.extract_strided_slice %428 {offsets = [0, 32], sizes = [2, 16], strides = [1, 1]} : vector<2x48xf32> to vector<2x16xf32>
    %447 = arith.mulf %436, %446 : vector<2x16xf32>
    %448 = arith.addf %445, %447 : vector<2x16xf32>
    %449 = math.tanh %448 : vector<2x16xf32>
    %cst_98 = arith.constant 1.000000e+00 : f32
    %450 = vector.broadcast %cst_98 : f32 to vector<2x16xf32>
    %451 = arith.subf %450, %444 : vector<2x16xf32>
    %452 = arith.mulf %451, %449 : vector<2x16xf32>
    %453 = arith.mulf %444, %396 : vector<2x16xf32>
    %454 = arith.addf %452, %453 : vector<2x16xf32>
    %cst_99 = arith.constant dense<0.000000e+00> : vector<2x48xf32>
    %455 = tpu.matmul %425, %26, %cst_99 {dimension_numbers = #tpu.dot_dimension_numbers<[1], [0], [0], [1], [0, 0, 1, 1], [], []>} : vector<2x16xf32>, vector<16x48xf32>, vector<2x48xf32> -> vector<2x48xf32>
    %456 = vector.broadcast %11 : vector<1x48xf32> to vector<2x48xf32>
    %457 = arith.addf %455, %456 : vector<2x48xf32>
    %458 = vector.extract_strided_slice %102 {offsets = [0, 0], sizes = [2, 16], strides = [1, 1]} : vector<2x48xf32> to vector<2x16xf32>
    %459 = vector.extract_strided_slice %457 {offsets = [0, 0], sizes = [2, 16], strides = [1, 1]} : vector<2x48xf32> to vector<2x16xf32>
    %460 = arith.addf %458, %459 : vector<2x16xf32>
    %461 = arith.negf %460 : vector<2x16xf32>
    %462 = math.exp %461 : vector<2x16xf32>
    %cst_100 = arith.constant 1.000000e+00 : f32
    %463 = vector.broadcast %cst_100 : f32 to vector<2x16xf32>
    %464 = arith.addf %463, %462 : vector<2x16xf32>
    %465 = arith.divf %463, %464 : vector<2x16xf32>
    %466 = vector.extract_strided_slice %102 {offsets = [0, 16], sizes = [2, 16], strides = [1, 1]} : vector<2x48xf32> to vector<2x16xf32>
    %467 = vector.extract_strided_slice %457 {offsets = [0, 16], sizes = [2, 16], strides = [1, 1]} : vector<2x48xf32> to vector<2x16xf32>
    %468 = arith.addf %466, %467 : vector<2x16xf32>
    %469 = arith.negf %468 : vector<2x16xf32>
    %470 = math.exp %469 : vector<2x16xf32>
    %cst_101 = arith.constant 1.000000e+00 : f32
    %471 = vector.broadcast %cst_101 : f32 to vector<2x16xf32>
    %472 = arith.addf %471, %470 : vector<2x16xf32>
    %473 = arith.divf %471, %472 : vector<2x16xf32>
    %474 = vector.extract_strided_slice %102 {offsets = [0, 32], sizes = [2, 16], strides = [1, 1]} : vector<2x48xf32> to vector<2x16xf32>
    %475 = vector.extract_strided_slice %457 {offsets = [0, 32], sizes = [2, 16], strides = [1, 1]} : vector<2x48xf32> to vector<2x16xf32>
    %476 = arith.mulf %465, %475 : vector<2x16xf32>
    %477 = arith.addf %474, %476 : vector<2x16xf32>
    %478 = math.tanh %477 : vector<2x16xf32>
    %cst_102 = arith.constant 1.000000e+00 : f32
    %479 = vector.broadcast %cst_102 : f32 to vector<2x16xf32>
    %480 = arith.subf %479, %473 : vector<2x16xf32>
    %481 = arith.mulf %480, %478 : vector<2x16xf32>
    %482 = arith.mulf %473, %425 : vector<2x16xf32>
    %483 = arith.addf %481, %482 : vector<2x16xf32>
    %cst_103 = arith.constant dense<0.000000e+00> : vector<2x48xf32>
    %484 = tpu.matmul %454, %28, %cst_103 {dimension_numbers = #tpu.dot_dimension_numbers<[1], [0], [0], [1], [0, 0, 1, 1], [], []>} : vector<2x16xf32>, vector<16x48xf32>, vector<2x48xf32> -> vector<2x48xf32>
    %485 = vector.broadcast %12 : vector<1x48xf32> to vector<2x48xf32>
    %486 = arith.addf %484, %485 : vector<2x48xf32>
    %487 = vector.extract_strided_slice %105 {offsets = [0, 0], sizes = [2, 16], strides = [1, 1]} : vector<2x48xf32> to vector<2x16xf32>
    %488 = vector.extract_strided_slice %486 {offsets = [0, 0], sizes = [2, 16], strides = [1, 1]} : vector<2x48xf32> to vector<2x16xf32>
    %489 = arith.addf %487, %488 : vector<2x16xf32>
    %490 = arith.negf %489 : vector<2x16xf32>
    %491 = math.exp %490 : vector<2x16xf32>
    %cst_104 = arith.constant 1.000000e+00 : f32
    %492 = vector.broadcast %cst_104 : f32 to vector<2x16xf32>
    %493 = arith.addf %492, %491 : vector<2x16xf32>
    %494 = arith.divf %492, %493 : vector<2x16xf32>
    %495 = vector.extract_strided_slice %105 {offsets = [0, 16], sizes = [2, 16], strides = [1, 1]} : vector<2x48xf32> to vector<2x16xf32>
    %496 = vector.extract_strided_slice %486 {offsets = [0, 16], sizes = [2, 16], strides = [1, 1]} : vector<2x48xf32> to vector<2x16xf32>
    %497 = arith.addf %495, %496 : vector<2x16xf32>
    %498 = arith.negf %497 : vector<2x16xf32>
    %499 = math.exp %498 : vector<2x16xf32>
    %cst_105 = arith.constant 1.000000e+00 : f32
    %500 = vector.broadcast %cst_105 : f32 to vector<2x16xf32>
    %501 = arith.addf %500, %499 : vector<2x16xf32>
    %502 = arith.divf %500, %501 : vector<2x16xf32>
    %503 = vector.extract_strided_slice %105 {offsets = [0, 32], sizes = [2, 16], strides = [1, 1]} : vector<2x48xf32> to vector<2x16xf32>
    %504 = vector.extract_strided_slice %486 {offsets = [0, 32], sizes = [2, 16], strides = [1, 1]} : vector<2x48xf32> to vector<2x16xf32>
    %505 = arith.mulf %494, %504 : vector<2x16xf32>
    %506 = arith.addf %503, %505 : vector<2x16xf32>
    %507 = math.tanh %506 : vector<2x16xf32>
    %cst_106 = arith.constant 1.000000e+00 : f32
    %508 = vector.broadcast %cst_106 : f32 to vector<2x16xf32>
    %509 = arith.subf %508, %502 : vector<2x16xf32>
    %510 = arith.mulf %509, %507 : vector<2x16xf32>
    %511 = arith.mulf %502, %454 : vector<2x16xf32>
    %512 = arith.addf %510, %511 : vector<2x16xf32>
    %cst_107 = arith.constant dense<0.000000e+00> : vector<2x48xf32>
    %513 = tpu.matmul %483, %26, %cst_107 {dimension_numbers = #tpu.dot_dimension_numbers<[1], [0], [0], [1], [0, 0, 1, 1], [], []>} : vector<2x16xf32>, vector<16x48xf32>, vector<2x48xf32> -> vector<2x48xf32>
    %514 = vector.broadcast %11 : vector<1x48xf32> to vector<2x48xf32>
    %515 = arith.addf %513, %514 : vector<2x48xf32>
    %516 = vector.extract_strided_slice %102 {offsets = [0, 0], sizes = [2, 16], strides = [1, 1]} : vector<2x48xf32> to vector<2x16xf32>
    %517 = vector.extract_strided_slice %515 {offsets = [0, 0], sizes = [2, 16], strides = [1, 1]} : vector<2x48xf32> to vector<2x16xf32>
    %518 = arith.addf %516, %517 : vector<2x16xf32>
    %519 = arith.negf %518 : vector<2x16xf32>
    %520 = math.exp %519 : vector<2x16xf32>
    %cst_108 = arith.constant 1.000000e+00 : f32
    %521 = vector.broadcast %cst_108 : f32 to vector<2x16xf32>
    %522 = arith.addf %521, %520 : vector<2x16xf32>
    %523 = arith.divf %521, %522 : vector<2x16xf32>
    %524 = vector.extract_strided_slice %102 {offsets = [0, 16], sizes = [2, 16], strides = [1, 1]} : vector<2x48xf32> to vector<2x16xf32>
    %525 = vector.extract_strided_slice %515 {offsets = [0, 16], sizes = [2, 16], strides = [1, 1]} : vector<2x48xf32> to vector<2x16xf32>
    %526 = arith.addf %524, %525 : vector<2x16xf32>
    %527 = arith.negf %526 : vector<2x16xf32>
    %528 = math.exp %527 : vector<2x16xf32>
    %cst_109 = arith.constant 1.000000e+00 : f32
    %529 = vector.broadcast %cst_109 : f32 to vector<2x16xf32>
    %530 = arith.addf %529, %528 : vector<2x16xf32>
    %531 = arith.divf %529, %530 : vector<2x16xf32>
    %532 = vector.extract_strided_slice %102 {offsets = [0, 32], sizes = [2, 16], strides = [1, 1]} : vector<2x48xf32> to vector<2x16xf32>
    %533 = vector.extract_strided_slice %515 {offsets = [0, 32], sizes = [2, 16], strides = [1, 1]} : vector<2x48xf32> to vector<2x16xf32>
    %534 = arith.mulf %523, %533 : vector<2x16xf32>
    %535 = arith.addf %532, %534 : vector<2x16xf32>
    %536 = math.tanh %535 : vector<2x16xf32>
    %cst_110 = arith.constant 1.000000e+00 : f32
    %537 = vector.broadcast %cst_110 : f32 to vector<2x16xf32>
    %538 = arith.subf %537, %531 : vector<2x16xf32>
    %539 = arith.mulf %538, %536 : vector<2x16xf32>
    %540 = arith.mulf %531, %483 : vector<2x16xf32>
    %541 = arith.addf %539, %540 : vector<2x16xf32>
    %cst_111 = arith.constant dense<0.000000e+00> : vector<2x48xf32>
    %542 = tpu.matmul %512, %28, %cst_111 {dimension_numbers = #tpu.dot_dimension_numbers<[1], [0], [0], [1], [0, 0, 1, 1], [], []>} : vector<2x16xf32>, vector<16x48xf32>, vector<2x48xf32> -> vector<2x48xf32>
    %543 = vector.broadcast %12 : vector<1x48xf32> to vector<2x48xf32>
    %544 = arith.addf %542, %543 : vector<2x48xf32>
    %545 = vector.extract_strided_slice %105 {offsets = [0, 0], sizes = [2, 16], strides = [1, 1]} : vector<2x48xf32> to vector<2x16xf32>
    %546 = vector.extract_strided_slice %544 {offsets = [0, 0], sizes = [2, 16], strides = [1, 1]} : vector<2x48xf32> to vector<2x16xf32>
    %547 = arith.addf %545, %546 : vector<2x16xf32>
    %548 = arith.negf %547 : vector<2x16xf32>
    %549 = math.exp %548 : vector<2x16xf32>
    %cst_112 = arith.constant 1.000000e+00 : f32
    %550 = vector.broadcast %cst_112 : f32 to vector<2x16xf32>
    %551 = arith.addf %550, %549 : vector<2x16xf32>
    %552 = arith.divf %550, %551 : vector<2x16xf32>
    %553 = vector.extract_strided_slice %105 {offsets = [0, 16], sizes = [2, 16], strides = [1, 1]} : vector<2x48xf32> to vector<2x16xf32>
    %554 = vector.extract_strided_slice %544 {offsets = [0, 16], sizes = [2, 16], strides = [1, 1]} : vector<2x48xf32> to vector<2x16xf32>
    %555 = arith.addf %553, %554 : vector<2x16xf32>
    %556 = arith.negf %555 : vector<2x16xf32>
    %557 = math.exp %556 : vector<2x16xf32>
    %cst_113 = arith.constant 1.000000e+00 : f32
    %558 = vector.broadcast %cst_113 : f32 to vector<2x16xf32>
    %559 = arith.addf %558, %557 : vector<2x16xf32>
    %560 = arith.divf %558, %559 : vector<2x16xf32>
    %561 = vector.extract_strided_slice %105 {offsets = [0, 32], sizes = [2, 16], strides = [1, 1]} : vector<2x48xf32> to vector<2x16xf32>
    %562 = vector.extract_strided_slice %544 {offsets = [0, 32], sizes = [2, 16], strides = [1, 1]} : vector<2x48xf32> to vector<2x16xf32>
    %563 = arith.mulf %552, %562 : vector<2x16xf32>
    %564 = arith.addf %561, %563 : vector<2x16xf32>
    %565 = math.tanh %564 : vector<2x16xf32>
    %cst_114 = arith.constant 1.000000e+00 : f32
    %566 = vector.broadcast %cst_114 : f32 to vector<2x16xf32>
    %567 = arith.subf %566, %560 : vector<2x16xf32>
    %568 = arith.mulf %567, %565 : vector<2x16xf32>
    %569 = arith.mulf %560, %512 : vector<2x16xf32>
    %570 = arith.addf %568, %569 : vector<2x16xf32>
    %571 = tpu.concatenate %135, %570 in 1 : vector<2x16xf32>, vector<2x16xf32> -> vector<2x32xf32>
    %572 = tpu.concatenate %193, %512 in 1 : vector<2x16xf32>, vector<2x16xf32> -> vector<2x32xf32>
    %573 = tpu.concatenate %251, %454 in 1 : vector<2x16xf32>, vector<2x16xf32> -> vector<2x32xf32>
    %574 = tpu.concatenate %309, %396 in 1 : vector<2x16xf32>, vector<2x16xf32> -> vector<2x32xf32>
    %575 = tpu.concatenate %367, %338 in 1 : vector<2x16xf32>, vector<2x16xf32> -> vector<2x32xf32>
    %576 = tpu.concatenate %425, %280 in 1 : vector<2x16xf32>, vector<2x16xf32> -> vector<2x32xf32>
    %577 = tpu.concatenate %483, %222 in 1 : vector<2x16xf32>, vector<2x16xf32> -> vector<2x32xf32>
    %578 = tpu.concatenate %541, %164 in 1 : vector<2x16xf32>, vector<2x16xf32> -> vector<2x32xf32>
    %579 = tpu.concatenate %571, %572, %573, %574, %575, %576, %577, %578 in 0 : vector<2x32xf32>, vector<2x32xf32>, vector<2x32xf32>, vector<2x32xf32>, vector<2x32xf32>, vector<2x32xf32>, vector<2x32xf32>, vector<2x32xf32> -> vector<16x32xf32>
    %cst_115 = arith.constant dense<0.000000e+00> : vector<16x48xf32>
    %580 = tpu.matmul %579, %22, %cst_115 {dimension_numbers = #tpu.dot_dimension_numbers<[1], [0], [0], [1], [0, 0, 1, 1], [], []>} : vector<16x32xf32>, vector<32x48xf32>, vector<16x48xf32> -> vector<16x48xf32>
    %581 = vector.broadcast %13 : vector<1x48xf32> to vector<16x48xf32>
    %582 = arith.addf %580, %581 : vector<16x48xf32>
    %cst_116 = arith.constant dense<0.000000e+00> : vector<16x48xf32>
    %583 = tpu.matmul %579, %24, %cst_116 {dimension_numbers = #tpu.dot_dimension_numbers<[1], [0], [0], [1], [0, 0, 1, 1], [], []>} : vector<16x32xf32>, vector<32x48xf32>, vector<16x48xf32> -> vector<16x48xf32>
    %584 = vector.broadcast %14 : vector<1x48xf32> to vector<16x48xf32>
    %585 = arith.addf %583, %584 : vector<16x48xf32>
    %586 = vector.extract_strided_slice %582 {offsets = [0, 0], sizes = [2, 48], strides = [1, 1]} : vector<16x48xf32> to vector<2x48xf32>
    %cst_117 = arith.constant dense<0.000000e+00> : vector<2x48xf32>
    %587 = tpu.matmul %106, %30, %cst_117 {dimension_numbers = #tpu.dot_dimension_numbers<[1], [0], [0], [1], [0, 0, 1, 1], [], []>} : vector<2x16xf32>, vector<16x48xf32>, vector<2x48xf32> -> vector<2x48xf32>
    %588 = vector.broadcast %15 : vector<1x48xf32> to vector<2x48xf32>
    %589 = arith.addf %587, %588 : vector<2x48xf32>
    %590 = vector.extract_strided_slice %586 {offsets = [0, 0], sizes = [2, 16], strides = [1, 1]} : vector<2x48xf32> to vector<2x16xf32>
    %591 = vector.extract_strided_slice %589 {offsets = [0, 0], sizes = [2, 16], strides = [1, 1]} : vector<2x48xf32> to vector<2x16xf32>
    %592 = arith.addf %590, %591 : vector<2x16xf32>
    %593 = arith.negf %592 : vector<2x16xf32>
    %594 = math.exp %593 : vector<2x16xf32>
    %cst_118 = arith.constant 1.000000e+00 : f32
    %595 = vector.broadcast %cst_118 : f32 to vector<2x16xf32>
    %596 = arith.addf %595, %594 : vector<2x16xf32>
    %597 = arith.divf %595, %596 : vector<2x16xf32>
    %598 = vector.extract_strided_slice %586 {offsets = [0, 16], sizes = [2, 16], strides = [1, 1]} : vector<2x48xf32> to vector<2x16xf32>
    %599 = vector.extract_strided_slice %589 {offsets = [0, 16], sizes = [2, 16], strides = [1, 1]} : vector<2x48xf32> to vector<2x16xf32>
    %600 = arith.addf %598, %599 : vector<2x16xf32>
    %601 = arith.negf %600 : vector<2x16xf32>
    %602 = math.exp %601 : vector<2x16xf32>
    %cst_119 = arith.constant 1.000000e+00 : f32
    %603 = vector.broadcast %cst_119 : f32 to vector<2x16xf32>
    %604 = arith.addf %603, %602 : vector<2x16xf32>
    %605 = arith.divf %603, %604 : vector<2x16xf32>
    %606 = vector.extract_strided_slice %586 {offsets = [0, 32], sizes = [2, 16], strides = [1, 1]} : vector<2x48xf32> to vector<2x16xf32>
    %607 = vector.extract_strided_slice %589 {offsets = [0, 32], sizes = [2, 16], strides = [1, 1]} : vector<2x48xf32> to vector<2x16xf32>
    %608 = arith.mulf %597, %607 : vector<2x16xf32>
    %609 = arith.addf %606, %608 : vector<2x16xf32>
    %610 = math.tanh %609 : vector<2x16xf32>
    %cst_120 = arith.constant 1.000000e+00 : f32
    %611 = vector.broadcast %cst_120 : f32 to vector<2x16xf32>
    %612 = arith.subf %611, %605 : vector<2x16xf32>
    %613 = arith.mulf %612, %610 : vector<2x16xf32>
    %614 = arith.mulf %605, %106 : vector<2x16xf32>
    %615 = arith.addf %613, %614 : vector<2x16xf32>
    %616 = vector.extract_strided_slice %585 {offsets = [14, 0], sizes = [2, 48], strides = [1, 1]} : vector<16x48xf32> to vector<2x48xf32>
    %cst_121 = arith.constant dense<0.000000e+00> : vector<2x48xf32>
    %617 = tpu.matmul %106, %32, %cst_121 {dimension_numbers = #tpu.dot_dimension_numbers<[1], [0], [0], [1], [0, 0, 1, 1], [], []>} : vector<2x16xf32>, vector<16x48xf32>, vector<2x48xf32> -> vector<2x48xf32>
    %618 = vector.broadcast %16 : vector<1x48xf32> to vector<2x48xf32>
    %619 = arith.addf %617, %618 : vector<2x48xf32>
    %620 = vector.extract_strided_slice %616 {offsets = [0, 0], sizes = [2, 16], strides = [1, 1]} : vector<2x48xf32> to vector<2x16xf32>
    %621 = vector.extract_strided_slice %619 {offsets = [0, 0], sizes = [2, 16], strides = [1, 1]} : vector<2x48xf32> to vector<2x16xf32>
    %622 = arith.addf %620, %621 : vector<2x16xf32>
    %623 = arith.negf %622 : vector<2x16xf32>
    %624 = math.exp %623 : vector<2x16xf32>
    %cst_122 = arith.constant 1.000000e+00 : f32
    %625 = vector.broadcast %cst_122 : f32 to vector<2x16xf32>
    %626 = arith.addf %625, %624 : vector<2x16xf32>
    %627 = arith.divf %625, %626 : vector<2x16xf32>
    %628 = vector.extract_strided_slice %616 {offsets = [0, 16], sizes = [2, 16], strides = [1, 1]} : vector<2x48xf32> to vector<2x16xf32>
    %629 = vector.extract_strided_slice %619 {offsets = [0, 16], sizes = [2, 16], strides = [1, 1]} : vector<2x48xf32> to vector<2x16xf32>
    %630 = arith.addf %628, %629 : vector<2x16xf32>
    %631 = arith.negf %630 : vector<2x16xf32>
    %632 = math.exp %631 : vector<2x16xf32>
    %cst_123 = arith.constant 1.000000e+00 : f32
    %633 = vector.broadcast %cst_123 : f32 to vector<2x16xf32>
    %634 = arith.addf %633, %632 : vector<2x16xf32>
    %635 = arith.divf %633, %634 : vector<2x16xf32>
    %636 = vector.extract_strided_slice %616 {offsets = [0, 32], sizes = [2, 16], strides = [1, 1]} : vector<2x48xf32> to vector<2x16xf32>
    %637 = vector.extract_strided_slice %619 {offsets = [0, 32], sizes = [2, 16], strides = [1, 1]} : vector<2x48xf32> to vector<2x16xf32>
    %638 = arith.mulf %627, %637 : vector<2x16xf32>
    %639 = arith.addf %636, %638 : vector<2x16xf32>
    %640 = math.tanh %639 : vector<2x16xf32>
    %cst_124 = arith.constant 1.000000e+00 : f32
    %641 = vector.broadcast %cst_124 : f32 to vector<2x16xf32>
    %642 = arith.subf %641, %635 : vector<2x16xf32>
    %643 = arith.mulf %642, %640 : vector<2x16xf32>
    %644 = arith.mulf %635, %106 : vector<2x16xf32>
    %645 = arith.addf %643, %644 : vector<2x16xf32>
    %646 = vector.extract_strided_slice %582 {offsets = [2, 0], sizes = [2, 48], strides = [1, 1]} : vector<16x48xf32> to vector<2x48xf32>
    %cst_125 = arith.constant dense<0.000000e+00> : vector<2x48xf32>
    %647 = tpu.matmul %615, %30, %cst_125 {dimension_numbers = #tpu.dot_dimension_numbers<[1], [0], [0], [1], [0, 0, 1, 1], [], []>} : vector<2x16xf32>, vector<16x48xf32>, vector<2x48xf32> -> vector<2x48xf32>
    %648 = vector.broadcast %15 : vector<1x48xf32> to vector<2x48xf32>
    %649 = arith.addf %647, %648 : vector<2x48xf32>
    %650 = vector.extract_strided_slice %646 {offsets = [0, 0], sizes = [2, 16], strides = [1, 1]} : vector<2x48xf32> to vector<2x16xf32>
    %651 = vector.extract_strided_slice %649 {offsets = [0, 0], sizes = [2, 16], strides = [1, 1]} : vector<2x48xf32> to vector<2x16xf32>
    %652 = arith.addf %650, %651 : vector<2x16xf32>
    %653 = arith.negf %652 : vector<2x16xf32>
    %654 = math.exp %653 : vector<2x16xf32>
    %cst_126 = arith.constant 1.000000e+00 : f32
    %655 = vector.broadcast %cst_126 : f32 to vector<2x16xf32>
    %656 = arith.addf %655, %654 : vector<2x16xf32>
    %657 = arith.divf %655, %656 : vector<2x16xf32>
    %658 = vector.extract_strided_slice %646 {offsets = [0, 16], sizes = [2, 16], strides = [1, 1]} : vector<2x48xf32> to vector<2x16xf32>
    %659 = vector.extract_strided_slice %649 {offsets = [0, 16], sizes = [2, 16], strides = [1, 1]} : vector<2x48xf32> to vector<2x16xf32>
    %660 = arith.addf %658, %659 : vector<2x16xf32>
    %661 = arith.negf %660 : vector<2x16xf32>
    %662 = math.exp %661 : vector<2x16xf32>
    %cst_127 = arith.constant 1.000000e+00 : f32
    %663 = vector.broadcast %cst_127 : f32 to vector<2x16xf32>
    %664 = arith.addf %663, %662 : vector<2x16xf32>
    %665 = arith.divf %663, %664 : vector<2x16xf32>
    %666 = vector.extract_strided_slice %646 {offsets = [0, 32], sizes = [2, 16], strides = [1, 1]} : vector<2x48xf32> to vector<2x16xf32>
    %667 = vector.extract_strided_slice %649 {offsets = [0, 32], sizes = [2, 16], strides = [1, 1]} : vector<2x48xf32> to vector<2x16xf32>
    %668 = arith.mulf %657, %667 : vector<2x16xf32>
    %669 = arith.addf %666, %668 : vector<2x16xf32>
    %670 = math.tanh %669 : vector<2x16xf32>
    %cst_128 = arith.constant 1.000000e+00 : f32
    %671 = vector.broadcast %cst_128 : f32 to vector<2x16xf32>
    %672 = arith.subf %671, %665 : vector<2x16xf32>
    %673 = arith.mulf %672, %670 : vector<2x16xf32>
    %674 = arith.mulf %665, %615 : vector<2x16xf32>
    %675 = arith.addf %673, %674 : vector<2x16xf32>
    %676 = vector.extract_strided_slice %585 {offsets = [12, 0], sizes = [2, 48], strides = [1, 1]} : vector<16x48xf32> to vector<2x48xf32>
    %cst_129 = arith.constant dense<0.000000e+00> : vector<2x48xf32>
    %677 = tpu.matmul %645, %32, %cst_129 {dimension_numbers = #tpu.dot_dimension_numbers<[1], [0], [0], [1], [0, 0, 1, 1], [], []>} : vector<2x16xf32>, vector<16x48xf32>, vector<2x48xf32> -> vector<2x48xf32>
    %678 = vector.broadcast %16 : vector<1x48xf32> to vector<2x48xf32>
    %679 = arith.addf %677, %678 : vector<2x48xf32>
    %680 = vector.extract_strided_slice %676 {offsets = [0, 0], sizes = [2, 16], strides = [1, 1]} : vector<2x48xf32> to vector<2x16xf32>
    %681 = vector.extract_strided_slice %679 {offsets = [0, 0], sizes = [2, 16], strides = [1, 1]} : vector<2x48xf32> to vector<2x16xf32>
    %682 = arith.addf %680, %681 : vector<2x16xf32>
    %683 = arith.negf %682 : vector<2x16xf32>
    %684 = math.exp %683 : vector<2x16xf32>
    %cst_130 = arith.constant 1.000000e+00 : f32
    %685 = vector.broadcast %cst_130 : f32 to vector<2x16xf32>
    %686 = arith.addf %685, %684 : vector<2x16xf32>
    %687 = arith.divf %685, %686 : vector<2x16xf32>
    %688 = vector.extract_strided_slice %676 {offsets = [0, 16], sizes = [2, 16], strides = [1, 1]} : vector<2x48xf32> to vector<2x16xf32>
    %689 = vector.extract_strided_slice %679 {offsets = [0, 16], sizes = [2, 16], strides = [1, 1]} : vector<2x48xf32> to vector<2x16xf32>
    %690 = arith.addf %688, %689 : vector<2x16xf32>
    %691 = arith.negf %690 : vector<2x16xf32>
    %692 = math.exp %691 : vector<2x16xf32>
    %cst_131 = arith.constant 1.000000e+00 : f32
    %693 = vector.broadcast %cst_131 : f32 to vector<2x16xf32>
    %694 = arith.addf %693, %692 : vector<2x16xf32>
    %695 = arith.divf %693, %694 : vector<2x16xf32>
    %696 = vector.extract_strided_slice %676 {offsets = [0, 32], sizes = [2, 16], strides = [1, 1]} : vector<2x48xf32> to vector<2x16xf32>
    %697 = vector.extract_strided_slice %679 {offsets = [0, 32], sizes = [2, 16], strides = [1, 1]} : vector<2x48xf32> to vector<2x16xf32>
    %698 = arith.mulf %687, %697 : vector<2x16xf32>
    %699 = arith.addf %696, %698 : vector<2x16xf32>
    %700 = math.tanh %699 : vector<2x16xf32>
    %cst_132 = arith.constant 1.000000e+00 : f32
    %701 = vector.broadcast %cst_132 : f32 to vector<2x16xf32>
    %702 = arith.subf %701, %695 : vector<2x16xf32>
    %703 = arith.mulf %702, %700 : vector<2x16xf32>
    %704 = arith.mulf %695, %645 : vector<2x16xf32>
    %705 = arith.addf %703, %704 : vector<2x16xf32>
    %706 = vector.extract_strided_slice %582 {offsets = [4, 0], sizes = [2, 48], strides = [1, 1]} : vector<16x48xf32> to vector<2x48xf32>
    %cst_133 = arith.constant dense<0.000000e+00> : vector<2x48xf32>
    %707 = tpu.matmul %675, %30, %cst_133 {dimension_numbers = #tpu.dot_dimension_numbers<[1], [0], [0], [1], [0, 0, 1, 1], [], []>} : vector<2x16xf32>, vector<16x48xf32>, vector<2x48xf32> -> vector<2x48xf32>
    %708 = vector.broadcast %15 : vector<1x48xf32> to vector<2x48xf32>
    %709 = arith.addf %707, %708 : vector<2x48xf32>
    %710 = vector.extract_strided_slice %706 {offsets = [0, 0], sizes = [2, 16], strides = [1, 1]} : vector<2x48xf32> to vector<2x16xf32>
    %711 = vector.extract_strided_slice %709 {offsets = [0, 0], sizes = [2, 16], strides = [1, 1]} : vector<2x48xf32> to vector<2x16xf32>
    %712 = arith.addf %710, %711 : vector<2x16xf32>
    %713 = arith.negf %712 : vector<2x16xf32>
    %714 = math.exp %713 : vector<2x16xf32>
    %cst_134 = arith.constant 1.000000e+00 : f32
    %715 = vector.broadcast %cst_134 : f32 to vector<2x16xf32>
    %716 = arith.addf %715, %714 : vector<2x16xf32>
    %717 = arith.divf %715, %716 : vector<2x16xf32>
    %718 = vector.extract_strided_slice %706 {offsets = [0, 16], sizes = [2, 16], strides = [1, 1]} : vector<2x48xf32> to vector<2x16xf32>
    %719 = vector.extract_strided_slice %709 {offsets = [0, 16], sizes = [2, 16], strides = [1, 1]} : vector<2x48xf32> to vector<2x16xf32>
    %720 = arith.addf %718, %719 : vector<2x16xf32>
    %721 = arith.negf %720 : vector<2x16xf32>
    %722 = math.exp %721 : vector<2x16xf32>
    %cst_135 = arith.constant 1.000000e+00 : f32
    %723 = vector.broadcast %cst_135 : f32 to vector<2x16xf32>
    %724 = arith.addf %723, %722 : vector<2x16xf32>
    %725 = arith.divf %723, %724 : vector<2x16xf32>
    %726 = vector.extract_strided_slice %706 {offsets = [0, 32], sizes = [2, 16], strides = [1, 1]} : vector<2x48xf32> to vector<2x16xf32>
    %727 = vector.extract_strided_slice %709 {offsets = [0, 32], sizes = [2, 16], strides = [1, 1]} : vector<2x48xf32> to vector<2x16xf32>
    %728 = arith.mulf %717, %727 : vector<2x16xf32>
    %729 = arith.addf %726, %728 : vector<2x16xf32>
    %730 = math.tanh %729 : vector<2x16xf32>
    %cst_136 = arith.constant 1.000000e+00 : f32
    %731 = vector.broadcast %cst_136 : f32 to vector<2x16xf32>
    %732 = arith.subf %731, %725 : vector<2x16xf32>
    %733 = arith.mulf %732, %730 : vector<2x16xf32>
    %734 = arith.mulf %725, %675 : vector<2x16xf32>
    %735 = arith.addf %733, %734 : vector<2x16xf32>
    %736 = vector.extract_strided_slice %585 {offsets = [10, 0], sizes = [2, 48], strides = [1, 1]} : vector<16x48xf32> to vector<2x48xf32>
    %cst_137 = arith.constant dense<0.000000e+00> : vector<2x48xf32>
    %737 = tpu.matmul %705, %32, %cst_137 {dimension_numbers = #tpu.dot_dimension_numbers<[1], [0], [0], [1], [0, 0, 1, 1], [], []>} : vector<2x16xf32>, vector<16x48xf32>, vector<2x48xf32> -> vector<2x48xf32>
    %738 = vector.broadcast %16 : vector<1x48xf32> to vector<2x48xf32>
    %739 = arith.addf %737, %738 : vector<2x48xf32>
    %740 = vector.extract_strided_slice %736 {offsets = [0, 0], sizes = [2, 16], strides = [1, 1]} : vector<2x48xf32> to vector<2x16xf32>
    %741 = vector.extract_strided_slice %739 {offsets = [0, 0], sizes = [2, 16], strides = [1, 1]} : vector<2x48xf32> to vector<2x16xf32>
    %742 = arith.addf %740, %741 : vector<2x16xf32>
    %743 = arith.negf %742 : vector<2x16xf32>
    %744 = math.exp %743 : vector<2x16xf32>
    %cst_138 = arith.constant 1.000000e+00 : f32
    %745 = vector.broadcast %cst_138 : f32 to vector<2x16xf32>
    %746 = arith.addf %745, %744 : vector<2x16xf32>
    %747 = arith.divf %745, %746 : vector<2x16xf32>
    %748 = vector.extract_strided_slice %736 {offsets = [0, 16], sizes = [2, 16], strides = [1, 1]} : vector<2x48xf32> to vector<2x16xf32>
    %749 = vector.extract_strided_slice %739 {offsets = [0, 16], sizes = [2, 16], strides = [1, 1]} : vector<2x48xf32> to vector<2x16xf32>
    %750 = arith.addf %748, %749 : vector<2x16xf32>
    %751 = arith.negf %750 : vector<2x16xf32>
    %752 = math.exp %751 : vector<2x16xf32>
    %cst_139 = arith.constant 1.000000e+00 : f32
    %753 = vector.broadcast %cst_139 : f32 to vector<2x16xf32>
    %754 = arith.addf %753, %752 : vector<2x16xf32>
    %755 = arith.divf %753, %754 : vector<2x16xf32>
    %756 = vector.extract_strided_slice %736 {offsets = [0, 32], sizes = [2, 16], strides = [1, 1]} : vector<2x48xf32> to vector<2x16xf32>
    %757 = vector.extract_strided_slice %739 {offsets = [0, 32], sizes = [2, 16], strides = [1, 1]} : vector<2x48xf32> to vector<2x16xf32>
    %758 = arith.mulf %747, %757 : vector<2x16xf32>
    %759 = arith.addf %756, %758 : vector<2x16xf32>
    %760 = math.tanh %759 : vector<2x16xf32>
    %cst_140 = arith.constant 1.000000e+00 : f32
    %761 = vector.broadcast %cst_140 : f32 to vector<2x16xf32>
    %762 = arith.subf %761, %755 : vector<2x16xf32>
    %763 = arith.mulf %762, %760 : vector<2x16xf32>
    %764 = arith.mulf %755, %705 : vector<2x16xf32>
    %765 = arith.addf %763, %764 : vector<2x16xf32>
    %766 = vector.extract_strided_slice %582 {offsets = [6, 0], sizes = [2, 48], strides = [1, 1]} : vector<16x48xf32> to vector<2x48xf32>
    %cst_141 = arith.constant dense<0.000000e+00> : vector<2x48xf32>
    %767 = tpu.matmul %735, %30, %cst_141 {dimension_numbers = #tpu.dot_dimension_numbers<[1], [0], [0], [1], [0, 0, 1, 1], [], []>} : vector<2x16xf32>, vector<16x48xf32>, vector<2x48xf32> -> vector<2x48xf32>
    %768 = vector.broadcast %15 : vector<1x48xf32> to vector<2x48xf32>
    %769 = arith.addf %767, %768 : vector<2x48xf32>
    %770 = vector.extract_strided_slice %766 {offsets = [0, 0], sizes = [2, 16], strides = [1, 1]} : vector<2x48xf32> to vector<2x16xf32>
    %771 = vector.extract_strided_slice %769 {offsets = [0, 0], sizes = [2, 16], strides = [1, 1]} : vector<2x48xf32> to vector<2x16xf32>
    %772 = arith.addf %770, %771 : vector<2x16xf32>
    %773 = arith.negf %772 : vector<2x16xf32>
    %774 = math.exp %773 : vector<2x16xf32>
    %cst_142 = arith.constant 1.000000e+00 : f32
    %775 = vector.broadcast %cst_142 : f32 to vector<2x16xf32>
    %776 = arith.addf %775, %774 : vector<2x16xf32>
    %777 = arith.divf %775, %776 : vector<2x16xf32>
    %778 = vector.extract_strided_slice %766 {offsets = [0, 16], sizes = [2, 16], strides = [1, 1]} : vector<2x48xf32> to vector<2x16xf32>
    %779 = vector.extract_strided_slice %769 {offsets = [0, 16], sizes = [2, 16], strides = [1, 1]} : vector<2x48xf32> to vector<2x16xf32>
    %780 = arith.addf %778, %779 : vector<2x16xf32>
    %781 = arith.negf %780 : vector<2x16xf32>
    %782 = math.exp %781 : vector<2x16xf32>
    %cst_143 = arith.constant 1.000000e+00 : f32
    %783 = vector.broadcast %cst_143 : f32 to vector<2x16xf32>
    %784 = arith.addf %783, %782 : vector<2x16xf32>
    %785 = arith.divf %783, %784 : vector<2x16xf32>
    %786 = vector.extract_strided_slice %766 {offsets = [0, 32], sizes = [2, 16], strides = [1, 1]} : vector<2x48xf32> to vector<2x16xf32>
    %787 = vector.extract_strided_slice %769 {offsets = [0, 32], sizes = [2, 16], strides = [1, 1]} : vector<2x48xf32> to vector<2x16xf32>
    %788 = arith.mulf %777, %787 : vector<2x16xf32>
    %789 = arith.addf %786, %788 : vector<2x16xf32>
    %790 = math.tanh %789 : vector<2x16xf32>
    %cst_144 = arith.constant 1.000000e+00 : f32
    %791 = vector.broadcast %cst_144 : f32 to vector<2x16xf32>
    %792 = arith.subf %791, %785 : vector<2x16xf32>
    %793 = arith.mulf %792, %790 : vector<2x16xf32>
    %794 = arith.mulf %785, %735 : vector<2x16xf32>
    %795 = arith.addf %793, %794 : vector<2x16xf32>
    %796 = vector.extract_strided_slice %585 {offsets = [8, 0], sizes = [2, 48], strides = [1, 1]} : vector<16x48xf32> to vector<2x48xf32>
    %cst_145 = arith.constant dense<0.000000e+00> : vector<2x48xf32>
    %797 = tpu.matmul %765, %32, %cst_145 {dimension_numbers = #tpu.dot_dimension_numbers<[1], [0], [0], [1], [0, 0, 1, 1], [], []>} : vector<2x16xf32>, vector<16x48xf32>, vector<2x48xf32> -> vector<2x48xf32>
    %798 = vector.broadcast %16 : vector<1x48xf32> to vector<2x48xf32>
    %799 = arith.addf %797, %798 : vector<2x48xf32>
    %800 = vector.extract_strided_slice %796 {offsets = [0, 0], sizes = [2, 16], strides = [1, 1]} : vector<2x48xf32> to vector<2x16xf32>
    %801 = vector.extract_strided_slice %799 {offsets = [0, 0], sizes = [2, 16], strides = [1, 1]} : vector<2x48xf32> to vector<2x16xf32>
    %802 = arith.addf %800, %801 : vector<2x16xf32>
    %803 = arith.negf %802 : vector<2x16xf32>
    %804 = math.exp %803 : vector<2x16xf32>
    %cst_146 = arith.constant 1.000000e+00 : f32
    %805 = vector.broadcast %cst_146 : f32 to vector<2x16xf32>
    %806 = arith.addf %805, %804 : vector<2x16xf32>
    %807 = arith.divf %805, %806 : vector<2x16xf32>
    %808 = vector.extract_strided_slice %796 {offsets = [0, 16], sizes = [2, 16], strides = [1, 1]} : vector<2x48xf32> to vector<2x16xf32>
    %809 = vector.extract_strided_slice %799 {offsets = [0, 16], sizes = [2, 16], strides = [1, 1]} : vector<2x48xf32> to vector<2x16xf32>
    %810 = arith.addf %808, %809 : vector<2x16xf32>
    %811 = arith.negf %810 : vector<2x16xf32>
    %812 = math.exp %811 : vector<2x16xf32>
    %cst_147 = arith.constant 1.000000e+00 : f32
    %813 = vector.broadcast %cst_147 : f32 to vector<2x16xf32>
    %814 = arith.addf %813, %812 : vector<2x16xf32>
    %815 = arith.divf %813, %814 : vector<2x16xf32>
    %816 = vector.extract_strided_slice %796 {offsets = [0, 32], sizes = [2, 16], strides = [1, 1]} : vector<2x48xf32> to vector<2x16xf32>
    %817 = vector.extract_strided_slice %799 {offsets = [0, 32], sizes = [2, 16], strides = [1, 1]} : vector<2x48xf32> to vector<2x16xf32>
    %818 = arith.mulf %807, %817 : vector<2x16xf32>
    %819 = arith.addf %816, %818 : vector<2x16xf32>
    %820 = math.tanh %819 : vector<2x16xf32>
    %cst_148 = arith.constant 1.000000e+00 : f32
    %821 = vector.broadcast %cst_148 : f32 to vector<2x16xf32>
    %822 = arith.subf %821, %815 : vector<2x16xf32>
    %823 = arith.mulf %822, %820 : vector<2x16xf32>
    %824 = arith.mulf %815, %765 : vector<2x16xf32>
    %825 = arith.addf %823, %824 : vector<2x16xf32>
    %826 = vector.extract_strided_slice %582 {offsets = [8, 0], sizes = [2, 48], strides = [1, 1]} : vector<16x48xf32> to vector<2x48xf32>
    %cst_149 = arith.constant dense<0.000000e+00> : vector<2x48xf32>
    %827 = tpu.matmul %795, %30, %cst_149 {dimension_numbers = #tpu.dot_dimension_numbers<[1], [0], [0], [1], [0, 0, 1, 1], [], []>} : vector<2x16xf32>, vector<16x48xf32>, vector<2x48xf32> -> vector<2x48xf32>
    %828 = vector.broadcast %15 : vector<1x48xf32> to vector<2x48xf32>
    %829 = arith.addf %827, %828 : vector<2x48xf32>
    %830 = vector.extract_strided_slice %826 {offsets = [0, 0], sizes = [2, 16], strides = [1, 1]} : vector<2x48xf32> to vector<2x16xf32>
    %831 = vector.extract_strided_slice %829 {offsets = [0, 0], sizes = [2, 16], strides = [1, 1]} : vector<2x48xf32> to vector<2x16xf32>
    %832 = arith.addf %830, %831 : vector<2x16xf32>
    %833 = arith.negf %832 : vector<2x16xf32>
    %834 = math.exp %833 : vector<2x16xf32>
    %cst_150 = arith.constant 1.000000e+00 : f32
    %835 = vector.broadcast %cst_150 : f32 to vector<2x16xf32>
    %836 = arith.addf %835, %834 : vector<2x16xf32>
    %837 = arith.divf %835, %836 : vector<2x16xf32>
    %838 = vector.extract_strided_slice %826 {offsets = [0, 16], sizes = [2, 16], strides = [1, 1]} : vector<2x48xf32> to vector<2x16xf32>
    %839 = vector.extract_strided_slice %829 {offsets = [0, 16], sizes = [2, 16], strides = [1, 1]} : vector<2x48xf32> to vector<2x16xf32>
    %840 = arith.addf %838, %839 : vector<2x16xf32>
    %841 = arith.negf %840 : vector<2x16xf32>
    %842 = math.exp %841 : vector<2x16xf32>
    %cst_151 = arith.constant 1.000000e+00 : f32
    %843 = vector.broadcast %cst_151 : f32 to vector<2x16xf32>
    %844 = arith.addf %843, %842 : vector<2x16xf32>
    %845 = arith.divf %843, %844 : vector<2x16xf32>
    %846 = vector.extract_strided_slice %826 {offsets = [0, 32], sizes = [2, 16], strides = [1, 1]} : vector<2x48xf32> to vector<2x16xf32>
    %847 = vector.extract_strided_slice %829 {offsets = [0, 32], sizes = [2, 16], strides = [1, 1]} : vector<2x48xf32> to vector<2x16xf32>
    %848 = arith.mulf %837, %847 : vector<2x16xf32>
    %849 = arith.addf %846, %848 : vector<2x16xf32>
    %850 = math.tanh %849 : vector<2x16xf32>
    %cst_152 = arith.constant 1.000000e+00 : f32
    %851 = vector.broadcast %cst_152 : f32 to vector<2x16xf32>
    %852 = arith.subf %851, %845 : vector<2x16xf32>
    %853 = arith.mulf %852, %850 : vector<2x16xf32>
    %854 = arith.mulf %845, %795 : vector<2x16xf32>
    %855 = arith.addf %853, %854 : vector<2x16xf32>
    %856 = vector.extract_strided_slice %585 {offsets = [6, 0], sizes = [2, 48], strides = [1, 1]} : vector<16x48xf32> to vector<2x48xf32>
    %cst_153 = arith.constant dense<0.000000e+00> : vector<2x48xf32>
    %857 = tpu.matmul %825, %32, %cst_153 {dimension_numbers = #tpu.dot_dimension_numbers<[1], [0], [0], [1], [0, 0, 1, 1], [], []>} : vector<2x16xf32>, vector<16x48xf32>, vector<2x48xf32> -> vector<2x48xf32>
    %858 = vector.broadcast %16 : vector<1x48xf32> to vector<2x48xf32>
    %859 = arith.addf %857, %858 : vector<2x48xf32>
    %860 = vector.extract_strided_slice %856 {offsets = [0, 0], sizes = [2, 16], strides = [1, 1]} : vector<2x48xf32> to vector<2x16xf32>
    %861 = vector.extract_strided_slice %859 {offsets = [0, 0], sizes = [2, 16], strides = [1, 1]} : vector<2x48xf32> to vector<2x16xf32>
    %862 = arith.addf %860, %861 : vector<2x16xf32>
    %863 = arith.negf %862 : vector<2x16xf32>
    %864 = math.exp %863 : vector<2x16xf32>
    %cst_154 = arith.constant 1.000000e+00 : f32
    %865 = vector.broadcast %cst_154 : f32 to vector<2x16xf32>
    %866 = arith.addf %865, %864 : vector<2x16xf32>
    %867 = arith.divf %865, %866 : vector<2x16xf32>
    %868 = vector.extract_strided_slice %856 {offsets = [0, 16], sizes = [2, 16], strides = [1, 1]} : vector<2x48xf32> to vector<2x16xf32>
    %869 = vector.extract_strided_slice %859 {offsets = [0, 16], sizes = [2, 16], strides = [1, 1]} : vector<2x48xf32> to vector<2x16xf32>
    %870 = arith.addf %868, %869 : vector<2x16xf32>
    %871 = arith.negf %870 : vector<2x16xf32>
    %872 = math.exp %871 : vector<2x16xf32>
    %cst_155 = arith.constant 1.000000e+00 : f32
    %873 = vector.broadcast %cst_155 : f32 to vector<2x16xf32>
    %874 = arith.addf %873, %872 : vector<2x16xf32>
    %875 = arith.divf %873, %874 : vector<2x16xf32>
    %876 = vector.extract_strided_slice %856 {offsets = [0, 32], sizes = [2, 16], strides = [1, 1]} : vector<2x48xf32> to vector<2x16xf32>
    %877 = vector.extract_strided_slice %859 {offsets = [0, 32], sizes = [2, 16], strides = [1, 1]} : vector<2x48xf32> to vector<2x16xf32>
    %878 = arith.mulf %867, %877 : vector<2x16xf32>
    %879 = arith.addf %876, %878 : vector<2x16xf32>
    %880 = math.tanh %879 : vector<2x16xf32>
    %cst_156 = arith.constant 1.000000e+00 : f32
    %881 = vector.broadcast %cst_156 : f32 to vector<2x16xf32>
    %882 = arith.subf %881, %875 : vector<2x16xf32>
    %883 = arith.mulf %882, %880 : vector<2x16xf32>
    %884 = arith.mulf %875, %825 : vector<2x16xf32>
    %885 = arith.addf %883, %884 : vector<2x16xf32>
    %886 = vector.extract_strided_slice %582 {offsets = [10, 0], sizes = [2, 48], strides = [1, 1]} : vector<16x48xf32> to vector<2x48xf32>
    %cst_157 = arith.constant dense<0.000000e+00> : vector<2x48xf32>
    %887 = tpu.matmul %855, %30, %cst_157 {dimension_numbers = #tpu.dot_dimension_numbers<[1], [0], [0], [1], [0, 0, 1, 1], [], []>} : vector<2x16xf32>, vector<16x48xf32>, vector<2x48xf32> -> vector<2x48xf32>
    %888 = vector.broadcast %15 : vector<1x48xf32> to vector<2x48xf32>
    %889 = arith.addf %887, %888 : vector<2x48xf32>
    %890 = vector.extract_strided_slice %886 {offsets = [0, 0], sizes = [2, 16], strides = [1, 1]} : vector<2x48xf32> to vector<2x16xf32>
    %891 = vector.extract_strided_slice %889 {offsets = [0, 0], sizes = [2, 16], strides = [1, 1]} : vector<2x48xf32> to vector<2x16xf32>
    %892 = arith.addf %890, %891 : vector<2x16xf32>
    %893 = arith.negf %892 : vector<2x16xf32>
    %894 = math.exp %893 : vector<2x16xf32>
    %cst_158 = arith.constant 1.000000e+00 : f32
    %895 = vector.broadcast %cst_158 : f32 to vector<2x16xf32>
    %896 = arith.addf %895, %894 : vector<2x16xf32>
    %897 = arith.divf %895, %896 : vector<2x16xf32>
    %898 = vector.extract_strided_slice %886 {offsets = [0, 16], sizes = [2, 16], strides = [1, 1]} : vector<2x48xf32> to vector<2x16xf32>
    %899 = vector.extract_strided_slice %889 {offsets = [0, 16], sizes = [2, 16], strides = [1, 1]} : vector<2x48xf32> to vector<2x16xf32>
    %900 = arith.addf %898, %899 : vector<2x16xf32>
    %901 = arith.negf %900 : vector<2x16xf32>
    %902 = math.exp %901 : vector<2x16xf32>
    %cst_159 = arith.constant 1.000000e+00 : f32
    %903 = vector.broadcast %cst_159 : f32 to vector<2x16xf32>
    %904 = arith.addf %903, %902 : vector<2x16xf32>
    %905 = arith.divf %903, %904 : vector<2x16xf32>
    %906 = vector.extract_strided_slice %886 {offsets = [0, 32], sizes = [2, 16], strides = [1, 1]} : vector<2x48xf32> to vector<2x16xf32>
    %907 = vector.extract_strided_slice %889 {offsets = [0, 32], sizes = [2, 16], strides = [1, 1]} : vector<2x48xf32> to vector<2x16xf32>
    %908 = arith.mulf %897, %907 : vector<2x16xf32>
    %909 = arith.addf %906, %908 : vector<2x16xf32>
    %910 = math.tanh %909 : vector<2x16xf32>
    %cst_160 = arith.constant 1.000000e+00 : f32
    %911 = vector.broadcast %cst_160 : f32 to vector<2x16xf32>
    %912 = arith.subf %911, %905 : vector<2x16xf32>
    %913 = arith.mulf %912, %910 : vector<2x16xf32>
    %914 = arith.mulf %905, %855 : vector<2x16xf32>
    %915 = arith.addf %913, %914 : vector<2x16xf32>
    %916 = vector.extract_strided_slice %585 {offsets = [4, 0], sizes = [2, 48], strides = [1, 1]} : vector<16x48xf32> to vector<2x48xf32>
    %cst_161 = arith.constant dense<0.000000e+00> : vector<2x48xf32>
    %917 = tpu.matmul %885, %32, %cst_161 {dimension_numbers = #tpu.dot_dimension_numbers<[1], [0], [0], [1], [0, 0, 1, 1], [], []>} : vector<2x16xf32>, vector<16x48xf32>, vector<2x48xf32> -> vector<2x48xf32>
    %918 = vector.broadcast %16 : vector<1x48xf32> to vector<2x48xf32>
    %919 = arith.addf %917, %918 : vector<2x48xf32>
    %920 = vector.extract_strided_slice %916 {offsets = [0, 0], sizes = [2, 16], strides = [1, 1]} : vector<2x48xf32> to vector<2x16xf32>
    %921 = vector.extract_strided_slice %919 {offsets = [0, 0], sizes = [2, 16], strides = [1, 1]} : vector<2x48xf32> to vector<2x16xf32>
    %922 = arith.addf %920, %921 : vector<2x16xf32>
    %923 = arith.negf %922 : vector<2x16xf32>
    %924 = math.exp %923 : vector<2x16xf32>
    %cst_162 = arith.constant 1.000000e+00 : f32
    %925 = vector.broadcast %cst_162 : f32 to vector<2x16xf32>
    %926 = arith.addf %925, %924 : vector<2x16xf32>
    %927 = arith.divf %925, %926 : vector<2x16xf32>
    %928 = vector.extract_strided_slice %916 {offsets = [0, 16], sizes = [2, 16], strides = [1, 1]} : vector<2x48xf32> to vector<2x16xf32>
    %929 = vector.extract_strided_slice %919 {offsets = [0, 16], sizes = [2, 16], strides = [1, 1]} : vector<2x48xf32> to vector<2x16xf32>
    %930 = arith.addf %928, %929 : vector<2x16xf32>
    %931 = arith.negf %930 : vector<2x16xf32>
    %932 = math.exp %931 : vector<2x16xf32>
    %cst_163 = arith.constant 1.000000e+00 : f32
    %933 = vector.broadcast %cst_163 : f32 to vector<2x16xf32>
    %934 = arith.addf %933, %932 : vector<2x16xf32>
    %935 = arith.divf %933, %934 : vector<2x16xf32>
    %936 = vector.extract_strided_slice %916 {offsets = [0, 32], sizes = [2, 16], strides = [1, 1]} : vector<2x48xf32> to vector<2x16xf32>
    %937 = vector.extract_strided_slice %919 {offsets = [0, 32], sizes = [2, 16], strides = [1, 1]} : vector<2x48xf32> to vector<2x16xf32>
    %938 = arith.mulf %927, %937 : vector<2x16xf32>
    %939 = arith.addf %936, %938 : vector<2x16xf32>
    %940 = math.tanh %939 : vector<2x16xf32>
    %cst_164 = arith.constant 1.000000e+00 : f32
    %941 = vector.broadcast %cst_164 : f32 to vector<2x16xf32>
    %942 = arith.subf %941, %935 : vector<2x16xf32>
    %943 = arith.mulf %942, %940 : vector<2x16xf32>
    %944 = arith.mulf %935, %885 : vector<2x16xf32>
    %945 = arith.addf %943, %944 : vector<2x16xf32>
    %946 = vector.extract_strided_slice %582 {offsets = [12, 0], sizes = [2, 48], strides = [1, 1]} : vector<16x48xf32> to vector<2x48xf32>
    %cst_165 = arith.constant dense<0.000000e+00> : vector<2x48xf32>
    %947 = tpu.matmul %915, %30, %cst_165 {dimension_numbers = #tpu.dot_dimension_numbers<[1], [0], [0], [1], [0, 0, 1, 1], [], []>} : vector<2x16xf32>, vector<16x48xf32>, vector<2x48xf32> -> vector<2x48xf32>
    %948 = vector.broadcast %15 : vector<1x48xf32> to vector<2x48xf32>
    %949 = arith.addf %947, %948 : vector<2x48xf32>
    %950 = vector.extract_strided_slice %946 {offsets = [0, 0], sizes = [2, 16], strides = [1, 1]} : vector<2x48xf32> to vector<2x16xf32>
    %951 = vector.extract_strided_slice %949 {offsets = [0, 0], sizes = [2, 16], strides = [1, 1]} : vector<2x48xf32> to vector<2x16xf32>
    %952 = arith.addf %950, %951 : vector<2x16xf32>
    %953 = arith.negf %952 : vector<2x16xf32>
    %954 = math.exp %953 : vector<2x16xf32>
    %cst_166 = arith.constant 1.000000e+00 : f32
    %955 = vector.broadcast %cst_166 : f32 to vector<2x16xf32>
    %956 = arith.addf %955, %954 : vector<2x16xf32>
    %957 = arith.divf %955, %956 : vector<2x16xf32>
    %958 = vector.extract_strided_slice %946 {offsets = [0, 16], sizes = [2, 16], strides = [1, 1]} : vector<2x48xf32> to vector<2x16xf32>
    %959 = vector.extract_strided_slice %949 {offsets = [0, 16], sizes = [2, 16], strides = [1, 1]} : vector<2x48xf32> to vector<2x16xf32>
    %960 = arith.addf %958, %959 : vector<2x16xf32>
    %961 = arith.negf %960 : vector<2x16xf32>
    %962 = math.exp %961 : vector<2x16xf32>
    %cst_167 = arith.constant 1.000000e+00 : f32
    %963 = vector.broadcast %cst_167 : f32 to vector<2x16xf32>
    %964 = arith.addf %963, %962 : vector<2x16xf32>
    %965 = arith.divf %963, %964 : vector<2x16xf32>
    %966 = vector.extract_strided_slice %946 {offsets = [0, 32], sizes = [2, 16], strides = [1, 1]} : vector<2x48xf32> to vector<2x16xf32>
    %967 = vector.extract_strided_slice %949 {offsets = [0, 32], sizes = [2, 16], strides = [1, 1]} : vector<2x48xf32> to vector<2x16xf32>
    %968 = arith.mulf %957, %967 : vector<2x16xf32>
    %969 = arith.addf %966, %968 : vector<2x16xf32>
    %970 = math.tanh %969 : vector<2x16xf32>
    %cst_168 = arith.constant 1.000000e+00 : f32
    %971 = vector.broadcast %cst_168 : f32 to vector<2x16xf32>
    %972 = arith.subf %971, %965 : vector<2x16xf32>
    %973 = arith.mulf %972, %970 : vector<2x16xf32>
    %974 = arith.mulf %965, %915 : vector<2x16xf32>
    %975 = arith.addf %973, %974 : vector<2x16xf32>
    %976 = vector.extract_strided_slice %585 {offsets = [2, 0], sizes = [2, 48], strides = [1, 1]} : vector<16x48xf32> to vector<2x48xf32>
    %cst_169 = arith.constant dense<0.000000e+00> : vector<2x48xf32>
    %977 = tpu.matmul %945, %32, %cst_169 {dimension_numbers = #tpu.dot_dimension_numbers<[1], [0], [0], [1], [0, 0, 1, 1], [], []>} : vector<2x16xf32>, vector<16x48xf32>, vector<2x48xf32> -> vector<2x48xf32>
    %978 = vector.broadcast %16 : vector<1x48xf32> to vector<2x48xf32>
    %979 = arith.addf %977, %978 : vector<2x48xf32>
    %980 = vector.extract_strided_slice %976 {offsets = [0, 0], sizes = [2, 16], strides = [1, 1]} : vector<2x48xf32> to vector<2x16xf32>
    %981 = vector.extract_strided_slice %979 {offsets = [0, 0], sizes = [2, 16], strides = [1, 1]} : vector<2x48xf32> to vector<2x16xf32>
    %982 = arith.addf %980, %981 : vector<2x16xf32>
    %983 = arith.negf %982 : vector<2x16xf32>
    %984 = math.exp %983 : vector<2x16xf32>
    %cst_170 = arith.constant 1.000000e+00 : f32
    %985 = vector.broadcast %cst_170 : f32 to vector<2x16xf32>
    %986 = arith.addf %985, %984 : vector<2x16xf32>
    %987 = arith.divf %985, %986 : vector<2x16xf32>
    %988 = vector.extract_strided_slice %976 {offsets = [0, 16], sizes = [2, 16], strides = [1, 1]} : vector<2x48xf32> to vector<2x16xf32>
    %989 = vector.extract_strided_slice %979 {offsets = [0, 16], sizes = [2, 16], strides = [1, 1]} : vector<2x48xf32> to vector<2x16xf32>
    %990 = arith.addf %988, %989 : vector<2x16xf32>
    %991 = arith.negf %990 : vector<2x16xf32>
    %992 = math.exp %991 : vector<2x16xf32>
    %cst_171 = arith.constant 1.000000e+00 : f32
    %993 = vector.broadcast %cst_171 : f32 to vector<2x16xf32>
    %994 = arith.addf %993, %992 : vector<2x16xf32>
    %995 = arith.divf %993, %994 : vector<2x16xf32>
    %996 = vector.extract_strided_slice %976 {offsets = [0, 32], sizes = [2, 16], strides = [1, 1]} : vector<2x48xf32> to vector<2x16xf32>
    %997 = vector.extract_strided_slice %979 {offsets = [0, 32], sizes = [2, 16], strides = [1, 1]} : vector<2x48xf32> to vector<2x16xf32>
    %998 = arith.mulf %987, %997 : vector<2x16xf32>
    %999 = arith.addf %996, %998 : vector<2x16xf32>
    %1000 = math.tanh %999 : vector<2x16xf32>
    %cst_172 = arith.constant 1.000000e+00 : f32
    %1001 = vector.broadcast %cst_172 : f32 to vector<2x16xf32>
    %1002 = arith.subf %1001, %995 : vector<2x16xf32>
    %1003 = arith.mulf %1002, %1000 : vector<2x16xf32>
    %1004 = arith.mulf %995, %945 : vector<2x16xf32>
    %1005 = arith.addf %1003, %1004 : vector<2x16xf32>
    %1006 = vector.extract_strided_slice %582 {offsets = [14, 0], sizes = [2, 48], strides = [1, 1]} : vector<16x48xf32> to vector<2x48xf32>
    %cst_173 = arith.constant dense<0.000000e+00> : vector<2x48xf32>
    %1007 = tpu.matmul %975, %30, %cst_173 {dimension_numbers = #tpu.dot_dimension_numbers<[1], [0], [0], [1], [0, 0, 1, 1], [], []>} : vector<2x16xf32>, vector<16x48xf32>, vector<2x48xf32> -> vector<2x48xf32>
    %1008 = vector.broadcast %15 : vector<1x48xf32> to vector<2x48xf32>
    %1009 = arith.addf %1007, %1008 : vector<2x48xf32>
    %1010 = vector.extract_strided_slice %1006 {offsets = [0, 0], sizes = [2, 16], strides = [1, 1]} : vector<2x48xf32> to vector<2x16xf32>
    %1011 = vector.extract_strided_slice %1009 {offsets = [0, 0], sizes = [2, 16], strides = [1, 1]} : vector<2x48xf32> to vector<2x16xf32>
    %1012 = arith.addf %1010, %1011 : vector<2x16xf32>
    %1013 = arith.negf %1012 : vector<2x16xf32>
    %1014 = math.exp %1013 : vector<2x16xf32>
    %cst_174 = arith.constant 1.000000e+00 : f32
    %1015 = vector.broadcast %cst_174 : f32 to vector<2x16xf32>
    %1016 = arith.addf %1015, %1014 : vector<2x16xf32>
    %1017 = arith.divf %1015, %1016 : vector<2x16xf32>
    %1018 = vector.extract_strided_slice %1006 {offsets = [0, 16], sizes = [2, 16], strides = [1, 1]} : vector<2x48xf32> to vector<2x16xf32>
    %1019 = vector.extract_strided_slice %1009 {offsets = [0, 16], sizes = [2, 16], strides = [1, 1]} : vector<2x48xf32> to vector<2x16xf32>
    %1020 = arith.addf %1018, %1019 : vector<2x16xf32>
    %1021 = arith.negf %1020 : vector<2x16xf32>
    %1022 = math.exp %1021 : vector<2x16xf32>
    %cst_175 = arith.constant 1.000000e+00 : f32
    %1023 = vector.broadcast %cst_175 : f32 to vector<2x16xf32>
    %1024 = arith.addf %1023, %1022 : vector<2x16xf32>
    %1025 = arith.divf %1023, %1024 : vector<2x16xf32>
    %1026 = vector.extract_strided_slice %1006 {offsets = [0, 32], sizes = [2, 16], strides = [1, 1]} : vector<2x48xf32> to vector<2x16xf32>
    %1027 = vector.extract_strided_slice %1009 {offsets = [0, 32], sizes = [2, 16], strides = [1, 1]} : vector<2x48xf32> to vector<2x16xf32>
    %1028 = arith.mulf %1017, %1027 : vector<2x16xf32>
    %1029 = arith.addf %1026, %1028 : vector<2x16xf32>
    %1030 = math.tanh %1029 : vector<2x16xf32>
    %cst_176 = arith.constant 1.000000e+00 : f32
    %1031 = vector.broadcast %cst_176 : f32 to vector<2x16xf32>
    %1032 = arith.subf %1031, %1025 : vector<2x16xf32>
    %1033 = arith.mulf %1032, %1030 : vector<2x16xf32>
    %1034 = arith.mulf %1025, %975 : vector<2x16xf32>
    %1035 = arith.addf %1033, %1034 : vector<2x16xf32>
    %1036 = vector.extract_strided_slice %585 {offsets = [0, 0], sizes = [2, 48], strides = [1, 1]} : vector<16x48xf32> to vector<2x48xf32>
    %cst_177 = arith.constant dense<0.000000e+00> : vector<2x48xf32>
    %1037 = tpu.matmul %1005, %32, %cst_177 {dimension_numbers = #tpu.dot_dimension_numbers<[1], [0], [0], [1], [0, 0, 1, 1], [], []>} : vector<2x16xf32>, vector<16x48xf32>, vector<2x48xf32> -> vector<2x48xf32>
    %1038 = vector.broadcast %16 : vector<1x48xf32> to vector<2x48xf32>
    %1039 = arith.addf %1037, %1038 : vector<2x48xf32>
    %1040 = vector.extract_strided_slice %1036 {offsets = [0, 0], sizes = [2, 16], strides = [1, 1]} : vector<2x48xf32> to vector<2x16xf32>
    %1041 = vector.extract_strided_slice %1039 {offsets = [0, 0], sizes = [2, 16], strides = [1, 1]} : vector<2x48xf32> to vector<2x16xf32>
    %1042 = arith.addf %1040, %1041 : vector<2x16xf32>
    %1043 = arith.negf %1042 : vector<2x16xf32>
    %1044 = math.exp %1043 : vector<2x16xf32>
    %cst_178 = arith.constant 1.000000e+00 : f32
    %1045 = vector.broadcast %cst_178 : f32 to vector<2x16xf32>
    %1046 = arith.addf %1045, %1044 : vector<2x16xf32>
    %1047 = arith.divf %1045, %1046 : vector<2x16xf32>
    %1048 = vector.extract_strided_slice %1036 {offsets = [0, 16], sizes = [2, 16], strides = [1, 1]} : vector<2x48xf32> to vector<2x16xf32>
    %1049 = vector.extract_strided_slice %1039 {offsets = [0, 16], sizes = [2, 16], strides = [1, 1]} : vector<2x48xf32> to vector<2x16xf32>
    %1050 = arith.addf %1048, %1049 : vector<2x16xf32>
    %1051 = arith.negf %1050 : vector<2x16xf32>
    %1052 = math.exp %1051 : vector<2x16xf32>
    %cst_179 = arith.constant 1.000000e+00 : f32
    %1053 = vector.broadcast %cst_179 : f32 to vector<2x16xf32>
    %1054 = arith.addf %1053, %1052 : vector<2x16xf32>
    %1055 = arith.divf %1053, %1054 : vector<2x16xf32>
    %1056 = vector.extract_strided_slice %1036 {offsets = [0, 32], sizes = [2, 16], strides = [1, 1]} : vector<2x48xf32> to vector<2x16xf32>
    %1057 = vector.extract_strided_slice %1039 {offsets = [0, 32], sizes = [2, 16], strides = [1, 1]} : vector<2x48xf32> to vector<2x16xf32>
    %1058 = arith.mulf %1047, %1057 : vector<2x16xf32>
    %1059 = arith.addf %1056, %1058 : vector<2x16xf32>
    %1060 = math.tanh %1059 : vector<2x16xf32>
    %cst_180 = arith.constant 1.000000e+00 : f32
    %1061 = vector.broadcast %cst_180 : f32 to vector<2x16xf32>
    %1062 = arith.subf %1061, %1055 : vector<2x16xf32>
    %1063 = arith.mulf %1062, %1060 : vector<2x16xf32>
    %1064 = arith.mulf %1055, %1005 : vector<2x16xf32>
    %1065 = arith.addf %1063, %1064 : vector<2x16xf32>
    %1066 = tpu.concatenate %615, %1065 in 1 : vector<2x16xf32>, vector<2x16xf32> -> vector<2x32xf32>
    %1067 = tpu.concatenate %675, %1005 in 1 : vector<2x16xf32>, vector<2x16xf32> -> vector<2x32xf32>
    %1068 = tpu.concatenate %735, %945 in 1 : vector<2x16xf32>, vector<2x16xf32> -> vector<2x32xf32>
    %1069 = tpu.concatenate %795, %885 in 1 : vector<2x16xf32>, vector<2x16xf32> -> vector<2x32xf32>
    %1070 = tpu.concatenate %855, %825 in 1 : vector<2x16xf32>, vector<2x16xf32> -> vector<2x32xf32>
    %1071 = tpu.concatenate %915, %765 in 1 : vector<2x16xf32>, vector<2x16xf32> -> vector<2x32xf32>
    %1072 = tpu.concatenate %975, %705 in 1 : vector<2x16xf32>, vector<2x16xf32> -> vector<2x32xf32>
    %1073 = tpu.concatenate %1035, %645 in 1 : vector<2x16xf32>, vector<2x16xf32> -> vector<2x32xf32>
    %1074 = vector.extract_strided_slice %1066 {offsets = [0, 0], sizes = [1, 32], strides = [1, 1]} : vector<2x32xf32> to vector<1x32xf32>
    %1075 = vector.extract_strided_slice %1067 {offsets = [0, 0], sizes = [1, 32], strides = [1, 1]} : vector<2x32xf32> to vector<1x32xf32>
    %1076 = vector.extract_strided_slice %1068 {offsets = [0, 0], sizes = [1, 32], strides = [1, 1]} : vector<2x32xf32> to vector<1x32xf32>
    %1077 = vector.extract_strided_slice %1069 {offsets = [0, 0], sizes = [1, 32], strides = [1, 1]} : vector<2x32xf32> to vector<1x32xf32>
    %1078 = vector.extract_strided_slice %1070 {offsets = [0, 0], sizes = [1, 32], strides = [1, 1]} : vector<2x32xf32> to vector<1x32xf32>
    %1079 = vector.extract_strided_slice %1071 {offsets = [0, 0], sizes = [1, 32], strides = [1, 1]} : vector<2x32xf32> to vector<1x32xf32>
    %1080 = vector.extract_strided_slice %1072 {offsets = [0, 0], sizes = [1, 32], strides = [1, 1]} : vector<2x32xf32> to vector<1x32xf32>
    %1081 = vector.extract_strided_slice %1073 {offsets = [0, 0], sizes = [1, 32], strides = [1, 1]} : vector<2x32xf32> to vector<1x32xf32>
    %1082 = tpu.concatenate %1074, %1075, %1076, %1077, %1078, %1079, %1080, %1081 in 0 : vector<1x32xf32>, vector<1x32xf32>, vector<1x32xf32>, vector<1x32xf32>, vector<1x32xf32>, vector<1x32xf32>, vector<1x32xf32>, vector<1x32xf32> -> vector<8x32xf32>
    %1083 = vector.extract_strided_slice %1066 {offsets = [1, 0], sizes = [1, 32], strides = [1, 1]} : vector<2x32xf32> to vector<1x32xf32>
    %1084 = vector.extract_strided_slice %1067 {offsets = [1, 0], sizes = [1, 32], strides = [1, 1]} : vector<2x32xf32> to vector<1x32xf32>
    %1085 = vector.extract_strided_slice %1068 {offsets = [1, 0], sizes = [1, 32], strides = [1, 1]} : vector<2x32xf32> to vector<1x32xf32>
    %1086 = vector.extract_strided_slice %1069 {offsets = [1, 0], sizes = [1, 32], strides = [1, 1]} : vector<2x32xf32> to vector<1x32xf32>
    %1087 = vector.extract_strided_slice %1070 {offsets = [1, 0], sizes = [1, 32], strides = [1, 1]} : vector<2x32xf32> to vector<1x32xf32>
    %1088 = vector.extract_strided_slice %1071 {offsets = [1, 0], sizes = [1, 32], strides = [1, 1]} : vector<2x32xf32> to vector<1x32xf32>
    %1089 = vector.extract_strided_slice %1072 {offsets = [1, 0], sizes = [1, 32], strides = [1, 1]} : vector<2x32xf32> to vector<1x32xf32>
    %1090 = vector.extract_strided_slice %1073 {offsets = [1, 0], sizes = [1, 32], strides = [1, 1]} : vector<2x32xf32> to vector<1x32xf32>
    %1091 = tpu.concatenate %1083, %1084, %1085, %1086, %1087, %1088, %1089, %1090 in 0 : vector<1x32xf32>, vector<1x32xf32>, vector<1x32xf32>, vector<1x32xf32>, vector<1x32xf32>, vector<1x32xf32>, vector<1x32xf32>, vector<1x32xf32> -> vector<8x32xf32>
    %1092 = tpu.concatenate %1082, %1091 in 0 : vector<8x32xf32>, vector<8x32xf32> -> vector<16x32xf32>
    %1093 = tpu.iota {dimensions = array<i32: 0>} : vector<64x32xi32>
    %cst_181 = arith.constant 0.000000e+00 : f32
    %1094 = vector.broadcast %cst_181 : f32 to vector<64x32xf32>
    %c8_i32 = arith.constant 8 : i32
    %1095 = vector.broadcast %c8_i32 : i32 to vector<64x32xi32>
    %1096 = arith.cmpi sge, %1093, %1095 : vector<64x32xi32>
    %1097 = arith.extui %1096 : vector<64x32xi1> to vector<64x32xi32>
    %1098 = arith.sitofp %1097 : vector<64x32xi32> to vector<64x32xf32>
    %1099 = arith.addf %1094, %1098 : vector<64x32xf32>
    %c16_i32 = arith.constant 16 : i32
    %1100 = vector.broadcast %c16_i32 : i32 to vector<64x32xi32>
    %1101 = arith.cmpi sge, %1093, %1100 : vector<64x32xi32>
    %1102 = arith.extui %1101 : vector<64x32xi1> to vector<64x32xi32>
    %1103 = arith.sitofp %1102 : vector<64x32xi32> to vector<64x32xf32>
    %1104 = arith.addf %1099, %1103 : vector<64x32xf32>
    %c24_i32 = arith.constant 24 : i32
    %1105 = vector.broadcast %c24_i32 : i32 to vector<64x32xi32>
    %1106 = arith.cmpi sge, %1093, %1105 : vector<64x32xi32>
    %1107 = arith.extui %1106 : vector<64x32xi1> to vector<64x32xi32>
    %1108 = arith.sitofp %1107 : vector<64x32xi32> to vector<64x32xf32>
    %1109 = arith.addf %1104, %1108 : vector<64x32xf32>
    %c32_i32 = arith.constant 32 : i32
    %1110 = vector.broadcast %c32_i32 : i32 to vector<64x32xi32>
    %1111 = arith.cmpi sge, %1093, %1110 : vector<64x32xi32>
    %1112 = arith.extui %1111 : vector<64x32xi1> to vector<64x32xi32>
    %1113 = arith.sitofp %1112 : vector<64x32xi32> to vector<64x32xf32>
    %1114 = arith.addf %1109, %1113 : vector<64x32xf32>
    %c40_i32 = arith.constant 40 : i32
    %1115 = vector.broadcast %c40_i32 : i32 to vector<64x32xi32>
    %1116 = arith.cmpi sge, %1093, %1115 : vector<64x32xi32>
    %1117 = arith.extui %1116 : vector<64x32xi1> to vector<64x32xi32>
    %1118 = arith.sitofp %1117 : vector<64x32xi32> to vector<64x32xf32>
    %1119 = arith.addf %1114, %1118 : vector<64x32xf32>
    %c48_i32 = arith.constant 48 : i32
    %1120 = vector.broadcast %c48_i32 : i32 to vector<64x32xi32>
    %1121 = arith.cmpi sge, %1093, %1120 : vector<64x32xi32>
    %1122 = arith.extui %1121 : vector<64x32xi1> to vector<64x32xi32>
    %1123 = arith.sitofp %1122 : vector<64x32xi32> to vector<64x32xf32>
    %1124 = arith.addf %1119, %1123 : vector<64x32xf32>
    %c56_i32 = arith.constant 56 : i32
    %1125 = vector.broadcast %c56_i32 : i32 to vector<64x32xi32>
    %1126 = arith.cmpi sge, %1093, %1125 : vector<64x32xi32>
    %1127 = arith.extui %1126 : vector<64x32xi1> to vector<64x32xi32>
    %1128 = arith.sitofp %1127 : vector<64x32xi32> to vector<64x32xf32>
    %1129 = arith.addf %1124, %1128 : vector<64x32xf32>
    %1130 = tpu.iota {dimensions = array<i32: 1>} : vector<64x32xi32>
    %cst_182 = arith.constant 0.000000e+00 : f32
    %1131 = vector.broadcast %cst_182 : f32 to vector<64x32xf32>
    %c4_i32 = arith.constant 4 : i32
    %1132 = vector.broadcast %c4_i32 : i32 to vector<64x32xi32>
    %1133 = arith.cmpi sge, %1130, %1132 : vector<64x32xi32>
    %1134 = arith.extui %1133 : vector<64x32xi1> to vector<64x32xi32>
    %1135 = arith.sitofp %1134 : vector<64x32xi32> to vector<64x32xf32>
    %1136 = arith.addf %1131, %1135 : vector<64x32xf32>
    %c8_i32_183 = arith.constant 8 : i32
    %1137 = vector.broadcast %c8_i32_183 : i32 to vector<64x32xi32>
    %1138 = arith.cmpi sge, %1130, %1137 : vector<64x32xi32>
    %1139 = arith.extui %1138 : vector<64x32xi1> to vector<64x32xi32>
    %1140 = arith.sitofp %1139 : vector<64x32xi32> to vector<64x32xf32>
    %1141 = arith.addf %1136, %1140 : vector<64x32xf32>
    %c12_i32 = arith.constant 12 : i32
    %1142 = vector.broadcast %c12_i32 : i32 to vector<64x32xi32>
    %1143 = arith.cmpi sge, %1130, %1142 : vector<64x32xi32>
    %1144 = arith.extui %1143 : vector<64x32xi1> to vector<64x32xi32>
    %1145 = arith.sitofp %1144 : vector<64x32xi32> to vector<64x32xf32>
    %1146 = arith.addf %1141, %1145 : vector<64x32xf32>
    %c16_i32_184 = arith.constant 16 : i32
    %1147 = vector.broadcast %c16_i32_184 : i32 to vector<64x32xi32>
    %1148 = arith.cmpi sge, %1130, %1147 : vector<64x32xi32>
    %1149 = arith.extui %1148 : vector<64x32xi1> to vector<64x32xi32>
    %1150 = arith.sitofp %1149 : vector<64x32xi32> to vector<64x32xf32>
    %1151 = arith.addf %1146, %1150 : vector<64x32xf32>
    %c20_i32 = arith.constant 20 : i32
    %1152 = vector.broadcast %c20_i32 : i32 to vector<64x32xi32>
    %1153 = arith.cmpi sge, %1130, %1152 : vector<64x32xi32>
    %1154 = arith.extui %1153 : vector<64x32xi1> to vector<64x32xi32>
    %1155 = arith.sitofp %1154 : vector<64x32xi32> to vector<64x32xf32>
    %1156 = arith.addf %1151, %1155 : vector<64x32xf32>
    %c24_i32_185 = arith.constant 24 : i32
    %1157 = vector.broadcast %c24_i32_185 : i32 to vector<64x32xi32>
    %1158 = arith.cmpi sge, %1130, %1157 : vector<64x32xi32>
    %1159 = arith.extui %1158 : vector<64x32xi1> to vector<64x32xi32>
    %1160 = arith.sitofp %1159 : vector<64x32xi32> to vector<64x32xf32>
    %1161 = arith.addf %1156, %1160 : vector<64x32xf32>
    %c28_i32 = arith.constant 28 : i32
    %1162 = vector.broadcast %c28_i32 : i32 to vector<64x32xi32>
    %1163 = arith.cmpi sge, %1130, %1162 : vector<64x32xi32>
    %1164 = arith.extui %1163 : vector<64x32xi1> to vector<64x32xi32>
    %1165 = arith.sitofp %1164 : vector<64x32xi32> to vector<64x32xf32>
    %1166 = arith.addf %1161, %1165 : vector<64x32xf32>
    %1167 = arith.cmpf oeq, %1129, %1166 : vector<64x32xf32>
    %1168 = arith.extui %1167 : vector<64x32xi1> to vector<64x32xi32>
    %1169 = arith.sitofp %1168 : vector<64x32xi32> to vector<64x32xf32>
    %1170 = tpu.iota {dimensions = array<i32: 0>} : vector<64x8xi32>
    %cst_186 = arith.constant 0.000000e+00 : f32
    %1171 = vector.broadcast %cst_186 : f32 to vector<64x8xf32>
    %c8_i32_187 = arith.constant 8 : i32
    %1172 = vector.broadcast %c8_i32_187 : i32 to vector<64x8xi32>
    %1173 = arith.cmpi sge, %1170, %1172 : vector<64x8xi32>
    %1174 = arith.extui %1173 : vector<64x8xi1> to vector<64x8xi32>
    %1175 = arith.sitofp %1174 : vector<64x8xi32> to vector<64x8xf32>
    %1176 = arith.addf %1171, %1175 : vector<64x8xf32>
    %c16_i32_188 = arith.constant 16 : i32
    %1177 = vector.broadcast %c16_i32_188 : i32 to vector<64x8xi32>
    %1178 = arith.cmpi sge, %1170, %1177 : vector<64x8xi32>
    %1179 = arith.extui %1178 : vector<64x8xi1> to vector<64x8xi32>
    %1180 = arith.sitofp %1179 : vector<64x8xi32> to vector<64x8xf32>
    %1181 = arith.addf %1176, %1180 : vector<64x8xf32>
    %c24_i32_189 = arith.constant 24 : i32
    %1182 = vector.broadcast %c24_i32_189 : i32 to vector<64x8xi32>
    %1183 = arith.cmpi sge, %1170, %1182 : vector<64x8xi32>
    %1184 = arith.extui %1183 : vector<64x8xi1> to vector<64x8xi32>
    %1185 = arith.sitofp %1184 : vector<64x8xi32> to vector<64x8xf32>
    %1186 = arith.addf %1181, %1185 : vector<64x8xf32>
    %c32_i32_190 = arith.constant 32 : i32
    %1187 = vector.broadcast %c32_i32_190 : i32 to vector<64x8xi32>
    %1188 = arith.cmpi sge, %1170, %1187 : vector<64x8xi32>
    %1189 = arith.extui %1188 : vector<64x8xi1> to vector<64x8xi32>
    %1190 = arith.sitofp %1189 : vector<64x8xi32> to vector<64x8xf32>
    %1191 = arith.addf %1186, %1190 : vector<64x8xf32>
    %c40_i32_191 = arith.constant 40 : i32
    %1192 = vector.broadcast %c40_i32_191 : i32 to vector<64x8xi32>
    %1193 = arith.cmpi sge, %1170, %1192 : vector<64x8xi32>
    %1194 = arith.extui %1193 : vector<64x8xi1> to vector<64x8xi32>
    %1195 = arith.sitofp %1194 : vector<64x8xi32> to vector<64x8xf32>
    %1196 = arith.addf %1191, %1195 : vector<64x8xf32>
    %c48_i32_192 = arith.constant 48 : i32
    %1197 = vector.broadcast %c48_i32_192 : i32 to vector<64x8xi32>
    %1198 = arith.cmpi sge, %1170, %1197 : vector<64x8xi32>
    %1199 = arith.extui %1198 : vector<64x8xi1> to vector<64x8xi32>
    %1200 = arith.sitofp %1199 : vector<64x8xi32> to vector<64x8xf32>
    %1201 = arith.addf %1196, %1200 : vector<64x8xf32>
    %c56_i32_193 = arith.constant 56 : i32
    %1202 = vector.broadcast %c56_i32_193 : i32 to vector<64x8xi32>
    %1203 = arith.cmpi sge, %1170, %1202 : vector<64x8xi32>
    %1204 = arith.extui %1203 : vector<64x8xi1> to vector<64x8xi32>
    %1205 = arith.sitofp %1204 : vector<64x8xi32> to vector<64x8xf32>
    %1206 = arith.addf %1201, %1205 : vector<64x8xf32>
    %1207 = tpu.iota {dimensions = array<i32: 1>} : vector<64x8xi32>
    %1208 = arith.sitofp %1207 : vector<64x8xi32> to vector<64x8xf32>
    %1209 = arith.cmpf oeq, %1206, %1208 : vector<64x8xf32>
    %1210 = arith.extui %1209 : vector<64x8xi1> to vector<64x8xi32>
    %1211 = arith.sitofp %1210 : vector<64x8xi32> to vector<64x8xf32>
    %c0_194 = arith.constant 0 : index
    %c0_195 = arith.constant 0 : index
    %1212 = vector.load %arg6[%c0_194, %c0_195] : memref<32x96xf32, #tpu.memory_space<vmem>>, vector<32x96xf32>
    %cst_196 = arith.constant dense<0.000000e+00> : vector<16x96xf32>
    %1213 = tpu.matmul %1092, %1212, %cst_196 {dimension_numbers = #tpu.dot_dimension_numbers<[1], [0], [0], [1], [0, 0, 1, 1], [], []>} : vector<16x32xf32>, vector<32x96xf32>, vector<16x96xf32> -> vector<16x96xf32>
    %c0_197 = arith.constant 0 : index
    %c0_198 = arith.constant 0 : index
    %1214 = vector.load %arg7[%c0_197, %c0_198] : memref<1x96xf32, #tpu.memory_space<vmem>>, vector<1x96xf32>
    %1215 = vector.broadcast %1214 : vector<1x96xf32> to vector<16x96xf32>
    %1216 = arith.addf %1213, %1215 : vector<16x96xf32>
    %1217 = vector.extract_strided_slice %1216 {offsets = [0, 0], sizes = [8, 32], strides = [1, 1]} : vector<16x96xf32> to vector<8x32xf32>
    %cst_199 = arith.constant 5.000000e-01 : f32
    %1218 = vector.broadcast %cst_199 : f32 to vector<8x32xf32>
    %1219 = arith.mulf %1217, %1218 : vector<8x32xf32>
    %1220 = vector.extract_strided_slice %1216 {offsets = [0, 32], sizes = [8, 32], strides = [1, 1]} : vector<16x96xf32> to vector<8x32xf32>
    %1221 = vector.extract_strided_slice %1216 {offsets = [0, 64], sizes = [8, 32], strides = [1, 1]} : vector<16x96xf32> to vector<8x32xf32>
    %1222 = tpu.concatenate %1220, %1220, %1220, %1220, %1220, %1220, %1220, %1220 in 0 : vector<8x32xf32>, vector<8x32xf32>, vector<8x32xf32>, vector<8x32xf32>, vector<8x32xf32>, vector<8x32xf32>, vector<8x32xf32>, vector<8x32xf32> -> vector<64x32xf32>
    %1223 = arith.mulf %1222, %1169 : vector<64x32xf32>
    %1224 = tpu.concatenate %1221, %1221, %1221, %1221, %1221, %1221, %1221, %1221 in 0 : vector<8x32xf32>, vector<8x32xf32>, vector<8x32xf32>, vector<8x32xf32>, vector<8x32xf32>, vector<8x32xf32>, vector<8x32xf32>, vector<8x32xf32> -> vector<64x32xf32>
    %1225 = arith.mulf %1224, %1169 : vector<64x32xf32>
    %cst_200 = arith.constant dense<0.000000e+00> : vector<8x64xf32>
    %1226 = tpu.matmul %1219, %1223, %cst_200 {dimension_numbers = #tpu.dot_dimension_numbers<[1], [1], [0], [0], [0, 0, 1, 0], [], []>} : vector<8x32xf32>, vector<64x32xf32>, vector<8x64xf32> -> vector<8x64xf32>
    %1227 = vector.extract_strided_slice %1226 {offsets = [0, 0], sizes = [8, 8], strides = [1, 1]} : vector<8x64xf32> to vector<8x8xf32>
    %cst_201 = arith.constant dense<0xFF800000> : vector<8xf32>
    %1228 = vector.multi_reduction <maximumf>, %1227, %cst_201 [1] : vector<8x8xf32> to vector<8xf32>
    %1229 = vector.shape_cast %1228 : vector<8xf32> to vector<8x1xf32>
    %1230 = vector.extract_strided_slice %1226 {offsets = [0, 8], sizes = [8, 8], strides = [1, 1]} : vector<8x64xf32> to vector<8x8xf32>
    %cst_202 = arith.constant dense<0xFF800000> : vector<8xf32>
    %1231 = vector.multi_reduction <maximumf>, %1230, %cst_202 [1] : vector<8x8xf32> to vector<8xf32>
    %1232 = vector.shape_cast %1231 : vector<8xf32> to vector<8x1xf32>
    %1233 = vector.extract_strided_slice %1226 {offsets = [0, 16], sizes = [8, 8], strides = [1, 1]} : vector<8x64xf32> to vector<8x8xf32>
    %cst_203 = arith.constant dense<0xFF800000> : vector<8xf32>
    %1234 = vector.multi_reduction <maximumf>, %1233, %cst_203 [1] : vector<8x8xf32> to vector<8xf32>
    %1235 = vector.shape_cast %1234 : vector<8xf32> to vector<8x1xf32>
    %1236 = vector.extract_strided_slice %1226 {offsets = [0, 24], sizes = [8, 8], strides = [1, 1]} : vector<8x64xf32> to vector<8x8xf32>
    %cst_204 = arith.constant dense<0xFF800000> : vector<8xf32>
    %1237 = vector.multi_reduction <maximumf>, %1236, %cst_204 [1] : vector<8x8xf32> to vector<8xf32>
    %1238 = vector.shape_cast %1237 : vector<8xf32> to vector<8x1xf32>
    %1239 = vector.extract_strided_slice %1226 {offsets = [0, 32], sizes = [8, 8], strides = [1, 1]} : vector<8x64xf32> to vector<8x8xf32>
    %cst_205 = arith.constant dense<0xFF800000> : vector<8xf32>
    %1240 = vector.multi_reduction <maximumf>, %1239, %cst_205 [1] : vector<8x8xf32> to vector<8xf32>
    %1241 = vector.shape_cast %1240 : vector<8xf32> to vector<8x1xf32>
    %1242 = vector.extract_strided_slice %1226 {offsets = [0, 40], sizes = [8, 8], strides = [1, 1]} : vector<8x64xf32> to vector<8x8xf32>
    %cst_206 = arith.constant dense<0xFF800000> : vector<8xf32>
    %1243 = vector.multi_reduction <maximumf>, %1242, %cst_206 [1] : vector<8x8xf32> to vector<8xf32>
    %1244 = vector.shape_cast %1243 : vector<8xf32> to vector<8x1xf32>
    %1245 = vector.extract_strided_slice %1226 {offsets = [0, 48], sizes = [8, 8], strides = [1, 1]} : vector<8x64xf32> to vector<8x8xf32>
    %cst_207 = arith.constant dense<0xFF800000> : vector<8xf32>
    %1246 = vector.multi_reduction <maximumf>, %1245, %cst_207 [1] : vector<8x8xf32> to vector<8xf32>
    %1247 = vector.shape_cast %1246 : vector<8xf32> to vector<8x1xf32>
    %1248 = vector.extract_strided_slice %1226 {offsets = [0, 56], sizes = [8, 8], strides = [1, 1]} : vector<8x64xf32> to vector<8x8xf32>
    %cst_208 = arith.constant dense<0xFF800000> : vector<8xf32>
    %1249 = vector.multi_reduction <maximumf>, %1248, %cst_208 [1] : vector<8x8xf32> to vector<8xf32>
    %1250 = vector.shape_cast %1249 : vector<8xf32> to vector<8x1xf32>
    %1251 = tpu.concatenate %1229, %1232, %1235, %1238, %1241, %1244, %1247, %1250 in 1 : vector<8x1xf32>, vector<8x1xf32>, vector<8x1xf32>, vector<8x1xf32>, vector<8x1xf32>, vector<8x1xf32>, vector<8x1xf32>, vector<8x1xf32> -> vector<8x8xf32>
    %cst_209 = arith.constant dense<0.000000e+00> : vector<8x64xf32>
    %1252 = tpu.matmul %1251, %1211, %cst_209 {dimension_numbers = #tpu.dot_dimension_numbers<[1], [1], [0], [0], [0, 0, 1, 0], [], []>} : vector<8x8xf32>, vector<64x8xf32>, vector<8x64xf32> -> vector<8x64xf32>
    %1253 = arith.subf %1226, %1252 : vector<8x64xf32>
    %1254 = math.exp %1253 : vector<8x64xf32>
    %cst_210 = arith.constant dense<0.000000e+00> : vector<8x8xf32>
    %1255 = tpu.matmul %1254, %1211, %cst_210 {dimension_numbers = #tpu.dot_dimension_numbers<[1], [0], [0], [1], [0, 0, 1, 1], [], []>} : vector<8x64xf32>, vector<64x8xf32>, vector<8x8xf32> -> vector<8x8xf32>
    %1256 = tpu.reciprocal %1255 {approx = true} : vector<8x8xf32> -> vector<8x8xf32>
    %cst_211 = arith.constant dense<0.000000e+00> : vector<8x64xf32>
    %1257 = tpu.matmul %1256, %1211, %cst_211 {dimension_numbers = #tpu.dot_dimension_numbers<[1], [1], [0], [0], [0, 0, 1, 0], [], []>} : vector<8x8xf32>, vector<64x8xf32>, vector<8x64xf32> -> vector<8x64xf32>
    %1258 = arith.mulf %1254, %1257 : vector<8x64xf32>
    %cst_212 = arith.constant dense<0.000000e+00> : vector<8x32xf32>
    %1259 = tpu.matmul %1258, %1225, %cst_212 {dimension_numbers = #tpu.dot_dimension_numbers<[1], [0], [0], [1], [0, 0, 1, 1], [], []>} : vector<8x64xf32>, vector<64x32xf32>, vector<8x32xf32> -> vector<8x32xf32>
    %1260 = vector.extract_strided_slice %1216 {offsets = [8, 0], sizes = [8, 32], strides = [1, 1]} : vector<16x96xf32> to vector<8x32xf32>
    %cst_213 = arith.constant 5.000000e-01 : f32
    %1261 = vector.broadcast %cst_213 : f32 to vector<8x32xf32>
    %1262 = arith.mulf %1260, %1261 : vector<8x32xf32>
    %1263 = vector.extract_strided_slice %1216 {offsets = [8, 32], sizes = [8, 32], strides = [1, 1]} : vector<16x96xf32> to vector<8x32xf32>
    %1264 = vector.extract_strided_slice %1216 {offsets = [8, 64], sizes = [8, 32], strides = [1, 1]} : vector<16x96xf32> to vector<8x32xf32>
    %1265 = tpu.concatenate %1263, %1263, %1263, %1263, %1263, %1263, %1263, %1263 in 0 : vector<8x32xf32>, vector<8x32xf32>, vector<8x32xf32>, vector<8x32xf32>, vector<8x32xf32>, vector<8x32xf32>, vector<8x32xf32>, vector<8x32xf32> -> vector<64x32xf32>
    %1266 = arith.mulf %1265, %1169 : vector<64x32xf32>
    %1267 = tpu.concatenate %1264, %1264, %1264, %1264, %1264, %1264, %1264, %1264 in 0 : vector<8x32xf32>, vector<8x32xf32>, vector<8x32xf32>, vector<8x32xf32>, vector<8x32xf32>, vector<8x32xf32>, vector<8x32xf32>, vector<8x32xf32> -> vector<64x32xf32>
    %1268 = arith.mulf %1267, %1169 : vector<64x32xf32>
    %cst_214 = arith.constant dense<0.000000e+00> : vector<8x64xf32>
    %1269 = tpu.matmul %1262, %1266, %cst_214 {dimension_numbers = #tpu.dot_dimension_numbers<[1], [1], [0], [0], [0, 0, 1, 0], [], []>} : vector<8x32xf32>, vector<64x32xf32>, vector<8x64xf32> -> vector<8x64xf32>
    %1270 = vector.extract_strided_slice %1269 {offsets = [0, 0], sizes = [8, 8], strides = [1, 1]} : vector<8x64xf32> to vector<8x8xf32>
    %cst_215 = arith.constant dense<0xFF800000> : vector<8xf32>
    %1271 = vector.multi_reduction <maximumf>, %1270, %cst_215 [1] : vector<8x8xf32> to vector<8xf32>
    %1272 = vector.shape_cast %1271 : vector<8xf32> to vector<8x1xf32>
    %1273 = vector.extract_strided_slice %1269 {offsets = [0, 8], sizes = [8, 8], strides = [1, 1]} : vector<8x64xf32> to vector<8x8xf32>
    %cst_216 = arith.constant dense<0xFF800000> : vector<8xf32>
    %1274 = vector.multi_reduction <maximumf>, %1273, %cst_216 [1] : vector<8x8xf32> to vector<8xf32>
    %1275 = vector.shape_cast %1274 : vector<8xf32> to vector<8x1xf32>
    %1276 = vector.extract_strided_slice %1269 {offsets = [0, 16], sizes = [8, 8], strides = [1, 1]} : vector<8x64xf32> to vector<8x8xf32>
    %cst_217 = arith.constant dense<0xFF800000> : vector<8xf32>
    %1277 = vector.multi_reduction <maximumf>, %1276, %cst_217 [1] : vector<8x8xf32> to vector<8xf32>
    %1278 = vector.shape_cast %1277 : vector<8xf32> to vector<8x1xf32>
    %1279 = vector.extract_strided_slice %1269 {offsets = [0, 24], sizes = [8, 8], strides = [1, 1]} : vector<8x64xf32> to vector<8x8xf32>
    %cst_218 = arith.constant dense<0xFF800000> : vector<8xf32>
    %1280 = vector.multi_reduction <maximumf>, %1279, %cst_218 [1] : vector<8x8xf32> to vector<8xf32>
    %1281 = vector.shape_cast %1280 : vector<8xf32> to vector<8x1xf32>
    %1282 = vector.extract_strided_slice %1269 {offsets = [0, 32], sizes = [8, 8], strides = [1, 1]} : vector<8x64xf32> to vector<8x8xf32>
    %cst_219 = arith.constant dense<0xFF800000> : vector<8xf32>
    %1283 = vector.multi_reduction <maximumf>, %1282, %cst_219 [1] : vector<8x8xf32> to vector<8xf32>
    %1284 = vector.shape_cast %1283 : vector<8xf32> to vector<8x1xf32>
    %1285 = vector.extract_strided_slice %1269 {offsets = [0, 40], sizes = [8, 8], strides = [1, 1]} : vector<8x64xf32> to vector<8x8xf32>
    %cst_220 = arith.constant dense<0xFF800000> : vector<8xf32>
    %1286 = vector.multi_reduction <maximumf>, %1285, %cst_220 [1] : vector<8x8xf32> to vector<8xf32>
    %1287 = vector.shape_cast %1286 : vector<8xf32> to vector<8x1xf32>
    %1288 = vector.extract_strided_slice %1269 {offsets = [0, 48], sizes = [8, 8], strides = [1, 1]} : vector<8x64xf32> to vector<8x8xf32>
    %cst_221 = arith.constant dense<0xFF800000> : vector<8xf32>
    %1289 = vector.multi_reduction <maximumf>, %1288, %cst_221 [1] : vector<8x8xf32> to vector<8xf32>
    %1290 = vector.shape_cast %1289 : vector<8xf32> to vector<8x1xf32>
    %1291 = vector.extract_strided_slice %1269 {offsets = [0, 56], sizes = [8, 8], strides = [1, 1]} : vector<8x64xf32> to vector<8x8xf32>
    %cst_222 = arith.constant dense<0xFF800000> : vector<8xf32>
    %1292 = vector.multi_reduction <maximumf>, %1291, %cst_222 [1] : vector<8x8xf32> to vector<8xf32>
    %1293 = vector.shape_cast %1292 : vector<8xf32> to vector<8x1xf32>
    %1294 = tpu.concatenate %1272, %1275, %1278, %1281, %1284, %1287, %1290, %1293 in 1 : vector<8x1xf32>, vector<8x1xf32>, vector<8x1xf32>, vector<8x1xf32>, vector<8x1xf32>, vector<8x1xf32>, vector<8x1xf32>, vector<8x1xf32> -> vector<8x8xf32>
    %cst_223 = arith.constant dense<0.000000e+00> : vector<8x64xf32>
    %1295 = tpu.matmul %1294, %1211, %cst_223 {dimension_numbers = #tpu.dot_dimension_numbers<[1], [1], [0], [0], [0, 0, 1, 0], [], []>} : vector<8x8xf32>, vector<64x8xf32>, vector<8x64xf32> -> vector<8x64xf32>
    %1296 = arith.subf %1269, %1295 : vector<8x64xf32>
    %1297 = math.exp %1296 : vector<8x64xf32>
    %cst_224 = arith.constant dense<0.000000e+00> : vector<8x8xf32>
    %1298 = tpu.matmul %1297, %1211, %cst_224 {dimension_numbers = #tpu.dot_dimension_numbers<[1], [0], [0], [1], [0, 0, 1, 1], [], []>} : vector<8x64xf32>, vector<64x8xf32>, vector<8x8xf32> -> vector<8x8xf32>
    %1299 = tpu.reciprocal %1298 {approx = true} : vector<8x8xf32> -> vector<8x8xf32>
    %cst_225 = arith.constant dense<0.000000e+00> : vector<8x64xf32>
    %1300 = tpu.matmul %1299, %1211, %cst_225 {dimension_numbers = #tpu.dot_dimension_numbers<[1], [1], [0], [0], [0, 0, 1, 0], [], []>} : vector<8x8xf32>, vector<64x8xf32>, vector<8x64xf32> -> vector<8x64xf32>
    %1301 = arith.mulf %1297, %1300 : vector<8x64xf32>
    %cst_226 = arith.constant dense<0.000000e+00> : vector<8x32xf32>
    %1302 = tpu.matmul %1301, %1268, %cst_226 {dimension_numbers = #tpu.dot_dimension_numbers<[1], [0], [0], [1], [0, 0, 1, 1], [], []>} : vector<8x64xf32>, vector<64x32xf32>, vector<8x32xf32> -> vector<8x32xf32>
    %1303 = tpu.concatenate %1259, %1302 in 0 : vector<8x32xf32>, vector<8x32xf32> -> vector<16x32xf32>
    %c0_227 = arith.constant 0 : index
    %c0_228 = arith.constant 0 : index
    %1304 = vector.load %arg8[%c0_227, %c0_228] : memref<32x32xf32, #tpu.memory_space<vmem>>, vector<32x32xf32>
    %cst_229 = arith.constant dense<0.000000e+00> : vector<16x32xf32>
    %1305 = tpu.matmul %1303, %1304, %cst_229 {dimension_numbers = #tpu.dot_dimension_numbers<[1], [0], [0], [1], [0, 0, 1, 1], [], []>} : vector<16x32xf32>, vector<32x32xf32>, vector<16x32xf32> -> vector<16x32xf32>
    %1306 = vector.broadcast %4 : vector<1x32xf32> to vector<16x32xf32>
    %1307 = arith.addf %1305, %1306 : vector<16x32xf32>
    %1308 = arith.addf %1092, %1307 : vector<16x32xf32>
    %c0_230 = arith.constant 0 : index
    %c0_231 = arith.constant 0 : index
    %1309 = vector.load %arg9[%c0_230, %c0_231] : memref<32x32xf32, #tpu.memory_space<vmem>>, vector<32x32xf32>
    %cst_232 = arith.constant dense<0.000000e+00> : vector<16x32xf32>
    %1310 = tpu.matmul %1308, %1309, %cst_232 {dimension_numbers = #tpu.dot_dimension_numbers<[1], [0], [0], [1], [0, 0, 1, 1], [], []>} : vector<16x32xf32>, vector<32x32xf32>, vector<16x32xf32> -> vector<16x32xf32>
    %1311 = vector.broadcast %5 : vector<1x32xf32> to vector<16x32xf32>
    %1312 = arith.addf %1310, %1311 : vector<16x32xf32>
    %cst_233 = arith.constant dense<0.000000e+00> : vector<16xf32>
    %1313 = vector.multi_reduction <add>, %1312, %cst_233 [1] : vector<16x32xf32> to vector<16xf32>
    %1314 = vector.shape_cast %1313 : vector<16xf32> to vector<16x1xf32>
    %cst_234 = arith.constant 3.200000e+01 : f32
    %1315 = vector.broadcast %cst_234 : f32 to vector<16x1xf32>
    %1316 = arith.divf %1314, %1315 : vector<16x1xf32>
    %1317 = vector.broadcast %1316 : vector<16x1xf32> to vector<16x32xf32>
    %1318 = arith.subf %1312, %1317 : vector<16x32xf32>
    %1319 = arith.mulf %1318, %1318 : vector<16x32xf32>
    %cst_235 = arith.constant dense<0.000000e+00> : vector<16xf32>
    %1320 = vector.multi_reduction <add>, %1319, %cst_235 [1] : vector<16x32xf32> to vector<16xf32>
    %1321 = vector.shape_cast %1320 : vector<16xf32> to vector<16x1xf32>
    %cst_236 = arith.constant 3.200000e+01 : f32
    %1322 = vector.broadcast %cst_236 : f32 to vector<16x1xf32>
    %1323 = arith.divf %1321, %1322 : vector<16x1xf32>
    %1324 = vector.broadcast %1316 : vector<16x1xf32> to vector<16x32xf32>
    %1325 = arith.subf %1312, %1324 : vector<16x32xf32>
    %cst_237 = arith.constant 9.99999974E-6 : f32
    %1326 = vector.broadcast %cst_237 : f32 to vector<16x1xf32>
    %1327 = arith.addf %1323, %1326 : vector<16x1xf32>
    %1328 = math.rsqrt %1327 : vector<16x1xf32>
    %1329 = vector.broadcast %1328 : vector<16x1xf32> to vector<16x32xf32>
    %1330 = arith.mulf %1325, %1329 : vector<16x32xf32>
    %1331 = vector.broadcast %6 : vector<1x32xf32> to vector<16x32xf32>
    %1332 = arith.mulf %1330, %1331 : vector<16x32xf32>
    %1333 = vector.broadcast %7 : vector<1x32xf32> to vector<16x32xf32>
    %1334 = arith.addf %1332, %1333 : vector<16x32xf32>
    %cst_238 = arith.constant 5.000000e-01 : f32
    %1335 = vector.broadcast %cst_238 : f32 to vector<16x32xf32>
    %1336 = arith.mulf %1335, %1334 : vector<16x32xf32>
    %cst_239 = arith.constant 0.707106769 : f32
    %1337 = vector.broadcast %cst_239 : f32 to vector<16x32xf32>
    %1338 = arith.mulf %1334, %1337 : vector<16x32xf32>
    %1339 = math.absf %1338 : vector<16x32xf32>
    %cst_240 = arith.constant 0.327591091 : f32
    %1340 = vector.broadcast %cst_240 : f32 to vector<16x32xf32>
    %1341 = arith.mulf %1340, %1339 : vector<16x32xf32>
    %cst_241 = arith.constant 1.000000e+00 : f32
    %1342 = vector.broadcast %cst_241 : f32 to vector<16x32xf32>
    %1343 = arith.addf %1342, %1341 : vector<16x32xf32>
    %cst_242 = arith.constant 1.000000e+00 : f32
    %1344 = vector.broadcast %cst_242 : f32 to vector<16x32xf32>
    %1345 = arith.divf %1344, %1343 : vector<16x32xf32>
    %cst_243 = arith.constant 1.06140542 : f32
    %1346 = vector.broadcast %cst_243 : f32 to vector<16x32xf32>
    %1347 = arith.mulf %1346, %1345 : vector<16x32xf32>
    %cst_244 = arith.constant -1.45315206 : f32
    %1348 = vector.broadcast %cst_244 : f32 to vector<16x32xf32>
    %1349 = arith.addf %1347, %1348 : vector<16x32xf32>
    %1350 = arith.mulf %1349, %1345 : vector<16x32xf32>
    %cst_245 = arith.constant 1.42141378 : f32
    %1351 = vector.broadcast %cst_245 : f32 to vector<16x32xf32>
    %1352 = arith.addf %1350, %1351 : vector<16x32xf32>
    %1353 = arith.mulf %1352, %1345 : vector<16x32xf32>
    %cst_246 = arith.constant -0.284496725 : f32
    %1354 = vector.broadcast %cst_246 : f32 to vector<16x32xf32>
    %1355 = arith.addf %1353, %1354 : vector<16x32xf32>
    %1356 = arith.mulf %1355, %1345 : vector<16x32xf32>
    %cst_247 = arith.constant 0.254829586 : f32
    %1357 = vector.broadcast %cst_247 : f32 to vector<16x32xf32>
    %1358 = arith.addf %1356, %1357 : vector<16x32xf32>
    %1359 = arith.mulf %1358, %1345 : vector<16x32xf32>
    %cst_248 = arith.constant 0.000000e+00 : f32
    %1360 = vector.broadcast %cst_248 : f32 to vector<16x32xf32>
    %1361 = arith.subf %1360, %1339 : vector<16x32xf32>
    %1362 = arith.mulf %1361, %1339 : vector<16x32xf32>
    %1363 = math.exp %1362 : vector<16x32xf32>
    %1364 = arith.mulf %1359, %1363 : vector<16x32xf32>
    %cst_249 = arith.constant 1.000000e+00 : f32
    %1365 = vector.broadcast %cst_249 : f32 to vector<16x32xf32>
    %1366 = arith.subf %1365, %1364 : vector<16x32xf32>
    %cst_250 = arith.constant 0.000000e+00 : f32
    %1367 = vector.broadcast %cst_250 : f32 to vector<16x32xf32>
    %1368 = arith.cmpf oge, %1338, %1367 : vector<16x32xf32>
    %cst_251 = arith.constant 0.000000e+00 : f32
    %1369 = vector.broadcast %cst_251 : f32 to vector<16x32xf32>
    %1370 = arith.subf %1369, %1366 : vector<16x32xf32>
    %1371 = arith.select %1368, %1366, %1370 : vector<16x32xi1>, vector<16x32xf32>
    %cst_252 = arith.constant 1.000000e+00 : f32
    %1372 = vector.broadcast %cst_252 : f32 to vector<16x32xf32>
    %1373 = arith.addf %1372, %1371 : vector<16x32xf32>
    %1374 = arith.mulf %1336, %1373 : vector<16x32xf32>
    %c0_253 = arith.constant 0 : index
    %c0_254 = arith.constant 0 : index
    %1375 = vector.load %arg10[%c0_253, %c0_254] : memref<32x8xf32, #tpu.memory_space<vmem>>, vector<32x8xf32>
    %cst_255 = arith.constant dense<0.000000e+00> : vector<16x8xf32>
    %1376 = tpu.matmul %1374, %1375, %cst_255 {dimension_numbers = #tpu.dot_dimension_numbers<[1], [0], [0], [1], [0, 0, 1, 1], [], []>} : vector<16x32xf32>, vector<32x8xf32>, vector<16x8xf32> -> vector<16x8xf32>
    %c0_256 = arith.constant 0 : index
    %c0_257 = arith.constant 0 : index
    %1377 = vector.load %arg11[%c0_256, %c0_257] : memref<1x8xf32, #tpu.memory_space<vmem>>, vector<1x8xf32>
    %1378 = vector.broadcast %1377 : vector<1x8xf32> to vector<16x8xf32>
    %1379 = arith.addf %1376, %1378 : vector<16x8xf32>
    %1380 = vector.extract_strided_slice %1379 {offsets = [0, 0], sizes = [8, 8], strides = [1, 1]} : vector<16x8xf32> to vector<8x8xf32>
    %c0_258 = arith.constant 0 : index
    %c0_259 = arith.constant 0 : index
    %c0_260 = arith.constant 0 : index
    %1381 = vector.load %arg12[%c0_258, %c0_259, %c0_260] : memref<2x8x8xf32, #tpu.memory_space<vmem>>, vector<1x8x8xf32>
    %1382 = vector.shape_cast %1381 : vector<1x8x8xf32> to vector<8x8xf32>
    %1383 = vector.shape_cast %1380 : vector<8x8xf32> to vector<1x8x8xf32>
    tpu.vector_store %arg12[%c0_258, %c0_259, %c0_260], %1383 {strides = array<i32>} : memref<2x8x8xf32, #tpu.memory_space<vmem>>, vector<1x8x8xf32>,
    %1384 = vector.extract_strided_slice %1379 {offsets = [8, 0], sizes = [8, 8], strides = [1, 1]} : vector<16x8xf32> to vector<8x8xf32>
    %c1_261 = arith.constant 1 : index
    %c0_262 = arith.constant 0 : index
    %c0_263 = arith.constant 0 : index
    %1385 = vector.load %arg12[%c1_261, %c0_262, %c0_263] : memref<2x8x8xf32, #tpu.memory_space<vmem>>, vector<1x8x8xf32>
    %1386 = vector.shape_cast %1385 : vector<1x8x8xf32> to vector<8x8xf32>
    %1387 = vector.shape_cast %1384 : vector<8x8xf32> to vector<1x8x8xf32>
    tpu.vector_store %arg12[%c1_261, %c0_262, %c0_263], %1387 {strides = array<i32>} : memref<2x8x8xf32, #tpu.memory_space<vmem>>, vector<1x8x8xf32>,
    return
  }
}

</mosaic_0001>

<llo_original>
// kernel: tpu_custom_call.1
$region0: #{tpu_custom_call.1}
  #allocation0 [shape = 'u32[]', space=smem, size = 0x4, offset = 0x4, fixed_abs, tag = 'smem constant byte address 0x4 - core index']
  #allocation1 [shape = 'u32[144,128]{1,0:T(1,128)}', space=vmem, size = 0x12000, scoped, tag = 'internal scratch']
  %s0 = inlined_call_operand.hbm [shape: f32[2,16], index: 0, kind: input, shape index: {}]
  %s1 = inlined_call_operand.vmem [shape: f32[16,32], index: 1, kind: input, shape index: {}]
  %s2 = inlined_call_operand.hbm [shape: f32[7,32], index: 2, kind: input, shape index: {}]
  %s3 = inlined_call_operand.hbm [shape: f32[4,32,48], index: 3, kind: input, shape index: {}]
  %s4 = inlined_call_operand.hbm [shape: f32[4,16,48], index: 4, kind: input, shape index: {}]
  %s5 = inlined_call_operand.hbm [shape: f32[8,48], index: 5, kind: input, shape index: {}]
  %s6 = inlined_call_operand.vmem [shape: f32[32,96], index: 6, kind: input, shape index: {}]
  %s7 = inlined_call_operand.hbm [shape: f32[1,96], index: 7, kind: input, shape index: {}]
  %s8 = inlined_call_operand.hbm [shape: f32[32,32], index: 8, kind: input, shape index: {}]
  %s9 = inlined_call_operand.hbm [shape: f32[32,32], index: 9, kind: input, shape index: {}]
  %s10 = inlined_call_operand.vmem [shape: f32[32,8], index: 10, kind: input, shape index: {}]
  %s11 = inlined_call_operand.vmem [shape: f32[1,8], index: 11, kind: input, shape index: {}]
  %s12 = inlined_call_operand.hbm [shape: f32[2,8,8], index: 12, kind: output, shape index: {}]
  %s13 = sld [smem:[#allocation0]]
  $region90: #{tpu_custom_call.1} parent=0
    _
  %s15 = ssub.s32 1, %s13
  %s16 = scalar_select 0, %s15, %s13
  $region1: #{tpu_custom_call.1} parent=0
    #allocation2 [shape = 'u8[1024]{0}', space=vmem, size = 0x400, scoped, tag = 'input window, operand 0, single buffered']
    #allocation3 [shape = 's32[1]{0}', space=sflag, size = 0x4, scoped, tag = 'scoped memory for tpu_custom_call.1']
    #allocation4 [shape = 's32[1]{0}', space=sflag, size = 0x4, scoped, tag = 'scoped memory for tpu_custom_call.1']
    #allocation5 [shape = 'u8[4096]{0}', space=vmem, size = 0x1000, scoped, tag = 'input window, operand 2, single buffered']
    #allocation6 [shape = 's32[1]{0}', space=sflag, size = 0x4, scoped, tag = 'scoped memory for tpu_custom_call.1']
    #allocation7 [shape = 'u8[65536]{0}', space=vmem, size = 0x10000, scoped, tag = 'input window, operand 3, single buffered']
    #allocation8 [shape = 'u8[32768]{0}', space=vmem, size = 0x8000, scoped, tag = 'input window, operand 4, single buffered']
    #allocation9 [shape = 's32[1]{0}', space=sflag, size = 0x4, scoped, tag = 'scoped memory for tpu_custom_call.1']
    #allocation10 [shape = 'u8[4096]{0}', space=vmem, size = 0x1000, scoped, tag = 'input window, operand 5, single buffered']
    #allocation11 [shape = 'u8[512]{0}', space=vmem, size = 0x400, scoped, tag = 'input window, operand 7, single buffered']
    #allocation12 [shape = 's32[1]{0}', space=sflag, size = 0x4, scoped, tag = 'scoped memory for tpu_custom_call.1']
    #allocation13 [shape = 'u8[16384]{0}', space=vmem, size = 0x4000, scoped, tag = 'input window, operand 8, single buffered']
    #allocation14 [shape = 'u8[16384]{0}', space=vmem, size = 0x4000, scoped, tag = 'input window, operand 9, single buffered']
    #allocation15 [shape = 's32[1]{0}', space=sflag, size = 0x4, scoped, tag = 'scoped memory for tpu_custom_call.1']
    #allocation16 [shape = 'u8[8192]{0}', space=vmem, size = 0x2000, scoped, tag = 'output window, operand 0, single buffered']
    %17 = vsyncpa [#allocation3], 0
    %18 = vsyncpa [#allocation6], 0
    %19 = vsyncpa [#allocation9], 0
    %20 = vsyncpa [#allocation12], 0
    %21 = vsyncpa [#allocation15], 0
    %22 = vsyncpa [#allocation4], 0
    // Predicated region
    $region2: #{tpu_custom_call.1} parent=1 // pred_check
      _
    $region3: #{tpu_custom_call.1} parent=1 // pred_check_branch
      %24 = sbr.rel (0) target = $region5
    $region4: #{tpu_custom_call.1} parent=1 // pred_region
      %s26 = ssub.s32 32, 32
      %27 = vsyncadd [#allocation3], %s26
      %s29 = sshll.u32 [#allocation2], 4
      %s30 = int_to_ptr.vmem [resolvable:$true] %s29
      %32 = dma.hbm_to_vmem [thread:$0]  %s0, 32, %s30, [#allocation3]
    $region5: #{tpu_custom_call.1} parent=1 // pred_fallthru
      _
    // Predicated region
    $region6: #{tpu_custom_call.1} parent=1 // pred_check
      _
    $region7: #{tpu_custom_call.1} parent=1 // pred_check_branch
      %34 = sbr.rel (0) target = $region9
    $region8: #{tpu_custom_call.1} parent=1 // pred_region
      _
    $region9: #{tpu_custom_call.1} parent=1 // pred_fallthru
      _
    // Predicated region
    $region10: #{tpu_custom_call.1} parent=1 // pred_check
      _
    $region11: #{tpu_custom_call.1} parent=1 // pred_check_branch
      %36 = sbr.rel (0) target = $region13
    $region12: #{tpu_custom_call.1} parent=1 // pred_region
      %s38 = ssub.s32 128, 128
      %39 = vsyncadd [#allocation6], %s38
      %s41 = sshll.u32 [#allocation5], 4
      %s42 = int_to_ptr.vmem [resolvable:$true] %s41
      %44 = dma.hbm_to_vmem [thread:$0]  %s2, 128, %s42, [#allocation6]
    $region13: #{tpu_custom_call.1} parent=1 // pred_fallthru
      _
    // Predicated region
    $region14: #{tpu_custom_call.1} parent=1 // pred_check
      _
    $region15: #{tpu_custom_call.1} parent=1 // pred_check_branch
      %46 = sbr.rel (0) target = $region17
    $region16: #{tpu_custom_call.1} parent=1 // pred_region
      %s48 = ssub.s32 2048, 2048
      %49 = vsyncadd [#allocation6], %s48
      %s50 = sshll.u32 [#allocation7], 4
      %s51 = int_to_ptr.vmem [resolvable:$true] %s50
      %56 = dma.hbm_to_vmem [thread:$0]  %s3, 2048, %s51, [#allocation6], 128, 128, 8
    $region17: #{tpu_custom_call.1} parent=1 // pred_fallthru
      _
    // Predicated region
    $region18: #{tpu_custom_call.1} parent=1 // pred_check
      _
    $region19: #{tpu_custom_call.1} parent=1 // pred_check_branch
      %58 = sbr.rel (0) target = $region21
    $region20: #{tpu_custom_call.1} parent=1 // pred_region
      %s60 = ssub.s32 1024, 1024
      %61 = vsyncadd [#allocation9], %s60
      %s62 = sshll.u32 [#allocation8], 4
      %s63 = int_to_ptr.vmem [resolvable:$true] %s62
      %68 = dma.hbm_to_vmem [thread:$0]  %s4, 1024, %s63, [#allocation9], 128, 128, 8
    $region21: #{tpu_custom_call.1} parent=1 // pred_fallthru
      _
    // Predicated region
    $region22: #{tpu_custom_call.1} parent=1 // pred_check
      _
    $region23: #{tpu_custom_call.1} parent=1 // pred_check_branch
      %70 = sbr.rel (0) target = $region25
    $region24: #{tpu_custom_call.1} parent=1 // pred_region
      %s72 = ssub.s32 128, 128
      %73 = vsyncadd [#allocation9], %s72
      %s75 = sshll.u32 [#allocation10], 4
      %s76 = int_to_ptr.vmem [resolvable:$true] %s75
      %78 = dma.hbm_to_vmem [thread:$0]  %s5, 128, %s76, [#allocation9]
    $region25: #{tpu_custom_call.1} parent=1 // pred_fallthru
      _
    // Predicated region
    $region26: #{tpu_custom_call.1} parent=1 // pred_check
      _
    $region27: #{tpu_custom_call.1} parent=1 // pred_check_branch
      %80 = sbr.rel (0) target = $region29
    $region28: #{tpu_custom_call.1} parent=1 // pred_region
      _
    $region29: #{tpu_custom_call.1} parent=1 // pred_fallthru
      _
    // Predicated region
    $region30: #{tpu_custom_call.1} parent=1 // pred_check
      _
    $region31: #{tpu_custom_call.1} parent=1 // pred_check_branch
      %82 = sbr.rel (0) target = $region33
    $region32: #{tpu_custom_call.1} parent=1 // pred_region
      %s84 = ssub.s32 16, 16
      %85 = vsyncadd [#allocation12], %s84
      %s87 = sshll.u32 [#allocation11], 4
      %s88 = int_to_ptr.vmem [resolvable:$true] %s87
      %90 = dma.hbm_to_vmem [thread:$0]  %s7, 16, %s88, [#allocation12]
    $region33: #{tpu_custom_call.1} parent=1 // pred_fallthru
      _
    // Predicated region
    $region34: #{tpu_custom_call.1} parent=1 // pred_check
      _
    $region35: #{tpu_custom_call.1} parent=1 // pred_check_branch
      %92 = sbr.rel (0) target = $region37
    $region36: #{tpu_custom_call.1} parent=1 // pred_region
      %s94 = ssub.s32 512, 512
      %95 = vsyncadd [#allocation12], %s94
      %s96 = sshll.u32 [#allocation13], 4
      %s97 = int_to_ptr.vmem [resolvable:$true] %s96
      %102 = dma.hbm_to_vmem [thread:$0]  %s8, 512, %s97, [#allocation12], 128, 128, 8
    $region37: #{tpu_custom_call.1} parent=1 // pred_fallthru
      _
    // Predicated region
    $region38: #{tpu_custom_call.1} parent=1 // pred_check
      _
    $region39: #{tpu_custom_call.1} parent=1 // pred_check_branch
      %104 = sbr.rel (0) target = $region41
    $region40: #{tpu_custom_call.1} parent=1 // pred_region
      %s106 = ssub.s32 512, 512
      %107 = vsyncadd [#allocation15], %s106
      %s108 = sshll.u32 [#allocation14], 4
      %s109 = int_to_ptr.vmem [resolvable:$true] %s108
      %114 = dma.hbm_to_vmem [thread:$0]  %s9, 512, %s109, [#allocation15], 128, 128, 8
    $region41: #{tpu_custom_call.1} parent=1 // pred_fallthru
      _
    // Predicated region
    $region42: #{tpu_custom_call.1} parent=1 // pred_check
      _
    $region43: #{tpu_custom_call.1} parent=1 // pred_check_branch
      %116 = sbr.rel (0) target = $region45
    $region44: #{tpu_custom_call.1} parent=1 // pred_region
      _
    $region45: #{tpu_custom_call.1} parent=1 // pred_fallthru
      _
    // Predicated region
    $region46: #{tpu_custom_call.1} parent=1 // pred_check
      _
    $region47: #{tpu_custom_call.1} parent=1 // pred_check_branch
      %118 = sbr.rel (0) target = $region49
    $region48: #{tpu_custom_call.1} parent=1 // pred_region
      _
    $region49: #{tpu_custom_call.1} parent=1 // pred_fallthru
      _
    // Predicated region
    $region50: #{tpu_custom_call.1} parent=1 // pred_check
      _
    $region51: #{tpu_custom_call.1} parent=1 // pred_check_branch
      %120 = sbr.rel (0) target = $region53
    $region52: #{tpu_custom_call.1} parent=1 // pred_region
      %121 = dma.done [#allocation3], 32
    $region53: #{tpu_custom_call.1} parent=1 // pred_fallthru
      _
    // Predicated region
    $region54: #{tpu_custom_call.1} parent=1 // pred_check
      _
    $region55: #{tpu_custom_call.1} parent=1 // pred_check_branch
      %123 = sbr.rel (0) target = $region57
    $region56: #{tpu_custom_call.1} parent=1 // pred_region
      %124 = dma.done [#allocation6], 128
    $region57: #{tpu_custom_call.1} parent=1 // pred_fallthru
      _
    // Predicated region
    $region58: #{tpu_custom_call.1} parent=1 // pred_check
      _
    $region59: #{tpu_custom_call.1} parent=1 // pred_check_branch
      %126 = sbr.rel (0) target = $region61
    $region60: #{tpu_custom_call.1} parent=1 // pred_region
      %127 = dma.done [#allocation6], 2048
    $region61: #{tpu_custom_call.1} parent=1 // pred_fallthru
      _
    // Predicated region
    $region62: #{tpu_custom_call.1} parent=1 // pred_check
      _
    $region63: #{tpu_custom_call.1} parent=1 // pred_check_branch
      %129 = sbr.rel (0) target = $region65
    $region64: #{tpu_custom_call.1} parent=1 // pred_region
      %130 = dma.done [#allocation9], 1024
    $region65: #{tpu_custom_call.1} parent=1 // pred_fallthru
      _
    // Predicated region
    $region66: #{tpu_custom_call.1} parent=1 // pred_check
      _
    $region67: #{tpu_custom_call.1} parent=1 // pred_check_branch
      %132 = sbr.rel (0) target = $region69
    $region68: #{tpu_custom_call.1} parent=1 // pred_region
      %133 = dma.done [#allocation9], 128
    $region69: #{tpu_custom_call.1} parent=1 // pred_fallthru
      _
    // Predicated region
    $region70: #{tpu_custom_call.1} parent=1 // pred_check
      _
    $region71: #{tpu_custom_call.1} parent=1 // pred_check_branch
      %135 = sbr.rel (0) target = $region73
    $region72: #{tpu_custom_call.1} parent=1 // pred_region
      %136 = dma.done [#allocation12], 16
    $region73: #{tpu_custom_call.1} parent=1 // pred_fallthru
      _
    // Predicated region
    $region74: #{tpu_custom_call.1} parent=1 // pred_check
      _
    $region75: #{tpu_custom_call.1} parent=1 // pred_check_branch
      %138 = sbr.rel (0) target = $region77
    $region76: #{tpu_custom_call.1} parent=1 // pred_region
      %139 = dma.done [#allocation12], 512
    $region77: #{tpu_custom_call.1} parent=1 // pred_fallthru
      _
    // Predicated region
    $region78: #{tpu_custom_call.1} parent=1 // pred_check
      _
    $region79: #{tpu_custom_call.1} parent=1 // pred_check_branch
      %141 = sbr.rel (0) target = $region81
    $region80: #{tpu_custom_call.1} parent=1 // pred_region
      %142 = dma.done [#allocation15], 512
    $region81: #{tpu_custom_call.1} parent=1 // pred_fallthru
      _
    %v143 = vld [vmem:[#allocation5] sm:$0x7f]
    %v144 = vld [vmem:[#allocation10] sm:$0xff]
    %v145 = vld [vmem:[#allocation7] sm:$0xff]
    %v146 = vld [vmem:[#allocation7 + $0x8] sm:$0xff]
    %v147 = vld [vmem:[#allocation7 + $0x10] sm:$0xff]
    %v148 = vld [vmem:[#allocation7 + $0x18] sm:$0xff]
    %s149 = scalar_lea.vmem [#allocation7], 32
    %v150 = vld [vmem:[%s149] sm:$0xff]
    %v151 = vld [vmem:[%s149 + $0x8] sm:$0xff]
    %v152 = vld [vmem:[%s149 + $0x10] sm:$0xff]
    %v153 = vld [vmem:[%s149 + $0x18] sm:$0xff]
    %s154 = scalar_lea.vmem [#allocation7], 64
    %v155 = vld [vmem:[%s154] sm:$0xff]
    %v156 = vld [vmem:[%s154 + $0x8] sm:$0xff]
    %v157 = vld [vmem:[%s154 + $0x10] sm:$0xff]
    %v158 = vld [vmem:[%s154 + $0x18] sm:$0xff]
    %s159 = scalar_lea.vmem [#allocation7], 96
    %v160 = vld [vmem:[%s159] sm:$0xff]
    %v161 = vld [vmem:[%s159 + $0x8] sm:$0xff]
    %v162 = vld [vmem:[%s159 + $0x10] sm:$0xff]
    %v163 = vld [vmem:[%s159 + $0x18] sm:$0xff]
    %v164 = vld [vmem:[#allocation8] sm:$0xff]
    %v165 = vld [vmem:[#allocation8 + $0x8] sm:$0xff]
    %s166 = scalar_lea.vmem [#allocation8], 16
    %v167 = vld [vmem:[%s166] sm:$0xff]
    %v168 = vld [vmem:[%s166 + $0x8] sm:$0xff]
    %s169 = scalar_lea.vmem [#allocation8], 32
    %v170 = vld [vmem:[%s169] sm:$0xff]
    %v171 = vld [vmem:[%s169 + $0x8] sm:$0xff]
    %s172 = scalar_lea.vmem [#allocation8], 48
    %v173 = vld [vmem:[%s172] sm:$0xff]
    %v174 = vld [vmem:[%s172 + $0x8] sm:$0xff]
    %v175 = vld [vmem:[#allocation2] sm:$0x3]
    %v176 = vld [vmem:[%s1] sm:$0xff]
    %v177 = vld [vmem:[%s1 + $0x8] sm:$0xff]
    %v178 = vlaneseq
    %v179 = vshrl.u32 %v178, 7
    %v180 = vsub.s32 0, %v179
    %v181 = vrot.slane %v143, %v180
    %vm182 = vcmask 130048
    %v184 = vsel %vm182, %v175, 0
    %186 = vmatprep.subr.mxu0 0.0
    %187 = vmatpush1.msra.mxu0 0.0
    %188 = vmatprep.subr.mxu0 0.0
    %189 = vmatpush1.msra.mxu0 0.0
    %190 = vmatprep.subr.mxu0 0.0
    %191 = vmatpush1.msra.mxu0 0.0
    %192 = vmatprep.subr.mxu0 0.0
    %193 = vmatpush1.msra.mxu0 0.0
    %194 = vmatprep.subr.mxu0 0.0
    %195 = vmatpush1.msra.mxu0 0.0
    %196 = vmatprep.subr.mxu0 0.0
    %197 = vmatpush1.msra.mxu0 0.0
    %198 = vmatprep.subr.mxu0 0.0
    %199 = vmatpush1.msra.mxu0 0.0
    %200 = vmatprep.subr.mxu0 0.0
    %201 = vmatpush1.msra.mxu0 0.0
    %202 = vmatprep.subr.mxu0 0.0
    %203 = vmatpush1.msra.mxu0 0.0
    %204 = vmatprep.subr.mxu0 0.0
    %205 = vmatpush1.msra.mxu0 0.0
    %206 = vmatprep.subr.mxu0 0.0
    %207 = vmatpush1.msra.mxu0 0.0
    %208 = vmatprep.subr.mxu0 0.0
    %209 = vmatpush1.msra.mxu0 0.0
    %210 = vmatprep.subr.mxu0 0.0
    %211 = vmatpush1.msra.mxu0 0.0
    %212 = vmatprep.subr.mxu0 0.0
    %213 = vmatpush1.msra.mxu0 0.0
    %214 = vmatprep.subr.mxu0 0.0
    %215 = vmatpush1.msra.mxu0 %v177
    %216 = vmatprep.subr.mxu0 0.0
    %217 = vmatpush1.msra.mxu0 %v176
    %218 = vmatprep.subr.mxu0 0.0
    %219 = vmatpush2.msra.mxu0 0.0
    %220 = vmatprep.subr.mxu0 0.0
    %221 = vmatpush2.msra.mxu0 0.0
    %222 = vmatprep.subr.mxu0 0.0
    %223 = vmatpush2.msra.mxu0 0.0
    %224 = vmatprep.subr.mxu0 0.0
    %225 = vmatpush2.msra.mxu0 0.0
    %226 = vmatprep.subr.mxu0 0.0
    %227 = vmatpush2.msra.mxu0 0.0
    %228 = vmatprep.subr.mxu0 0.0
    %229 = vmatpush2.msra.mxu0 0.0
    %230 = vmatprep.subr.mxu0 0.0
    %231 = vmatpush2.msra.mxu0 0.0
    %232 = vmatprep.subr.mxu0 0.0
    %233 = vmatpush2.msra.mxu0 0.0
    %234 = vmatprep.subr.mxu0 0.0
    %235 = vmatpush2.msra.mxu0 0.0
    %236 = vmatprep.subr.mxu0 0.0
    %237 = vmatpush2.msra.mxu0 0.0
    %238 = vmatprep.subr.mxu0 0.0
    %239 = vmatpush2.msra.mxu0 0.0
    %240 = vmatprep.subr.mxu0 0.0
    %241 = vmatpush2.msra.mxu0 0.0
    %242 = vmatprep.subr.mxu0 0.0
    %243 = vmatpush2.msra.mxu0 0.0
    %244 = vmatprep.subr.mxu0 0.0
    %245 = vmatpush2.msra.mxu0 0.0
    %246 = vmatprep.subr.mxu0 0.0
    %247 = vmatpush2.msra.mxu0 0.0
    %248 = vmatprep.subr.mxu0 0.0
    %249 = vmatpush2.msra.mxu0 0.0
    %250 = vmatprep.mubr.f32.mxu0 0.0
    %251 = vmatmul.mubr.f32.gmra.mxu0 %v184
    %v252 = vpop.f32.mrf.mxu0
    %v253 = vadd.f32 %v181, %v252
    %v254 = vpop.f32.mrf.mxu0
    %255 = vdwg.mxu0
    %vm256 = vcmask 254976
    %v257 = vsel %vm256, %v253, 0.0
    %258 = vadd.xlane.f32.xlu0 %v257
    %v259 = vpop.xlane.xlu0 %258
    %v260 = vrcp.pop 32.0
    %v261 = vmul.f32 %v259, %v260
    %v262 = vsub.f32 %v253, %v261
    %v263 = vmul.f32 %v262, %v262
    %v264 = vsel %vm256, %v263, 0.0
    %265 = vadd.xlane.f32.xlu0 %v264
    %v266 = vpop.xlane.xlu0 %265
    %v267 = vmul.f32 %v266, %v260
    %v268 = vadd.f32 %v267, 1e-05
    %v269 = vrsqrt.pop %v268
    %v270 = vmul.f32 %v262, %v269
    %v271 = vlaneseq
    %v272 = vshrl.u32 %v271, 7
    %v273 = vsub.s32 1, %v272
    %v274 = vrot.slane %v143, %v273
    %v275 = vmul.f32 %v270, %v274
    %v276 = vlaneseq
    %v277 = vshrl.u32 %v276, 7
    %v278 = vsub.s32 2, %v277
    %v279 = vrot.slane %v143, %v278
    %v280 = vadd.f32 %v275, %v279
    %v281 = vmul.f32 %v280, 0.5
    %v282 = vmul.f32 %v280, 0.70710677
    %v283 = vand.u32 2147483647, %v282
    %v284 = vmul.f32 %v283, 0.3275911
    %v285 = vadd.f32 %v284, 1.0
    %v286 = vrcp.pop %v285
    %v287 = vmul.f32 1.0, %v286
    %v288 = vmul.f32 %v287, 1.0614054
    %v289 = vadd.f32 %v288, -1.4531521
    %v290 = vmul.f32 %v289, %v287
    %v291 = vadd.f32 %v290, 1.4214138
    %v292 = vmul.f32 %v291, %v287
    %v293 = vadd.f32 %v292, -0.28449672
    %v294 = vmul.f32 %v293, %v287
    %v295 = vadd.f32 %v294, 0.2548296
    %v296 = vmul.f32 %v295, %v287
    %v297 = vsub.f32 0.0, %v283
    %v298 = vmul.f32 %v297, %v283
    %v299 = vmul.f32 %v298, 1.442695
    %v300 = vpow.pop %v299
    %v301 = vmul.f32 %v296, %v300
    %v302 = vsub.f32 1.0, %v301
    %vm303 = vcmp.ge.f32.partialorder %v282, 0.0
    %v304 = vsub.f32 0.0, %v302
    %v305 = vsel %vm303, %v302, %v304
    %v306 = vadd.f32 %v305, 1.0
    %v307 = vmul.f32 %v281, %v306
    %v308 = vlaneseq
    %v309 = vshrl.u32 %v308, 7
    %v310 = vsub.s32 0, %v309
    %v311 = vrot.slane %v144, %v310
    %vm312 = vcmask 261120
    %v314 = vsel %vm312, %v307, 0
    %316 = vmatprep.subr.mxu0 0.0
    %317 = vmatpush1.msra.mxu0 0.0
    %318 = vmatprep.subr.mxu0 0.0
    %319 = vmatpush1.msra.mxu0 0.0
    %320 = vmatprep.subr.mxu0 0.0
    %321 = vmatpush1.msra.mxu0 0.0
    %322 = vmatprep.subr.mxu0 0.0
    %323 = vmatpush1.msra.mxu0 0.0
    %324 = vmatprep.subr.mxu0 0.0
    %325 = vmatpush1.msra.mxu0 0.0
    %326 = vmatprep.subr.mxu0 0.0
    %327 = vmatpush1.msra.mxu0 0.0
    %328 = vmatprep.subr.mxu0 0.0
    %329 = vmatpush1.msra.mxu0 0.0
    %330 = vmatprep.subr.mxu0 0.0
    %331 = vmatpush1.msra.mxu0 0.0
    %332 = vmatprep.subr.mxu0 0.0
    %333 = vmatpush1.msra.mxu0 0.0
    %334 = vmatprep.subr.mxu0 0.0
    %335 = vmatpush1.msra.mxu0 0.0
    %336 = vmatprep.subr.mxu0 0.0
    %337 = vmatpush1.msra.mxu0 0.0
    %338 = vmatprep.subr.mxu0 0.0
    %339 = vmatpush1.msra.mxu0 0.0
    %340 = vmatprep.subr.mxu0 0.0
    %341 = vmatpush1.msra.mxu0 %v148
    %342 = vmatprep.subr.mxu0 0.0
    %343 = vmatpush1.msra.mxu0 %v147
    %344 = vmatprep.subr.mxu0 0.0
    %345 = vmatpush1.msra.mxu0 %v146
    %346 = vmatprep.subr.mxu0 0.0
    %347 = vmatpush1.msra.mxu0 %v145
    %348 = vmatprep.subr.mxu0 0.0
    %349 = vmatpush2.msra.mxu0 0.0
    %350 = vmatprep.subr.mxu0 0.0
    %351 = vmatpush2.msra.mxu0 0.0
    %352 = vmatprep.subr.mxu0 0.0
    %353 = vmatpush2.msra.mxu0 0.0
    %354 = vmatprep.subr.mxu0 0.0
    %355 = vmatpush2.msra.mxu0 0.0
    %356 = vmatprep.subr.mxu0 0.0
    %357 = vmatpush2.msra.mxu0 0.0
    %358 = vmatprep.subr.mxu0 0.0
    %359 = vmatpush2.msra.mxu0 0.0
    %360 = vmatprep.subr.mxu0 0.0
    %361 = vmatpush2.msra.mxu0 0.0
    %362 = vmatprep.subr.mxu0 0.0
    %363 = vmatpush2.msra.mxu0 0.0
    %364 = vmatprep.subr.mxu0 0.0
    %365 = vmatpush2.msra.mxu0 0.0
    %366 = vmatprep.subr.mxu0 0.0
    %367 = vmatpush2.msra.mxu0 0.0
    %368 = vmatprep.subr.mxu0 0.0
    %369 = vmatpush2.msra.mxu0 0.0
    %370 = vmatprep.subr.mxu0 0.0
    %371 = vmatpush2.msra.mxu0 0.0
    %372 = vmatprep.subr.mxu0 0.0
    %373 = vmatpush2.msra.mxu0 0.0
    %374 = vmatprep.subr.mxu0 0.0
    %375 = vmatpush2.msra.mxu0 0.0
    %376 = vmatprep.subr.mxu0 0.0
    %377 = vmatpush2.msra.mxu0 0.0
    %378 = vmatprep.subr.mxu0 0.0
    %379 = vmatpush2.msra.mxu0 0.0
    %380 = vmatprep.mubr.f32.mxu0 0.0
    %381 = vmatmul.mubr.f32.gmra.mxu0 %v314
    %v382 = vpop.f32.mrf.mxu0
    %v383 = vadd.f32 %v311, %v382
    %v384 = vpop.f32.mrf.mxu0
    %385 = vdwg.mxu0
    %v386 = vlaneseq
    %v387 = vshrl.u32 %v386, 7
    %v388 = vsub.s32 1, %v387
    %v389 = vrot.slane %v144, %v388
    %390 = vmatprep.subr.mxu0 0.0
    %391 = vmatpush1.msra.mxu0 0.0
    %392 = vmatprep.subr.mxu0 0.0
    %393 = vmatpush1.msra.mxu0 0.0
    %394 = vmatprep.subr.mxu0 0.0
    %395 = vmatpush1.msra.mxu0 0.0
    %396 = vmatprep.subr.mxu0 0.0
    %397 = vmatpush1.msra.mxu0 0.0
    %398 = vmatprep.subr.mxu0 0.0
    %399 = vmatpush1.msra.mxu0 0.0
    %400 = vmatprep.subr.mxu0 0.0
    %401 = vmatpush1.msra.mxu0 0.0
    %402 = vmatprep.subr.mxu0 0.0
    %403 = vmatpush1.msra.mxu0 0.0
    %404 = vmatprep.subr.mxu0 0.0
    %405 = vmatpush1.msra.mxu0 0.0
    %406 = vmatprep.subr.mxu0 0.0
    %407 = vmatpush1.msra.mxu0 0.0
    %408 = vmatprep.subr.mxu0 0.0
    %409 = vmatpush1.msra.mxu0 0.0
    %410 = vmatprep.subr.mxu0 0.0
    %411 = vmatpush1.msra.mxu0 0.0
    %412 = vmatprep.subr.mxu0 0.0
    %413 = vmatpush1.msra.mxu0 0.0
    %414 = vmatprep.subr.mxu0 0.0
    %415 = vmatpush1.msra.mxu0 %v153
    %416 = vmatprep.subr.mxu0 0.0
    %417 = vmatpush1.msra.mxu0 %v152
    %418 = vmatprep.subr.mxu0 0.0
    %419 = vmatpush1.msra.mxu0 %v151
    %420 = vmatprep.subr.mxu0 0.0
    %421 = vmatpush1.msra.mxu0 %v150
    %422 = vmatprep.subr.mxu0 0.0
    %423 = vmatpush2.msra.mxu0 0.0
    %424 = vmatprep.subr.mxu0 0.0
    %425 = vmatpush2.msra.mxu0 0.0
    %426 = vmatprep.subr.mxu0 0.0
    %427 = vmatpush2.msra.mxu0 0.0
    %428 = vmatprep.subr.mxu0 0.0
    %429 = vmatpush2.msra.mxu0 0.0
    %430 = vmatprep.subr.mxu0 0.0
    %431 = vmatpush2.msra.mxu0 0.0
    %432 = vmatprep.subr.mxu0 0.0
    %433 = vmatpush2.msra.mxu0 0.0
    %434 = vmatprep.subr.mxu0 0.0
    %435 = vmatpush2.msra.mxu0 0.0
    %436 = vmatprep.subr.mxu0 0.0
    %437 = vmatpush2.msra.mxu0 0.0
    %438 = vmatprep.subr.mxu0 0.0
    %439 = vmatpush2.msra.mxu0 0.0
    %440 = vmatprep.subr.mxu0 0.0
    %441 = vmatpush2.msra.mxu0 0.0
    %442 = vmatprep.subr.mxu0 0.0
    %443 = vmatpush2.msra.mxu0 0.0
    %444 = vmatprep.subr.mxu0 0.0
    %445 = vmatpush2.msra.mxu0 0.0
    %446 = vmatprep.subr.mxu0 0.0
    %447 = vmatpush2.msra.mxu0 0.0
    %448 = vmatprep.subr.mxu0 0.0
    %449 = vmatpush2.msra.mxu0 0.0
    %450 = vmatprep.subr.mxu0 0.0
    %451 = vmatpush2.msra.mxu0 0.0
    %452 = vmatprep.subr.mxu0 0.0
    %453 = vmatpush2.msra.mxu0 0.0
    %454 = vmatprep.mubr.f32.mxu0 0.0
    %455 = vmatmul.mubr.f32.gmra.mxu0 %v314
    %v456 = vpop.f32.mrf.mxu0
    %v457 = vadd.f32 %v389, %v456
    %v458 = vpop.f32.mrf.mxu0
    %459 = vdwg.mxu0
    %v460 = vlaneseq
    %v461 = vshrl.u32 %v460, 7
    %v462 = vsub.s32 2, %v461
    %v463 = vrot.slane %v144, %v462
    %v465 = vsel %vm182, 0.0, 0
    %467 = vmatprep.subr.mxu0 0.0
    %468 = vmatpush1.msra.mxu0 0.0
    %469 = vmatprep.subr.mxu0 0.0
    %470 = vmatpush1.msra.mxu0 0.0
    %471 = vmatprep.subr.mxu0 0.0
    %472 = vmatpush1.msra.mxu0 0.0
    %473 = vmatprep.subr.mxu0 0.0
    %474 = vmatpush1.msra.mxu0 0.0
    %475 = vmatprep.subr.mxu0 0.0
    %476 = vmatpush1.msra.mxu0 0.0
    %477 = vmatprep.subr.mxu0 0.0
    %478 = vmatpush1.msra.mxu0 0.0
    %479 = vmatprep.subr.mxu0 0.0
    %480 = vmatpush1.msra.mxu0 0.0
    %481 = vmatprep.subr.mxu0 0.0
    %482 = vmatpush1.msra.mxu0 0.0
    %483 = vmatprep.subr.mxu0 0.0
    %484 = vmatpush1.msra.mxu0 0.0
    %485 = vmatprep.subr.mxu0 0.0
    %486 = vmatpush1.msra.mxu0 0.0
    %487 = vmatprep.subr.mxu0 0.0
    %488 = vmatpush1.msra.mxu0 0.0
    %489 = vmatprep.subr.mxu0 0.0
    %490 = vmatpush1.msra.mxu0 0.0
    %491 = vmatprep.subr.mxu0 0.0
    %492 = vmatpush1.msra.mxu0 0.0
    %493 = vmatprep.subr.mxu0 0.0
    %494 = vmatpush1.msra.mxu0 0.0
    %495 = vmatprep.subr.mxu0 0.0
    %496 = vmatpush1.msra.mxu0 %v165
    %497 = vmatprep.subr.mxu0 0.0
    %498 = vmatpush1.msra.mxu0 %v164
    %499 = vmatprep.subr.mxu0 0.0
    %500 = vmatpush2.msra.mxu0 0.0
    %501 = vmatprep.subr.mxu0 0.0
    %502 = vmatpush2.msra.mxu0 0.0
    %503 = vmatprep.subr.mxu0 0.0
    %504 = vmatpush2.msra.mxu0 0.0
    %505 = vmatprep.subr.mxu0 0.0
    %506 = vmatpush2.msra.mxu0 0.0
    %507 = vmatprep.subr.mxu0 0.0
    %508 = vmatpush2.msra.mxu0 0.0
    %509 = vmatprep.subr.mxu0 0.0
    %510 = vmatpush2.msra.mxu0 0.0
    %511 = vmatprep.subr.mxu0 0.0
    %512 = vmatpush2.msra.mxu0 0.0
    %513 = vmatprep.subr.mxu0 0.0
    %514 = vmatpush2.msra.mxu0 0.0
    %515 = vmatprep.subr.mxu0 0.0
    %516 = vmatpush2.msra.mxu0 0.0
    %517 = vmatprep.subr.mxu0 0.0
    %518 = vmatpush2.msra.mxu0 0.0
    %519 = vmatprep.subr.mxu0 0.0
    %520 = vmatpush2.msra.mxu0 0.0
    %521 = vmatprep.subr.mxu0 0.0
    %522 = vmatpush2.msra.mxu0 0.0
    %523 = vmatprep.subr.mxu0 0.0
    %524 = vmatpush2.msra.mxu0 0.0
    %525 = vmatprep.subr.mxu0 0.0
    %526 = vmatpush2.msra.mxu0 0.0
    %527 = vmatprep.subr.mxu0 0.0
    %528 = vmatpush2.msra.mxu0 0.0
    %529 = vmatprep.subr.mxu0 0.0
    %530 = vmatpush2.msra.mxu0 0.0
    %531 = vmatprep.mubr.f32.mxu0 0.0
    %532 = vmatmul.mubr.f32.gmra.mxu0 %v465
    %v533 = vpop.f32.mrf.mxu0
    %v534 = vadd.f32 %v463, %v533
    %v535 = vpop.f32.mrf.mxu0
    %536 = vdwg.mxu0
    %v537 = vadd.f32 %v383, %v534
    %v538 = vxor.u32 %v537, 2147483648
    %v539 = vmul.f32 %v538, 1.442695
    %v540 = vpow.pop %v539
    %v541 = vadd.f32 %v540, 1.0
    %v542 = vrcp.pop %v541
    %v543 = vmul.f32 1.0, %v542
    %545 = vrot.lane.b32.xlu0 %v534, 96
    %v546 = vpop.permute.xlu0 %545
    %v548 = vmul.f32 %v543, %v546
    %550 = vrot.lane.b32.xlu0 %v548, 32
    %v551 = vpop.permute.xlu0 %550
    %v553 = vadd.f32 %v383, %v551
    %v554 = vtanh.pop %v553
    %v555 = vsub.f32 1.0, %v543
    %557 = vrot.lane.b32.xlu0 %v554, 112
    %v558 = vpop.permute.xlu0 %557
    %v560 = vmul.f32 %v555, %v558
    %v561 = vmul.f32 %v543, 0.0
    %v562 = vadd.f32 %v560, %v561
    %v563 = vlaneseq
    %v564 = vshrl.u32 %v563, 7
    %v565 = vsub.s32 3, %v564
    %v566 = vrot.slane %v144, %v565
    %567 = vmatprep.subr.mxu0 0.0
    %568 = vmatpush1.msra.mxu0 0.0
    %569 = vmatprep.subr.mxu0 0.0
    %570 = vmatpush1.msra.mxu0 0.0
    %571 = vmatprep.subr.mxu0 0.0
    %572 = vmatpush1.msra.mxu0 0.0
    %573 = vmatprep.subr.mxu0 0.0
    %574 = vmatpush1.msra.mxu0 0.0
    %575 = vmatprep.subr.mxu0 0.0
    %576 = vmatpush1.msra.mxu0 0.0
    %577 = vmatprep.subr.mxu0 0.0
    %578 = vmatpush1.msra.mxu0 0.0
    %579 = vmatprep.subr.mxu0 0.0
    %580 = vmatpush1.msra.mxu0 0.0
    %581 = vmatprep.subr.mxu0 0.0
    %582 = vmatpush1.msra.mxu0 0.0
    %583 = vmatprep.subr.mxu0 0.0
    %584 = vmatpush1.msra.mxu0 0.0
    %585 = vmatprep.subr.mxu0 0.0
    %586 = vmatpush1.msra.mxu0 0.0
    %587 = vmatprep.subr.mxu0 0.0
    %588 = vmatpush1.msra.mxu0 0.0
    %589 = vmatprep.subr.mxu0 0.0
    %590 = vmatpush1.msra.mxu0 0.0
    %591 = vmatprep.subr.mxu0 0.0
    %592 = vmatpush1.msra.mxu0 0.0
    %593 = vmatprep.subr.mxu0 0.0
    %594 = vmatpush1.msra.mxu0 0.0
    %595 = vmatprep.subr.mxu0 0.0
    %596 = vmatpush1.msra.mxu0 %v168
    %597 = vmatprep.subr.mxu0 0.0
    %598 = vmatpush1.msra.mxu0 %v167
    %599 = vmatprep.subr.mxu0 0.0
    %600 = vmatpush2.msra.mxu0 0.0
    %601 = vmatprep.subr.mxu0 0.0
    %602 = vmatpush2.msra.mxu0 0.0
    %603 = vmatprep.subr.mxu0 0.0
    %604 = vmatpush2.msra.mxu0 0.0
    %605 = vmatprep.subr.mxu0 0.0
    %606 = vmatpush2.msra.mxu0 0.0
    %607 = vmatprep.subr.mxu0 0.0
    %608 = vmatpush2.msra.mxu0 0.0
    %609 = vmatprep.subr.mxu0 0.0
    %610 = vmatpush2.msra.mxu0 0.0
    %611 = vmatprep.subr.mxu0 0.0
    %612 = vmatpush2.msra.mxu0 0.0
    %613 = vmatprep.subr.mxu0 0.0
    %614 = vmatpush2.msra.mxu0 0.0
    %615 = vmatprep.subr.mxu0 0.0
    %616 = vmatpush2.msra.mxu0 0.0
    %617 = vmatprep.subr.mxu0 0.0
    %618 = vmatpush2.msra.mxu0 0.0
    %619 = vmatprep.subr.mxu0 0.0
    %620 = vmatpush2.msra.mxu0 0.0
    %621 = vmatprep.subr.mxu0 0.0
    %622 = vmatpush2.msra.mxu0 0.0
    %623 = vmatprep.subr.mxu0 0.0
    %624 = vmatpush2.msra.mxu0 0.0
    %625 = vmatprep.subr.mxu0 0.0
    %626 = vmatpush2.msra.mxu0 0.0
    %627 = vmatprep.subr.mxu0 0.0
    %628 = vmatpush2.msra.mxu0 0.0
    %629 = vmatprep.subr.mxu0 0.0
    %630 = vmatpush2.msra.mxu0 0.0
    %631 = vmatprep.mubr.f32.mxu0 0.0
    %632 = vmatmul.mubr.f32.gmra.mxu0 %v465
    %v633 = vpop.f32.mrf.mxu0
    %v634 = vadd.f32 %v566, %v633
    %v635 = vpop.f32.mrf.mxu0
    %636 = vdwg.mxu0
    %v637 = vadd.f32 %v457, %v634
    %v638 = vxor.u32 %v637, 2147483648
    %v639 = vmul.f32 %v638, 1.442695
    %v640 = vpow.pop %v639
    %v641 = vadd.f32 %v640, 1.0
    %v642 = vrcp.pop %v641
    %v643 = vmul.f32 1.0, %v642
    %645 = vrot.lane.b32.xlu0 %v634, 96
    %v646 = vpop.permute.xlu0 %645
    %v648 = vmul.f32 %v643, %v646
    %650 = vrot.lane.b32.xlu0 %v648, 32
    %v651 = vpop.permute.xlu0 %650
    %v653 = vadd.f32 %v457, %v651
    %v654 = vtanh.pop %v653
    %v655 = vsub.f32 1.0, %v643
    %657 = vrot.lane.b32.xlu0 %v654, 112
    %v658 = vpop.permute.xlu0 %657
    %v660 = vmul.f32 %v655, %v658
    %v661 = vmul.f32 %v643, 0.0
    %v662 = vadd.f32 %v660, %v661
    %664 = vrot.lane.b32.xlu0 %v562, 112
    %v665 = vpop.permute.xlu0 %664
    %v666 = vsel %vm182, %v665, 0
    %668 = vmatprep.subr.mxu0 0.0
    %669 = vmatpush1.msra.mxu0 0.0
    %670 = vmatprep.subr.mxu0 0.0
    %671 = vmatpush1.msra.mxu0 0.0
    %672 = vmatprep.subr.mxu0 0.0
    %673 = vmatpush1.msra.mxu0 0.0
    %674 = vmatprep.subr.mxu0 0.0
    %675 = vmatpush1.msra.mxu0 0.0
    %676 = vmatprep.subr.mxu0 0.0
    %677 = vmatpush1.msra.mxu0 0.0
    %678 = vmatprep.subr.mxu0 0.0
    %679 = vmatpush1.msra.mxu0 0.0
    %680 = vmatprep.subr.mxu0 0.0
    %681 = vmatpush1.msra.mxu0 0.0
    %682 = vmatprep.subr.mxu0 0.0
    %683 = vmatpush1.msra.mxu0 0.0
    %684 = vmatprep.subr.mxu0 0.0
    %685 = vmatpush1.msra.mxu0 0.0
    %686 = vmatprep.subr.mxu0 0.0
    %687 = vmatpush1.msra.mxu0 0.0
    %688 = vmatprep.subr.mxu0 0.0
    %689 = vmatpush1.msra.mxu0 0.0
    %690 = vmatprep.subr.mxu0 0.0
    %691 = vmatpush1.msra.mxu0 0.0
    %692 = vmatprep.subr.mxu0 0.0
    %693 = vmatpush1.msra.mxu0 0.0
    %694 = vmatprep.subr.mxu0 0.0
    %695 = vmatpush1.msra.mxu0 0.0
    %696 = vmatprep.subr.mxu0 0.0
    %697 = vmatpush1.msra.mxu0 %v165
    %698 = vmatprep.subr.mxu0 0.0
    %699 = vmatpush1.msra.mxu0 %v164
    %700 = vmatprep.subr.mxu0 0.0
    %701 = vmatpush2.msra.mxu0 0.0
    %702 = vmatprep.subr.mxu0 0.0
    %703 = vmatpush2.msra.mxu0 0.0
    %704 = vmatprep.subr.mxu0 0.0
    %705 = vmatpush2.msra.mxu0 0.0
    %706 = vmatprep.subr.mxu0 0.0
    %707 = vmatpush2.msra.mxu0 0.0
    %708 = vmatprep.subr.mxu0 0.0
    %709 = vmatpush2.msra.mxu0 0.0
    %710 = vmatprep.subr.mxu0 0.0
    %711 = vmatpush2.msra.mxu0 0.0
    %712 = vmatprep.subr.mxu0 0.0
    %713 = vmatpush2.msra.mxu0 0.0
    %714 = vmatprep.subr.mxu0 0.0
    %715 = vmatpush2.msra.mxu0 0.0
    %716 = vmatprep.subr.mxu0 0.0
    %717 = vmatpush2.msra.mxu0 0.0
    %718 = vmatprep.subr.mxu0 0.0
    %719 = vmatpush2.msra.mxu0 0.0
    %720 = vmatprep.subr.mxu0 0.0
    %721 = vmatpush2.msra.mxu0 0.0
    %722 = vmatprep.subr.mxu0 0.0
    %723 = vmatpush2.msra.mxu0 0.0
    %724 = vmatprep.subr.mxu0 0.0
    %725 = vmatpush2.msra.mxu0 0.0
    %726 = vmatprep.subr.mxu0 0.0
    %727 = vmatpush2.msra.mxu0 0.0
    %728 = vmatprep.subr.mxu0 0.0
    %729 = vmatpush2.msra.mxu0 0.0
    %730 = vmatprep.subr.mxu0 0.0
    %731 = vmatpush2.msra.mxu0 0.0
    %732 = vmatprep.mubr.f32.mxu0 0.0
    %733 = vmatmul.mubr.f32.gmra.mxu0 %v666
    %v734 = vpop.f32.mrf.mxu0
    %v735 = vadd.f32 %v463, %v734
    %v736 = vpop.f32.mrf.mxu0
    %737 = vdwg.mxu0
    %v738 = vadd.f32 %v383, %v735
    %v739 = vxor.u32 %v738, 2147483648
    %v740 = vmul.f32 %v739, 1.442695
    %v741 = vpow.pop %v740
    %v742 = vadd.f32 %v741, 1.0
    %v743 = vrcp.pop %v742
    %v744 = vmul.f32 1.0, %v743
    %746 = vrot.lane.b32.xlu0 %v735, 96
    %v747 = vpop.permute.xlu0 %746
    %v749 = vmul.f32 %v744, %v747
    %751 = vrot.lane.b32.xlu0 %v749, 32
    %v752 = vpop.permute.xlu0 %751
    %v754 = vadd.f32 %v383, %v752
    %v755 = vtanh.pop %v754
    %v756 = vsub.f32 1.0, %v744
    %758 = vrot.lane.b32.xlu0 %v755, 112
    %v759 = vpop.permute.xlu0 %758
    %v761 = vmul.f32 %v756, %v759
    %v762 = vmul.f32 %v744, %v562
    %v763 = vadd.f32 %v761, %v762
    %765 = vrot.lane.b32.xlu0 %v662, 112
    %v766 = vpop.permute.xlu0 %765
    %v767 = vsel %vm182, %v766, 0
    %769 = vmatprep.subr.mxu0 0.0
    %770 = vmatpush1.msra.mxu0 0.0
    %771 = vmatprep.subr.mxu0 0.0
    %772 = vmatpush1.msra.mxu0 0.0
    %773 = vmatprep.subr.mxu0 0.0
    %774 = vmatpush1.msra.mxu0 0.0
    %775 = vmatprep.subr.mxu0 0.0
    %776 = vmatpush1.msra.mxu0 0.0
    %777 = vmatprep.subr.mxu0 0.0
    %778 = vmatpush1.msra.mxu0 0.0
    %779 = vmatprep.subr.mxu0 0.0
    %780 = vmatpush1.msra.mxu0 0.0
    %781 = vmatprep.subr.mxu0 0.0
    %782 = vmatpush1.msra.mxu0 0.0
    %783 = vmatprep.subr.mxu0 0.0
    %784 = vmatpush1.msra.mxu0 0.0
    %785 = vmatprep.subr.mxu0 0.0
    %786 = vmatpush1.msra.mxu0 0.0
    %787 = vmatprep.subr.mxu0 0.0
    %788 = vmatpush1.msra.mxu0 0.0
    %789 = vmatprep.subr.mxu0 0.0
    %790 = vmatpush1.msra.mxu0 0.0
    %791 = vmatprep.subr.mxu0 0.0
    %792 = vmatpush1.msra.mxu0 0.0
    %793 = vmatprep.subr.mxu0 0.0
    %794 = vmatpush1.msra.mxu0 0.0
    %795 = vmatprep.subr.mxu0 0.0
    %796 = vmatpush1.msra.mxu0 0.0
    %797 = vmatprep.subr.mxu0 0.0
    %798 = vmatpush1.msra.mxu0 %v168
    %799 = vmatprep.subr.mxu0 0.0
    %800 = vmatpush1.msra.mxu0 %v167
    %801 = vmatprep.subr.mxu0 0.0
    %802 = vmatpush2.msra.mxu0 0.0
    %803 = vmatprep.subr.mxu0 0.0
    %804 = vmatpush2.msra.mxu0 0.0
    %805 = vmatprep.subr.mxu0 0.0
    %806 = vmatpush2.msra.mxu0 0.0
    %807 = vmatprep.subr.mxu0 0.0
    %808 = vmatpush2.msra.mxu0 0.0
    %809 = vmatprep.subr.mxu0 0.0
    %810 = vmatpush2.msra.mxu0 0.0
    %811 = vmatprep.subr.mxu0 0.0
    %812 = vmatpush2.msra.mxu0 0.0
    %813 = vmatprep.subr.mxu0 0.0
    %814 = vmatpush2.msra.mxu0 0.0
    %815 = vmatprep.subr.mxu0 0.0
    %816 = vmatpush2.msra.mxu0 0.0
    %817 = vmatprep.subr.mxu0 0.0
    %818 = vmatpush2.msra.mxu0 0.0
    %819 = vmatprep.subr.mxu0 0.0
    %820 = vmatpush2.msra.mxu0 0.0
    %821 = vmatprep.subr.mxu0 0.0
    %822 = vmatpush2.msra.mxu0 0.0
    %823 = vmatprep.subr.mxu0 0.0
    %824 = vmatpush2.msra.mxu0 0.0
    %825 = vmatprep.subr.mxu0 0.0
    %826 = vmatpush2.msra.mxu0 0.0
    %827 = vmatprep.subr.mxu0 0.0
    %828 = vmatpush2.msra.mxu0 0.0
    %829 = vmatprep.subr.mxu0 0.0
    %830 = vmatpush2.msra.mxu0 0.0
    %831 = vmatprep.subr.mxu0 0.0
    %832 = vmatpush2.msra.mxu0 0.0
    %833 = vmatprep.mubr.f32.mxu0 0.0
    %834 = vmatmul.mubr.f32.gmra.mxu0 %v767
    %v835 = vpop.f32.mrf.mxu0
    %v836 = vadd.f32 %v566, %v835
    %v837 = vpop.f32.mrf.mxu0
    %838 = vdwg.mxu0
    %v839 = vadd.f32 %v457, %v836
    %v840 = vxor.u32 %v839, 2147483648
    %v841 = vmul.f32 %v840, 1.442695
    %v842 = vpow.pop %v841
    %v843 = vadd.f32 %v842, 1.0
    %v844 = vrcp.pop %v843
    %v845 = vmul.f32 1.0, %v844
    %847 = vrot.lane.b32.xlu0 %v836, 96
    %v848 = vpop.permute.xlu0 %847
    %v850 = vmul.f32 %v845, %v848
    %852 = vrot.lane.b32.xlu0 %v850, 32
    %v853 = vpop.permute.xlu0 %852
    %v855 = vadd.f32 %v457, %v853
    %v856 = vtanh.pop %v855
    %v857 = vsub.f32 1.0, %v845
    %859 = vrot.lane.b32.xlu0 %v856, 112
    %v860 = vpop.permute.xlu0 %859
    %v862 = vmul.f32 %v857, %v860
    %v863 = vmul.f32 %v845, %v662
    %v864 = vadd.f32 %v862, %v863
    %866 = vrot.lane.b32.xlu0 %v763, 112
    %v867 = vpop.permute.xlu0 %866
    %v868 = vsel %vm182, %v867, 0
    %870 = vmatprep.subr.mxu0 0.0
    %871 = vmatpush1.msra.mxu0 0.0
    %872 = vmatprep.subr.mxu0 0.0
    %873 = vmatpush1.msra.mxu0 0.0
    %874 = vmatprep.subr.mxu0 0.0
    %875 = vmatpush1.msra.mxu0 0.0
    %876 = vmatprep.subr.mxu0 0.0
    %877 = vmatpush1.msra.mxu0 0.0
    %878 = vmatprep.subr.mxu0 0.0
    %879 = vmatpush1.msra.mxu0 0.0
    %880 = vmatprep.subr.mxu0 0.0
    %881 = vmatpush1.msra.mxu0 0.0
    %882 = vmatprep.subr.mxu0 0.0
    %883 = vmatpush1.msra.mxu0 0.0
    %884 = vmatprep.subr.mxu0 0.0
    %885 = vmatpush1.msra.mxu0 0.0
    %886 = vmatprep.subr.mxu0 0.0
    %887 = vmatpush1.msra.mxu0 0.0
    %888 = vmatprep.subr.mxu0 0.0
    %889 = vmatpush1.msra.mxu0 0.0
    %890 = vmatprep.subr.mxu0 0.0
    %891 = vmatpush1.msra.mxu0 0.0
    %892 = vmatprep.subr.mxu0 0.0
    %893 = vmatpush1.msra.mxu0 0.0
    %894 = vmatprep.subr.mxu0 0.0
    %895 = vmatpush1.msra.mxu0 0.0
    %896 = vmatprep.subr.mxu0 0.0
    %897 = vmatpush1.msra.mxu0 0.0
    %898 = vmatprep.subr.mxu0 0.0
    %899 = vmatpush1.msra.mxu0 %v165
    %900 = vmatprep.subr.mxu0 0.0
    %901 = vmatpush1.msra.mxu0 %v164
    %902 = vmatprep.subr.mxu0 0.0
    %903 = vmatpush2.msra.mxu0 0.0
    %904 = vmatprep.subr.mxu0 0.0
    %905 = vmatpush2.msra.mxu0 0.0
    %906 = vmatprep.subr.mxu0 0.0
    %907 = vmatpush2.msra.mxu0 0.0
    %908 = vmatprep.subr.mxu0 0.0
    %909 = vmatpush2.msra.mxu0 0.0
    %910 = vmatprep.subr.mxu0 0.0
    %911 = vmatpush2.msra.mxu0 0.0
    %912 = vmatprep.subr.mxu0 0.0
    %913 = vmatpush2.msra.mxu0 0.0
    %914 = vmatprep.subr.mxu0 0.0
    %915 = vmatpush2.msra.mxu0 0.0
    %916 = vmatprep.subr.mxu0 0.0
    %917 = vmatpush2.msra.mxu0 0.0
    %918 = vmatprep.subr.mxu0 0.0
    %919 = vmatpush2.msra.mxu0 0.0
    %920 = vmatprep.subr.mxu0 0.0
    %921 = vmatpush2.msra.mxu0 0.0
    %922 = vmatprep.subr.mxu0 0.0
    %923 = vmatpush2.msra.mxu0 0.0
    %924 = vmatprep.subr.mxu0 0.0
    %925 = vmatpush2.msra.mxu0 0.0
    %926 = vmatprep.subr.mxu0 0.0
    %927 = vmatpush2.msra.mxu0 0.0
    %928 = vmatprep.subr.mxu0 0.0
    %929 = vmatpush2.msra.mxu0 0.0
    %930 = vmatprep.subr.mxu0 0.0
    %931 = vmatpush2.msra.mxu0 0.0
    %932 = vmatprep.subr.mxu0 0.0
    %933 = vmatpush2.msra.mxu0 0.0
    %934 = vmatprep.mubr.f32.mxu0 0.0
    %935 = vmatmul.mubr.f32.gmra.mxu0 %v868
    %v936 = vpop.f32.mrf.mxu0
    %v937 = vadd.f32 %v463, %v936
    %v938 = vpop.f32.mrf.mxu0
    %939 = vdwg.mxu0
    %v940 = vadd.f32 %v383, %v937
    %v941 = vxor.u32 %v940, 2147483648
    %v942 = vmul.f32 %v941, 1.442695
    %v943 = vpow.pop %v942
    %v944 = vadd.f32 %v943, 1.0
    %v945 = vrcp.pop %v944
    %v946 = vmul.f32 1.0, %v945
    %948 = vrot.lane.b32.xlu0 %v937, 96
    %v949 = vpop.permute.xlu0 %948
    %v951 = vmul.f32 %v946, %v949
    %953 = vrot.lane.b32.xlu0 %v951, 32
    %v954 = vpop.permute.xlu0 %953
    %v956 = vadd.f32 %v383, %v954
    %v957 = vtanh.pop %v956
    %v958 = vsub.f32 1.0, %v946
    %960 = vrot.lane.b32.xlu0 %v957, 112
    %v961 = vpop.permute.xlu0 %960
    %v963 = vmul.f32 %v958, %v961
    %v964 = vmul.f32 %v946, %v763
    %v965 = vadd.f32 %v963, %v964
    %967 = vrot.lane.b32.xlu0 %v864, 112
    %v968 = vpop.permute.xlu0 %967
    %v969 = vsel %vm182, %v968, 0
    %971 = vmatprep.subr.mxu0 0.0
    %972 = vmatpush1.msra.mxu0 0.0
    %973 = vmatprep.subr.mxu0 0.0
    %974 = vmatpush1.msra.mxu0 0.0
    %975 = vmatprep.subr.mxu0 0.0
    %976 = vmatpush1.msra.mxu0 0.0
    %977 = vmatprep.subr.mxu0 0.0
    %978 = vmatpush1.msra.mxu0 0.0
    %979 = vmatprep.subr.mxu0 0.0
    %980 = vmatpush1.msra.mxu0 0.0
    %981 = vmatprep.subr.mxu0 0.0
    %982 = vmatpush1.msra.mxu0 0.0
    %983 = vmatprep.subr.mxu0 0.0
    %984 = vmatpush1.msra.mxu0 0.0
    %985 = vmatprep.subr.mxu0 0.0
    %986 = vmatpush1.msra.mxu0 0.0
    %987 = vmatprep.subr.mxu0 0.0
    %988 = vmatpush1.msra.mxu0 0.0
    %989 = vmatprep.subr.mxu0 0.0
    %990 = vmatpush1.msra.mxu0 0.0
    %991 = vmatprep.subr.mxu0 0.0
    %992 = vmatpush1.msra.mxu0 0.0
    %993 = vmatprep.subr.mxu0 0.0
    %994 = vmatpush1.msra.mxu0 0.0
    %995 = vmatprep.subr.mxu0 0.0
    %996 = vmatpush1.msra.mxu0 0.0
    %997 = vmatprep.subr.mxu0 0.0
    %998 = vmatpush1.msra.mxu0 0.0
    %999 = vmatprep.subr.mxu0 0.0
    %1000 = vmatpush1.msra.mxu0 %v168
    %1001 = vmatprep.subr.mxu0 0.0
    %1002 = vmatpush1.msra.mxu0 %v167
    %1003 = vmatprep.subr.mxu0 0.0
    %1004 = vmatpush2.msra.mxu0 0.0
    %1005 = vmatprep.subr.mxu0 0.0
    %1006 = vmatpush2.msra.mxu0 0.0
    %1007 = vmatprep.subr.mxu0 0.0
    %1008 = vmatpush2.msra.mxu0 0.0
    %1009 = vmatprep.subr.mxu0 0.0
    %1010 = vmatpush2.msra.mxu0 0.0
    %1011 = vmatprep.subr.mxu0 0.0
    %1012 = vmatpush2.msra.mxu0 0.0
    %1013 = vmatprep.subr.mxu0 0.0
    %1014 = vmatpush2.msra.mxu0 0.0
    %1015 = vmatprep.subr.mxu0 0.0
    %1016 = vmatpush2.msra.mxu0 0.0
    %1017 = vmatprep.subr.mxu0 0.0
    %1018 = vmatpush2.msra.mxu0 0.0
    %1019 = vmatprep.subr.mxu0 0.0
    %1020 = vmatpush2.msra.mxu0 0.0
    %1021 = vmatprep.subr.mxu0 0.0
    %1022 = vmatpush2.msra.mxu0 0.0
    %1023 = vmatprep.subr.mxu0 0.0
    %1024 = vmatpush2.msra.mxu0 0.0
    %1025 = vmatprep.subr.mxu0 0.0
    %1026 = vmatpush2.msra.mxu0 0.0
    %1027 = vmatprep.subr.mxu0 0.0
    %1028 = vmatpush2.msra.mxu0 0.0
    %1029 = vmatprep.subr.mxu0 0.0
    %1030 = vmatpush2.msra.mxu0 0.0
    %1031 = vmatprep.subr.mxu0 0.0
    %1032 = vmatpush2.msra.mxu0 0.0
    %1033 = vmatprep.subr.mxu0 0.0
    %1034 = vmatpush2.msra.mxu0 0.0
    %1035 = vmatprep.mubr.f32.mxu0 0.0
    %1036 = vmatmul.mubr.f32.gmra.mxu0 %v969
    %v1037 = vpop.f32.mrf.mxu0
    %v1038 = vadd.f32 %v566, %v1037
    %v1039 = vpop.f32.mrf.mxu0
    %1040 = vdwg.mxu0
    %v1041 = vadd.f32 %v457, %v1038
    %v1042 = vxor.u32 %v1041, 2147483648
    %v1043 = vmul.f32 %v1042, 1.442695
    %v1044 = vpow.pop %v1043
    %v1045 = vadd.f32 %v1044, 1.0
    %v1046 = vrcp.pop %v1045
    %v1047 = vmul.f32 1.0, %v1046
    %1049 = vrot.lane.b32.xlu0 %v1038, 96
    %v1050 = vpop.permute.xlu0 %1049
    %v1052 = vmul.f32 %v1047, %v1050
    %1054 = vrot.lane.b32.xlu0 %v1052, 32
    %v1055 = vpop.permute.xlu0 %1054
    %v1057 = vadd.f32 %v457, %v1055
    %v1058 = vtanh.pop %v1057
    %v1059 = vsub.f32 1.0, %v1047
    %1061 = vrot.lane.b32.xlu0 %v1058, 112
    %v1062 = vpop.permute.xlu0 %1061
    %v1064 = vmul.f32 %v1059, %v1062
    %v1065 = vmul.f32 %v1047, %v864
    %v1066 = vadd.f32 %v1064, %v1065
    %1068 = vrot.lane.b32.xlu0 %v965, 112
    %v1069 = vpop.permute.xlu0 %1068
    %v1070 = vsel %vm182, %v1069, 0
    %1072 = vmatprep.subr.mxu0 0.0
    %1073 = vmatpush1.msra.mxu0 0.0
    %1074 = vmatprep.subr.mxu0 0.0
    %1075 = vmatpush1.msra.mxu0 0.0
    %1076 = vmatprep.subr.mxu0 0.0
    %1077 = vmatpush1.msra.mxu0 0.0
    %1078 = vmatprep.subr.mxu0 0.0
    %1079 = vmatpush1.msra.mxu0 0.0
    %1080 = vmatprep.subr.mxu0 0.0
    %1081 = vmatpush1.msra.mxu0 0.0
    %1082 = vmatprep.subr.mxu0 0.0
    %1083 = vmatpush1.msra.mxu0 0.0
    %1084 = vmatprep.subr.mxu0 0.0
    %1085 = vmatpush1.msra.mxu0 0.0
    %1086 = vmatprep.subr.mxu0 0.0
    %1087 = vmatpush1.msra.mxu0 0.0
    %1088 = vmatprep.subr.mxu0 0.0
    %1089 = vmatpush1.msra.mxu0 0.0
    %1090 = vmatprep.subr.mxu0 0.0
    %1091 = vmatpush1.msra.mxu0 0.0
    %1092 = vmatprep.subr.mxu0 0.0
    %1093 = vmatpush1.msra.mxu0 0.0
    %1094 = vmatprep.subr.mxu0 0.0
    %1095 = vmatpush1.msra.mxu0 0.0
    %1096 = vmatprep.subr.mxu0 0.0
    %1097 = vmatpush1.msra.mxu0 0.0
    %1098 = vmatprep.subr.mxu0 0.0
    %1099 = vmatpush1.msra.mxu0 0.0
    %1100 = vmatprep.subr.mxu0 0.0
    %1101 = vmatpush1.msra.mxu0 %v165
    %1102 = vmatprep.subr.mxu0 0.0
    %1103 = vmatpush1.msra.mxu0 %v164
    %1104 = vmatprep.subr.mxu0 0.0
    %1105 = vmatpush2.msra.mxu0 0.0
    %1106 = vmatprep.subr.mxu0 0.0
    %1107 = vmatpush2.msra.mxu0 0.0
    %1108 = vmatprep.subr.mxu0 0.0
    %1109 = vmatpush2.msra.mxu0 0.0
    %1110 = vmatprep.subr.mxu0 0.0
    %1111 = vmatpush2.msra.mxu0 0.0
    %1112 = vmatprep.subr.mxu0 0.0
    %1113 = vmatpush2.msra.mxu0 0.0
    %1114 = vmatprep.subr.mxu0 0.0
    %1115 = vmatpush2.msra.mxu0 0.0
    %1116 = vmatprep.subr.mxu0 0.0
    %1117 = vmatpush2.msra.mxu0 0.0
    %1118 = vmatprep.subr.mxu0 0.0
    %1119 = vmatpush2.msra.mxu0 0.0
    %1120 = vmatprep.subr.mxu0 0.0
    %1121 = vmatpush2.msra.mxu0 0.0
    %1122 = vmatprep.subr.mxu0 0.0
    %1123 = vmatpush2.msra.mxu0 0.0
    %1124 = vmatprep.subr.mxu0 0.0
    %1125 = vmatpush2.msra.mxu0 0.0
    %1126 = vmatprep.subr.mxu0 0.0
    %1127 = vmatpush2.msra.mxu0 0.0
    %1128 = vmatprep.subr.mxu0 0.0
    %1129 = vmatpush2.msra.mxu0 0.0
    %1130 = vmatprep.subr.mxu0 0.0
    %1131 = vmatpush2.msra.mxu0 0.0
    %1132 = vmatprep.subr.mxu0 0.0
    %1133 = vmatpush2.msra.mxu0 0.0
    %1134 = vmatprep.subr.mxu0 0.0
    %1135 = vmatpush2.msra.mxu0 0.0
    %1136 = vmatprep.mubr.f32.mxu0 0.0
    %1137 = vmatmul.mubr.f32.gmra.mxu0 %v1070
    %v1138 = vpop.f32.mrf.mxu0
    %v1139 = vadd.f32 %v463, %v1138
    %v1140 = vpop.f32.mrf.mxu0
    %1141 = vdwg.mxu0
    %v1142 = vadd.f32 %v383, %v1139
    %v1143 = vxor.u32 %v1142, 2147483648
    %v1144 = vmul.f32 %v1143, 1.442695
    %v1145 = vpow.pop %v1144
    %v1146 = vadd.f32 %v1145, 1.0
    %v1147 = vrcp.pop %v1146
    %v1148 = vmul.f32 1.0, %v1147
    %1150 = vrot.lane.b32.xlu0 %v1139, 96
    %v1151 = vpop.permute.xlu0 %1150
    %v1153 = vmul.f32 %v1148, %v1151
    %1155 = vrot.lane.b32.xlu0 %v1153, 32
    %v1156 = vpop.permute.xlu0 %1155
    %v1158 = vadd.f32 %v383, %v1156
    %v1159 = vtanh.pop %v1158
    %v1160 = vsub.f32 1.0, %v1148
    %1162 = vrot.lane.b32.xlu0 %v1159, 112
    %v1163 = vpop.permute.xlu0 %1162
    %v1165 = vmul.f32 %v1160, %v1163
    %v1166 = vmul.f32 %v1148, %v965
    %v1167 = vadd.f32 %v1165, %v1166
    %1169 = vrot.lane.b32.xlu0 %v1066, 112
    %v1170 = vpop.permute.xlu0 %1169
    %v1171 = vsel %vm182, %v1170, 0
    %1173 = vmatprep.subr.mxu0 0.0
    %1174 = vmatpush1.msra.mxu0 0.0
    %1175 = vmatprep.subr.mxu0 0.0
    %1176 = vmatpush1.msra.mxu0 0.0
    %1177 = vmatprep.subr.mxu0 0.0
    %1178 = vmatpush1.msra.mxu0 0.0
    %1179 = vmatprep.subr.mxu0 0.0
    %1180 = vmatpush1.msra.mxu0 0.0
    %1181 = vmatprep.subr.mxu0 0.0
    %1182 = vmatpush1.msra.mxu0 0.0
    %1183 = vmatprep.subr.mxu0 0.0
    %1184 = vmatpush1.msra.mxu0 0.0
    %1185 = vmatprep.subr.mxu0 0.0
    %1186 = vmatpush1.msra.mxu0 0.0
    %1187 = vmatprep.subr.mxu0 0.0
    %1188 = vmatpush1.msra.mxu0 0.0
    %1189 = vmatprep.subr.mxu0 0.0
    %1190 = vmatpush1.msra.mxu0 0.0
    %1191 = vmatprep.subr.mxu0 0.0
    %1192 = vmatpush1.msra.mxu0 0.0
    %1193 = vmatprep.subr.mxu0 0.0
    %1194 = vmatpush1.msra.mxu0 0.0
    %1195 = vmatprep.subr.mxu0 0.0
    %1196 = vmatpush1.msra.mxu0 0.0
    %1197 = vmatprep.subr.mxu0 0.0
    %1198 = vmatpush1.msra.mxu0 0.0
    %1199 = vmatprep.subr.mxu0 0.0
    %1200 = vmatpush1.msra.mxu0 0.0
    %1201 = vmatprep.subr.mxu0 0.0
    %1202 = vmatpush1.msra.mxu0 %v168
    %1203 = vmatprep.subr.mxu0 0.0
    %1204 = vmatpush1.msra.mxu0 %v167
    %1205 = vmatprep.subr.mxu0 0.0
    %1206 = vmatpush2.msra.mxu0 0.0
    %1207 = vmatprep.subr.mxu0 0.0
    %1208 = vmatpush2.msra.mxu0 0.0
    %1209 = vmatprep.subr.mxu0 0.0
    %1210 = vmatpush2.msra.mxu0 0.0
    %1211 = vmatprep.subr.mxu0 0.0
    %1212 = vmatpush2.msra.mxu0 0.0
    %1213 = vmatprep.subr.mxu0 0.0
    %1214 = vmatpush2.msra.mxu0 0.0
    %1215 = vmatprep.subr.mxu0 0.0
    %1216 = vmatpush2.msra.mxu0 0.0
    %1217 = vmatprep.subr.mxu0 0.0
    %1218 = vmatpush2.msra.mxu0 0.0
    %1219 = vmatprep.subr.mxu0 0.0
    %1220 = vmatpush2.msra.mxu0 0.0
    %1221 = vmatprep.subr.mxu0 0.0
    %1222 = vmatpush2.msra.mxu0 0.0
    %1223 = vmatprep.subr.mxu0 0.0
    %1224 = vmatpush2.msra.mxu0 0.0
    %1225 = vmatprep.subr.mxu0 0.0
    %1226 = vmatpush2.msra.mxu0 0.0
    %1227 = vmatprep.subr.mxu0 0.0
    %1228 = vmatpush2.msra.mxu0 0.0
    %1229 = vmatprep.subr.mxu0 0.0
    %1230 = vmatpush2.msra.mxu0 0.0
    %1231 = vmatprep.subr.mxu0 0.0
    %1232 = vmatpush2.msra.mxu0 0.0
    %1233 = vmatprep.subr.mxu0 0.0
    %1234 = vmatpush2.msra.mxu0 0.0
    %1235 = vmatprep.subr.mxu0 0.0
    %1236 = vmatpush2.msra.mxu0 0.0
    %1237 = vmatprep.mubr.f32.mxu0 0.0
    %1238 = vmatmul.mubr.f32.gmra.mxu0 %v1171
    %v1239 = vpop.f32.mrf.mxu0
    %v1240 = vadd.f32 %v566, %v1239
    %v1241 = vpop.f32.mrf.mxu0
    %1242 = vdwg.mxu0
    %v1243 = vadd.f32 %v457, %v1240
    %v1244 = vxor.u32 %v1243, 2147483648
    %v1245 = vmul.f32 %v1244, 1.442695
    %v1246 = vpow.pop %v1245
    %v1247 = vadd.f32 %v1246, 1.0
    %v1248 = vrcp.pop %v1247
    %v1249 = vmul.f32 1.0, %v1248
    %1251 = vrot.lane.b32.xlu0 %v1240, 96
    %v1252 = vpop.permute.xlu0 %1251
    %v1254 = vmul.f32 %v1249, %v1252
    %1256 = vrot.lane.b32.xlu0 %v1254, 32
    %v1257 = vpop.permute.xlu0 %1256
    %v1259 = vadd.f32 %v457, %v1257
    %v1260 = vtanh.pop %v1259
    %v1261 = vsub.f32 1.0, %v1249
    %1263 = vrot.lane.b32.xlu0 %v1260, 112
    %v1264 = vpop.permute.xlu0 %1263
    %v1266 = vmul.f32 %v1261, %v1264
    %v1267 = vmul.f32 %v1249, %v1066
    %v1268 = vadd.f32 %v1266, %v1267
    %1270 = vrot.lane.b32.xlu0 %v1167, 112
    %v1271 = vpop.permute.xlu0 %1270
    %v1272 = vsel %vm182, %v1271, 0
    %1274 = vmatprep.subr.mxu0 0.0
    %1275 = vmatpush1.msra.mxu0 0.0
    %1276 = vmatprep.subr.mxu0 0.0
    %1277 = vmatpush1.msra.mxu0 0.0
    %1278 = vmatprep.subr.mxu0 0.0
    %1279 = vmatpush1.msra.mxu0 0.0
    %1280 = vmatprep.subr.mxu0 0.0
    %1281 = vmatpush1.msra.mxu0 0.0
    %1282 = vmatprep.subr.mxu0 0.0
    %1283 = vmatpush1.msra.mxu0 0.0
    %1284 = vmatprep.subr.mxu0 0.0
    %1285 = vmatpush1.msra.mxu0 0.0
    %1286 = vmatprep.subr.mxu0 0.0
    %1287 = vmatpush1.msra.mxu0 0.0
    %1288 = vmatprep.subr.mxu0 0.0
    %1289 = vmatpush1.msra.mxu0 0.0
    %1290 = vmatprep.subr.mxu0 0.0
    %1291 = vmatpush1.msra.mxu0 0.0
    %1292 = vmatprep.subr.mxu0 0.0
    %1293 = vmatpush1.msra.mxu0 0.0
    %1294 = vmatprep.subr.mxu0 0.0
    %1295 = vmatpush1.msra.mxu0 0.0
    %1296 = vmatprep.subr.mxu0 0.0
    %1297 = vmatpush1.msra.mxu0 0.0
    %1298 = vmatprep.subr.mxu0 0.0
    %1299 = vmatpush1.msra.mxu0 0.0
    %1300 = vmatprep.subr.mxu0 0.0
    %1301 = vmatpush1.msra.mxu0 0.0
    %1302 = vmatprep.subr.mxu0 0.0
    %1303 = vmatpush1.msra.mxu0 %v165
    %1304 = vmatprep.subr.mxu0 0.0
    %1305 = vmatpush1.msra.mxu0 %v164
    %1306 = vmatprep.subr.mxu0 0.0
    %1307 = vmatpush2.msra.mxu0 0.0
    %1308 = vmatprep.subr.mxu0 0.0
    %1309 = vmatpush2.msra.mxu0 0.0
    %1310 = vmatprep.subr.mxu0 0.0
    %1311 = vmatpush2.msra.mxu0 0.0
    %1312 = vmatprep.subr.mxu0 0.0
    %1313 = vmatpush2.msra.mxu0 0.0
    %1314 = vmatprep.subr.mxu0 0.0
    %1315 = vmatpush2.msra.mxu0 0.0
    %1316 = vmatprep.subr.mxu0 0.0
    %1317 = vmatpush2.msra.mxu0 0.0
    %1318 = vmatprep.subr.mxu0 0.0
    %1319 = vmatpush2.msra.mxu0 0.0
    %1320 = vmatprep.subr.mxu0 0.0
    %1321 = vmatpush2.msra.mxu0 0.0
    %1322 = vmatprep.subr.mxu0 0.0
    %1323 = vmatpush2.msra.mxu0 0.0
    %1324 = vmatprep.subr.mxu0 0.0
    %1325 = vmatpush2.msra.mxu0 0.0
    %1326 = vmatprep.subr.mxu0 0.0
    %1327 = vmatpush2.msra.mxu0 0.0
    %1328 = vmatprep.subr.mxu0 0.0
    %1329 = vmatpush2.msra.mxu0 0.0
    %1330 = vmatprep.subr.mxu0 0.0
    %1331 = vmatpush2.msra.mxu0 0.0
    %1332 = vmatprep.subr.mxu0 0.0
    %1333 = vmatpush2.msra.mxu0 0.0
    %1334 = vmatprep.subr.mxu0 0.0
    %1335 = vmatpush2.msra.mxu0 0.0
    %1336 = vmatprep.subr.mxu0 0.0
    %1337 = vmatpush2.msra.mxu0 0.0
    %1338 = vmatprep.mubr.f32.mxu0 0.0
    %1339 = vmatmul.mubr.f32.gmra.mxu0 %v1272
    %v1340 = vpop.f32.mrf.mxu0
    %v1341 = vadd.f32 %v463, %v1340
    %v1342 = vpop.f32.mrf.mxu0
    %1343 = vdwg.mxu0
    %v1344 = vadd.f32 %v383, %v1341
    %v1345 = vxor.u32 %v1344, 2147483648
    %v1346 = vmul.f32 %v1345, 1.442695
    %v1347 = vpow.pop %v1346
    %v1348 = vadd.f32 %v1347, 1.0
    %v1349 = vrcp.pop %v1348
    %v1350 = vmul.f32 1.0, %v1349
    %1352 = vrot.lane.b32.xlu0 %v1341, 96
    %v1353 = vpop.permute.xlu0 %1352
    %v1355 = vmul.f32 %v1350, %v1353
    %1357 = vrot.lane.b32.xlu0 %v1355, 32
    %v1358 = vpop.permute.xlu0 %1357
    %v1360 = vadd.f32 %v383, %v1358
    %v1361 = vtanh.pop %v1360
    %v1362 = vsub.f32 1.0, %v1350
    %1364 = vrot.lane.b32.xlu0 %v1361, 112
    %v1365 = vpop.permute.xlu0 %1364
    %v1367 = vmul.f32 %v1362, %v1365
    %v1368 = vmul.f32 %v1350, %v1167
    %v1369 = vadd.f32 %v1367, %v1368
    %1371 = vrot.lane.b32.xlu0 %v1268, 112
    %v1372 = vpop.permute.xlu0 %1371
    %v1373 = vsel %vm182, %v1372, 0
    %1375 = vmatprep.subr.mxu0 0.0
    %1376 = vmatpush1.msra.mxu0 0.0
    %1377 = vmatprep.subr.mxu0 0.0
    %1378 = vmatpush1.msra.mxu0 0.0
    %1379 = vmatprep.subr.mxu0 0.0
    %1380 = vmatpush1.msra.mxu0 0.0
    %1381 = vmatprep.subr.mxu0 0.0
    %1382 = vmatpush1.msra.mxu0 0.0
    %1383 = vmatprep.subr.mxu0 0.0
    %1384 = vmatpush1.msra.mxu0 0.0
    %1385 = vmatprep.subr.mxu0 0.0
    %1386 = vmatpush1.msra.mxu0 0.0
    %1387 = vmatprep.subr.mxu0 0.0
    %1388 = vmatpush1.msra.mxu0 0.0
    %1389 = vmatprep.subr.mxu0 0.0
    %1390 = vmatpush1.msra.mxu0 0.0
    %1391 = vmatprep.subr.mxu0 0.0
    %1392 = vmatpush1.msra.mxu0 0.0
    %1393 = vmatprep.subr.mxu0 0.0
    %1394 = vmatpush1.msra.mxu0 0.0
    %1395 = vmatprep.subr.mxu0 0.0
    %1396 = vmatpush1.msra.mxu0 0.0
    %1397 = vmatprep.subr.mxu0 0.0
    %1398 = vmatpush1.msra.mxu0 0.0
    %1399 = vmatprep.subr.mxu0 0.0
    %1400 = vmatpush1.msra.mxu0 0.0
    %1401 = vmatprep.subr.mxu0 0.0
    %1402 = vmatpush1.msra.mxu0 0.0
    %1403 = vmatprep.subr.mxu0 0.0
    %1404 = vmatpush1.msra.mxu0 %v168
    %1405 = vmatprep.subr.mxu0 0.0
    %1406 = vmatpush1.msra.mxu0 %v167
    %1407 = vmatprep.subr.mxu0 0.0
    %1408 = vmatpush2.msra.mxu0 0.0
    %1409 = vmatprep.subr.mxu0 0.0
    %1410 = vmatpush2.msra.mxu0 0.0
    %1411 = vmatprep.subr.mxu0 0.0
    %1412 = vmatpush2.msra.mxu0 0.0
    %1413 = vmatprep.subr.mxu0 0.0
    %1414 = vmatpush2.msra.mxu0 0.0
    %1415 = vmatprep.subr.mxu0 0.0
    %1416 = vmatpush2.msra.mxu0 0.0
    %1417 = vmatprep.subr.mxu0 0.0
    %1418 = vmatpush2.msra.mxu0 0.0
    %1419 = vmatprep.subr.mxu0 0.0
    %1420 = vmatpush2.msra.mxu0 0.0
    %1421 = vmatprep.subr.mxu0 0.0
    %1422 = vmatpush2.msra.mxu0 0.0
    %1423 = vmatprep.subr.mxu0 0.0
    %1424 = vmatpush2.msra.mxu0 0.0
    %1425 = vmatprep.subr.mxu0 0.0
    %1426 = vmatpush2.msra.mxu0 0.0
    %1427 = vmatprep.subr.mxu0 0.0
    %1428 = vmatpush2.msra.mxu0 0.0
    %1429 = vmatprep.subr.mxu0 0.0
    %1430 = vmatpush2.msra.mxu0 0.0
    %1431 = vmatprep.subr.mxu0 0.0
    %1432 = vmatpush2.msra.mxu0 0.0
    %1433 = vmatprep.subr.mxu0 0.0
    %1434 = vmatpush2.msra.mxu0 0.0
    %1435 = vmatprep.subr.mxu0 0.0
    %1436 = vmatpush2.msra.mxu0 0.0
    %1437 = vmatprep.subr.mxu0 0.0
    %1438 = vmatpush2.msra.mxu0 0.0
    %1439 = vmatprep.mubr.f32.mxu0 0.0
    %1440 = vmatmul.mubr.f32.gmra.mxu0 %v1373
    %v1441 = vpop.f32.mrf.mxu0
    %v1442 = vadd.f32 %v566, %v1441
    %v1443 = vpop.f32.mrf.mxu0
    %1444 = vdwg.mxu0
    %v1445 = vadd.f32 %v457, %v1442
    %v1446 = vxor.u32 %v1445, 2147483648
    %v1447 = vmul.f32 %v1446, 1.442695
    %v1448 = vpow.pop %v1447
    %v1449 = vadd.f32 %v1448, 1.0
    %v1450 = vrcp.pop %v1449
    %v1451 = vmul.f32 1.0, %v1450
    %1453 = vrot.lane.b32.xlu0 %v1442, 96
    %v1454 = vpop.permute.xlu0 %1453
    %v1456 = vmul.f32 %v1451, %v1454
    %1458 = vrot.lane.b32.xlu0 %v1456, 32
    %v1459 = vpop.permute.xlu0 %1458
    %v1461 = vadd.f32 %v457, %v1459
    %v1462 = vtanh.pop %v1461
    %v1463 = vsub.f32 1.0, %v1451
    %1465 = vrot.lane.b32.xlu0 %v1462, 112
    %v1466 = vpop.permute.xlu0 %1465
    %v1468 = vmul.f32 %v1463, %v1466
    %v1469 = vmul.f32 %v1451, %v1268
    %v1470 = vadd.f32 %v1468, %v1469
    %1472 = vrot.lane.b32.xlu0 %v1369, 112
    %v1473 = vpop.permute.xlu0 %1472
    %v1474 = vsel %vm182, %v1473, 0
    %1476 = vmatprep.subr.mxu0 0.0
    %1477 = vmatpush1.msra.mxu0 0.0
    %1478 = vmatprep.subr.mxu0 0.0
    %1479 = vmatpush1.msra.mxu0 0.0
    %1480 = vmatprep.subr.mxu0 0.0
    %1481 = vmatpush1.msra.mxu0 0.0
    %1482 = vmatprep.subr.mxu0 0.0
    %1483 = vmatpush1.msra.mxu0 0.0
    %1484 = vmatprep.subr.mxu0 0.0
    %1485 = vmatpush1.msra.mxu0 0.0
    %1486 = vmatprep.subr.mxu0 0.0
    %1487 = vmatpush1.msra.mxu0 0.0
    %1488 = vmatprep.subr.mxu0 0.0
    %1489 = vmatpush1.msra.mxu0 0.0
    %1490 = vmatprep.subr.mxu0 0.0
    %1491 = vmatpush1.msra.mxu0 0.0
    %1492 = vmatprep.subr.mxu0 0.0
    %1493 = vmatpush1.msra.mxu0 0.0
    %1494 = vmatprep.subr.mxu0 0.0
    %1495 = vmatpush1.msra.mxu0 0.0
    %1496 = vmatprep.subr.mxu0 0.0
    %1497 = vmatpush1.msra.mxu0 0.0
    %1498 = vmatprep.subr.mxu0 0.0
    %1499 = vmatpush1.msra.mxu0 0.0
    %1500 = vmatprep.subr.mxu0 0.0
    %1501 = vmatpush1.msra.mxu0 0.0
    %1502 = vmatprep.subr.mxu0 0.0
    %1503 = vmatpush1.msra.mxu0 0.0
    %1504 = vmatprep.subr.mxu0 0.0
    %1505 = vmatpush1.msra.mxu0 %v165
    %1506 = vmatprep.subr.mxu0 0.0
    %1507 = vmatpush1.msra.mxu0 %v164
    %1508 = vmatprep.subr.mxu0 0.0
    %1509 = vmatpush2.msra.mxu0 0.0
    %1510 = vmatprep.subr.mxu0 0.0
    %1511 = vmatpush2.msra.mxu0 0.0
    %1512 = vmatprep.subr.mxu0 0.0
    %1513 = vmatpush2.msra.mxu0 0.0
    %1514 = vmatprep.subr.mxu0 0.0
    %1515 = vmatpush2.msra.mxu0 0.0
    %1516 = vmatprep.subr.mxu0 0.0
    %1517 = vmatpush2.msra.mxu0 0.0
    %1518 = vmatprep.subr.mxu0 0.0
    %1519 = vmatpush2.msra.mxu0 0.0
    %1520 = vmatprep.subr.mxu0 0.0
    %1521 = vmatpush2.msra.mxu0 0.0
    %1522 = vmatprep.subr.mxu0 0.0
    %1523 = vmatpush2.msra.mxu0 0.0
    %1524 = vmatprep.subr.mxu0 0.0
    %1525 = vmatpush2.msra.mxu0 0.0
    %1526 = vmatprep.subr.mxu0 0.0
    %1527 = vmatpush2.msra.mxu0 0.0
    %1528 = vmatprep.subr.mxu0 0.0
    %1529 = vmatpush2.msra.mxu0 0.0
    %1530 = vmatprep.subr.mxu0 0.0
    %1531 = vmatpush2.msra.mxu0 0.0
    %1532 = vmatprep.subr.mxu0 0.0
    %1533 = vmatpush2.msra.mxu0 0.0
    %1534 = vmatprep.subr.mxu0 0.0
    %1535 = vmatpush2.msra.mxu0 0.0
    %1536 = vmatprep.subr.mxu0 0.0
    %1537 = vmatpush2.msra.mxu0 0.0
    %1538 = vmatprep.subr.mxu0 0.0
    %1539 = vmatpush2.msra.mxu0 0.0
    %1540 = vmatprep.mubr.f32.mxu0 0.0
    %1541 = vmatmul.mubr.f32.gmra.mxu0 %v1474
    %v1542 = vpop.f32.mrf.mxu0
    %v1543 = vadd.f32 %v463, %v1542
    %v1544 = vpop.f32.mrf.mxu0
    %1545 = vdwg.mxu0
    %v1546 = vadd.f32 %v383, %v1543
    %v1547 = vxor.u32 %v1546, 2147483648
    %v1548 = vmul.f32 %v1547, 1.442695
    %v1549 = vpow.pop %v1548
    %v1550 = vadd.f32 %v1549, 1.0
    %v1551 = vrcp.pop %v1550
    %v1552 = vmul.f32 1.0, %v1551
    %1554 = vrot.lane.b32.xlu0 %v1543, 96
    %v1555 = vpop.permute.xlu0 %1554
    %v1557 = vmul.f32 %v1552, %v1555
    %1559 = vrot.lane.b32.xlu0 %v1557, 32
    %v1560 = vpop.permute.xlu0 %1559
    %v1562 = vadd.f32 %v383, %v1560
    %v1563 = vtanh.pop %v1562
    %v1564 = vsub.f32 1.0, %v1552
    %1566 = vrot.lane.b32.xlu0 %v1563, 112
    %v1567 = vpop.permute.xlu0 %1566
    %v1569 = vmul.f32 %v1564, %v1567
    %v1570 = vmul.f32 %v1552, %v1369
    %v1571 = vadd.f32 %v1569, %v1570
    %1573 = vrot.lane.b32.xlu0 %v1470, 112
    %v1574 = vpop.permute.xlu0 %1573
    %v1575 = vsel %vm182, %v1574, 0
    %1577 = vmatprep.subr.mxu0 0.0
    %1578 = vmatpush1.msra.mxu0 0.0
    %1579 = vmatprep.subr.mxu0 0.0
    %1580 = vmatpush1.msra.mxu0 0.0
    %1581 = vmatprep.subr.mxu0 0.0
    %1582 = vmatpush1.msra.mxu0 0.0
    %1583 = vmatprep.subr.mxu0 0.0
    %1584 = vmatpush1.msra.mxu0 0.0
    %1585 = vmatprep.subr.mxu0 0.0
    %1586 = vmatpush1.msra.mxu0 0.0
    %1587 = vmatprep.subr.mxu0 0.0
    %1588 = vmatpush1.msra.mxu0 0.0
    %1589 = vmatprep.subr.mxu0 0.0
    %1590 = vmatpush1.msra.mxu0 0.0
    %1591 = vmatprep.subr.mxu0 0.0
    %1592 = vmatpush1.msra.mxu0 0.0
    %1593 = vmatprep.subr.mxu0 0.0
    %1594 = vmatpush1.msra.mxu0 0.0
    %1595 = vmatprep.subr.mxu0 0.0
    %1596 = vmatpush1.msra.mxu0 0.0
    %1597 = vmatprep.subr.mxu0 0.0
    %1598 = vmatpush1.msra.mxu0 0.0
    %1599 = vmatprep.subr.mxu0 0.0
    %1600 = vmatpush1.msra.mxu0 0.0
    %1601 = vmatprep.subr.mxu0 0.0
    %1602 = vmatpush1.msra.mxu0 0.0
    %1603 = vmatprep.subr.mxu0 0.0
    %1604 = vmatpush1.msra.mxu0 0.0
    %1605 = vmatprep.subr.mxu0 0.0
    %1606 = vmatpush1.msra.mxu0 %v168
    %1607 = vmatprep.subr.mxu0 0.0
    %1608 = vmatpush1.msra.mxu0 %v167
    %1609 = vmatprep.subr.mxu0 0.0
    %1610 = vmatpush2.msra.mxu0 0.0
    %1611 = vmatprep.subr.mxu0 0.0
    %1612 = vmatpush2.msra.mxu0 0.0
    %1613 = vmatprep.subr.mxu0 0.0
    %1614 = vmatpush2.msra.mxu0 0.0
    %1615 = vmatprep.subr.mxu0 0.0
    %1616 = vmatpush2.msra.mxu0 0.0
    %1617 = vmatprep.subr.mxu0 0.0
    %1618 = vmatpush2.msra.mxu0 0.0
    %1619 = vmatprep.subr.mxu0 0.0
    %1620 = vmatpush2.msra.mxu0 0.0
    %1621 = vmatprep.subr.mxu0 0.0
    %1622 = vmatpush2.msra.mxu0 0.0
    %1623 = vmatprep.subr.mxu0 0.0
    %1624 = vmatpush2.msra.mxu0 0.0
    %1625 = vmatprep.subr.mxu0 0.0
    %1626 = vmatpush2.msra.mxu0 0.0
    %1627 = vmatprep.subr.mxu0 0.0
    %1628 = vmatpush2.msra.mxu0 0.0
    %1629 = vmatprep.subr.mxu0 0.0
    %1630 = vmatpush2.msra.mxu0 0.0
    %1631 = vmatprep.subr.mxu0 0.0
    %1632 = vmatpush2.msra.mxu0 0.0
    %1633 = vmatprep.subr.mxu0 0.0
    %1634 = vmatpush2.msra.mxu0 0.0
    %1635 = vmatprep.subr.mxu0 0.0
    %1636 = vmatpush2.msra.mxu0 0.0
    %1637 = vmatprep.subr.mxu0 0.0
    %1638 = vmatpush2.msra.mxu0 0.0
    %1639 = vmatprep.subr.mxu0 0.0
    %1640 = vmatpush2.msra.mxu0 0.0
    %1641 = vmatprep.mubr.f32.mxu0 0.0
    %1642 = vmatmul.mubr.f32.gmra.mxu0 %v1575
    %v1643 = vpop.f32.mrf.mxu0
    %v1644 = vadd.f32 %v566, %v1643
    %v1645 = vpop.f32.mrf.mxu0
    %1646 = vdwg.mxu0
    %v1647 = vadd.f32 %v457, %v1644
    %v1648 = vxor.u32 %v1647, 2147483648
    %v1649 = vmul.f32 %v1648, 1.442695
    %v1650 = vpow.pop %v1649
    %v1651 = vadd.f32 %v1650, 1.0
    %v1652 = vrcp.pop %v1651
    %v1653 = vmul.f32 1.0, %v1652
    %1655 = vrot.lane.b32.xlu0 %v1644, 96
    %v1656 = vpop.permute.xlu0 %1655
    %v1658 = vmul.f32 %v1653, %v1656
    %1660 = vrot.lane.b32.xlu0 %v1658, 32
    %v1661 = vpop.permute.xlu0 %1660
    %v1663 = vadd.f32 %v457, %v1661
    %v1664 = vtanh.pop %v1663
    %v1665 = vsub.f32 1.0, %v1653
    %1667 = vrot.lane.b32.xlu0 %v1664, 112
    %v1668 = vpop.permute.xlu0 %1667
    %v1670 = vmul.f32 %v1665, %v1668
    %v1671 = vmul.f32 %v1653, %v1470
    %v1672 = vadd.f32 %v1670, %v1671
    %1674 = vrot.lane.b32.xlu0 %v1571, 112
    %v1675 = vpop.permute.xlu0 %1674
    %v1676 = vsel %vm182, %v1675, 0
    %1678 = vmatprep.subr.mxu0 0.0
    %1679 = vmatpush1.msra.mxu0 0.0
    %1680 = vmatprep.subr.mxu0 0.0
    %1681 = vmatpush1.msra.mxu0 0.0
    %1682 = vmatprep.subr.mxu0 0.0
    %1683 = vmatpush1.msra.mxu0 0.0
    %1684 = vmatprep.subr.mxu0 0.0
    %1685 = vmatpush1.msra.mxu0 0.0
    %1686 = vmatprep.subr.mxu0 0.0
    %1687 = vmatpush1.msra.mxu0 0.0
    %1688 = vmatprep.subr.mxu0 0.0
    %1689 = vmatpush1.msra.mxu0 0.0
    %1690 = vmatprep.subr.mxu0 0.0
    %1691 = vmatpush1.msra.mxu0 0.0
    %1692 = vmatprep.subr.mxu0 0.0
    %1693 = vmatpush1.msra.mxu0 0.0
    %1694 = vmatprep.subr.mxu0 0.0
    %1695 = vmatpush1.msra.mxu0 0.0
    %1696 = vmatprep.subr.mxu0 0.0
    %1697 = vmatpush1.msra.mxu0 0.0
    %1698 = vmatprep.subr.mxu0 0.0
    %1699 = vmatpush1.msra.mxu0 0.0
    %1700 = vmatprep.subr.mxu0 0.0
    %1701 = vmatpush1.msra.mxu0 0.0
    %1702 = vmatprep.subr.mxu0 0.0
    %1703 = vmatpush1.msra.mxu0 0.0
    %1704 = vmatprep.subr.mxu0 0.0
    %1705 = vmatpush1.msra.mxu0 0.0
    %1706 = vmatprep.subr.mxu0 0.0
    %1707 = vmatpush1.msra.mxu0 %v165
    %1708 = vmatprep.subr.mxu0 0.0
    %1709 = vmatpush1.msra.mxu0 %v164
    %1710 = vmatprep.subr.mxu0 0.0
    %1711 = vmatpush2.msra.mxu0 0.0
    %1712 = vmatprep.subr.mxu0 0.0
    %1713 = vmatpush2.msra.mxu0 0.0
    %1714 = vmatprep.subr.mxu0 0.0
    %1715 = vmatpush2.msra.mxu0 0.0
    %1716 = vmatprep.subr.mxu0 0.0
    %1717 = vmatpush2.msra.mxu0 0.0
    %1718 = vmatprep.subr.mxu0 0.0
    %1719 = vmatpush2.msra.mxu0 0.0
    %1720 = vmatprep.subr.mxu0 0.0
    %1721 = vmatpush2.msra.mxu0 0.0
    %1722 = vmatprep.subr.mxu0 0.0
    %1723 = vmatpush2.msra.mxu0 0.0
    %1724 = vmatprep.subr.mxu0 0.0
    %1725 = vmatpush2.msra.mxu0 0.0
    %1726 = vmatprep.subr.mxu0 0.0
    %1727 = vmatpush2.msra.mxu0 0.0
    %1728 = vmatprep.subr.mxu0 0.0
    %1729 = vmatpush2.msra.mxu0 0.0
    %1730 = vmatprep.subr.mxu0 0.0
    %1731 = vmatpush2.msra.mxu0 0.0
    %1732 = vmatprep.subr.mxu0 0.0
    %1733 = vmatpush2.msra.mxu0 0.0
    %1734 = vmatprep.subr.mxu0 0.0
    %1735 = vmatpush2.msra.mxu0 0.0
    %1736 = vmatprep.subr.mxu0 0.0
    %1737 = vmatpush2.msra.mxu0 0.0
    %1738 = vmatprep.subr.mxu0 0.0
    %1739 = vmatpush2.msra.mxu0 0.0
    %1740 = vmatprep.subr.mxu0 0.0
    %1741 = vmatpush2.msra.mxu0 0.0
    %1742 = vmatprep.mubr.f32.mxu0 0.0
    %1743 = vmatmul.mubr.f32.gmra.mxu0 %v1676
    %v1744 = vpop.f32.mrf.mxu0
    %v1745 = vadd.f32 %v463, %v1744
    %v1746 = vpop.f32.mrf.mxu0
    %1747 = vdwg.mxu0
    %v1748 = vadd.f32 %v383, %v1745
    %v1749 = vxor.u32 %v1748, 2147483648
    %v1750 = vmul.f32 %v1749, 1.442695
    %v1751 = vpow.pop %v1750
    %v1752 = vadd.f32 %v1751, 1.0
    %v1753 = vrcp.pop %v1752
    %v1754 = vmul.f32 1.0, %v1753
    %1756 = vrot.lane.b32.xlu0 %v1745, 96
    %v1757 = vpop.permute.xlu0 %1756
    %v1759 = vmul.f32 %v1754, %v1757
    %1761 = vrot.lane.b32.xlu0 %v1759, 32
    %v1762 = vpop.permute.xlu0 %1761
    %v1764 = vadd.f32 %v383, %v1762
    %v1765 = vtanh.pop %v1764
    %v1766 = vsub.f32 1.0, %v1754
    %1768 = vrot.lane.b32.xlu0 %v1765, 112
    %v1769 = vpop.permute.xlu0 %1768
    %v1771 = vmul.f32 %v1766, %v1769
    %v1772 = vmul.f32 %v1754, %v1571
    %v1773 = vadd.f32 %v1771, %v1772
    %1775 = vrot.lane.b32.xlu0 %v1672, 112
    %v1776 = vpop.permute.xlu0 %1775
    %v1777 = vsel %vm182, %v1776, 0
    %1779 = vmatprep.subr.mxu0 0.0
    %1780 = vmatpush1.msra.mxu0 0.0
    %1781 = vmatprep.subr.mxu0 0.0
    %1782 = vmatpush1.msra.mxu0 0.0
    %1783 = vmatprep.subr.mxu0 0.0
    %1784 = vmatpush1.msra.mxu0 0.0
    %1785 = vmatprep.subr.mxu0 0.0
    %1786 = vmatpush1.msra.mxu0 0.0
    %1787 = vmatprep.subr.mxu0 0.0
    %1788 = vmatpush1.msra.mxu0 0.0
    %1789 = vmatprep.subr.mxu0 0.0
    %1790 = vmatpush1.msra.mxu0 0.0
    %1791 = vmatprep.subr.mxu0 0.0
    %1792 = vmatpush1.msra.mxu0 0.0
    %1793 = vmatprep.subr.mxu0 0.0
    %1794 = vmatpush1.msra.mxu0 0.0
    %1795 = vmatprep.subr.mxu0 0.0
    %1796 = vmatpush1.msra.mxu0 0.0
    %1797 = vmatprep.subr.mxu0 0.0
    %1798 = vmatpush1.msra.mxu0 0.0
    %1799 = vmatprep.subr.mxu0 0.0
    %1800 = vmatpush1.msra.mxu0 0.0
    %1801 = vmatprep.subr.mxu0 0.0
    %1802 = vmatpush1.msra.mxu0 0.0
    %1803 = vmatprep.subr.mxu0 0.0
    %1804 = vmatpush1.msra.mxu0 0.0
    %1805 = vmatprep.subr.mxu0 0.0
    %1806 = vmatpush1.msra.mxu0 0.0
    %1807 = vmatprep.subr.mxu0 0.0
    %1808 = vmatpush1.msra.mxu0 %v168
    %1809 = vmatprep.subr.mxu0 0.0
    %1810 = vmatpush1.msra.mxu0 %v167
    %1811 = vmatprep.subr.mxu0 0.0
    %1812 = vmatpush2.msra.mxu0 0.0
    %1813 = vmatprep.subr.mxu0 0.0
    %1814 = vmatpush2.msra.mxu0 0.0
    %1815 = vmatprep.subr.mxu0 0.0
    %1816 = vmatpush2.msra.mxu0 0.0
    %1817 = vmatprep.subr.mxu0 0.0
    %1818 = vmatpush2.msra.mxu0 0.0
    %1819 = vmatprep.subr.mxu0 0.0
    %1820 = vmatpush2.msra.mxu0 0.0
    %1821 = vmatprep.subr.mxu0 0.0
    %1822 = vmatpush2.msra.mxu0 0.0
    %1823 = vmatprep.subr.mxu0 0.0
    %1824 = vmatpush2.msra.mxu0 0.0
    %1825 = vmatprep.subr.mxu0 0.0
    %1826 = vmatpush2.msra.mxu0 0.0
    %1827 = vmatprep.subr.mxu0 0.0
    %1828 = vmatpush2.msra.mxu0 0.0
    %1829 = vmatprep.subr.mxu0 0.0
    %1830 = vmatpush2.msra.mxu0 0.0
    %1831 = vmatprep.subr.mxu0 0.0
    %1832 = vmatpush2.msra.mxu0 0.0
    %1833 = vmatprep.subr.mxu0 0.0
    %1834 = vmatpush2.msra.mxu0 0.0
    %1835 = vmatprep.subr.mxu0 0.0
    %1836 = vmatpush2.msra.mxu0 0.0
    %1837 = vmatprep.subr.mxu0 0.0
    %1838 = vmatpush2.msra.mxu0 0.0
    %1839 = vmatprep.subr.mxu0 0.0
    %1840 = vmatpush2.msra.mxu0 0.0
    %1841 = vmatprep.subr.mxu0 0.0
    %1842 = vmatpush2.msra.mxu0 0.0
    %1843 = vmatprep.mubr.f32.mxu0 0.0
    %1844 = vmatmul.mubr.f32.gmra.mxu0 %v1777
    %v1845 = vpop.f32.mrf.mxu0
    %v1846 = vadd.f32 %v566, %v1845
    %v1847 = vpop.f32.mrf.mxu0
    %1848 = vdwg.mxu0
    %v1849 = vadd.f32 %v457, %v1846
    %v1850 = vxor.u32 %v1849, 2147483648
    %v1851 = vmul.f32 %v1850, 1.442695
    %v1852 = vpow.pop %v1851
    %v1853 = vadd.f32 %v1852, 1.0
    %v1854 = vrcp.pop %v1853
    %v1855 = vmul.f32 1.0, %v1854
    %1857 = vrot.lane.b32.xlu0 %v1846, 96
    %v1858 = vpop.permute.xlu0 %1857
    %v1860 = vmul.f32 %v1855, %v1858
    %1862 = vrot.lane.b32.xlu0 %v1860, 32
    %v1863 = vpop.permute.xlu0 %1862
    %v1865 = vadd.f32 %v457, %v1863
    %v1866 = vtanh.pop %v1865
    %v1867 = vsub.f32 1.0, %v1855
    %1869 = vrot.lane.b32.xlu0 %v1866, 112
    %v1870 = vpop.permute.xlu0 %1869
    %v1872 = vmul.f32 %v1867, %v1870
    %v1873 = vmul.f32 %v1855, %v1672
    %v1874 = vadd.f32 %v1872, %v1873
    %1876 = vrot.lane.b32.xlu0 %v1773, 112
    %v1877 = vpop.permute.xlu0 %1876
    %v1878 = vsel %vm182, %v1877, 0
    %1880 = vmatprep.subr.mxu0 0.0
    %1881 = vmatpush1.msra.mxu0 0.0
    %1882 = vmatprep.subr.mxu0 0.0
    %1883 = vmatpush1.msra.mxu0 0.0
    %1884 = vmatprep.subr.mxu0 0.0
    %1885 = vmatpush1.msra.mxu0 0.0
    %1886 = vmatprep.subr.mxu0 0.0
    %1887 = vmatpush1.msra.mxu0 0.0
    %1888 = vmatprep.subr.mxu0 0.0
    %1889 = vmatpush1.msra.mxu0 0.0
    %1890 = vmatprep.subr.mxu0 0.0
    %1891 = vmatpush1.msra.mxu0 0.0
    %1892 = vmatprep.subr.mxu0 0.0
    %1893 = vmatpush1.msra.mxu0 0.0
    %1894 = vmatprep.subr.mxu0 0.0
    %1895 = vmatpush1.msra.mxu0 0.0
    %1896 = vmatprep.subr.mxu0 0.0
    %1897 = vmatpush1.msra.mxu0 0.0
    %1898 = vmatprep.subr.mxu0 0.0
    %1899 = vmatpush1.msra.mxu0 0.0
    %1900 = vmatprep.subr.mxu0 0.0
    %1901 = vmatpush1.msra.mxu0 0.0
    %1902 = vmatprep.subr.mxu0 0.0
    %1903 = vmatpush1.msra.mxu0 0.0
    %1904 = vmatprep.subr.mxu0 0.0
    %1905 = vmatpush1.msra.mxu0 0.0
    %1906 = vmatprep.subr.mxu0 0.0
    %1907 = vmatpush1.msra.mxu0 0.0
    %1908 = vmatprep.subr.mxu0 0.0
    %1909 = vmatpush1.msra.mxu0 %v165
    %1910 = vmatprep.subr.mxu0 0.0
    %1911 = vmatpush1.msra.mxu0 %v164
    %1912 = vmatprep.subr.mxu0 0.0
    %1913 = vmatpush2.msra.mxu0 0.0
    %1914 = vmatprep.subr.mxu0 0.0
    %1915 = vmatpush2.msra.mxu0 0.0
    %1916 = vmatprep.subr.mxu0 0.0
    %1917 = vmatpush2.msra.mxu0 0.0
    %1918 = vmatprep.subr.mxu0 0.0
    %1919 = vmatpush2.msra.mxu0 0.0
    %1920 = vmatprep.subr.mxu0 0.0
    %1921 = vmatpush2.msra.mxu0 0.0
    %1922 = vmatprep.subr.mxu0 0.0
    %1923 = vmatpush2.msra.mxu0 0.0
    %1924 = vmatprep.subr.mxu0 0.0
    %1925 = vmatpush2.msra.mxu0 0.0
    %1926 = vmatprep.subr.mxu0 0.0
    %1927 = vmatpush2.msra.mxu0 0.0
    %1928 = vmatprep.subr.mxu0 0.0
    %1929 = vmatpush2.msra.mxu0 0.0
    %1930 = vmatprep.subr.mxu0 0.0
    %1931 = vmatpush2.msra.mxu0 0.0
    %1932 = vmatprep.subr.mxu0 0.0
    %1933 = vmatpush2.msra.mxu0 0.0
    %1934 = vmatprep.subr.mxu0 0.0
    %1935 = vmatpush2.msra.mxu0 0.0
    %1936 = vmatprep.subr.mxu0 0.0
    %1937 = vmatpush2.msra.mxu0 0.0
    %1938 = vmatprep.subr.mxu0 0.0
    %1939 = vmatpush2.msra.mxu0 0.0
    %1940 = vmatprep.subr.mxu0 0.0
    %1941 = vmatpush2.msra.mxu0 0.0
    %1942 = vmatprep.subr.mxu0 0.0
    %1943 = vmatpush2.msra.mxu0 0.0
    %1944 = vmatprep.mubr.f32.mxu0 0.0
    %1945 = vmatmul.mubr.f32.gmra.mxu0 %v1878
    %v1946 = vpop.f32.mrf.mxu0
    %v1947 = vadd.f32 %v463, %v1946
    %v1948 = vpop.f32.mrf.mxu0
    %1949 = vdwg.mxu0
    %v1950 = vadd.f32 %v383, %v1947
    %v1951 = vxor.u32 %v1950, 2147483648
    %v1952 = vmul.f32 %v1951, 1.442695
    %v1953 = vpow.pop %v1952
    %v1954 = vadd.f32 %v1953, 1.0
    %v1955 = vrcp.pop %v1954
    %v1956 = vmul.f32 1.0, %v1955
    %1958 = vrot.lane.b32.xlu0 %v1947, 96
    %v1959 = vpop.permute.xlu0 %1958
    %v1961 = vmul.f32 %v1956, %v1959
    %1963 = vrot.lane.b32.xlu0 %v1961, 32
    %v1964 = vpop.permute.xlu0 %1963
    %v1966 = vadd.f32 %v383, %v1964
    %v1967 = vtanh.pop %v1966
    %v1968 = vsub.f32 1.0, %v1956
    %1970 = vrot.lane.b32.xlu0 %v1967, 112
    %v1971 = vpop.permute.xlu0 %1970
    %v1973 = vmul.f32 %v1968, %v1971
    %v1974 = vmul.f32 %v1956, %v1773
    %v1975 = vadd.f32 %v1973, %v1974
    %1977 = vrot.lane.b32.xlu0 %v1874, 112
    %v1978 = vpop.permute.xlu0 %1977
    %v1979 = vsel %vm182, %v1978, 0
    %1981 = vmatprep.subr.mxu0 0.0
    %1982 = vmatpush1.msra.mxu0 0.0
    %1983 = vmatprep.subr.mxu0 0.0
    %1984 = vmatpush1.msra.mxu0 0.0
    %1985 = vmatprep.subr.mxu0 0.0
    %1986 = vmatpush1.msra.mxu0 0.0
    %1987 = vmatprep.subr.mxu0 0.0
    %1988 = vmatpush1.msra.mxu0 0.0
    %1989 = vmatprep.subr.mxu0 0.0
    %1990 = vmatpush1.msra.mxu0 0.0
    %1991 = vmatprep.subr.mxu0 0.0
    %1992 = vmatpush1.msra.mxu0 0.0
    %1993 = vmatprep.subr.mxu0 0.0
    %1994 = vmatpush1.msra.mxu0 0.0
    %1995 = vmatprep.subr.mxu0 0.0
    %1996 = vmatpush1.msra.mxu0 0.0
    %1997 = vmatprep.subr.mxu0 0.0
    %1998 = vmatpush1.msra.mxu0 0.0
    %1999 = vmatprep.subr.mxu0 0.0
    %2000 = vmatpush1.msra.mxu0 0.0
    %2001 = vmatprep.subr.mxu0 0.0
    %2002 = vmatpush1.msra.mxu0 0.0
    %2003 = vmatprep.subr.mxu0 0.0
    %2004 = vmatpush1.msra.mxu0 0.0
    %2005 = vmatprep.subr.mxu0 0.0
    %2006 = vmatpush1.msra.mxu0 0.0
    %2007 = vmatprep.subr.mxu0 0.0
    %2008 = vmatpush1.msra.mxu0 0.0
    %2009 = vmatprep.subr.mxu0 0.0
    %2010 = vmatpush1.msra.mxu0 %v168
    %2011 = vmatprep.subr.mxu0 0.0
    %2012 = vmatpush1.msra.mxu0 %v167
    %2013 = vmatprep.subr.mxu0 0.0
    %2014 = vmatpush2.msra.mxu0 0.0
    %2015 = vmatprep.subr.mxu0 0.0
    %2016 = vmatpush2.msra.mxu0 0.0
    %2017 = vmatprep.subr.mxu0 0.0
    %2018 = vmatpush2.msra.mxu0 0.0
    %2019 = vmatprep.subr.mxu0 0.0
    %2020 = vmatpush2.msra.mxu0 0.0
    %2021 = vmatprep.subr.mxu0 0.0
    %2022 = vmatpush2.msra.mxu0 0.0
    %2023 = vmatprep.subr.mxu0 0.0
    %2024 = vmatpush2.msra.mxu0 0.0
    %2025 = vmatprep.subr.mxu0 0.0
    %2026 = vmatpush2.msra.mxu0 0.0
    %2027 = vmatprep.subr.mxu0 0.0
    %2028 = vmatpush2.msra.mxu0 0.0
    %2029 = vmatprep.subr.mxu0 0.0
    %2030 = vmatpush2.msra.mxu0 0.0
    %2031 = vmatprep.subr.mxu0 0.0
    %2032 = vmatpush2.msra.mxu0 0.0
    %2033 = vmatprep.subr.mxu0 0.0
    %2034 = vmatpush2.msra.mxu0 0.0
    %2035 = vmatprep.subr.mxu0 0.0
    %2036 = vmatpush2.msra.mxu0 0.0
    %2037 = vmatprep.subr.mxu0 0.0
    %2038 = vmatpush2.msra.mxu0 0.0
    %2039 = vmatprep.subr.mxu0 0.0
    %2040 = vmatpush2.msra.mxu0 0.0
    %2041 = vmatprep.subr.mxu0 0.0
    %2042 = vmatpush2.msra.mxu0 0.0
    %2043 = vmatprep.subr.mxu0 0.0
    %2044 = vmatpush2.msra.mxu0 0.0
    %2045 = vmatprep.mubr.f32.mxu0 0.0
    %2046 = vmatmul.mubr.f32.gmra.mxu0 %v1979
    %v2047 = vpop.f32.mrf.mxu0
    %v2048 = vadd.f32 %v566, %v2047
    %v2049 = vpop.f32.mrf.mxu0
    %2050 = vdwg.mxu0
    %v2051 = vadd.f32 %v457, %v2048
    %v2052 = vxor.u32 %v2051, 2147483648
    %v2053 = vmul.f32 %v2052, 1.442695
    %v2054 = vpow.pop %v2053
    %v2055 = vadd.f32 %v2054, 1.0
    %v2056 = vrcp.pop %v2055
    %v2057 = vmul.f32 1.0, %v2056
    %2059 = vrot.lane.b32.xlu0 %v2048, 96
    %v2060 = vpop.permute.xlu0 %2059
    %v2062 = vmul.f32 %v2057, %v2060
    %2064 = vrot.lane.b32.xlu0 %v2062, 32
    %v2065 = vpop.permute.xlu0 %2064
    %v2067 = vadd.f32 %v457, %v2065
    %v2068 = vtanh.pop %v2067
    %v2069 = vsub.f32 1.0, %v2057
    %2071 = vrot.lane.b32.xlu0 %v2068, 112
    %v2072 = vpop.permute.xlu0 %2071
    %v2074 = vmul.f32 %v2069, %v2072
    %v2075 = vmul.f32 %v2057, %v1874
    %v2076 = vadd.f32 %v2074, %v2075
    %v2078 = vsel %vm182, %v665, %v2076
    %v2080 = vsel %vm182, %v867, %v1874
    %v2082 = vsel %vm182, %v1069, %v1672
    %v2084 = vsel %vm182, %v1271, %v1470
    %v2086 = vsel %vm182, %v1473, %v1268
    %v2088 = vsel %vm182, %v1675, %v1066
    %v2090 = vsel %vm182, %v1877, %v864
    %2092 = vrot.lane.b32.xlu0 %v1975, 112
    %v2093 = vpop.permute.xlu0 %2092
    %v2095 = vsel %vm182, %v2093, %v662
    %v2097 = vrot.slane %v2080, 6
    %v2100 = vrot.slane %v2082, 4
    %v2103 = vrot.slane %v2084, 2
    %v2106 = vrot.slane %v2088, 6
    %v2109 = vrot.slane %v2090, 4
    %v2112 = vrot.slane %v2095, 2
    %vm2114 = vcmask 1041408
    %v2115 = vsel %vm2114, %v2078, %v2097
    %vm2116 = vcmask 1043456
    %v2117 = vsel %vm2116, %v2115, %v2100
    %vm2118 = vcmask 1045504
    %v2119 = vsel %vm2118, %v2117, %v2103
    %v2120 = vsel %vm2114, %v2086, %v2106
    %v2121 = vsel %vm2116, %v2120, %v2109
    %v2122 = vsel %vm2118, %v2121, %v2112
    %v2123 = vlaneseq
    %v2124 = vshrl.u32 %v2123, 7
    %v2125 = vsub.s32 4, %v2124
    %v2126 = vrot.slane %v144, %v2125
    %v2128 = vsel %vm312, %v2119, 0
    %v2131 = vsel %vm312, %v2122, 0
    %2133 = vmatprep.subr.mxu0 0.0
    %2134 = vmatpush1.msra.mxu0 0.0
    %2135 = vmatprep.subr.mxu0 0.0
    %2136 = vmatpush1.msra.mxu0 0.0
    %2137 = vmatprep.subr.mxu0 0.0
    %2138 = vmatpush1.msra.mxu0 0.0
    %2139 = vmatprep.subr.mxu0 0.0
    %2140 = vmatpush1.msra.mxu0 0.0
    %2141 = vmatprep.subr.mxu0 0.0
    %2142 = vmatpush1.msra.mxu0 0.0
    %2143 = vmatprep.subr.mxu0 0.0
    %2144 = vmatpush1.msra.mxu0 0.0
    %2145 = vmatprep.subr.mxu0 0.0
    %2146 = vmatpush1.msra.mxu0 0.0
    %2147 = vmatprep.subr.mxu0 0.0
    %2148 = vmatpush1.msra.mxu0 0.0
    %2149 = vmatprep.subr.mxu0 0.0
    %2150 = vmatpush1.msra.mxu0 0.0
    %2151 = vmatprep.subr.mxu0 0.0
    %2152 = vmatpush1.msra.mxu0 0.0
    %2153 = vmatprep.subr.mxu0 0.0
    %2154 = vmatpush1.msra.mxu0 0.0
    %2155 = vmatprep.subr.mxu0 0.0
    %2156 = vmatpush1.msra.mxu0 0.0
    %2157 = vmatprep.subr.mxu0 0.0
    %2158 = vmatpush1.msra.mxu0 %v158
    %2159 = vmatprep.subr.mxu0 0.0
    %2160 = vmatpush1.msra.mxu0 %v157
    %2161 = vmatprep.subr.mxu0 0.0
    %2162 = vmatpush1.msra.mxu0 %v156
    %2163 = vmatprep.subr.mxu0 0.0
    %2164 = vmatpush1.msra.mxu0 %v155
    %2165 = vmatprep.subr.mxu0 0.0
    %2166 = vmatpush2.msra.mxu0 0.0
    %2167 = vmatprep.subr.mxu0 0.0
    %2168 = vmatpush2.msra.mxu0 0.0
    %2169 = vmatprep.subr.mxu0 0.0
    %2170 = vmatpush2.msra.mxu0 0.0
    %2171 = vmatprep.subr.mxu0 0.0
    %2172 = vmatpush2.msra.mxu0 0.0
    %2173 = vmatprep.subr.mxu0 0.0
    %2174 = vmatpush2.msra.mxu0 0.0
    %2175 = vmatprep.subr.mxu0 0.0
    %2176 = vmatpush2.msra.mxu0 0.0
    %2177 = vmatprep.subr.mxu0 0.0
    %2178 = vmatpush2.msra.mxu0 0.0
    %2179 = vmatprep.subr.mxu0 0.0
    %2180 = vmatpush2.msra.mxu0 0.0
    %2181 = vmatprep.subr.mxu0 0.0
    %2182 = vmatpush2.msra.mxu0 0.0
    %2183 = vmatprep.subr.mxu0 0.0
    %2184 = vmatpush2.msra.mxu0 0.0
    %2185 = vmatprep.subr.mxu0 0.0
    %2186 = vmatpush2.msra.mxu0 0.0
    %2187 = vmatprep.subr.mxu0 0.0
    %2188 = vmatpush2.msra.mxu0 0.0
    %2189 = vmatprep.subr.mxu0 0.0
    %2190 = vmatpush2.msra.mxu0 0.0
    %2191 = vmatprep.subr.mxu0 0.0
    %2192 = vmatpush2.msra.mxu0 0.0
    %2193 = vmatprep.subr.mxu0 0.0
    %2194 = vmatpush2.msra.mxu0 0.0
    %2195 = vmatprep.subr.mxu0 0.0
    %2196 = vmatpush2.msra.mxu0 0.0
    %2197 = vmatprep.mubr.f32.mxu0 0.0
    %2198 = vmatmul.mubr.f32.gmra.mxu0 %v2128
    %v2199 = vpop.f32.mrf.mxu0
    %v2200 = vadd.f32 %v2126, %v2199
    %v2201 = vpop.f32.mrf.mxu0
    %2202 = vmatprep.mubr.f32.mxu0 0.0
    %2203 = vmatmul.mubr.f32.gmra.mxu0 %v2131
    %v2204 = vpop.f32.mrf.mxu0
    %v2205 = vadd.f32 %v2126, %v2204
    %v2206 = vpop.f32.mrf.mxu0
    %2207 = vdwg.mxu0
    %v2208 = vlaneseq
    %v2209 = vshrl.u32 %v2208, 7
    %v2210 = vsub.s32 5, %v2209
    %v2211 = vrot.slane %v144, %v2210
    %2212 = vmatprep.subr.mxu0 0.0
    %2213 = vmatpush1.msra.mxu0 0.0
    %2214 = vmatprep.subr.mxu0 0.0
    %2215 = vmatpush1.msra.mxu0 0.0
    %2216 = vmatprep.subr.mxu0 0.0
    %2217 = vmatpush1.msra.mxu0 0.0
    %2218 = vmatprep.subr.mxu0 0.0
    %2219 = vmatpush1.msra.mxu0 0.0
    %2220 = vmatprep.subr.mxu0 0.0
    %2221 = vmatpush1.msra.mxu0 0.0
    %2222 = vmatprep.subr.mxu0 0.0
    %2223 = vmatpush1.msra.mxu0 0.0
    %2224 = vmatprep.subr.mxu0 0.0
    %2225 = vmatpush1.msra.mxu0 0.0
    %2226 = vmatprep.subr.mxu0 0.0
    %2227 = vmatpush1.msra.mxu0 0.0
    %2228 = vmatprep.subr.mxu0 0.0
    %2229 = vmatpush1.msra.mxu0 0.0
    %2230 = vmatprep.subr.mxu0 0.0
    %2231 = vmatpush1.msra.mxu0 0.0
    %2232 = vmatprep.subr.mxu0 0.0
    %2233 = vmatpush1.msra.mxu0 0.0
    %2234 = vmatprep.subr.mxu0 0.0
    %2235 = vmatpush1.msra.mxu0 0.0
    %2236 = vmatprep.subr.mxu0 0.0
    %2237 = vmatpush1.msra.mxu0 %v163
    %2238 = vmatprep.subr.mxu0 0.0
    %2239 = vmatpush1.msra.mxu0 %v162
    %2240 = vmatprep.subr.mxu0 0.0
    %2241 = vmatpush1.msra.mxu0 %v161
    %2242 = vmatprep.subr.mxu0 0.0
    %2243 = vmatpush1.msra.mxu0 %v160
    %2244 = vmatprep.subr.mxu0 0.0
    %2245 = vmatpush2.msra.mxu0 0.0
    %2246 = vmatprep.subr.mxu0 0.0
    %2247 = vmatpush2.msra.mxu0 0.0
    %2248 = vmatprep.subr.mxu0 0.0
    %2249 = vmatpush2.msra.mxu0 0.0
    %2250 = vmatprep.subr.mxu0 0.0
    %2251 = vmatpush2.msra.mxu0 0.0
    %2252 = vmatprep.subr.mxu0 0.0
    %2253 = vmatpush2.msra.mxu0 0.0
    %2254 = vmatprep.subr.mxu0 0.0
    %2255 = vmatpush2.msra.mxu0 0.0
    %2256 = vmatprep.subr.mxu0 0.0
    %2257 = vmatpush2.msra.mxu0 0.0
    %2258 = vmatprep.subr.mxu0 0.0
    %2259 = vmatpush2.msra.mxu0 0.0
    %2260 = vmatprep.subr.mxu0 0.0
    %2261 = vmatpush2.msra.mxu0 0.0
    %2262 = vmatprep.subr.mxu0 0.0
    %2263 = vmatpush2.msra.mxu0 0.0
    %2264 = vmatprep.subr.mxu0 0.0
    %2265 = vmatpush2.msra.mxu0 0.0
    %2266 = vmatprep.subr.mxu0 0.0
    %2267 = vmatpush2.msra.mxu0 0.0
    %2268 = vmatprep.subr.mxu0 0.0
    %2269 = vmatpush2.msra.mxu0 0.0
    %2270 = vmatprep.subr.mxu0 0.0
    %2271 = vmatpush2.msra.mxu0 0.0
    %2272 = vmatprep.subr.mxu0 0.0
    %2273 = vmatpush2.msra.mxu0 0.0
    %2274 = vmatprep.subr.mxu0 0.0
    %2275 = vmatpush2.msra.mxu0 0.0
    %2276 = vmatprep.mubr.f32.mxu0 0.0
    %2277 = vmatmul.mubr.f32.gmra.mxu0 %v2128
    %v2278 = vpop.f32.mrf.mxu0
    %v2279 = vadd.f32 %v2211, %v2278
    %v2280 = vpop.f32.mrf.mxu0
    %2281 = vmatprep.mubr.f32.mxu0 0.0
    %2282 = vmatmul.mubr.f32.gmra.mxu0 %v2131
    %v2283 = vpop.f32.mrf.mxu0
    %v2284 = vadd.f32 %v2211, %v2283
    %v2285 = vpop.f32.mrf.mxu0
    %2286 = vdwg.mxu0
    %v2287 = vlaneseq
    %v2288 = vshrl.u32 %v2287, 7
    %v2289 = vsub.s32 6, %v2288
    %v2290 = vrot.slane %v144, %v2289
    %2291 = vmatprep.subr.mxu0 0.0
    %2292 = vmatpush1.msra.mxu0 0.0
    %2293 = vmatprep.subr.mxu0 0.0
    %2294 = vmatpush1.msra.mxu0 0.0
    %2295 = vmatprep.subr.mxu0 0.0
    %2296 = vmatpush1.msra.mxu0 0.0
    %2297 = vmatprep.subr.mxu0 0.0
    %2298 = vmatpush1.msra.mxu0 0.0
    %2299 = vmatprep.subr.mxu0 0.0
    %2300 = vmatpush1.msra.mxu0 0.0
    %2301 = vmatprep.subr.mxu0 0.0
    %2302 = vmatpush1.msra.mxu0 0.0
    %2303 = vmatprep.subr.mxu0 0.0
    %2304 = vmatpush1.msra.mxu0 0.0
    %2305 = vmatprep.subr.mxu0 0.0
    %2306 = vmatpush1.msra.mxu0 0.0
    %2307 = vmatprep.subr.mxu0 0.0
    %2308 = vmatpush1.msra.mxu0 0.0
    %2309 = vmatprep.subr.mxu0 0.0
    %2310 = vmatpush1.msra.mxu0 0.0
    %2311 = vmatprep.subr.mxu0 0.0
    %2312 = vmatpush1.msra.mxu0 0.0
    %2313 = vmatprep.subr.mxu0 0.0
    %2314 = vmatpush1.msra.mxu0 0.0
    %2315 = vmatprep.subr.mxu0 0.0
    %2316 = vmatpush1.msra.mxu0 0.0
    %2317 = vmatprep.subr.mxu0 0.0
    %2318 = vmatpush1.msra.mxu0 0.0
    %2319 = vmatprep.subr.mxu0 0.0
    %2320 = vmatpush1.msra.mxu0 %v171
    %2321 = vmatprep.subr.mxu0 0.0
    %2322 = vmatpush1.msra.mxu0 %v170
    %2323 = vmatprep.subr.mxu0 0.0
    %2324 = vmatpush2.msra.mxu0 0.0
    %2325 = vmatprep.subr.mxu0 0.0
    %2326 = vmatpush2.msra.mxu0 0.0
    %2327 = vmatprep.subr.mxu0 0.0
    %2328 = vmatpush2.msra.mxu0 0.0
    %2329 = vmatprep.subr.mxu0 0.0
    %2330 = vmatpush2.msra.mxu0 0.0
    %2331 = vmatprep.subr.mxu0 0.0
    %2332 = vmatpush2.msra.mxu0 0.0
    %2333 = vmatprep.subr.mxu0 0.0
    %2334 = vmatpush2.msra.mxu0 0.0
    %2335 = vmatprep.subr.mxu0 0.0
    %2336 = vmatpush2.msra.mxu0 0.0
    %2337 = vmatprep.subr.mxu0 0.0
    %2338 = vmatpush2.msra.mxu0 0.0
    %2339 = vmatprep.subr.mxu0 0.0
    %2340 = vmatpush2.msra.mxu0 0.0
    %2341 = vmatprep.subr.mxu0 0.0
    %2342 = vmatpush2.msra.mxu0 0.0
    %2343 = vmatprep.subr.mxu0 0.0
    %2344 = vmatpush2.msra.mxu0 0.0
    %2345 = vmatprep.subr.mxu0 0.0
    %2346 = vmatpush2.msra.mxu0 0.0
    %2347 = vmatprep.subr.mxu0 0.0
    %2348 = vmatpush2.msra.mxu0 0.0
    %2349 = vmatprep.subr.mxu0 0.0
    %2350 = vmatpush2.msra.mxu0 0.0
    %2351 = vmatprep.subr.mxu0 0.0
    %2352 = vmatpush2.msra.mxu0 0.0
    %2353 = vmatprep.subr.mxu0 0.0
    %2354 = vmatpush2.msra.mxu0 0.0
    %2355 = vmatprep.mubr.f32.mxu0 0.0
    %2356 = vmatmul.mubr.f32.gmra.mxu0 %v465
    %v2357 = vpop.f32.mrf.mxu0
    %v2358 = vadd.f32 %v2290, %v2357
    %v2359 = vpop.f32.mrf.mxu0
    %2360 = vdwg.mxu0
    %v2361 = vadd.f32 %v2200, %v2358
    %v2362 = vxor.u32 %v2361, 2147483648
    %v2363 = vmul.f32 %v2362, 1.442695
    %v2364 = vpow.pop %v2363
    %v2365 = vadd.f32 %v2364, 1.0
    %v2366 = vrcp.pop %v2365
    %v2367 = vmul.f32 1.0, %v2366
    %2369 = vrot.lane.b32.xlu0 %v2358, 96
    %v2370 = vpop.permute.xlu0 %2369
    %v2372 = vmul.f32 %v2367, %v2370
    %2374 = vrot.lane.b32.xlu0 %v2372, 32
    %v2375 = vpop.permute.xlu0 %2374
    %v2377 = vadd.f32 %v2200, %v2375
    %v2378 = vtanh.pop %v2377
    %v2379 = vsub.f32 1.0, %v2367
    %2381 = vrot.lane.b32.xlu0 %v2378, 112
    %v2382 = vpop.permute.xlu0 %2381
    %v2384 = vmul.f32 %v2379, %v2382
    %v2385 = vmul.f32 %v2367, 0.0
    %v2386 = vadd.f32 %v2384, %v2385
    %v2387 = vlaneseq
    %v2388 = vshrl.u32 %v2387, 7
    %v2389 = vsub.s32 7, %v2388
    %v2390 = vrot.slane %v144, %v2389
    %2391 = vmatprep.subr.mxu0 0.0
    %2392 = vmatpush1.msra.mxu0 0.0
    %2393 = vmatprep.subr.mxu0 0.0
    %2394 = vmatpush1.msra.mxu0 0.0
    %2395 = vmatprep.subr.mxu0 0.0
    %2396 = vmatpush1.msra.mxu0 0.0
    %2397 = vmatprep.subr.mxu0 0.0
    %2398 = vmatpush1.msra.mxu0 0.0
    %2399 = vmatprep.subr.mxu0 0.0
    %2400 = vmatpush1.msra.mxu0 0.0
    %2401 = vmatprep.subr.mxu0 0.0
    %2402 = vmatpush1.msra.mxu0 0.0
    %2403 = vmatprep.subr.mxu0 0.0
    %2404 = vmatpush1.msra.mxu0 0.0
    %2405 = vmatprep.subr.mxu0 0.0
    %2406 = vmatpush1.msra.mxu0 0.0
    %2407 = vmatprep.subr.mxu0 0.0
    %2408 = vmatpush1.msra.mxu0 0.0
    %2409 = vmatprep.subr.mxu0 0.0
    %2410 = vmatpush1.msra.mxu0 0.0
    %2411 = vmatprep.subr.mxu0 0.0
    %2412 = vmatpush1.msra.mxu0 0.0
    %2413 = vmatprep.subr.mxu0 0.0
    %2414 = vmatpush1.msra.mxu0 0.0
    %2415 = vmatprep.subr.mxu0 0.0
    %2416 = vmatpush1.msra.mxu0 0.0
    %2417 = vmatprep.subr.mxu0 0.0
    %2418 = vmatpush1.msra.mxu0 0.0
    %2419 = vmatprep.subr.mxu0 0.0
    %2420 = vmatpush1.msra.mxu0 %v174
    %2421 = vmatprep.subr.mxu0 0.0
    %2422 = vmatpush1.msra.mxu0 %v173
    %2423 = vmatprep.subr.mxu0 0.0
    %2424 = vmatpush2.msra.mxu0 0.0
    %2425 = vmatprep.subr.mxu0 0.0
    %2426 = vmatpush2.msra.mxu0 0.0
    %2427 = vmatprep.subr.mxu0 0.0
    %2428 = vmatpush2.msra.mxu0 0.0
    %2429 = vmatprep.subr.mxu0 0.0
    %2430 = vmatpush2.msra.mxu0 0.0
    %2431 = vmatprep.subr.mxu0 0.0
    %2432 = vmatpush2.msra.mxu0 0.0
    %2433 = vmatprep.subr.mxu0 0.0
    %2434 = vmatpush2.msra.mxu0 0.0
    %2435 = vmatprep.subr.mxu0 0.0
    %2436 = vmatpush2.msra.mxu0 0.0
    %2437 = vmatprep.subr.mxu0 0.0
    %2438 = vmatpush2.msra.mxu0 0.0
    %2439 = vmatprep.subr.mxu0 0.0
    %2440 = vmatpush2.msra.mxu0 0.0
    %2441 = vmatprep.subr.mxu0 0.0
    %2442 = vmatpush2.msra.mxu0 0.0
    %2443 = vmatprep.subr.mxu0 0.0
    %2444 = vmatpush2.msra.mxu0 0.0
    %2445 = vmatprep.subr.mxu0 0.0
    %2446 = vmatpush2.msra.mxu0 0.0
    %2447 = vmatprep.subr.mxu0 0.0
    %2448 = vmatpush2.msra.mxu0 0.0
    %2449 = vmatprep.subr.mxu0 0.0
    %2450 = vmatpush2.msra.mxu0 0.0
    %2451 = vmatprep.subr.mxu0 0.0
    %2452 = vmatpush2.msra.mxu0 0.0
    %2453 = vmatprep.subr.mxu0 0.0
    %2454 = vmatpush2.msra.mxu0 0.0
    %2455 = vmatprep.mubr.f32.mxu0 0.0
    %2456 = vmatmul.mubr.f32.gmra.mxu0 %v465
    %v2457 = vpop.f32.mrf.mxu0
    %v2458 = vadd.f32 %v2390, %v2457
    %v2459 = vpop.f32.mrf.mxu0
    %2460 = vdwg.mxu0
    %v2462 = vrot.slane %v2458, 2
    %v2464 = vadd.f32 %v2284, %v2462
    %v2465 = vxor.u32 %v2464, 2147483648
    %v2466 = vmul.f32 %v2465, 1.442695
    %v2467 = vpow.pop %v2466
    %v2468 = vadd.f32 %v2467, 1.0
    %v2469 = vrcp.pop %v2468
    %v2470 = vmul.f32 1.0, %v2469
    %2471 = vrot.lane.b32.xlu0 %v2462, 96
    %v2472 = vpop.permute.xlu0 %2471
    %v2474 = vmul.f32 %v2470, %v2472
    %2476 = vrot.lane.b32.xlu0 %v2474, 32
    %v2477 = vpop.permute.xlu0 %2476
    %v2479 = vadd.f32 %v2284, %v2477
    %v2480 = vtanh.pop %v2479
    %v2481 = vsub.f32 1.0, %v2470
    %2483 = vrot.lane.b32.xlu0 %v2480, 112
    %v2484 = vpop.permute.xlu0 %2483
    %v2486 = vmul.f32 %v2481, %v2484
    %v2487 = vmul.f32 %v2470, 0.0
    %v2488 = vadd.f32 %v2486, %v2487
    %2490 = vrot.lane.b32.xlu0 %v2386, 112
    %v2491 = vpop.permute.xlu0 %2490
    %v2492 = vsel %vm182, %v2491, 0
    %2494 = vmatprep.subr.mxu0 0.0
    %2495 = vmatpush1.msra.mxu0 0.0
    %2496 = vmatprep.subr.mxu0 0.0
    %2497 = vmatpush1.msra.mxu0 0.0
    %2498 = vmatprep.subr.mxu0 0.0
    %2499 = vmatpush1.msra.mxu0 0.0
    %2500 = vmatprep.subr.mxu0 0.0
    %2501 = vmatpush1.msra.mxu0 0.0
    %2502 = vmatprep.subr.mxu0 0.0
    %2503 = vmatpush1.msra.mxu0 0.0
    %2504 = vmatprep.subr.mxu0 0.0
    %2505 = vmatpush1.msra.mxu0 0.0
    %2506 = vmatprep.subr.mxu0 0.0
    %2507 = vmatpush1.msra.mxu0 0.0
    %2508 = vmatprep.subr.mxu0 0.0
    %2509 = vmatpush1.msra.mxu0 0.0
    %2510 = vmatprep.subr.mxu0 0.0
    %2511 = vmatpush1.msra.mxu0 0.0
    %2512 = vmatprep.subr.mxu0 0.0
    %2513 = vmatpush1.msra.mxu0 0.0
    %2514 = vmatprep.subr.mxu0 0.0
    %2515 = vmatpush1.msra.mxu0 0.0
    %2516 = vmatprep.subr.mxu0 0.0
    %2517 = vmatpush1.msra.mxu0 0.0
    %2518 = vmatprep.subr.mxu0 0.0
    %2519 = vmatpush1.msra.mxu0 0.0
    %2520 = vmatprep.subr.mxu0 0.0
    %2521 = vmatpush1.msra.mxu0 0.0
    %2522 = vmatprep.subr.mxu0 0.0
    %2523 = vmatpush1.msra.mxu0 %v171
    %2524 = vmatprep.subr.mxu0 0.0
    %2525 = vmatpush1.msra.mxu0 %v170
    %2526 = vmatprep.subr.mxu0 0.0
    %2527 = vmatpush2.msra.mxu0 0.0
    %2528 = vmatprep.subr.mxu0 0.0
    %2529 = vmatpush2.msra.mxu0 0.0
    %2530 = vmatprep.subr.mxu0 0.0
    %2531 = vmatpush2.msra.mxu0 0.0
    %2532 = vmatprep.subr.mxu0 0.0
    %2533 = vmatpush2.msra.mxu0 0.0
    %2534 = vmatprep.subr.mxu0 0.0
    %2535 = vmatpush2.msra.mxu0 0.0
    %2536 = vmatprep.subr.mxu0 0.0
    %2537 = vmatpush2.msra.mxu0 0.0
    %2538 = vmatprep.subr.mxu0 0.0
    %2539 = vmatpush2.msra.mxu0 0.0
    %2540 = vmatprep.subr.mxu0 0.0
    %2541 = vmatpush2.msra.mxu0 0.0
    %2542 = vmatprep.subr.mxu0 0.0
    %2543 = vmatpush2.msra.mxu0 0.0
    %2544 = vmatprep.subr.mxu0 0.0
    %2545 = vmatpush2.msra.mxu0 0.0
    %2546 = vmatprep.subr.mxu0 0.0
    %2547 = vmatpush2.msra.mxu0 0.0
    %2548 = vmatprep.subr.mxu0 0.0
    %2549 = vmatpush2.msra.mxu0 0.0
    %2550 = vmatprep.subr.mxu0 0.0
    %2551 = vmatpush2.msra.mxu0 0.0
    %2552 = vmatprep.subr.mxu0 0.0
    %2553 = vmatpush2.msra.mxu0 0.0
    %2554 = vmatprep.subr.mxu0 0.0
    %2555 = vmatpush2.msra.mxu0 0.0
    %2556 = vmatprep.subr.mxu0 0.0
    %2557 = vmatpush2.msra.mxu0 0.0
    %2558 = vmatprep.mubr.f32.mxu0 0.0
    %2559 = vmatmul.mubr.f32.gmra.mxu0 %v2492
    %v2560 = vpop.f32.mrf.mxu0
    %v2561 = vadd.f32 %v2290, %v2560
    %v2562 = vpop.f32.mrf.mxu0
    %2563 = vdwg.mxu0
    %v2565 = vrot.slane %v2561, 6
    %v2567 = vadd.f32 %v2200, %v2565
    %v2568 = vxor.u32 %v2567, 2147483648
    %v2569 = vmul.f32 %v2568, 1.442695
    %v2570 = vpow.pop %v2569
    %v2571 = vadd.f32 %v2570, 1.0
    %v2572 = vrcp.pop %v2571
    %v2573 = vmul.f32 1.0, %v2572
    %2574 = vrot.lane.b32.xlu0 %v2565, 96
    %v2575 = vpop.permute.xlu0 %2574
    %v2577 = vmul.f32 %v2573, %v2575
    %2579 = vrot.lane.b32.xlu0 %v2577, 32
    %v2580 = vpop.permute.xlu0 %2579
    %v2582 = vadd.f32 %v2200, %v2580
    %v2583 = vtanh.pop %v2582
    %v2584 = vsub.f32 1.0, %v2573
    %2586 = vrot.lane.b32.xlu0 %v2583, 112
    %v2587 = vpop.permute.xlu0 %2586
    %v2589 = vmul.f32 %v2584, %v2587
    %v2590 = vrot.slane %v2386, 6
    %v2592 = vmul.f32 %v2573, %v2590
    %v2593 = vadd.f32 %v2589, %v2592
    %v2595 = vrot.slane %v2488, 6
    %2596 = vrot.lane.b32.xlu0 %v2595, 112
    %v2597 = vpop.permute.xlu0 %2596
    %v2598 = vsel %vm182, %v2597, 0
    %2600 = vmatprep.subr.mxu0 0.0
    %2601 = vmatpush1.msra.mxu0 0.0
    %2602 = vmatprep.subr.mxu0 0.0
    %2603 = vmatpush1.msra.mxu0 0.0
    %2604 = vmatprep.subr.mxu0 0.0
    %2605 = vmatpush1.msra.mxu0 0.0
    %2606 = vmatprep.subr.mxu0 0.0
    %2607 = vmatpush1.msra.mxu0 0.0
    %2608 = vmatprep.subr.mxu0 0.0
    %2609 = vmatpush1.msra.mxu0 0.0
    %2610 = vmatprep.subr.mxu0 0.0
    %2611 = vmatpush1.msra.mxu0 0.0
    %2612 = vmatprep.subr.mxu0 0.0
    %2613 = vmatpush1.msra.mxu0 0.0
    %2614 = vmatprep.subr.mxu0 0.0
    %2615 = vmatpush1.msra.mxu0 0.0
    %2616 = vmatprep.subr.mxu0 0.0
    %2617 = vmatpush1.msra.mxu0 0.0
    %2618 = vmatprep.subr.mxu0 0.0
    %2619 = vmatpush1.msra.mxu0 0.0
    %2620 = vmatprep.subr.mxu0 0.0
    %2621 = vmatpush1.msra.mxu0 0.0
    %2622 = vmatprep.subr.mxu0 0.0
    %2623 = vmatpush1.msra.mxu0 0.0
    %2624 = vmatprep.subr.mxu0 0.0
    %2625 = vmatpush1.msra.mxu0 0.0
    %2626 = vmatprep.subr.mxu0 0.0
    %2627 = vmatpush1.msra.mxu0 0.0
    %2628 = vmatprep.subr.mxu0 0.0
    %2629 = vmatpush1.msra.mxu0 %v174
    %2630 = vmatprep.subr.mxu0 0.0
    %2631 = vmatpush1.msra.mxu0 %v173
    %2632 = vmatprep.subr.mxu0 0.0
    %2633 = vmatpush2.msra.mxu0 0.0
    %2634 = vmatprep.subr.mxu0 0.0
    %2635 = vmatpush2.msra.mxu0 0.0
    %2636 = vmatprep.subr.mxu0 0.0
    %2637 = vmatpush2.msra.mxu0 0.0
    %2638 = vmatprep.subr.mxu0 0.0
    %2639 = vmatpush2.msra.mxu0 0.0
    %2640 = vmatprep.subr.mxu0 0.0
    %2641 = vmatpush2.msra.mxu0 0.0
    %2642 = vmatprep.subr.mxu0 0.0
    %2643 = vmatpush2.msra.mxu0 0.0
    %2644 = vmatprep.subr.mxu0 0.0
    %2645 = vmatpush2.msra.mxu0 0.0
    %2646 = vmatprep.subr.mxu0 0.0
    %2647 = vmatpush2.msra.mxu0 0.0
    %2648 = vmatprep.subr.mxu0 0.0
    %2649 = vmatpush2.msra.mxu0 0.0
    %2650 = vmatprep.subr.mxu0 0.0
    %2651 = vmatpush2.msra.mxu0 0.0
    %2652 = vmatprep.subr.mxu0 0.0
    %2653 = vmatpush2.msra.mxu0 0.0
    %2654 = vmatprep.subr.mxu0 0.0
    %2655 = vmatpush2.msra.mxu0 0.0
    %2656 = vmatprep.subr.mxu0 0.0
    %2657 = vmatpush2.msra.mxu0 0.0
    %2658 = vmatprep.subr.mxu0 0.0
    %2659 = vmatpush2.msra.mxu0 0.0
    %2660 = vmatprep.subr.mxu0 0.0
    %2661 = vmatpush2.msra.mxu0 0.0
    %2662 = vmatprep.subr.mxu0 0.0
    %2663 = vmatpush2.msra.mxu0 0.0
    %2664 = vmatprep.mubr.f32.mxu0 0.0
    %2665 = vmatmul.mubr.f32.gmra.mxu0 %v2598
    %v2666 = vpop.f32.mrf.mxu0
    %v2667 = vadd.f32 %v2390, %v2666
    %v2668 = vpop.f32.mrf.mxu0
    %2669 = vdwg.mxu0
    %v2671 = vrot.slane %v2667, 4
    %v2673 = vadd.f32 %v2284, %v2671
    %v2674 = vxor.u32 %v2673, 2147483648
    %v2675 = vmul.f32 %v2674, 1.442695
    %v2676 = vpow.pop %v2675
    %v2677 = vadd.f32 %v2676, 1.0
    %v2678 = vrcp.pop %v2677
    %v2679 = vmul.f32 1.0, %v2678
    %2680 = vrot.lane.b32.xlu0 %v2671, 96
    %v2681 = vpop.permute.xlu0 %2680
    %v2683 = vmul.f32 %v2679, %v2681
    %2685 = vrot.lane.b32.xlu0 %v2683, 32
    %v2686 = vpop.permute.xlu0 %2685
    %v2688 = vadd.f32 %v2284, %v2686
    %v2689 = vtanh.pop %v2688
    %v2690 = vsub.f32 1.0, %v2679
    %2692 = vrot.lane.b32.xlu0 %v2689, 112
    %v2693 = vpop.permute.xlu0 %2692
    %v2695 = vmul.f32 %v2690, %v2693
    %v2696 = vrot.slane %v2488, 2
    %v2698 = vmul.f32 %v2679, %v2696
    %v2699 = vadd.f32 %v2695, %v2698
    %v2701 = vrot.slane %v2593, 2
    %2702 = vrot.lane.b32.xlu0 %v2701, 112
    %v2703 = vpop.permute.xlu0 %2702
    %v2704 = vsel %vm182, %v2703, 0
    %2706 = vmatprep.subr.mxu0 0.0
    %2707 = vmatpush1.msra.mxu0 0.0
    %2708 = vmatprep.subr.mxu0 0.0
    %2709 = vmatpush1.msra.mxu0 0.0
    %2710 = vmatprep.subr.mxu0 0.0
    %2711 = vmatpush1.msra.mxu0 0.0
    %2712 = vmatprep.subr.mxu0 0.0
    %2713 = vmatpush1.msra.mxu0 0.0
    %2714 = vmatprep.subr.mxu0 0.0
    %2715 = vmatpush1.msra.mxu0 0.0
    %2716 = vmatprep.subr.mxu0 0.0
    %2717 = vmatpush1.msra.mxu0 0.0
    %2718 = vmatprep.subr.mxu0 0.0
    %2719 = vmatpush1.msra.mxu0 0.0
    %2720 = vmatprep.subr.mxu0 0.0
    %2721 = vmatpush1.msra.mxu0 0.0
    %2722 = vmatprep.subr.mxu0 0.0
    %2723 = vmatpush1.msra.mxu0 0.0
    %2724 = vmatprep.subr.mxu0 0.0
    %2725 = vmatpush1.msra.mxu0 0.0
    %2726 = vmatprep.subr.mxu0 0.0
    %2727 = vmatpush1.msra.mxu0 0.0
    %2728 = vmatprep.subr.mxu0 0.0
    %2729 = vmatpush1.msra.mxu0 0.0
    %2730 = vmatprep.subr.mxu0 0.0
    %2731 = vmatpush1.msra.mxu0 0.0
    %2732 = vmatprep.subr.mxu0 0.0
    %2733 = vmatpush1.msra.mxu0 0.0
    %2734 = vmatprep.subr.mxu0 0.0
    %2735 = vmatpush1.msra.mxu0 %v171
    %2736 = vmatprep.subr.mxu0 0.0
    %2737 = vmatpush1.msra.mxu0 %v170
    %2738 = vmatprep.subr.mxu0 0.0
    %2739 = vmatpush2.msra.mxu0 0.0
    %2740 = vmatprep.subr.mxu0 0.0
    %2741 = vmatpush2.msra.mxu0 0.0
    %2742 = vmatprep.subr.mxu0 0.0
    %2743 = vmatpush2.msra.mxu0 0.0
    %2744 = vmatprep.subr.mxu0 0.0
    %2745 = vmatpush2.msra.mxu0 0.0
    %2746 = vmatprep.subr.mxu0 0.0
    %2747 = vmatpush2.msra.mxu0 0.0
    %2748 = vmatprep.subr.mxu0 0.0
    %2749 = vmatpush2.msra.mxu0 0.0
    %2750 = vmatprep.subr.mxu0 0.0
    %2751 = vmatpush2.msra.mxu0 0.0
    %2752 = vmatprep.subr.mxu0 0.0
    %2753 = vmatpush2.msra.mxu0 0.0
    %2754 = vmatprep.subr.mxu0 0.0
    %2755 = vmatpush2.msra.mxu0 0.0
    %2756 = vmatprep.subr.mxu0 0.0
    %2757 = vmatpush2.msra.mxu0 0.0
    %2758 = vmatprep.subr.mxu0 0.0
    %2759 = vmatpush2.msra.mxu0 0.0
    %2760 = vmatprep.subr.mxu0 0.0
    %2761 = vmatpush2.msra.mxu0 0.0
    %2762 = vmatprep.subr.mxu0 0.0
    %2763 = vmatpush2.msra.mxu0 0.0
    %2764 = vmatprep.subr.mxu0 0.0
    %2765 = vmatpush2.msra.mxu0 0.0
    %2766 = vmatprep.subr.mxu0 0.0
    %2767 = vmatpush2.msra.mxu0 0.0
    %2768 = vmatprep.subr.mxu0 0.0
    %2769 = vmatpush2.msra.mxu0 0.0
    %2770 = vmatprep.mubr.f32.mxu0 0.0
    %2771 = vmatmul.mubr.f32.gmra.mxu0 %v2704
    %v2772 = vpop.f32.mrf.mxu0
    %v2773 = vadd.f32 %v2290, %v2772
    %v2774 = vpop.f32.mrf.mxu0
    %2775 = vdwg.mxu0
    %v2777 = vrot.slane %v2773, 4
    %v2779 = vadd.f32 %v2200, %v2777
    %v2780 = vxor.u32 %v2779, 2147483648
    %v2781 = vmul.f32 %v2780, 1.442695
    %v2782 = vpow.pop %v2781
    %v2783 = vadd.f32 %v2782, 1.0
    %v2784 = vrcp.pop %v2783
    %v2785 = vmul.f32 1.0, %v2784
    %2786 = vrot.lane.b32.xlu0 %v2777, 96
    %v2787 = vpop.permute.xlu0 %2786
    %v2789 = vmul.f32 %v2785, %v2787
    %2791 = vrot.lane.b32.xlu0 %v2789, 32
    %v2792 = vpop.permute.xlu0 %2791
    %v2794 = vadd.f32 %v2200, %v2792
    %v2795 = vtanh.pop %v2794
    %v2796 = vsub.f32 1.0, %v2785
    %2798 = vrot.lane.b32.xlu0 %v2795, 112
    %v2799 = vpop.permute.xlu0 %2798
    %v2801 = vmul.f32 %v2796, %v2799
    %v2802 = vrot.slane %v2593, 6
    %v2804 = vmul.f32 %v2785, %v2802
    %v2805 = vadd.f32 %v2801, %v2804
    %v2807 = vrot.slane %v2699, 4
    %2808 = vrot.lane.b32.xlu0 %v2807, 112
    %v2809 = vpop.permute.xlu0 %2808
    %v2810 = vsel %vm182, %v2809, 0
    %2812 = vmatprep.subr.mxu0 0.0
    %2813 = vmatpush1.msra.mxu0 0.0
    %2814 = vmatprep.subr.mxu0 0.0
    %2815 = vmatpush1.msra.mxu0 0.0
    %2816 = vmatprep.subr.mxu0 0.0
    %2817 = vmatpush1.msra.mxu0 0.0
    %2818 = vmatprep.subr.mxu0 0.0
    %2819 = vmatpush1.msra.mxu0 0.0
    %2820 = vmatprep.subr.mxu0 0.0
    %2821 = vmatpush1.msra.mxu0 0.0
    %2822 = vmatprep.subr.mxu0 0.0
    %2823 = vmatpush1.msra.mxu0 0.0
    %2824 = vmatprep.subr.mxu0 0.0
    %2825 = vmatpush1.msra.mxu0 0.0
    %2826 = vmatprep.subr.mxu0 0.0
    %2827 = vmatpush1.msra.mxu0 0.0
    %2828 = vmatprep.subr.mxu0 0.0
    %2829 = vmatpush1.msra.mxu0 0.0
    %2830 = vmatprep.subr.mxu0 0.0
    %2831 = vmatpush1.msra.mxu0 0.0
    %2832 = vmatprep.subr.mxu0 0.0
    %2833 = vmatpush1.msra.mxu0 0.0
    %2834 = vmatprep.subr.mxu0 0.0
    %2835 = vmatpush1.msra.mxu0 0.0
    %2836 = vmatprep.subr.mxu0 0.0
    %2837 = vmatpush1.msra.mxu0 0.0
    %2838 = vmatprep.subr.mxu0 0.0
    %2839 = vmatpush1.msra.mxu0 0.0
    %2840 = vmatprep.subr.mxu0 0.0
    %2841 = vmatpush1.msra.mxu0 %v174
    %2842 = vmatprep.subr.mxu0 0.0
    %2843 = vmatpush1.msra.mxu0 %v173
    %2844 = vmatprep.subr.mxu0 0.0
    %2845 = vmatpush2.msra.mxu0 0.0
    %2846 = vmatprep.subr.mxu0 0.0
    %2847 = vmatpush2.msra.mxu0 0.0
    %2848 = vmatprep.subr.mxu0 0.0
    %2849 = vmatpush2.msra.mxu0 0.0
    %2850 = vmatprep.subr.mxu0 0.0
    %2851 = vmatpush2.msra.mxu0 0.0
    %2852 = vmatprep.subr.mxu0 0.0
    %2853 = vmatpush2.msra.mxu0 0.0
    %2854 = vmatprep.subr.mxu0 0.0
    %2855 = vmatpush2.msra.mxu0 0.0
    %2856 = vmatprep.subr.mxu0 0.0
    %2857 = vmatpush2.msra.mxu0 0.0
    %2858 = vmatprep.subr.mxu0 0.0
    %2859 = vmatpush2.msra.mxu0 0.0
    %2860 = vmatprep.subr.mxu0 0.0
    %2861 = vmatpush2.msra.mxu0 0.0
    %2862 = vmatprep.subr.mxu0 0.0
    %2863 = vmatpush2.msra.mxu0 0.0
    %2864 = vmatprep.subr.mxu0 0.0
    %2865 = vmatpush2.msra.mxu0 0.0
    %2866 = vmatprep.subr.mxu0 0.0
    %2867 = vmatpush2.msra.mxu0 0.0
    %2868 = vmatprep.subr.mxu0 0.0
    %2869 = vmatpush2.msra.mxu0 0.0
    %2870 = vmatprep.subr.mxu0 0.0
    %2871 = vmatpush2.msra.mxu0 0.0
    %2872 = vmatprep.subr.mxu0 0.0
    %2873 = vmatpush2.msra.mxu0 0.0
    %2874 = vmatprep.subr.mxu0 0.0
    %2875 = vmatpush2.msra.mxu0 0.0
    %2876 = vmatprep.mubr.f32.mxu0 0.0
    %2877 = vmatmul.mubr.f32.gmra.mxu0 %v2810
    %v2878 = vpop.f32.mrf.mxu0
    %v2879 = vadd.f32 %v2390, %v2878
    %v2880 = vpop.f32.mrf.mxu0
    %2881 = vdwg.mxu0
    %v2883 = vrot.slane %v2879, 6
    %v2885 = vadd.f32 %v2284, %v2883
    %v2886 = vxor.u32 %v2885, 2147483648
    %v2887 = vmul.f32 %v2886, 1.442695
    %v2888 = vpow.pop %v2887
    %v2889 = vadd.f32 %v2888, 1.0
    %v2890 = vrcp.pop %v2889
    %v2891 = vmul.f32 1.0, %v2890
    %2892 = vrot.lane.b32.xlu0 %v2883, 96
    %v2893 = vpop.permute.xlu0 %2892
    %v2895 = vmul.f32 %v2891, %v2893
    %2897 = vrot.lane.b32.xlu0 %v2895, 32
    %v2898 = vpop.permute.xlu0 %2897
    %v2900 = vadd.f32 %v2284, %v2898
    %v2901 = vtanh.pop %v2900
    %v2902 = vsub.f32 1.0, %v2891
    %2904 = vrot.lane.b32.xlu0 %v2901, 112
    %v2905 = vpop.permute.xlu0 %2904
    %v2907 = vmul.f32 %v2902, %v2905
    %v2908 = vrot.slane %v2699, 2
    %v2910 = vmul.f32 %v2891, %v2908
    %v2911 = vadd.f32 %v2907, %v2910
    %v2913 = vrot.slane %v2805, 4
    %2914 = vrot.lane.b32.xlu0 %v2913, 112
    %v2915 = vpop.permute.xlu0 %2914
    %v2916 = vsel %vm182, %v2915, 0
    %2918 = vmatprep.subr.mxu0 0.0
    %2919 = vmatpush1.msra.mxu0 0.0
    %2920 = vmatprep.subr.mxu0 0.0
    %2921 = vmatpush1.msra.mxu0 0.0
    %2922 = vmatprep.subr.mxu0 0.0
    %2923 = vmatpush1.msra.mxu0 0.0
    %2924 = vmatprep.subr.mxu0 0.0
    %2925 = vmatpush1.msra.mxu0 0.0
    %2926 = vmatprep.subr.mxu0 0.0
    %2927 = vmatpush1.msra.mxu0 0.0
    %2928 = vmatprep.subr.mxu0 0.0
    %2929 = vmatpush1.msra.mxu0 0.0
    %2930 = vmatprep.subr.mxu0 0.0
    %2931 = vmatpush1.msra.mxu0 0.0
    %2932 = vmatprep.subr.mxu0 0.0
    %2933 = vmatpush1.msra.mxu0 0.0
    %2934 = vmatprep.subr.mxu0 0.0
    %2935 = vmatpush1.msra.mxu0 0.0
    %2936 = vmatprep.subr.mxu0 0.0
    %2937 = vmatpush1.msra.mxu0 0.0
    %2938 = vmatprep.subr.mxu0 0.0
    %2939 = vmatpush1.msra.mxu0 0.0
    %2940 = vmatprep.subr.mxu0 0.0
    %2941 = vmatpush1.msra.mxu0 0.0
    %2942 = vmatprep.subr.mxu0 0.0
    %2943 = vmatpush1.msra.mxu0 0.0
    %2944 = vmatprep.subr.mxu0 0.0
    %2945 = vmatpush1.msra.mxu0 0.0
    %2946 = vmatprep.subr.mxu0 0.0
    %2947 = vmatpush1.msra.mxu0 %v171
    %2948 = vmatprep.subr.mxu0 0.0
    %2949 = vmatpush1.msra.mxu0 %v170
    %2950 = vmatprep.subr.mxu0 0.0
    %2951 = vmatpush2.msra.mxu0 0.0
    %2952 = vmatprep.subr.mxu0 0.0
    %2953 = vmatpush2.msra.mxu0 0.0
    %2954 = vmatprep.subr.mxu0 0.0
    %2955 = vmatpush2.msra.mxu0 0.0
    %2956 = vmatprep.subr.mxu0 0.0
    %2957 = vmatpush2.msra.mxu0 0.0
    %2958 = vmatprep.subr.mxu0 0.0
    %2959 = vmatpush2.msra.mxu0 0.0
    %2960 = vmatprep.subr.mxu0 0.0
    %2961 = vmatpush2.msra.mxu0 0.0
    %2962 = vmatprep.subr.mxu0 0.0
    %2963 = vmatpush2.msra.mxu0 0.0
    %2964 = vmatprep.subr.mxu0 0.0
    %2965 = vmatpush2.msra.mxu0 0.0
    %2966 = vmatprep.subr.mxu0 0.0
    %2967 = vmatpush2.msra.mxu0 0.0
    %2968 = vmatprep.subr.mxu0 0.0
    %2969 = vmatpush2.msra.mxu0 0.0
    %2970 = vmatprep.subr.mxu0 0.0
    %2971 = vmatpush2.msra.mxu0 0.0
    %2972 = vmatprep.subr.mxu0 0.0
    %2973 = vmatpush2.msra.mxu0 0.0
    %2974 = vmatprep.subr.mxu0 0.0
    %2975 = vmatpush2.msra.mxu0 0.0
    %2976 = vmatprep.subr.mxu0 0.0
    %2977 = vmatpush2.msra.mxu0 0.0
    %2978 = vmatprep.subr.mxu0 0.0
    %2979 = vmatpush2.msra.mxu0 0.0
    %2980 = vmatprep.subr.mxu0 0.0
    %2981 = vmatpush2.msra.mxu0 0.0
    %2982 = vmatprep.mubr.f32.mxu0 0.0
    %2983 = vmatmul.mubr.f32.gmra.mxu0 %v2916
    %v2984 = vpop.f32.mrf.mxu0
    %v2985 = vadd.f32 %v2290, %v2984
    %v2986 = vpop.f32.mrf.mxu0
    %2987 = vdwg.mxu0
    %v2989 = vrot.slane %v2985, 2
    %v2991 = vadd.f32 %v2200, %v2989
    %v2992 = vxor.u32 %v2991, 2147483648
    %v2993 = vmul.f32 %v2992, 1.442695
    %v2994 = vpow.pop %v2993
    %v2995 = vadd.f32 %v2994, 1.0
    %v2996 = vrcp.pop %v2995
    %v2997 = vmul.f32 1.0, %v2996
    %2998 = vrot.lane.b32.xlu0 %v2989, 96
    %v2999 = vpop.permute.xlu0 %2998
    %v3001 = vmul.f32 %v2997, %v2999
    %3003 = vrot.lane.b32.xlu0 %v3001, 32
    %v3004 = vpop.permute.xlu0 %3003
    %v3006 = vadd.f32 %v2200, %v3004
    %v3007 = vtanh.pop %v3006
    %v3008 = vsub.f32 1.0, %v2997
    %3010 = vrot.lane.b32.xlu0 %v3007, 112
    %v3011 = vpop.permute.xlu0 %3010
    %v3013 = vmul.f32 %v3008, %v3011
    %v3014 = vrot.slane %v2805, 6
    %v3016 = vmul.f32 %v2997, %v3014
    %v3017 = vadd.f32 %v3013, %v3016
    %v3019 = vrot.slane %v2911, 2
    %3020 = vrot.lane.b32.xlu0 %v3019, 112
    %v3021 = vpop.permute.xlu0 %3020
    %v3022 = vsel %vm182, %v3021, 0
    %3024 = vmatprep.subr.mxu0 0.0
    %3025 = vmatpush1.msra.mxu0 0.0
    %3026 = vmatprep.subr.mxu0 0.0
    %3027 = vmatpush1.msra.mxu0 0.0
    %3028 = vmatprep.subr.mxu0 0.0
    %3029 = vmatpush1.msra.mxu0 0.0
    %3030 = vmatprep.subr.mxu0 0.0
    %3031 = vmatpush1.msra.mxu0 0.0
    %3032 = vmatprep.subr.mxu0 0.0
    %3033 = vmatpush1.msra.mxu0 0.0
    %3034 = vmatprep.subr.mxu0 0.0
    %3035 = vmatpush1.msra.mxu0 0.0
    %3036 = vmatprep.subr.mxu0 0.0
    %3037 = vmatpush1.msra.mxu0 0.0
    %3038 = vmatprep.subr.mxu0 0.0
    %3039 = vmatpush1.msra.mxu0 0.0
    %3040 = vmatprep.subr.mxu0 0.0
    %3041 = vmatpush1.msra.mxu0 0.0
    %3042 = vmatprep.subr.mxu0 0.0
    %3043 = vmatpush1.msra.mxu0 0.0
    %3044 = vmatprep.subr.mxu0 0.0
    %3045 = vmatpush1.msra.mxu0 0.0
    %3046 = vmatprep.subr.mxu0 0.0
    %3047 = vmatpush1.msra.mxu0 0.0
    %3048 = vmatprep.subr.mxu0 0.0
    %3049 = vmatpush1.msra.mxu0 0.0
    %3050 = vmatprep.subr.mxu0 0.0
    %3051 = vmatpush1.msra.mxu0 0.0
    %3052 = vmatprep.subr.mxu0 0.0
    %3053 = vmatpush1.msra.mxu0 %v174
    %3054 = vmatprep.subr.mxu0 0.0
    %3055 = vmatpush1.msra.mxu0 %v173
    %3056 = vmatprep.subr.mxu0 0.0
    %3057 = vmatpush2.msra.mxu0 0.0
    %3058 = vmatprep.subr.mxu0 0.0
    %3059 = vmatpush2.msra.mxu0 0.0
    %3060 = vmatprep.subr.mxu0 0.0
    %3061 = vmatpush2.msra.mxu0 0.0
    %3062 = vmatprep.subr.mxu0 0.0
    %3063 = vmatpush2.msra.mxu0 0.0
    %3064 = vmatprep.subr.mxu0 0.0
    %3065 = vmatpush2.msra.mxu0 0.0
    %3066 = vmatprep.subr.mxu0 0.0
    %3067 = vmatpush2.msra.mxu0 0.0
    %3068 = vmatprep.subr.mxu0 0.0
    %3069 = vmatpush2.msra.mxu0 0.0
    %3070 = vmatprep.subr.mxu0 0.0
    %3071 = vmatpush2.msra.mxu0 0.0
    %3072 = vmatprep.subr.mxu0 0.0
    %3073 = vmatpush2.msra.mxu0 0.0
    %3074 = vmatprep.subr.mxu0 0.0
    %3075 = vmatpush2.msra.mxu0 0.0
    %3076 = vmatprep.subr.mxu0 0.0
    %3077 = vmatpush2.msra.mxu0 0.0
    %3078 = vmatprep.subr.mxu0 0.0
    %3079 = vmatpush2.msra.mxu0 0.0
    %3080 = vmatprep.subr.mxu0 0.0
    %3081 = vmatpush2.msra.mxu0 0.0
    %3082 = vmatprep.subr.mxu0 0.0
    %3083 = vmatpush2.msra.mxu0 0.0
    %3084 = vmatprep.subr.mxu0 0.0
    %3085 = vmatpush2.msra.mxu0 0.0
    %3086 = vmatprep.subr.mxu0 0.0
    %3087 = vmatpush2.msra.mxu0 0.0
    %3088 = vmatprep.mubr.f32.mxu0 0.0
    %3089 = vmatmul.mubr.f32.gmra.mxu0 %v3022
    %v3090 = vpop.f32.mrf.mxu0
    %v3091 = vadd.f32 %v2390, %v3090
    %v3092 = vpop.f32.mrf.mxu0
    %3093 = vdwg.mxu0
    %v3094 = vadd.f32 %v2284, %v3091
    %v3095 = vxor.u32 %v3094, 2147483648
    %v3096 = vmul.f32 %v3095, 1.442695
    %v3097 = vpow.pop %v3096
    %v3098 = vadd.f32 %v3097, 1.0
    %v3099 = vrcp.pop %v3098
    %v3100 = vmul.f32 1.0, %v3099
    %3102 = vrot.lane.b32.xlu0 %v3091, 96
    %v3103 = vpop.permute.xlu0 %3102
    %v3105 = vmul.f32 %v3100, %v3103
    %3107 = vrot.lane.b32.xlu0 %v3105, 32
    %v3108 = vpop.permute.xlu0 %3107
    %v3110 = vadd.f32 %v2284, %v3108
    %v3111 = vtanh.pop %v3110
    %v3112 = vsub.f32 1.0, %v3100
    %3114 = vrot.lane.b32.xlu0 %v3111, 112
    %v3115 = vpop.permute.xlu0 %3114
    %v3117 = vmul.f32 %v3112, %v3115
    %v3119 = vmul.f32 %v3100, %v3019
    %v3120 = vadd.f32 %v3117, %v3119
    %v3122 = vrot.slane %v3017, 6
    %3123 = vrot.lane.b32.xlu0 %v3122, 112
    %v3124 = vpop.permute.xlu0 %3123
    %v3125 = vsel %vm182, %v3124, 0
    %3127 = vmatprep.subr.mxu0 0.0
    %3128 = vmatpush1.msra.mxu0 0.0
    %3129 = vmatprep.subr.mxu0 0.0
    %3130 = vmatpush1.msra.mxu0 0.0
    %3131 = vmatprep.subr.mxu0 0.0
    %3132 = vmatpush1.msra.mxu0 0.0
    %3133 = vmatprep.subr.mxu0 0.0
    %3134 = vmatpush1.msra.mxu0 0.0
    %3135 = vmatprep.subr.mxu0 0.0
    %3136 = vmatpush1.msra.mxu0 0.0
    %3137 = vmatprep.subr.mxu0 0.0
    %3138 = vmatpush1.msra.mxu0 0.0
    %3139 = vmatprep.subr.mxu0 0.0
    %3140 = vmatpush1.msra.mxu0 0.0
    %3141 = vmatprep.subr.mxu0 0.0
    %3142 = vmatpush1.msra.mxu0 0.0
    %3143 = vmatprep.subr.mxu0 0.0
    %3144 = vmatpush1.msra.mxu0 0.0
    %3145 = vmatprep.subr.mxu0 0.0
    %3146 = vmatpush1.msra.mxu0 0.0
    %3147 = vmatprep.subr.mxu0 0.0
    %3148 = vmatpush1.msra.mxu0 0.0
    %3149 = vmatprep.subr.mxu0 0.0
    %3150 = vmatpush1.msra.mxu0 0.0
    %3151 = vmatprep.subr.mxu0 0.0
    %3152 = vmatpush1.msra.mxu0 0.0
    %3153 = vmatprep.subr.mxu0 0.0
    %3154 = vmatpush1.msra.mxu0 0.0
    %3155 = vmatprep.subr.mxu0 0.0
    %3156 = vmatpush1.msra.mxu0 %v171
    %3157 = vmatprep.subr.mxu0 0.0
    %3158 = vmatpush1.msra.mxu0 %v170
    %3159 = vmatprep.subr.mxu0 0.0
    %3160 = vmatpush2.msra.mxu0 0.0
    %3161 = vmatprep.subr.mxu0 0.0
    %3162 = vmatpush2.msra.mxu0 0.0
    %3163 = vmatprep.subr.mxu0 0.0
    %3164 = vmatpush2.msra.mxu0 0.0
    %3165 = vmatprep.subr.mxu0 0.0
    %3166 = vmatpush2.msra.mxu0 0.0
    %3167 = vmatprep.subr.mxu0 0.0
    %3168 = vmatpush2.msra.mxu0 0.0
    %3169 = vmatprep.subr.mxu0 0.0
    %3170 = vmatpush2.msra.mxu0 0.0
    %3171 = vmatprep.subr.mxu0 0.0
    %3172 = vmatpush2.msra.mxu0 0.0
    %3173 = vmatprep.subr.mxu0 0.0
    %3174 = vmatpush2.msra.mxu0 0.0
    %3175 = vmatprep.subr.mxu0 0.0
    %3176 = vmatpush2.msra.mxu0 0.0
    %3177 = vmatprep.subr.mxu0 0.0
    %3178 = vmatpush2.msra.mxu0 0.0
    %3179 = vmatprep.subr.mxu0 0.0
    %3180 = vmatpush2.msra.mxu0 0.0
    %3181 = vmatprep.subr.mxu0 0.0
    %3182 = vmatpush2.msra.mxu0 0.0
    %3183 = vmatprep.subr.mxu0 0.0
    %3184 = vmatpush2.msra.mxu0 0.0
    %3185 = vmatprep.subr.mxu0 0.0
    %3186 = vmatpush2.msra.mxu0 0.0
    %3187 = vmatprep.subr.mxu0 0.0
    %3188 = vmatpush2.msra.mxu0 0.0
    %3189 = vmatprep.subr.mxu0 0.0
    %3190 = vmatpush2.msra.mxu0 0.0
    %3191 = vmatprep.mubr.f32.mxu0 0.0
    %3192 = vmatmul.mubr.f32.gmra.mxu0 %v3125
    %v3193 = vpop.f32.mrf.mxu0
    %v3194 = vadd.f32 %v2290, %v3193
    %v3195 = vpop.f32.mrf.mxu0
    %3196 = vdwg.mxu0
    %v3197 = vadd.f32 %v2205, %v3194
    %v3198 = vxor.u32 %v3197, 2147483648
    %v3199 = vmul.f32 %v3198, 1.442695
    %v3200 = vpow.pop %v3199
    %v3201 = vadd.f32 %v3200, 1.0
    %v3202 = vrcp.pop %v3201
    %v3203 = vmul.f32 1.0, %v3202
    %3205 = vrot.lane.b32.xlu0 %v3194, 96
    %v3206 = vpop.permute.xlu0 %3205
    %v3208 = vmul.f32 %v3203, %v3206
    %3210 = vrot.lane.b32.xlu0 %v3208, 32
    %v3211 = vpop.permute.xlu0 %3210
    %v3213 = vadd.f32 %v2205, %v3211
    %v3214 = vtanh.pop %v3213
    %v3215 = vsub.f32 1.0, %v3203
    %3217 = vrot.lane.b32.xlu0 %v3214, 112
    %v3218 = vpop.permute.xlu0 %3217
    %v3220 = vmul.f32 %v3215, %v3218
    %v3222 = vmul.f32 %v3203, %v3122
    %v3223 = vadd.f32 %v3220, %v3222
    %3225 = vrot.lane.b32.xlu0 %v3120, 112
    %v3226 = vpop.permute.xlu0 %3225
    %v3227 = vsel %vm182, %v3226, 0
    %3229 = vmatprep.subr.mxu0 0.0
    %3230 = vmatpush1.msra.mxu0 0.0
    %3231 = vmatprep.subr.mxu0 0.0
    %3232 = vmatpush1.msra.mxu0 0.0
    %3233 = vmatprep.subr.mxu0 0.0
    %3234 = vmatpush1.msra.mxu0 0.0
    %3235 = vmatprep.subr.mxu0 0.0
    %3236 = vmatpush1.msra.mxu0 0.0
    %3237 = vmatprep.subr.mxu0 0.0
    %3238 = vmatpush1.msra.mxu0 0.0
    %3239 = vmatprep.subr.mxu0 0.0
    %3240 = vmatpush1.msra.mxu0 0.0
    %3241 = vmatprep.subr.mxu0 0.0
    %3242 = vmatpush1.msra.mxu0 0.0
    %3243 = vmatprep.subr.mxu0 0.0
    %3244 = vmatpush1.msra.mxu0 0.0
    %3245 = vmatprep.subr.mxu0 0.0
    %3246 = vmatpush1.msra.mxu0 0.0
    %3247 = vmatprep.subr.mxu0 0.0
    %3248 = vmatpush1.msra.mxu0 0.0
    %3249 = vmatprep.subr.mxu0 0.0
    %3250 = vmatpush1.msra.mxu0 0.0
    %3251 = vmatprep.subr.mxu0 0.0
    %3252 = vmatpush1.msra.mxu0 0.0
    %3253 = vmatprep.subr.mxu0 0.0
    %3254 = vmatpush1.msra.mxu0 0.0
    %3255 = vmatprep.subr.mxu0 0.0
    %3256 = vmatpush1.msra.mxu0 0.0
    %3257 = vmatprep.subr.mxu0 0.0
    %3258 = vmatpush1.msra.mxu0 %v174
    %3259 = vmatprep.subr.mxu0 0.0
    %3260 = vmatpush1.msra.mxu0 %v173
    %3261 = vmatprep.subr.mxu0 0.0
    %3262 = vmatpush2.msra.mxu0 0.0
    %3263 = vmatprep.subr.mxu0 0.0
    %3264 = vmatpush2.msra.mxu0 0.0
    %3265 = vmatprep.subr.mxu0 0.0
    %3266 = vmatpush2.msra.mxu0 0.0
    %3267 = vmatprep.subr.mxu0 0.0
    %3268 = vmatpush2.msra.mxu0 0.0
    %3269 = vmatprep.subr.mxu0 0.0
    %3270 = vmatpush2.msra.mxu0 0.0
    %3271 = vmatprep.subr.mxu0 0.0
    %3272 = vmatpush2.msra.mxu0 0.0
    %3273 = vmatprep.subr.mxu0 0.0
    %3274 = vmatpush2.msra.mxu0 0.0
    %3275 = vmatprep.subr.mxu0 0.0
    %3276 = vmatpush2.msra.mxu0 0.0
    %3277 = vmatprep.subr.mxu0 0.0
    %3278 = vmatpush2.msra.mxu0 0.0
    %3279 = vmatprep.subr.mxu0 0.0
    %3280 = vmatpush2.msra.mxu0 0.0
    %3281 = vmatprep.subr.mxu0 0.0
    %3282 = vmatpush2.msra.mxu0 0.0
    %3283 = vmatprep.subr.mxu0 0.0
    %3284 = vmatpush2.msra.mxu0 0.0
    %3285 = vmatprep.subr.mxu0 0.0
    %3286 = vmatpush2.msra.mxu0 0.0
    %3287 = vmatprep.subr.mxu0 0.0
    %3288 = vmatpush2.msra.mxu0 0.0
    %3289 = vmatprep.subr.mxu0 0.0
    %3290 = vmatpush2.msra.mxu0 0.0
    %3291 = vmatprep.subr.mxu0 0.0
    %3292 = vmatpush2.msra.mxu0 0.0
    %3293 = vmatprep.mubr.f32.mxu0 0.0
    %3294 = vmatmul.mubr.f32.gmra.mxu0 %v3227
    %v3295 = vpop.f32.mrf.mxu0
    %v3296 = vadd.f32 %v2390, %v3295
    %v3297 = vpop.f32.mrf.mxu0
    %3298 = vdwg.mxu0
    %v3300 = vrot.slane %v3296, 2
    %v3302 = vadd.f32 %v2279, %v3300
    %v3303 = vxor.u32 %v3302, 2147483648
    %v3304 = vmul.f32 %v3303, 1.442695
    %v3305 = vpow.pop %v3304
    %v3306 = vadd.f32 %v3305, 1.0
    %v3307 = vrcp.pop %v3306
    %v3308 = vmul.f32 1.0, %v3307
    %3309 = vrot.lane.b32.xlu0 %v3300, 96
    %v3310 = vpop.permute.xlu0 %3309
    %v3312 = vmul.f32 %v3308, %v3310
    %3314 = vrot.lane.b32.xlu0 %v3312, 32
    %v3315 = vpop.permute.xlu0 %3314
    %v3317 = vadd.f32 %v2279, %v3315
    %v3318 = vtanh.pop %v3317
    %v3319 = vsub.f32 1.0, %v3308
    %3321 = vrot.lane.b32.xlu0 %v3318, 112
    %v3322 = vpop.permute.xlu0 %3321
    %v3324 = vmul.f32 %v3319, %v3322
    %v3325 = vrot.slane %v3120, 2
    %v3327 = vmul.f32 %v3308, %v3325
    %v3328 = vadd.f32 %v3324, %v3327
    %3330 = vrot.lane.b32.xlu0 %v3223, 112
    %v3331 = vpop.permute.xlu0 %3330
    %v3332 = vsel %vm182, %v3331, 0
    %3334 = vmatprep.subr.mxu0 0.0
    %3335 = vmatpush1.msra.mxu0 0.0
    %3336 = vmatprep.subr.mxu0 0.0
    %3337 = vmatpush1.msra.mxu0 0.0
    %3338 = vmatprep.subr.mxu0 0.0
    %3339 = vmatpush1.msra.mxu0 0.0
    %3340 = vmatprep.subr.mxu0 0.0
    %3341 = vmatpush1.msra.mxu0 0.0
    %3342 = vmatprep.subr.mxu0 0.0
    %3343 = vmatpush1.msra.mxu0 0.0
    %3344 = vmatprep.subr.mxu0 0.0
    %3345 = vmatpush1.msra.mxu0 0.0
    %3346 = vmatprep.subr.mxu0 0.0
    %3347 = vmatpush1.msra.mxu0 0.0
    %3348 = vmatprep.subr.mxu0 0.0
    %3349 = vmatpush1.msra.mxu0 0.0
    %3350 = vmatprep.subr.mxu0 0.0
    %3351 = vmatpush1.msra.mxu0 0.0
    %3352 = vmatprep.subr.mxu0 0.0
    %3353 = vmatpush1.msra.mxu0 0.0
    %3354 = vmatprep.subr.mxu0 0.0
    %3355 = vmatpush1.msra.mxu0 0.0
    %3356 = vmatprep.subr.mxu0 0.0
    %3357 = vmatpush1.msra.mxu0 0.0
    %3358 = vmatprep.subr.mxu0 0.0
    %3359 = vmatpush1.msra.mxu0 0.0
    %3360 = vmatprep.subr.mxu0 0.0
    %3361 = vmatpush1.msra.mxu0 0.0
    %3362 = vmatprep.subr.mxu0 0.0
    %3363 = vmatpush1.msra.mxu0 %v171
    %3364 = vmatprep.subr.mxu0 0.0
    %3365 = vmatpush1.msra.mxu0 %v170
    %3366 = vmatprep.subr.mxu0 0.0
    %3367 = vmatpush2.msra.mxu0 0.0
    %3368 = vmatprep.subr.mxu0 0.0
    %3369 = vmatpush2.msra.mxu0 0.0
    %3370 = vmatprep.subr.mxu0 0.0
    %3371 = vmatpush2.msra.mxu0 0.0
    %3372 = vmatprep.subr.mxu0 0.0
    %3373 = vmatpush2.msra.mxu0 0.0
    %3374 = vmatprep.subr.mxu0 0.0
    %3375 = vmatpush2.msra.mxu0 0.0
    %3376 = vmatprep.subr.mxu0 0.0
    %3377 = vmatpush2.msra.mxu0 0.0
    %3378 = vmatprep.subr.mxu0 0.0
    %3379 = vmatpush2.msra.mxu0 0.0
    %3380 = vmatprep.subr.mxu0 0.0
    %3381 = vmatpush2.msra.mxu0 0.0
    %3382 = vmatprep.subr.mxu0 0.0
    %3383 = vmatpush2.msra.mxu0 0.0
    %3384 = vmatprep.subr.mxu0 0.0
    %3385 = vmatpush2.msra.mxu0 0.0
    %3386 = vmatprep.subr.mxu0 0.0
    %3387 = vmatpush2.msra.mxu0 0.0
    %3388 = vmatprep.subr.mxu0 0.0
    %3389 = vmatpush2.msra.mxu0 0.0
    %3390 = vmatprep.subr.mxu0 0.0
    %3391 = vmatpush2.msra.mxu0 0.0
    %3392 = vmatprep.subr.mxu0 0.0
    %3393 = vmatpush2.msra.mxu0 0.0
    %3394 = vmatprep.subr.mxu0 0.0
    %3395 = vmatpush2.msra.mxu0 0.0
    %3396 = vmatprep.subr.mxu0 0.0
    %3397 = vmatpush2.msra.mxu0 0.0
    %3398 = vmatprep.mubr.f32.mxu0 0.0
    %3399 = vmatmul.mubr.f32.gmra.mxu0 %v3332
    %v3400 = vpop.f32.mrf.mxu0
    %v3401 = vadd.f32 %v2290, %v3400
    %v3402 = vpop.f32.mrf.mxu0
    %3403 = vdwg.mxu0
    %v3405 = vrot.slane %v3401, 6
    %v3407 = vadd.f32 %v2205, %v3405
    %v3408 = vxor.u32 %v3407, 2147483648
    %v3409 = vmul.f32 %v3408, 1.442695
    %v3410 = vpow.pop %v3409
    %v3411 = vadd.f32 %v3410, 1.0
    %v3412 = vrcp.pop %v3411
    %v3413 = vmul.f32 1.0, %v3412
    %3414 = vrot.lane.b32.xlu0 %v3405, 96
    %v3415 = vpop.permute.xlu0 %3414
    %v3417 = vmul.f32 %v3413, %v3415
    %3419 = vrot.lane.b32.xlu0 %v3417, 32
    %v3420 = vpop.permute.xlu0 %3419
    %v3422 = vadd.f32 %v2205, %v3420
    %v3423 = vtanh.pop %v3422
    %v3424 = vsub.f32 1.0, %v3413
    %3426 = vrot.lane.b32.xlu0 %v3423, 112
    %v3427 = vpop.permute.xlu0 %3426
    %v3429 = vmul.f32 %v3424, %v3427
    %v3430 = vrot.slane %v3223, 6
    %v3432 = vmul.f32 %v3413, %v3430
    %v3433 = vadd.f32 %v3429, %v3432
    %v3435 = vrot.slane %v3328, 6
    %3436 = vrot.lane.b32.xlu0 %v3435, 112
    %v3437 = vpop.permute.xlu0 %3436
    %v3438 = vsel %vm182, %v3437, 0
    %3440 = vmatprep.subr.mxu0 0.0
    %3441 = vmatpush1.msra.mxu0 0.0
    %3442 = vmatprep.subr.mxu0 0.0
    %3443 = vmatpush1.msra.mxu0 0.0
    %3444 = vmatprep.subr.mxu0 0.0
    %3445 = vmatpush1.msra.mxu0 0.0
    %3446 = vmatprep.subr.mxu0 0.0
    %3447 = vmatpush1.msra.mxu0 0.0
    %3448 = vmatprep.subr.mxu0 0.0
    %3449 = vmatpush1.msra.mxu0 0.0
    %3450 = vmatprep.subr.mxu0 0.0
    %3451 = vmatpush1.msra.mxu0 0.0
    %3452 = vmatprep.subr.mxu0 0.0
    %3453 = vmatpush1.msra.mxu0 0.0
    %3454 = vmatprep.subr.mxu0 0.0
    %3455 = vmatpush1.msra.mxu0 0.0
    %3456 = vmatprep.subr.mxu0 0.0
    %3457 = vmatpush1.msra.mxu0 0.0
    %3458 = vmatprep.subr.mxu0 0.0
    %3459 = vmatpush1.msra.mxu0 0.0
    %3460 = vmatprep.subr.mxu0 0.0
    %3461 = vmatpush1.msra.mxu0 0.0
    %3462 = vmatprep.subr.mxu0 0.0
    %3463 = vmatpush1.msra.mxu0 0.0
    %3464 = vmatprep.subr.mxu0 0.0
    %3465 = vmatpush1.msra.mxu0 0.0
    %3466 = vmatprep.subr.mxu0 0.0
    %3467 = vmatpush1.msra.mxu0 0.0
    %3468 = vmatprep.subr.mxu0 0.0
    %3469 = vmatpush1.msra.mxu0 %v174
    %3470 = vmatprep.subr.mxu0 0.0
    %3471 = vmatpush1.msra.mxu0 %v173
    %3472 = vmatprep.subr.mxu0 0.0
    %3473 = vmatpush2.msra.mxu0 0.0
    %3474 = vmatprep.subr.mxu0 0.0
    %3475 = vmatpush2.msra.mxu0 0.0
    %3476 = vmatprep.subr.mxu0 0.0
    %3477 = vmatpush2.msra.mxu0 0.0
    %3478 = vmatprep.subr.mxu0 0.0
    %3479 = vmatpush2.msra.mxu0 0.0
    %3480 = vmatprep.subr.mxu0 0.0
    %3481 = vmatpush2.msra.mxu0 0.0
    %3482 = vmatprep.subr.mxu0 0.0
    %3483 = vmatpush2.msra.mxu0 0.0
    %3484 = vmatprep.subr.mxu0 0.0
    %3485 = vmatpush2.msra.mxu0 0.0
    %3486 = vmatprep.subr.mxu0 0.0
    %3487 = vmatpush2.msra.mxu0 0.0
    %3488 = vmatprep.subr.mxu0 0.0
    %3489 = vmatpush2.msra.mxu0 0.0
    %3490 = vmatprep.subr.mxu0 0.0
    %3491 = vmatpush2.msra.mxu0 0.0
    %3492 = vmatprep.subr.mxu0 0.0
    %3493 = vmatpush2.msra.mxu0 0.0
    %3494 = vmatprep.subr.mxu0 0.0
    %3495 = vmatpush2.msra.mxu0 0.0
    %3496 = vmatprep.subr.mxu0 0.0
    %3497 = vmatpush2.msra.mxu0 0.0
    %3498 = vmatprep.subr.mxu0 0.0
    %3499 = vmatpush2.msra.mxu0 0.0
    %3500 = vmatprep.subr.mxu0 0.0
    %3501 = vmatpush2.msra.mxu0 0.0
    %3502 = vmatprep.subr.mxu0 0.0
    %3503 = vmatpush2.msra.mxu0 0.0
    %3504 = vmatprep.mubr.f32.mxu0 0.0
    %3505 = vmatmul.mubr.f32.gmra.mxu0 %v3438
    %v3506 = vpop.f32.mrf.mxu0
    %v3507 = vadd.f32 %v2390, %v3506
    %v3508 = vpop.f32.mrf.mxu0
    %3509 = vdwg.mxu0
    %v3511 = vrot.slane %v3507, 4
    %v3513 = vadd.f32 %v2279, %v3511
    %v3514 = vxor.u32 %v3513, 2147483648
    %v3515 = vmul.f32 %v3514, 1.442695
    %v3516 = vpow.pop %v3515
    %v3517 = vadd.f32 %v3516, 1.0
    %v3518 = vrcp.pop %v3517
    %v3519 = vmul.f32 1.0, %v3518
    %3520 = vrot.lane.b32.xlu0 %v3511, 96
    %v3521 = vpop.permute.xlu0 %3520
    %v3523 = vmul.f32 %v3519, %v3521
    %3525 = vrot.lane.b32.xlu0 %v3523, 32
    %v3526 = vpop.permute.xlu0 %3525
    %v3528 = vadd.f32 %v2279, %v3526
    %v3529 = vtanh.pop %v3528
    %v3530 = vsub.f32 1.0, %v3519
    %3532 = vrot.lane.b32.xlu0 %v3529, 112
    %v3533 = vpop.permute.xlu0 %3532
    %v3535 = vmul.f32 %v3530, %v3533
    %v3536 = vrot.slane %v3328, 2
    %v3538 = vmul.f32 %v3519, %v3536
    %v3539 = vadd.f32 %v3535, %v3538
    %v3541 = vrot.slane %v3433, 2
    %3542 = vrot.lane.b32.xlu0 %v3541, 112
    %v3543 = vpop.permute.xlu0 %3542
    %v3544 = vsel %vm182, %v3543, 0
    %3546 = vmatprep.subr.mxu0 0.0
    %3547 = vmatpush1.msra.mxu0 0.0
    %3548 = vmatprep.subr.mxu0 0.0
    %3549 = vmatpush1.msra.mxu0 0.0
    %3550 = vmatprep.subr.mxu0 0.0
    %3551 = vmatpush1.msra.mxu0 0.0
    %3552 = vmatprep.subr.mxu0 0.0
    %3553 = vmatpush1.msra.mxu0 0.0
    %3554 = vmatprep.subr.mxu0 0.0
    %3555 = vmatpush1.msra.mxu0 0.0
    %3556 = vmatprep.subr.mxu0 0.0
    %3557 = vmatpush1.msra.mxu0 0.0
    %3558 = vmatprep.subr.mxu0 0.0
    %3559 = vmatpush1.msra.mxu0 0.0
    %3560 = vmatprep.subr.mxu0 0.0
    %3561 = vmatpush1.msra.mxu0 0.0
    %3562 = vmatprep.subr.mxu0 0.0
    %3563 = vmatpush1.msra.mxu0 0.0
    %3564 = vmatprep.subr.mxu0 0.0
    %3565 = vmatpush1.msra.mxu0 0.0
    %3566 = vmatprep.subr.mxu0 0.0
    %3567 = vmatpush1.msra.mxu0 0.0
    %3568 = vmatprep.subr.mxu0 0.0
    %3569 = vmatpush1.msra.mxu0 0.0
    %3570 = vmatprep.subr.mxu0 0.0
    %3571 = vmatpush1.msra.mxu0 0.0
    %3572 = vmatprep.subr.mxu0 0.0
    %3573 = vmatpush1.msra.mxu0 0.0
    %3574 = vmatprep.subr.mxu0 0.0
    %3575 = vmatpush1.msra.mxu0 %v171
    %3576 = vmatprep.subr.mxu0 0.0
    %3577 = vmatpush1.msra.mxu0 %v170
    %3578 = vmatprep.subr.mxu0 0.0
    %3579 = vmatpush2.msra.mxu0 0.0
    %3580 = vmatprep.subr.mxu0 0.0
    %3581 = vmatpush2.msra.mxu0 0.0
    %3582 = vmatprep.subr.mxu0 0.0
    %3583 = vmatpush2.msra.mxu0 0.0
    %3584 = vmatprep.subr.mxu0 0.0
    %3585 = vmatpush2.msra.mxu0 0.0
    %3586 = vmatprep.subr.mxu0 0.0
    %3587 = vmatpush2.msra.mxu0 0.0
    %3588 = vmatprep.subr.mxu0 0.0
    %3589 = vmatpush2.msra.mxu0 0.0
    %3590 = vmatprep.subr.mxu0 0.0
    %3591 = vmatpush2.msra.mxu0 0.0
    %3592 = vmatprep.subr.mxu0 0.0
    %3593 = vmatpush2.msra.mxu0 0.0
    %3594 = vmatprep.subr.mxu0 0.0
    %3595 = vmatpush2.msra.mxu0 0.0
    %3596 = vmatprep.subr.mxu0 0.0
    %3597 = vmatpush2.msra.mxu0 0.0
    %3598 = vmatprep.subr.mxu0 0.0
    %3599 = vmatpush2.msra.mxu0 0.0
    %3600 = vmatprep.subr.mxu0 0.0
    %3601 = vmatpush2.msra.mxu0 0.0
    %3602 = vmatprep.subr.mxu0 0.0
    %3603 = vmatpush2.msra.mxu0 0.0
    %3604 = vmatprep.subr.mxu0 0.0
    %3605 = vmatpush2.msra.mxu0 0.0
    %3606 = vmatprep.subr.mxu0 0.0
    %3607 = vmatpush2.msra.mxu0 0.0
    %3608 = vmatprep.subr.mxu0 0.0
    %3609 = vmatpush2.msra.mxu0 0.0
    %3610 = vmatprep.mubr.f32.mxu0 0.0
    %3611 = vmatmul.mubr.f32.gmra.mxu0 %v3544
    %v3612 = vpop.f32.mrf.mxu0
    %v3613 = vadd.f32 %v2290, %v3612
    %v3614 = vpop.f32.mrf.mxu0
    %3615 = vdwg.mxu0
    %v3617 = vrot.slane %v3613, 4
    %v3619 = vadd.f32 %v2205, %v3617
    %v3620 = vxor.u32 %v3619, 2147483648
    %v3621 = vmul.f32 %v3620, 1.442695
    %v3622 = vpow.pop %v3621
    %v3623 = vadd.f32 %v3622, 1.0
    %v3624 = vrcp.pop %v3623
    %v3625 = vmul.f32 1.0, %v3624
    %3626 = vrot.lane.b32.xlu0 %v3617, 96
    %v3627 = vpop.permute.xlu0 %3626
    %v3629 = vmul.f32 %v3625, %v3627
    %3631 = vrot.lane.b32.xlu0 %v3629, 32
    %v3632 = vpop.permute.xlu0 %3631
    %v3634 = vadd.f32 %v2205, %v3632
    %v3635 = vtanh.pop %v3634
    %v3636 = vsub.f32 1.0, %v3625
    %3638 = vrot.lane.b32.xlu0 %v3635, 112
    %v3639 = vpop.permute.xlu0 %3638
    %v3641 = vmul.f32 %v3636, %v3639
    %v3642 = vrot.slane %v3433, 6
    %v3644 = vmul.f32 %v3625, %v3642
    %v3645 = vadd.f32 %v3641, %v3644
    %v3647 = vrot.slane %v3539, 4
    %3648 = vrot.lane.b32.xlu0 %v3647, 112
    %v3649 = vpop.permute.xlu0 %3648
    %v3650 = vsel %vm182, %v3649, 0
    %3652 = vmatprep.subr.mxu0 0.0
    %3653 = vmatpush1.msra.mxu0 0.0
    %3654 = vmatprep.subr.mxu0 0.0
    %3655 = vmatpush1.msra.mxu0 0.0
    %3656 = vmatprep.subr.mxu0 0.0
    %3657 = vmatpush1.msra.mxu0 0.0
    %3658 = vmatprep.subr.mxu0 0.0
    %3659 = vmatpush1.msra.mxu0 0.0
    %3660 = vmatprep.subr.mxu0 0.0
    %3661 = vmatpush1.msra.mxu0 0.0
    %3662 = vmatprep.subr.mxu0 0.0
    %3663 = vmatpush1.msra.mxu0 0.0
    %3664 = vmatprep.subr.mxu0 0.0
    %3665 = vmatpush1.msra.mxu0 0.0
    %3666 = vmatprep.subr.mxu0 0.0
    %3667 = vmatpush1.msra.mxu0 0.0
    %3668 = vmatprep.subr.mxu0 0.0
    %3669 = vmatpush1.msra.mxu0 0.0
    %3670 = vmatprep.subr.mxu0 0.0
    %3671 = vmatpush1.msra.mxu0 0.0
    %3672 = vmatprep.subr.mxu0 0.0
    %3673 = vmatpush1.msra.mxu0 0.0
    %3674 = vmatprep.subr.mxu0 0.0
    %3675 = vmatpush1.msra.mxu0 0.0
    %3676 = vmatprep.subr.mxu0 0.0
    %3677 = vmatpush1.msra.mxu0 0.0
    %3678 = vmatprep.subr.mxu0 0.0
    %3679 = vmatpush1.msra.mxu0 0.0
    %3680 = vmatprep.subr.mxu0 0.0
    %3681 = vmatpush1.msra.mxu0 %v174
    %3682 = vmatprep.subr.mxu0 0.0
    %3683 = vmatpush1.msra.mxu0 %v173
    %3684 = vmatprep.subr.mxu0 0.0
    %3685 = vmatpush2.msra.mxu0 0.0
    %3686 = vmatprep.subr.mxu0 0.0
    %3687 = vmatpush2.msra.mxu0 0.0
    %3688 = vmatprep.subr.mxu0 0.0
    %3689 = vmatpush2.msra.mxu0 0.0
    %3690 = vmatprep.subr.mxu0 0.0
    %3691 = vmatpush2.msra.mxu0 0.0
    %3692 = vmatprep.subr.mxu0 0.0
    %3693 = vmatpush2.msra.mxu0 0.0
    %3694 = vmatprep.subr.mxu0 0.0
    %3695 = vmatpush2.msra.mxu0 0.0
    %3696 = vmatprep.subr.mxu0 0.0
    %3697 = vmatpush2.msra.mxu0 0.0
    %3698 = vmatprep.subr.mxu0 0.0
    %3699 = vmatpush2.msra.mxu0 0.0
    %3700 = vmatprep.subr.mxu0 0.0
    %3701 = vmatpush2.msra.mxu0 0.0
    %3702 = vmatprep.subr.mxu0 0.0
    %3703 = vmatpush2.msra.mxu0 0.0
    %3704 = vmatprep.subr.mxu0 0.0
    %3705 = vmatpush2.msra.mxu0 0.0
    %3706 = vmatprep.subr.mxu0 0.0
    %3707 = vmatpush2.msra.mxu0 0.0
    %3708 = vmatprep.subr.mxu0 0.0
    %3709 = vmatpush2.msra.mxu0 0.0
    %3710 = vmatprep.subr.mxu0 0.0
    %3711 = vmatpush2.msra.mxu0 0.0
    %3712 = vmatprep.subr.mxu0 0.0
    %3713 = vmatpush2.msra.mxu0 0.0
    %3714 = vmatprep.subr.mxu0 0.0
    %3715 = vmatpush2.msra.mxu0 0.0
    %3716 = vmatprep.mubr.f32.mxu0 0.0
    %3717 = vmatmul.mubr.f32.gmra.mxu0 %v3650
    %v3718 = vpop.f32.mrf.mxu0
    %v3719 = vadd.f32 %v2390, %v3718
    %v3720 = vpop.f32.mrf.mxu0
    %3721 = vdwg.mxu0
    %v3723 = vrot.slane %v3719, 6
    %v3725 = vadd.f32 %v2279, %v3723
    %v3726 = vxor.u32 %v3725, 2147483648
    %v3727 = vmul.f32 %v3726, 1.442695
    %v3728 = vpow.pop %v3727
    %v3729 = vadd.f32 %v3728, 1.0
    %v3730 = vrcp.pop %v3729
    %v3731 = vmul.f32 1.0, %v3730
    %3732 = vrot.lane.b32.xlu0 %v3723, 96
    %v3733 = vpop.permute.xlu0 %3732
    %v3735 = vmul.f32 %v3731, %v3733
    %3737 = vrot.lane.b32.xlu0 %v3735, 32
    %v3738 = vpop.permute.xlu0 %3737
    %v3740 = vadd.f32 %v2279, %v3738
    %v3741 = vtanh.pop %v3740
    %v3742 = vsub.f32 1.0, %v3731
    %3744 = vrot.lane.b32.xlu0 %v3741, 112
    %v3745 = vpop.permute.xlu0 %3744
    %v3747 = vmul.f32 %v3742, %v3745
    %v3748 = vrot.slane %v3539, 2
    %v3750 = vmul.f32 %v3731, %v3748
    %v3751 = vadd.f32 %v3747, %v3750
    %v3753 = vrot.slane %v3645, 4
    %3754 = vrot.lane.b32.xlu0 %v3753, 112
    %v3755 = vpop.permute.xlu0 %3754
    %v3756 = vsel %vm182, %v3755, 0
    %3758 = vmatprep.subr.mxu0 0.0
    %3759 = vmatpush1.msra.mxu0 0.0
    %3760 = vmatprep.subr.mxu0 0.0
    %3761 = vmatpush1.msra.mxu0 0.0
    %3762 = vmatprep.subr.mxu0 0.0
    %3763 = vmatpush1.msra.mxu0 0.0
    %3764 = vmatprep.subr.mxu0 0.0
    %3765 = vmatpush1.msra.mxu0 0.0
    %3766 = vmatprep.subr.mxu0 0.0
    %3767 = vmatpush1.msra.mxu0 0.0
    %3768 = vmatprep.subr.mxu0 0.0
    %3769 = vmatpush1.msra.mxu0 0.0
    %3770 = vmatprep.subr.mxu0 0.0
    %3771 = vmatpush1.msra.mxu0 0.0
    %3772 = vmatprep.subr.mxu0 0.0
    %3773 = vmatpush1.msra.mxu0 0.0
    %3774 = vmatprep.subr.mxu0 0.0
    %3775 = vmatpush1.msra.mxu0 0.0
    %3776 = vmatprep.subr.mxu0 0.0
    %3777 = vmatpush1.msra.mxu0 0.0
    %3778 = vmatprep.subr.mxu0 0.0
    %3779 = vmatpush1.msra.mxu0 0.0
    %3780 = vmatprep.subr.mxu0 0.0
    %3781 = vmatpush1.msra.mxu0 0.0
    %3782 = vmatprep.subr.mxu0 0.0
    %3783 = vmatpush1.msra.mxu0 0.0
    %3784 = vmatprep.subr.mxu0 0.0
    %3785 = vmatpush1.msra.mxu0 0.0
    %3786 = vmatprep.subr.mxu0 0.0
    %3787 = vmatpush1.msra.mxu0 %v171
    %3788 = vmatprep.subr.mxu0 0.0
    %3789 = vmatpush1.msra.mxu0 %v170
    %3790 = vmatprep.subr.mxu0 0.0
    %3791 = vmatpush2.msra.mxu0 0.0
    %3792 = vmatprep.subr.mxu0 0.0
    %3793 = vmatpush2.msra.mxu0 0.0
    %3794 = vmatprep.subr.mxu0 0.0
    %3795 = vmatpush2.msra.mxu0 0.0
    %3796 = vmatprep.subr.mxu0 0.0
    %3797 = vmatpush2.msra.mxu0 0.0
    %3798 = vmatprep.subr.mxu0 0.0
    %3799 = vmatpush2.msra.mxu0 0.0
    %3800 = vmatprep.subr.mxu0 0.0
    %3801 = vmatpush2.msra.mxu0 0.0
    %3802 = vmatprep.subr.mxu0 0.0
    %3803 = vmatpush2.msra.mxu0 0.0
    %3804 = vmatprep.subr.mxu0 0.0
    %3805 = vmatpush2.msra.mxu0 0.0
    %3806 = vmatprep.subr.mxu0 0.0
    %3807 = vmatpush2.msra.mxu0 0.0
    %3808 = vmatprep.subr.mxu0 0.0
    %3809 = vmatpush2.msra.mxu0 0.0
    %3810 = vmatprep.subr.mxu0 0.0
    %3811 = vmatpush2.msra.mxu0 0.0
    %3812 = vmatprep.subr.mxu0 0.0
    %3813 = vmatpush2.msra.mxu0 0.0
    %3814 = vmatprep.subr.mxu0 0.0
    %3815 = vmatpush2.msra.mxu0 0.0
    %3816 = vmatprep.subr.mxu0 0.0
    %3817 = vmatpush2.msra.mxu0 0.0
    %3818 = vmatprep.subr.mxu0 0.0
    %3819 = vmatpush2.msra.mxu0 0.0
    %3820 = vmatprep.subr.mxu0 0.0
    %3821 = vmatpush2.msra.mxu0 0.0
    %3822 = vmatprep.mubr.f32.mxu0 0.0
    %3823 = vmatmul.mubr.f32.gmra.mxu0 %v3756
    %v3824 = vpop.f32.mrf.mxu0
    %v3825 = vadd.f32 %v2290, %v3824
    %v3826 = vpop.f32.mrf.mxu0
    %3827 = vdwg.mxu0
    %v3829 = vrot.slane %v3825, 2
    %v3831 = vadd.f32 %v2205, %v3829
    %v3832 = vxor.u32 %v3831, 2147483648
    %v3833 = vmul.f32 %v3832, 1.442695
    %v3834 = vpow.pop %v3833
    %v3835 = vadd.f32 %v3834, 1.0
    %v3836 = vrcp.pop %v3835
    %v3837 = vmul.f32 1.0, %v3836
    %3838 = vrot.lane.b32.xlu0 %v3829, 96
    %v3839 = vpop.permute.xlu0 %3838
    %v3841 = vmul.f32 %v3837, %v3839
    %3843 = vrot.lane.b32.xlu0 %v3841, 32
    %v3844 = vpop.permute.xlu0 %3843
    %v3846 = vadd.f32 %v2205, %v3844
    %v3847 = vtanh.pop %v3846
    %v3848 = vsub.f32 1.0, %v3837
    %3850 = vrot.lane.b32.xlu0 %v3847, 112
    %v3851 = vpop.permute.xlu0 %3850
    %v3853 = vmul.f32 %v3848, %v3851
    %v3854 = vrot.slane %v3645, 6
    %v3856 = vmul.f32 %v3837, %v3854
    %v3857 = vadd.f32 %v3853, %v3856
    %v3859 = vrot.slane %v3751, 2
    %3860 = vrot.lane.b32.xlu0 %v3859, 112
    %v3861 = vpop.permute.xlu0 %3860
    %v3862 = vsel %vm182, %v3861, 0
    %3864 = vmatprep.subr.mxu0 0.0
    %3865 = vmatpush1.msra.mxu0 0.0
    %3866 = vmatprep.subr.mxu0 0.0
    %3867 = vmatpush1.msra.mxu0 0.0
    %3868 = vmatprep.subr.mxu0 0.0
    %3869 = vmatpush1.msra.mxu0 0.0
    %3870 = vmatprep.subr.mxu0 0.0
    %3871 = vmatpush1.msra.mxu0 0.0
    %3872 = vmatprep.subr.mxu0 0.0
    %3873 = vmatpush1.msra.mxu0 0.0
    %3874 = vmatprep.subr.mxu0 0.0
    %3875 = vmatpush1.msra.mxu0 0.0
    %3876 = vmatprep.subr.mxu0 0.0
    %3877 = vmatpush1.msra.mxu0 0.0
    %3878 = vmatprep.subr.mxu0 0.0
    %3879 = vmatpush1.msra.mxu0 0.0
    %3880 = vmatprep.subr.mxu0 0.0
    %3881 = vmatpush1.msra.mxu0 0.0
    %3882 = vmatprep.subr.mxu0 0.0
    %3883 = vmatpush1.msra.mxu0 0.0
    %3884 = vmatprep.subr.mxu0 0.0
    %3885 = vmatpush1.msra.mxu0 0.0
    %3886 = vmatprep.subr.mxu0 0.0
    %3887 = vmatpush1.msra.mxu0 0.0
    %3888 = vmatprep.subr.mxu0 0.0
    %3889 = vmatpush1.msra.mxu0 0.0
    %3890 = vmatprep.subr.mxu0 0.0
    %3891 = vmatpush1.msra.mxu0 0.0
    %3892 = vmatprep.subr.mxu0 0.0
    %3893 = vmatpush1.msra.mxu0 %v174
    %3894 = vmatprep.subr.mxu0 0.0
    %3895 = vmatpush1.msra.mxu0 %v173
    %3896 = vmatprep.subr.mxu0 0.0
    %3897 = vmatpush2.msra.mxu0 0.0
    %3898 = vmatprep.subr.mxu0 0.0
    %3899 = vmatpush2.msra.mxu0 0.0
    %3900 = vmatprep.subr.mxu0 0.0
    %3901 = vmatpush2.msra.mxu0 0.0
    %3902 = vmatprep.subr.mxu0 0.0
    %3903 = vmatpush2.msra.mxu0 0.0
    %3904 = vmatprep.subr.mxu0 0.0
    %3905 = vmatpush2.msra.mxu0 0.0
    %3906 = vmatprep.subr.mxu0 0.0
    %3907 = vmatpush2.msra.mxu0 0.0
    %3908 = vmatprep.subr.mxu0 0.0
    %3909 = vmatpush2.msra.mxu0 0.0
    %3910 = vmatprep.subr.mxu0 0.0
    %3911 = vmatpush2.msra.mxu0 0.0
    %3912 = vmatprep.subr.mxu0 0.0
    %3913 = vmatpush2.msra.mxu0 0.0
    %3914 = vmatprep.subr.mxu0 0.0
    %3915 = vmatpush2.msra.mxu0 0.0
    %3916 = vmatprep.subr.mxu0 0.0
    %3917 = vmatpush2.msra.mxu0 0.0
    %3918 = vmatprep.subr.mxu0 0.0
    %3919 = vmatpush2.msra.mxu0 0.0
    %3920 = vmatprep.subr.mxu0 0.0
    %3921 = vmatpush2.msra.mxu0 0.0
    %3922 = vmatprep.subr.mxu0 0.0
    %3923 = vmatpush2.msra.mxu0 0.0
    %3924 = vmatprep.subr.mxu0 0.0
    %3925 = vmatpush2.msra.mxu0 0.0
    %3926 = vmatprep.subr.mxu0 0.0
    %3927 = vmatpush2.msra.mxu0 0.0
    %3928 = vmatprep.mubr.f32.mxu0 0.0
    %3929 = vmatmul.mubr.f32.gmra.mxu0 %v3862
    %v3930 = vpop.f32.mrf.mxu0
    %v3931 = vadd.f32 %v2390, %v3930
    %v3932 = vpop.f32.mrf.mxu0
    %3933 = vdwg.mxu0
    %v3934 = vadd.f32 %v2279, %v3931
    %v3935 = vxor.u32 %v3934, 2147483648
    %v3936 = vmul.f32 %v3935, 1.442695
    %v3937 = vpow.pop %v3936
    %v3938 = vadd.f32 %v3937, 1.0
    %v3939 = vrcp.pop %v3938
    %v3940 = vmul.f32 1.0, %v3939
    %3942 = vrot.lane.b32.xlu0 %v3931, 96
    %v3943 = vpop.permute.xlu0 %3942
    %v3945 = vmul.f32 %v3940, %v3943
    %3947 = vrot.lane.b32.xlu0 %v3945, 32
    %v3948 = vpop.permute.xlu0 %3947
    %v3950 = vadd.f32 %v2279, %v3948
    %v3951 = vtanh.pop %v3950
    %v3952 = vsub.f32 1.0, %v3940
    %3954 = vrot.lane.b32.xlu0 %v3951, 112
    %v3955 = vpop.permute.xlu0 %3954
    %v3957 = vmul.f32 %v3952, %v3955
    %v3959 = vmul.f32 %v3940, %v3859
    %v3960 = vadd.f32 %v3957, %v3959
    %v3962 = vsel %vm182, %v2491, %v3960
    %3963 = vrot.lane.b32.xlu0 %v2593, 112
    %v3964 = vpop.permute.xlu0 %3963
    %v3966 = vsel %vm182, %v3964, %v3751
    %3967 = vrot.lane.b32.xlu0 %v2805, 112
    %v3968 = vpop.permute.xlu0 %3967
    %v3970 = vsel %vm182, %v3968, %v3539
    %3971 = vrot.lane.b32.xlu0 %v3017, 112
    %v3972 = vpop.permute.xlu0 %3971
    %v3974 = vsel %vm182, %v3972, %v3328
    %v3976 = vsel %vm182, %v3331, %v3120
    %3977 = vrot.lane.b32.xlu0 %v3433, 112
    %v3978 = vpop.permute.xlu0 %3977
    %v3980 = vsel %vm182, %v3978, %v2911
    %3981 = vrot.lane.b32.xlu0 %v3645, 112
    %v3982 = vpop.permute.xlu0 %3981
    %v3984 = vsel %vm182, %v3982, %v2699
    %3986 = vrot.lane.b32.xlu0 %v3857, 112
    %v3987 = vpop.permute.xlu0 %3986
    %v3989 = vsel %vm182, %v3987, %v2488
    %v3991 = vrot.slane %v3966, 1
    %v3994 = vrot.slane %v3970, 2
    %v3997 = vrot.slane %v3974, 3
    %v4000 = vrot.slane %v3976, 4
    %v4003 = vrot.slane %v3980, 5
    %v4006 = vrot.slane %v3984, 6
    %v4009 = vrot.slane %v3989, 7
    %vm4011 = vcmask 1040384
    %v4012 = vsel %vm4011, %v3962, %v3991
    %v4013 = vsel %vm2114, %v4012, %v3994
    %vm4014 = vcmask 1042432
    %v4015 = vsel %vm4014, %v4013, %v3997
    %v4016 = vsel %vm2116, %v4015, %v4000
    %vm4017 = vcmask 1044480
    %v4018 = vsel %vm4017, %v4016, %v4003
    %v4019 = vsel %vm2118, %v4018, %v4006
    %vm4020 = vcmask 1046528
    %v4021 = vsel %vm4020, %v4019, %v4009
    %v4023 = vrot.slane %v3962, 1
    %v4025 = vrot.slane %v3966, 2
    %v4027 = vrot.slane %v3970, 3
    %v4029 = vrot.slane %v3974, 4
    %v4031 = vrot.slane %v3976, 5
    %v4033 = vrot.slane %v3980, 6
    %v4035 = vrot.slane %v3984, 7
    %v4037 = vsel %vm4011, %v4023, %v4025
    %v4038 = vsel %vm2114, %v4037, %v4027
    %v4039 = vsel %vm4014, %v4038, %v4029
    %v4040 = vsel %vm2116, %v4039, %v4031
    %v4041 = vsel %vm4017, %v4040, %v4033
    %v4042 = vsel %vm2118, %v4041, %v4035
    %v4043 = vsel %vm4020, %v4042, %v3989
    %v4044 = vlaneseq
    %v4045 = vshrl.u32 %v4044, 7
    %v4046 = vadd.s32 %v4045, 8
    %v4047 = vadd.s32 %v4045, 16
    %v4048 = vadd.s32 %v4045, 24
    %v4049 = vadd.s32 %v4045, 32
    %v4050 = vadd.s32 %v4045, 40
    %v4051 = vadd.s32 %v4045, 48
    %v4052 = vadd.s32 %v4045, 56
    %vm4053 = vcmp.ge.s32.totalorder %v4045, 8
    %vm4054 = vcmp.ge.s32.totalorder %v4046, 8
    %vm4055 = vcmp.ge.s32.totalorder %v4047, 8
    %vm4056 = vcmp.ge.s32.totalorder %v4048, 8
    %vm4057 = vcmp.ge.s32.totalorder %v4049, 8
    %vm4058 = vcmp.ge.s32.totalorder %v4050, 8
    %vm4059 = vcmp.ge.s32.totalorder %v4051, 8
    %vm4060 = vcmp.ge.s32.totalorder %v4052, 8
    %v4061 = vsel %vm4053, 1, 0
    %v4062 = vsel %vm4054, 1, 0
    %v4063 = vsel %vm4055, 1, 0
    %v4064 = vsel %vm4056, 1, 0
    %v4065 = vsel %vm4057, 1, 0
    %v4066 = vsel %vm4058, 1, 0
    %v4067 = vsel %vm4059, 1, 0
    %v4068 = vsel %vm4060, 1, 0
    %v4069 = vcvt.s32.f32 %v4061
    %v4070 = vcvt.s32.f32 %v4062
    %v4071 = vcvt.s32.f32 %v4063
    %v4072 = vcvt.s32.f32 %v4064
    %v4073 = vcvt.s32.f32 %v4065
    %v4074 = vcvt.s32.f32 %v4066
    %v4075 = vcvt.s32.f32 %v4067
    %v4076 = vcvt.s32.f32 %v4068
    %v4077 = vadd.f32 %v4069, 0.0
    %v4078 = vadd.f32 %v4070, 0.0
    %v4079 = vadd.f32 %v4071, 0.0
    %v4080 = vadd.f32 %v4072, 0.0
    %v4081 = vadd.f32 %v4073, 0.0
    %v4082 = vadd.f32 %v4074, 0.0
    %v4083 = vadd.f32 %v4075, 0.0
    %v4084 = vadd.f32 %v4076, 0.0
    %vm4085 = vcmp.ge.s32.totalorder %v4045, 16
    %vm4086 = vcmp.ge.s32.totalorder %v4046, 16
    %vm4087 = vcmp.ge.s32.totalorder %v4047, 16
    %vm4088 = vcmp.ge.s32.totalorder %v4048, 16
    %vm4089 = vcmp.ge.s32.totalorder %v4049, 16
    %vm4090 = vcmp.ge.s32.totalorder %v4050, 16
    %vm4091 = vcmp.ge.s32.totalorder %v4051, 16
    %vm4092 = vcmp.ge.s32.totalorder %v4052, 16
    %v4093 = vsel %vm4085, 1, 0
    %v4094 = vsel %vm4086, 1, 0
    %v4095 = vsel %vm4087, 1, 0
    %v4096 = vsel %vm4088, 1, 0
    %v4097 = vsel %vm4089, 1, 0
    %v4098 = vsel %vm4090, 1, 0
    %v4099 = vsel %vm4091, 1, 0
    %v4100 = vsel %vm4092, 1, 0
    %v4101 = vcvt.s32.f32 %v4093
    %v4102 = vcvt.s32.f32 %v4094
    %v4103 = vcvt.s32.f32 %v4095
    %v4104 = vcvt.s32.f32 %v4096
    %v4105 = vcvt.s32.f32 %v4097
    %v4106 = vcvt.s32.f32 %v4098
    %v4107 = vcvt.s32.f32 %v4099
    %v4108 = vcvt.s32.f32 %v4100
    %v4109 = vadd.f32 %v4077, %v4101
    %v4110 = vadd.f32 %v4078, %v4102
    %v4111 = vadd.f32 %v4079, %v4103
    %v4112 = vadd.f32 %v4080, %v4104
    %v4113 = vadd.f32 %v4081, %v4105
    %v4114 = vadd.f32 %v4082, %v4106
    %v4115 = vadd.f32 %v4083, %v4107
    %v4116 = vadd.f32 %v4084, %v4108
    %vm4117 = vcmp.ge.s32.totalorder %v4045, 24
    %vm4118 = vcmp.ge.s32.totalorder %v4046, 24
    %vm4119 = vcmp.ge.s32.totalorder %v4047, 24
    %vm4120 = vcmp.ge.s32.totalorder %v4048, 24
    %vm4121 = vcmp.ge.s32.totalorder %v4049, 24
    %vm4122 = vcmp.ge.s32.totalorder %v4050, 24
    %vm4123 = vcmp.ge.s32.totalorder %v4051, 24
    %vm4124 = vcmp.ge.s32.totalorder %v4052, 24
    %v4125 = vsel %vm4117, 1, 0
    %v4126 = vsel %vm4118, 1, 0
    %v4127 = vsel %vm4119, 1, 0
    %v4128 = vsel %vm4120, 1, 0
    %v4129 = vsel %vm4121, 1, 0
    %v4130 = vsel %vm4122, 1, 0
    %v4131 = vsel %vm4123, 1, 0
    %v4132 = vsel %vm4124, 1, 0
    %v4133 = vcvt.s32.f32 %v4125
    %v4134 = vcvt.s32.f32 %v4126
    %v4135 = vcvt.s32.f32 %v4127
    %v4136 = vcvt.s32.f32 %v4128
    %v4137 = vcvt.s32.f32 %v4129
    %v4138 = vcvt.s32.f32 %v4130
    %v4139 = vcvt.s32.f32 %v4131
    %v4140 = vcvt.s32.f32 %v4132
    %v4141 = vadd.f32 %v4109, %v4133
    %v4142 = vadd.f32 %v4110, %v4134
    %v4143 = vadd.f32 %v4111, %v4135
    %v4144 = vadd.f32 %v4112, %v4136
    %v4145 = vadd.f32 %v4113, %v4137
    %v4146 = vadd.f32 %v4114, %v4138
    %v4147 = vadd.f32 %v4115, %v4139
    %v4148 = vadd.f32 %v4116, %v4140
    %vm4149 = vcmp.ge.s32.totalorder %v4045, 32
    %vm4150 = vcmp.ge.s32.totalorder %v4046, 32
    %vm4151 = vcmp.ge.s32.totalorder %v4047, 32
    %vm4152 = vcmp.ge.s32.totalorder %v4048, 32
    %vm4153 = vcmp.ge.s32.totalorder %v4049, 32
    %vm4154 = vcmp.ge.s32.totalorder %v4050, 32
    %vm4155 = vcmp.ge.s32.totalorder %v4051, 32
    %vm4156 = vcmp.ge.s32.totalorder %v4052, 32
    %v4157 = vsel %vm4149, 1, 0
    %v4158 = vsel %vm4150, 1, 0
    %v4159 = vsel %vm4151, 1, 0
    %v4160 = vsel %vm4152, 1, 0
    %v4161 = vsel %vm4153, 1, 0
    %v4162 = vsel %vm4154, 1, 0
    %v4163 = vsel %vm4155, 1, 0
    %v4164 = vsel %vm4156, 1, 0
    %v4165 = vcvt.s32.f32 %v4157
    %v4166 = vcvt.s32.f32 %v4158
    %v4167 = vcvt.s32.f32 %v4159
    %v4168 = vcvt.s32.f32 %v4160
    %v4169 = vcvt.s32.f32 %v4161
    %v4170 = vcvt.s32.f32 %v4162
    %v4171 = vcvt.s32.f32 %v4163
    %v4172 = vcvt.s32.f32 %v4164
    %v4173 = vadd.f32 %v4141, %v4165
    %v4174 = vadd.f32 %v4142, %v4166
    %v4175 = vadd.f32 %v4143, %v4167
    %v4176 = vadd.f32 %v4144, %v4168
    %v4177 = vadd.f32 %v4145, %v4169
    %v4178 = vadd.f32 %v4146, %v4170
    %v4179 = vadd.f32 %v4147, %v4171
    %v4180 = vadd.f32 %v4148, %v4172
    %vm4181 = vcmp.ge.s32.totalorder %v4045, 40
    %vm4182 = vcmp.ge.s32.totalorder %v4046, 40
    %vm4183 = vcmp.ge.s32.totalorder %v4047, 40
    %vm4184 = vcmp.ge.s32.totalorder %v4048, 40
    %vm4185 = vcmp.ge.s32.totalorder %v4049, 40
    %vm4186 = vcmp.ge.s32.totalorder %v4050, 40
    %vm4187 = vcmp.ge.s32.totalorder %v4051, 40
    %vm4188 = vcmp.ge.s32.totalorder %v4052, 40
    %v4189 = vsel %vm4181, 1, 0
    %v4190 = vsel %vm4182, 1, 0
    %v4191 = vsel %vm4183, 1, 0
    %v4192 = vsel %vm4184, 1, 0
    %v4193 = vsel %vm4185, 1, 0
    %v4194 = vsel %vm4186, 1, 0
    %v4195 = vsel %vm4187, 1, 0
    %v4196 = vsel %vm4188, 1, 0
    %v4197 = vcvt.s32.f32 %v4189
    %v4198 = vcvt.s32.f32 %v4190
    %v4199 = vcvt.s32.f32 %v4191
    %v4200 = vcvt.s32.f32 %v4192
    %v4201 = vcvt.s32.f32 %v4193
    %v4202 = vcvt.s32.f32 %v4194
    %v4203 = vcvt.s32.f32 %v4195
    %v4204 = vcvt.s32.f32 %v4196
    %v4205 = vadd.f32 %v4173, %v4197
    %v4206 = vadd.f32 %v4174, %v4198
    %v4207 = vadd.f32 %v4175, %v4199
    %v4208 = vadd.f32 %v4176, %v4200
    %v4209 = vadd.f32 %v4177, %v4201
    %v4210 = vadd.f32 %v4178, %v4202
    %v4211 = vadd.f32 %v4179, %v4203
    %v4212 = vadd.f32 %v4180, %v4204
    %vm4213 = vcmp.ge.s32.totalorder %v4045, 48
    %vm4214 = vcmp.ge.s32.totalorder %v4046, 48
    %vm4215 = vcmp.ge.s32.totalorder %v4047, 48
    %vm4216 = vcmp.ge.s32.totalorder %v4048, 48
    %vm4217 = vcmp.ge.s32.totalorder %v4049, 48
    %vm4218 = vcmp.ge.s32.totalorder %v4050, 48
    %vm4219 = vcmp.ge.s32.totalorder %v4051, 48
    %vm4220 = vcmp.ge.s32.totalorder %v4052, 48
    %v4221 = vsel %vm4213, 1, 0
    %v4222 = vsel %vm4214, 1, 0
    %v4223 = vsel %vm4215, 1, 0
    %v4224 = vsel %vm4216, 1, 0
    %v4225 = vsel %vm4217, 1, 0
    %v4226 = vsel %vm4218, 1, 0
    %v4227 = vsel %vm4219, 1, 0
    %v4228 = vsel %vm4220, 1, 0
    %v4229 = vcvt.s32.f32 %v4221
    %v4230 = vcvt.s32.f32 %v4222
    %v4231 = vcvt.s32.f32 %v4223
    %v4232 = vcvt.s32.f32 %v4224
    %v4233 = vcvt.s32.f32 %v4225
    %v4234 = vcvt.s32.f32 %v4226
    %v4235 = vcvt.s32.f32 %v4227
    %v4236 = vcvt.s32.f32 %v4228
    %v4237 = vadd.f32 %v4205, %v4229
    %v4238 = vadd.f32 %v4206, %v4230
    %v4239 = vadd.f32 %v4207, %v4231
    %v4240 = vadd.f32 %v4208, %v4232
    %v4241 = vadd.f32 %v4209, %v4233
    %v4242 = vadd.f32 %v4210, %v4234
    %v4243 = vadd.f32 %v4211, %v4235
    %v4244 = vadd.f32 %v4212, %v4236
    %vm4245 = vcmp.ge.s32.totalorder %v4045, 56
    %vm4246 = vcmp.ge.s32.totalorder %v4046, 56
    %vm4247 = vcmp.ge.s32.totalorder %v4047, 56
    %vm4248 = vcmp.ge.s32.totalorder %v4048, 56
    %vm4249 = vcmp.ge.s32.totalorder %v4049, 56
    %vm4250 = vcmp.ge.s32.totalorder %v4050, 56
    %vm4251 = vcmp.ge.s32.totalorder %v4051, 56
    %vm4252 = vcmp.ge.s32.totalorder %v4052, 56
    %v4253 = vsel %vm4245, 1, 0
    %v4254 = vsel %vm4246, 1, 0
    %v4255 = vsel %vm4247, 1, 0
    %v4256 = vsel %vm4248, 1, 0
    %v4257 = vsel %vm4249, 1, 0
    %v4258 = vsel %vm4250, 1, 0
    %v4259 = vsel %vm4251, 1, 0
    %v4260 = vsel %vm4252, 1, 0
    %v4261 = vcvt.s32.f32 %v4253
    %v4262 = vcvt.s32.f32 %v4254
    %v4263 = vcvt.s32.f32 %v4255
    %v4264 = vcvt.s32.f32 %v4256
    %v4265 = vcvt.s32.f32 %v4257
    %v4266 = vcvt.s32.f32 %v4258
    %v4267 = vcvt.s32.f32 %v4259
    %v4268 = vcvt.s32.f32 %v4260
    %v4269 = vadd.f32 %v4237, %v4261
    %v4270 = vadd.f32 %v4238, %v4262
    %v4271 = vadd.f32 %v4239, %v4263
    %v4272 = vadd.f32 %v4240, %v4264
    %v4273 = vadd.f32 %v4241, %v4265
    %v4274 = vadd.f32 %v4242, %v4266
    %v4275 = vadd.f32 %v4243, %v4267
    %v4276 = vadd.f32 %v4244, %v4268
    %v4277 = vlaneseq
    %v4278 = vand.u32 %v4277, 127
    %vm4279 = vcmp.ge.s32.totalorder %v4278, 4
    %v4280 = vsel %vm4279, 1, 0
    %v4281 = vcvt.s32.f32 %v4280
    %v4282 = vadd.f32 %v4281, 0.0
    %vm4283 = vcmp.ge.s32.totalorder %v4278, 8
    %v4284 = vsel %vm4283, 1, 0
    %v4285 = vcvt.s32.f32 %v4284
    %v4286 = vadd.f32 %v4282, %v4285
    %vm4287 = vcmp.ge.s32.totalorder %v4278, 12
    %v4288 = vsel %vm4287, 1, 0
    %v4289 = vcvt.s32.f32 %v4288
    %v4290 = vadd.f32 %v4286, %v4289
    %vm4291 = vcmp.ge.s32.totalorder %v4278, 16
    %v4292 = vsel %vm4291, 1, 0
    %v4293 = vcvt.s32.f32 %v4292
    %v4294 = vadd.f32 %v4290, %v4293
    %vm4295 = vcmp.ge.s32.totalorder %v4278, 20
    %v4296 = vsel %vm4295, 1, 0
    %v4297 = vcvt.s32.f32 %v4296
    %v4298 = vadd.f32 %v4294, %v4297
    %vm4299 = vcmp.ge.s32.totalorder %v4278, 24
    %v4300 = vsel %vm4299, 1, 0
    %v4301 = vcvt.s32.f32 %v4300
    %v4302 = vadd.f32 %v4298, %v4301
    %vm4303 = vcmp.ge.s32.totalorder %v4278, 28
    %v4304 = vsel %vm4303, 1, 0
    %v4305 = vcvt.s32.f32 %v4304
    %v4306 = vadd.f32 %v4302, %v4305
    %vm4307 = vcmp.eq.f32.partialorder %v4269, %v4306
    %vm4308 = vcmp.eq.f32.partialorder %v4270, %v4306
    %vm4309 = vcmp.eq.f32.partialorder %v4271, %v4306
    %vm4310 = vcmp.eq.f32.partialorder %v4272, %v4306
    %vm4311 = vcmp.eq.f32.partialorder %v4273, %v4306
    %vm4312 = vcmp.eq.f32.partialorder %v4274, %v4306
    %vm4313 = vcmp.eq.f32.partialorder %v4275, %v4306
    %vm4314 = vcmp.eq.f32.partialorder %v4276, %v4306
    %v4315 = vsel %vm4307, 1, 0
    %v4316 = vsel %vm4308, 1, 0
    %v4317 = vsel %vm4309, 1, 0
    %v4318 = vsel %vm4310, 1, 0
    %v4319 = vsel %vm4311, 1, 0
    %v4320 = vsel %vm4312, 1, 0
    %v4321 = vsel %vm4313, 1, 0
    %v4322 = vsel %vm4314, 1, 0
    %v4323 = vcvt.s32.f32 %v4315
    %v4324 = vcvt.s32.f32 %v4316
    %v4325 = vcvt.s32.f32 %v4317
    %v4326 = vcvt.s32.f32 %v4318
    %v4327 = vcvt.s32.f32 %v4319
    %v4328 = vcvt.s32.f32 %v4320
    %v4329 = vcvt.s32.f32 %v4321
    %v4330 = vcvt.s32.f32 %v4322
    %v4331 = vcvt.s32.f32 %v4278
    %vm4332 = vcmp.eq.f32.partialorder %v4269, %v4331
    %vm4333 = vcmp.eq.f32.partialorder %v4270, %v4331
    %vm4334 = vcmp.eq.f32.partialorder %v4271, %v4331
    %vm4335 = vcmp.eq.f32.partialorder %v4272, %v4331
    %vm4336 = vcmp.eq.f32.partialorder %v4273, %v4331
    %vm4337 = vcmp.eq.f32.partialorder %v4274, %v4331
    %vm4338 = vcmp.eq.f32.partialorder %v4275, %v4331
    %vm4339 = vcmp.eq.f32.partialorder %v4276, %v4331
    %v4340 = vsel %vm4332, 1, 0
    %v4341 = vsel %vm4333, 1, 0
    %v4342 = vsel %vm4334, 1, 0
    %v4343 = vsel %vm4335, 1, 0
    %v4344 = vsel %vm4336, 1, 0
    %v4345 = vsel %vm4337, 1, 0
    %v4346 = vsel %vm4338, 1, 0
    %v4347 = vsel %vm4339, 1, 0
    %v4348 = vcvt.s32.f32 %v4340
    %v4349 = vcvt.s32.f32 %v4341
    %v4350 = vcvt.s32.f32 %v4342
    %v4351 = vcvt.s32.f32 %v4343
    %v4352 = vcvt.s32.f32 %v4344
    %v4353 = vcvt.s32.f32 %v4345
    %v4354 = vcvt.s32.f32 %v4346
    %v4355 = vcvt.s32.f32 %v4347
    %v4356 = vld [vmem:[%s6] sm:$0xff]
    %v4357 = vld [vmem:[%s6 + $0x8] sm:$0xff]
    %v4358 = vld [vmem:[%s6 + $0x10] sm:$0xff]
    %v4359 = vld [vmem:[%s6 + $0x18] sm:$0xff]
    %v4360 = vld [vmem:[#allocation11] sm:$0x1]
    %v4362 = vlaneseq
    %v4363 = vshrl.u32 %v4362, 7
    %v4364 = vsub.s32 0, %v4363
    %v4365 = vrot.slane %v4360, %v4364
    %v4368 = vsel %vm312, %v4021, 0
    %v4371 = vsel %vm312, %v4043, 0
    %4373 = vmatprep.subr.mxu0 0.0
    %4374 = vmatpush1.msra.mxu0 0.0
    %4375 = vmatprep.subr.mxu0 0.0
    %4376 = vmatpush1.msra.mxu0 0.0
    %4377 = vmatprep.subr.mxu0 0.0
    %4378 = vmatpush1.msra.mxu0 0.0
    %4379 = vmatprep.subr.mxu0 0.0
    %4380 = vmatpush1.msra.mxu0 0.0
    %4381 = vmatprep.subr.mxu0 0.0
    %4382 = vmatpush1.msra.mxu0 0.0
    %4383 = vmatprep.subr.mxu0 0.0
    %4384 = vmatpush1.msra.mxu0 0.0
    %4385 = vmatprep.subr.mxu0 0.0
    %4386 = vmatpush1.msra.mxu0 0.0
    %4387 = vmatprep.subr.mxu0 0.0
    %4388 = vmatpush1.msra.mxu0 0.0
    %4389 = vmatprep.subr.mxu0 0.0
    %4390 = vmatpush1.msra.mxu0 0.0
    %4391 = vmatprep.subr.mxu0 0.0
    %4392 = vmatpush1.msra.mxu0 0.0
    %4393 = vmatprep.subr.mxu0 0.0
    %4394 = vmatpush1.msra.mxu0 0.0
    %4395 = vmatprep.subr.mxu0 0.0
    %4396 = vmatpush1.msra.mxu0 0.0
    %4397 = vmatprep.subr.mxu0 0.0
    %4398 = vmatpush1.msra.mxu0 %v4359
    %4399 = vmatprep.subr.mxu0 0.0
    %4400 = vmatpush1.msra.mxu0 %v4358
    %4401 = vmatprep.subr.mxu0 0.0
    %4402 = vmatpush1.msra.mxu0 %v4357
    %4403 = vmatprep.subr.mxu0 0.0
    %4404 = vmatpush1.msra.mxu0 %v4356
    %4405 = vmatprep.subr.mxu0 0.0
    %4406 = vmatpush2.msra.mxu0 0.0
    %4407 = vmatprep.subr.mxu0 0.0
    %4408 = vmatpush2.msra.mxu0 0.0
    %4409 = vmatprep.subr.mxu0 0.0
    %4410 = vmatpush2.msra.mxu0 0.0
    %4411 = vmatprep.subr.mxu0 0.0
    %4412 = vmatpush2.msra.mxu0 0.0
    %4413 = vmatprep.subr.mxu0 0.0
    %4414 = vmatpush2.msra.mxu0 0.0
    %4415 = vmatprep.subr.mxu0 0.0
    %4416 = vmatpush2.msra.mxu0 0.0
    %4417 = vmatprep.subr.mxu0 0.0
    %4418 = vmatpush2.msra.mxu0 0.0
    %4419 = vmatprep.subr.mxu0 0.0
    %4420 = vmatpush2.msra.mxu0 0.0
    %4421 = vmatprep.subr.mxu0 0.0
    %4422 = vmatpush2.msra.mxu0 0.0
    %4423 = vmatprep.subr.mxu0 0.0
    %4424 = vmatpush2.msra.mxu0 0.0
    %4425 = vmatprep.subr.mxu0 0.0
    %4426 = vmatpush2.msra.mxu0 0.0
    %4427 = vmatprep.subr.mxu0 0.0
    %4428 = vmatpush2.msra.mxu0 0.0
    %4429 = vmatprep.subr.mxu0 0.0
    %4430 = vmatpush2.msra.mxu0 0.0
    %4431 = vmatprep.subr.mxu0 0.0
    %4432 = vmatpush2.msra.mxu0 0.0
    %4433 = vmatprep.subr.mxu0 0.0
    %4434 = vmatpush2.msra.mxu0 0.0
    %4435 = vmatprep.subr.mxu0 0.0
    %4436 = vmatpush2.msra.mxu0 0.0
    %4437 = vmatprep.mubr.f32.mxu0 0.0
    %4438 = vmatmul.mubr.f32.gmra.mxu0 %v4368
    %v4439 = vpop.f32.mrf.mxu0
    %v4440 = vadd.f32 %v4365, %v4439
    %v4441 = vpop.f32.mrf.mxu0
    %4442 = vmatprep.mubr.f32.mxu0 0.0
    %4443 = vmatmul.mubr.f32.gmra.mxu0 %v4371
    %v4444 = vpop.f32.mrf.mxu0
    %v4445 = vadd.f32 %v4365, %v4444
    %v4446 = vpop.f32.mrf.mxu0
    %4447 = vdwg.mxu0
    %v4448 = vmul.f32 %v4440, 0.5
    %4457 = vrot.lane.b32.xlu0 %v4323, 32
    %v4458 = vpop.permute.xlu0 %4457
    %4459 = vrot.lane.b32.xlu0 %v4324, 32
    %v4460 = vpop.permute.xlu0 %4459
    %4461 = vrot.lane.b32.xlu0 %v4325, 32
    %v4462 = vpop.permute.xlu0 %4461
    %4463 = vrot.lane.b32.xlu0 %v4326, 32
    %v4464 = vpop.permute.xlu0 %4463
    %4465 = vrot.lane.b32.xlu0 %v4327, 32
    %v4466 = vpop.permute.xlu0 %4465
    %4467 = vrot.lane.b32.xlu0 %v4328, 32
    %v4468 = vpop.permute.xlu0 %4467
    %4469 = vrot.lane.b32.xlu0 %v4329, 32
    %v4470 = vpop.permute.xlu0 %4469
    %4471 = vrot.lane.b32.xlu0 %v4330, 32
    %v4472 = vpop.permute.xlu0 %4471
    %v4481 = vmul.f32 %v4440, %v4458
    %v4482 = vmul.f32 %v4440, %v4460
    %v4483 = vmul.f32 %v4440, %v4462
    %v4484 = vmul.f32 %v4440, %v4464
    %v4485 = vmul.f32 %v4440, %v4466
    %v4486 = vmul.f32 %v4440, %v4468
    %v4487 = vmul.f32 %v4440, %v4470
    %v4488 = vmul.f32 %v4440, %v4472
    %4489 = vrot.lane.b32.xlu0 %v4323, 64
    %v4490 = vpop.permute.xlu0 %4489
    %4491 = vrot.lane.b32.xlu0 %v4324, 64
    %v4492 = vpop.permute.xlu0 %4491
    %4493 = vrot.lane.b32.xlu0 %v4325, 64
    %v4494 = vpop.permute.xlu0 %4493
    %4495 = vrot.lane.b32.xlu0 %v4326, 64
    %v4496 = vpop.permute.xlu0 %4495
    %4497 = vrot.lane.b32.xlu0 %v4327, 64
    %v4498 = vpop.permute.xlu0 %4497
    %4499 = vrot.lane.b32.xlu0 %v4328, 64
    %v4500 = vpop.permute.xlu0 %4499
    %4501 = vrot.lane.b32.xlu0 %v4329, 64
    %v4502 = vpop.permute.xlu0 %4501
    %4503 = vrot.lane.b32.xlu0 %v4330, 64
    %v4504 = vpop.permute.xlu0 %4503
    %v4513 = vmul.f32 %v4440, %v4490
    %v4514 = vmul.f32 %v4440, %v4492
    %v4515 = vmul.f32 %v4440, %v4494
    %v4516 = vmul.f32 %v4440, %v4496
    %v4517 = vmul.f32 %v4440, %v4498
    %v4518 = vmul.f32 %v4440, %v4500
    %v4519 = vmul.f32 %v4440, %v4502
    %v4520 = vmul.f32 %v4440, %v4504
    %4529 = vrot.lane.b32.xlu0 %v4481, 96
    %v4530 = vpop.permute.xlu0 %4529
    %4531 = vrot.lane.b32.xlu0 %v4482, 96
    %v4532 = vpop.permute.xlu0 %4531
    %4533 = vrot.lane.b32.xlu0 %v4483, 96
    %v4534 = vpop.permute.xlu0 %4533
    %4535 = vrot.lane.b32.xlu0 %v4484, 96
    %v4536 = vpop.permute.xlu0 %4535
    %4537 = vrot.lane.b32.xlu0 %v4485, 96
    %v4538 = vpop.permute.xlu0 %4537
    %4539 = vrot.lane.b32.xlu0 %v4486, 96
    %v4540 = vpop.permute.xlu0 %4539
    %4541 = vrot.lane.b32.xlu0 %v4487, 96
    %v4542 = vpop.permute.xlu0 %4541
    %4543 = vrot.lane.b32.xlu0 %v4488, 96
    %v4544 = vpop.permute.xlu0 %4543
    %v4546 = vsel %vm312, %v4448, 0
    %v4548 = vsel %vm312, %v4530, 0
    %v4550 = vsel %vm312, %v4532, 0
    %v4552 = vsel %vm312, %v4534, 0
    %v4554 = vsel %vm312, %v4536, 0
    %v4556 = vsel %vm312, %v4538, 0
    %v4558 = vsel %vm312, %v4540, 0
    %v4560 = vsel %vm312, %v4542, 0
    %v4562 = vsel %vm312, %v4544, 0
    %4564 = vmatprep.subr.mxu0 0.0
    %4565 = vmatpush1.xpose.msra.mxu0 0.0
    %4566 = vmatprep.subr.mxu0 0.0
    %4567 = vmatpush1.xpose.msra.mxu0 0.0
    %4568 = vmatprep.subr.mxu0 0.0
    %4569 = vmatpush1.xpose.msra.mxu0 0.0
    %4570 = vmatprep.subr.mxu0 0.0
    %4571 = vmatpush1.xpose.msra.mxu0 0.0
    %4572 = vmatprep.subr.mxu0 0.0
    %4573 = vmatpush1.xpose.msra.mxu0 0.0
    %4574 = vmatprep.subr.mxu0 0.0
    %4575 = vmatpush1.xpose.msra.mxu0 0.0
    %4576 = vmatprep.subr.mxu0 0.0
    %4577 = vmatpush1.xpose.msra.mxu0 0.0
    %4578 = vmatprep.subr.mxu0 0.0
    %4579 = vmatpush1.xpose.msra.mxu0 0.0
    %4580 = vmatprep.subr.mxu0 0.0
    %4581 = vmatpush1.xpose.msra.mxu0 %v4562
    %4582 = vmatprep.subr.mxu0 0.0
    %4583 = vmatpush1.xpose.msra.mxu0 %v4560
    %4584 = vmatprep.subr.mxu0 0.0
    %4585 = vmatpush1.xpose.msra.mxu0 %v4558
    %4586 = vmatprep.subr.mxu0 0.0
    %4587 = vmatpush1.xpose.msra.mxu0 %v4556
    %4588 = vmatprep.subr.mxu0 0.0
    %4589 = vmatpush1.xpose.msra.mxu0 %v4554
    %4590 = vmatprep.subr.mxu0 0.0
    %4591 = vmatpush1.xpose.msra.mxu0 %v4552
    %4592 = vmatprep.subr.mxu0 0.0
    %4593 = vmatpush1.xpose.msra.mxu0 %v4550
    %4594 = vmatprep.subr.mxu0 0.0
    %4595 = vmatpush1.xpose.msra.mxu0 %v4548
    %4596 = vmatprep.subr.mxu0 0.0
    %4597 = vmatpush2.xpose.msra.mxu0 0.0
    %4598 = vmatprep.subr.mxu0 0.0
    %4599 = vmatpush2.xpose.msra.mxu0 0.0
    %4600 = vmatprep.subr.mxu0 0.0
    %4601 = vmatpush2.xpose.msra.mxu0 0.0
    %4602 = vmatprep.subr.mxu0 0.0
    %4603 = vmatpush2.xpose.msra.mxu0 0.0
    %4604 = vmatprep.subr.mxu0 0.0
    %4605 = vmatpush2.xpose.msra.mxu0 0.0
    %4606 = vmatprep.subr.mxu0 0.0
    %4607 = vmatpush2.xpose.msra.mxu0 0.0
    %4608 = vmatprep.subr.mxu0 0.0
    %4609 = vmatpush2.xpose.msra.mxu0 0.0
    %4610 = vmatprep.subr.mxu0 0.0
    %4611 = vmatpush2.xpose.msra.mxu0 0.0
    %4612 = vmatprep.subr.mxu0 0.0
    %4613 = vmatpush2.xpose.msra.mxu0 0.0
    %4614 = vmatprep.subr.mxu0 0.0
    %4615 = vmatpush2.xpose.msra.mxu0 0.0
    %4616 = vmatprep.subr.mxu0 0.0
    %4617 = vmatpush2.xpose.msra.mxu0 0.0
    %4618 = vmatprep.subr.mxu0 0.0
    %4619 = vmatpush2.xpose.msra.mxu0 0.0
    %4620 = vmatprep.subr.mxu0 0.0
    %4621 = vmatpush2.xpose.msra.mxu0 0.0
    %4622 = vmatprep.subr.mxu0 0.0
    %4623 = vmatpush2.xpose.msra.mxu0 0.0
    %4624 = vmatprep.subr.mxu0 0.0
    %4625 = vmatpush2.xpose.msra.mxu0 0.0
    %4626 = vmatprep.subr.mxu0 0.0
    %4627 = vmatpush2.xpose.msra.mxu0 0.0
    %4628 = vmatprep.mubr.f32.mxu0 0.0
    %4629 = vmatmul.mubr.f32.gmra.mxu0 %v4546
    %v4630 = vpop.f32.mrf.mxu0
    %v4631 = vadd.f32 0.0, %v4630
    %v4632 = vpop.f32.mrf.mxu0
    %4633 = vdwg.mxu0
    %vm4634 = vcmask 64512
    %v4635 = vsel %vm4634, %v4631, -inf
    %4636 = vmax.xlane.f32.xlu0 %v4635
    %v4637 = vpop.xlane.xlu0 %4636
    %vm4638 = vcmask 130112
    %v4639 = vsel %vm4638, %v4631, -inf
    %4640 = vmax.xlane.f32.xlu0 %v4639
    %v4641 = vpop.xlane.xlu0 %4640
    %vm4642 = vcmask 195712
    %v4643 = vsel %vm4642, %v4631, -inf
    %4644 = vmax.xlane.f32.xlu0 %v4643
    %v4645 = vpop.xlane.xlu0 %4644
    %vm4646 = vcmask 261312
    %v4647 = vsel %vm4646, %v4631, -inf
    %4648 = vmax.xlane.f32.xlu0 %v4647
    %v4649 = vpop.xlane.xlu0 %4648
    %vm4650 = vcmask 326912
    %v4651 = vsel %vm4650, %v4631, -inf
    %4652 = vmax.xlane.f32.xlu0 %v4651
    %v4653 = vpop.xlane.xlu0 %4652
    %vm4654 = vcmask 392512
    %v4655 = vsel %vm4654, %v4631, -inf
    %4656 = vmax.xlane.f32.xlu0 %v4655
    %v4657 = vpop.xlane.xlu0 %4656
    %vm4658 = vcmask 458112
    %v4659 = vsel %vm4658, %v4631, -inf
    %4660 = vmax.xlane.f32.xlu0 %v4659
    %v4661 = vpop.xlane.xlu0 %4660
    %vm4662 = vcmask 523712
    %v4663 = vsel %vm4662, %v4631, -inf
    %4664 = vmax.xlane.f32.xlu0 %v4663
    %v4665 = vpop.xlane.xlu0 %4664
    %vm4666 = vcmask 7168
    %v4667 = vsel %vm4666, %v4637, %v4641
    %vm4668 = vcmask 15360
    %v4669 = vsel %vm4668, %v4667, %v4645
    %vm4670 = vcmask 23552
    %v4671 = vsel %vm4670, %v4669, %v4649
    %vm4672 = vcmask 31744
    %v4673 = vsel %vm4672, %v4671, %v4653
    %vm4674 = vcmask 39936
    %v4675 = vsel %vm4674, %v4673, %v4657
    %vm4676 = vcmask 48128
    %v4677 = vsel %vm4676, %v4675, %v4661
    %vm4678 = vcmask 56320
    %v4679 = vsel %vm4678, %v4677, %v4665
    %v4681 = vsel %vm4634, %v4679, 0
    %v4684 = vsel %vm4634, %v4348, 0
    %v4687 = vsel %vm4634, %v4349, 0
    %v4690 = vsel %vm4634, %v4350, 0
    %v4693 = vsel %vm4634, %v4351, 0
    %v4696 = vsel %vm4634, %v4352, 0
    %v4699 = vsel %vm4634, %v4353, 0
    %v4702 = vsel %vm4634, %v4354, 0
    %v4705 = vsel %vm4634, %v4355, 0
    %4707 = vmatprep.subr.mxu0 0.0
    %4708 = vmatpush1.xpose.msra.mxu0 0.0
    %4709 = vmatprep.subr.mxu0 0.0
    %4710 = vmatpush1.xpose.msra.mxu0 0.0
    %4711 = vmatprep.subr.mxu0 0.0
    %4712 = vmatpush1.xpose.msra.mxu0 0.0
    %4713 = vmatprep.subr.mxu0 0.0
    %4714 = vmatpush1.xpose.msra.mxu0 0.0
    %4715 = vmatprep.subr.mxu0 0.0
    %4716 = vmatpush1.xpose.msra.mxu0 0.0
    %4717 = vmatprep.subr.mxu0 0.0
    %4718 = vmatpush1.xpose.msra.mxu0 0.0
    %4719 = vmatprep.subr.mxu0 0.0
    %4720 = vmatpush1.xpose.msra.mxu0 0.0
    %4721 = vmatprep.subr.mxu0 0.0
    %4722 = vmatpush1.xpose.msra.mxu0 0.0
    %4723 = vmatprep.subr.mxu0 0.0
    %4724 = vmatpush1.xpose.msra.mxu0 %v4705
    %4725 = vmatprep.subr.mxu0 0.0
    %4726 = vmatpush1.xpose.msra.mxu0 %v4702
    %4727 = vmatprep.subr.mxu0 0.0
    %4728 = vmatpush1.xpose.msra.mxu0 %v4699
    %4729 = vmatprep.subr.mxu0 0.0
    %4730 = vmatpush1.xpose.msra.mxu0 %v4696
    %4731 = vmatprep.subr.mxu0 0.0
    %4732 = vmatpush1.xpose.msra.mxu0 %v4693
    %4733 = vmatprep.subr.mxu0 0.0
    %4734 = vmatpush1.xpose.msra.mxu0 %v4690
    %4735 = vmatprep.subr.mxu0 0.0
    %4736 = vmatpush1.xpose.msra.mxu0 %v4687
    %4737 = vmatprep.subr.mxu0 0.0
    %4738 = vmatpush1.xpose.msra.mxu0 %v4684
    %4739 = vmatprep.subr.mxu0 0.0
    %4740 = vmatpush2.xpose.msra.mxu0 0.0
    %4741 = vmatprep.subr.mxu0 0.0
    %4742 = vmatpush2.xpose.msra.mxu0 0.0
    %4743 = vmatprep.subr.mxu0 0.0
    %4744 = vmatpush2.xpose.msra.mxu0 0.0
    %4745 = vmatprep.subr.mxu0 0.0
    %4746 = vmatpush2.xpose.msra.mxu0 0.0
    %4747 = vmatprep.subr.mxu0 0.0
    %4748 = vmatpush2.xpose.msra.mxu0 0.0
    %4749 = vmatprep.subr.mxu0 0.0
    %4750 = vmatpush2.xpose.msra.mxu0 0.0
    %4751 = vmatprep.subr.mxu0 0.0
    %4752 = vmatpush2.xpose.msra.mxu0 0.0
    %4753 = vmatprep.subr.mxu0 0.0
    %4754 = vmatpush2.xpose.msra.mxu0 0.0
    %4755 = vmatprep.subr.mxu0 0.0
    %4756 = vmatpush2.xpose.msra.mxu0 0.0
    %4757 = vmatprep.subr.mxu0 0.0
    %4758 = vmatpush2.xpose.msra.mxu0 0.0
    %4759 = vmatprep.subr.mxu0 0.0
    %4760 = vmatpush2.xpose.msra.mxu0 0.0
    %4761 = vmatprep.subr.mxu0 0.0
    %4762 = vmatpush2.xpose.msra.mxu0 0.0
    %4763 = vmatprep.subr.mxu0 0.0
    %4764 = vmatpush2.xpose.msra.mxu0 0.0
    %4765 = vmatprep.subr.mxu0 0.0
    %4766 = vmatpush2.xpose.msra.mxu0 0.0
    %4767 = vmatprep.subr.mxu0 0.0
    %4768 = vmatpush2.xpose.msra.mxu0 0.0
    %4769 = vmatprep.subr.mxu0 0.0
    %4770 = vmatpush2.xpose.msra.mxu0 0.0
    %4771 = vmatprep.mubr.f32.mxu0 0.0
    %4772 = vmatmul.mubr.f32.gmra.mxu0 %v4681
    %v4773 = vpop.f32.mrf.mxu0
    %v4774 = vadd.f32 0.0, %v4773
    %v4775 = vpop.f32.mrf.mxu0
    %4776 = vdwg.mxu0
    %v4777 = vsub.f32 %v4631, %v4774
    %v4778 = vmul.f32 %v4777, 1.442695
    %v4779 = vpow.pop %v4778
    %vm4780 = vcmask 523264
    %v4782 = vsel %vm4780, %v4779, 0
    %4784 = vmatprep.subr.mxu0 0.0
    %4785 = vmatpush1.msra.mxu0 0.0
    %4786 = vmatprep.subr.mxu0 0.0
    %4787 = vmatpush1.msra.mxu0 0.0
    %4788 = vmatprep.subr.mxu0 0.0
    %4789 = vmatpush1.msra.mxu0 0.0
    %4790 = vmatprep.subr.mxu0 0.0
    %4791 = vmatpush1.msra.mxu0 0.0
    %4792 = vmatprep.subr.mxu0 0.0
    %4793 = vmatpush1.msra.mxu0 0.0
    %4794 = vmatprep.subr.mxu0 0.0
    %4795 = vmatpush1.msra.mxu0 0.0
    %4796 = vmatprep.subr.mxu0 0.0
    %4797 = vmatpush1.msra.mxu0 0.0
    %4798 = vmatprep.subr.mxu0 0.0
    %4799 = vmatpush1.msra.mxu0 0.0
    %4800 = vmatprep.subr.mxu0 0.0
    %4801 = vmatpush1.msra.mxu0 %v4355
    %4802 = vmatprep.subr.mxu0 0.0
    %4803 = vmatpush1.msra.mxu0 %v4354
    %4804 = vmatprep.subr.mxu0 0.0
    %4805 = vmatpush1.msra.mxu0 %v4353
    %4806 = vmatprep.subr.mxu0 0.0
    %4807 = vmatpush1.msra.mxu0 %v4352
    %4808 = vmatprep.subr.mxu0 0.0
    %4809 = vmatpush1.msra.mxu0 %v4351
    %4810 = vmatprep.subr.mxu0 0.0
    %4811 = vmatpush1.msra.mxu0 %v4350
    %4812 = vmatprep.subr.mxu0 0.0
    %4813 = vmatpush1.msra.mxu0 %v4349
    %4814 = vmatprep.subr.mxu0 0.0
    %4815 = vmatpush1.msra.mxu0 %v4348
    %4816 = vmatprep.subr.mxu0 0.0
    %4817 = vmatpush2.msra.mxu0 0.0
    %4818 = vmatprep.subr.mxu0 0.0
    %4819 = vmatpush2.msra.mxu0 0.0
    %4820 = vmatprep.subr.mxu0 0.0
    %4821 = vmatpush2.msra.mxu0 0.0
    %4822 = vmatprep.subr.mxu0 0.0
    %4823 = vmatpush2.msra.mxu0 0.0
    %4824 = vmatprep.subr.mxu0 0.0
    %4825 = vmatpush2.msra.mxu0 0.0
    %4826 = vmatprep.subr.mxu0 0.0
    %4827 = vmatpush2.msra.mxu0 0.0
    %4828 = vmatprep.subr.mxu0 0.0
    %4829 = vmatpush2.msra.mxu0 0.0
    %4830 = vmatprep.subr.mxu0 0.0
    %4831 = vmatpush2.msra.mxu0 0.0
    %4832 = vmatprep.subr.mxu0 0.0
    %4833 = vmatpush2.msra.mxu0 0.0
    %4834 = vmatprep.subr.mxu0 0.0
    %4835 = vmatpush2.msra.mxu0 0.0
    %4836 = vmatprep.subr.mxu0 0.0
    %4837 = vmatpush2.msra.mxu0 0.0
    %4838 = vmatprep.subr.mxu0 0.0
    %4839 = vmatpush2.msra.mxu0 0.0
    %4840 = vmatprep.subr.mxu0 0.0
    %4841 = vmatpush2.msra.mxu0 0.0
    %4842 = vmatprep.subr.mxu0 0.0
    %4843 = vmatpush2.msra.mxu0 0.0
    %4844 = vmatprep.subr.mxu0 0.0
    %4845 = vmatpush2.msra.mxu0 0.0
    %4846 = vmatprep.subr.mxu0 0.0
    %4847 = vmatpush2.msra.mxu0 0.0
    %4848 = vmatprep.mubr.f32.mxu0 0.0
    %4849 = vmatmul.mubr.f32.gmra.mxu0 %v4782
    %v4850 = vpop.f32.mrf.mxu0
    %v4851 = vadd.f32 0.0, %v4850
    %v4852 = vpop.f32.mrf.mxu0
    %4853 = vdwg.mxu0
    %v4854 = vrcp.pop %v4851
    %v4856 = vsel %vm4634, %v4854, 0
    %4858 = vmatprep.subr.mxu0 0.0
    %4859 = vmatpush1.xpose.msra.mxu0 0.0
    %4860 = vmatprep.subr.mxu0 0.0
    %4861 = vmatpush1.xpose.msra.mxu0 0.0
    %4862 = vmatprep.subr.mxu0 0.0
    %4863 = vmatpush1.xpose.msra.mxu0 0.0
    %4864 = vmatprep.subr.mxu0 0.0
    %4865 = vmatpush1.xpose.msra.mxu0 0.0
    %4866 = vmatprep.subr.mxu0 0.0
    %4867 = vmatpush1.xpose.msra.mxu0 0.0
    %4868 = vmatprep.subr.mxu0 0.0
    %4869 = vmatpush1.xpose.msra.mxu0 0.0
    %4870 = vmatprep.subr.mxu0 0.0
    %4871 = vmatpush1.xpose.msra.mxu0 0.0
    %4872 = vmatprep.subr.mxu0 0.0
    %4873 = vmatpush1.xpose.msra.mxu0 0.0
    %4874 = vmatprep.subr.mxu0 0.0
    %4875 = vmatpush1.xpose.msra.mxu0 %v4705
    %4876 = vmatprep.subr.mxu0 0.0
    %4877 = vmatpush1.xpose.msra.mxu0 %v4702
    %4878 = vmatprep.subr.mxu0 0.0
    %4879 = vmatpush1.xpose.msra.mxu0 %v4699
    %4880 = vmatprep.subr.mxu0 0.0
    %4881 = vmatpush1.xpose.msra.mxu0 %v4696
    %4882 = vmatprep.subr.mxu0 0.0
    %4883 = vmatpush1.xpose.msra.mxu0 %v4693
    %4884 = vmatprep.subr.mxu0 0.0
    %4885 = vmatpush1.xpose.msra.mxu0 %v4690
    %4886 = vmatprep.subr.mxu0 0.0
    %4887 = vmatpush1.xpose.msra.mxu0 %v4687
    %4888 = vmatprep.subr.mxu0 0.0
    %4889 = vmatpush1.xpose.msra.mxu0 %v4684
    %4890 = vmatprep.subr.mxu0 0.0
    %4891 = vmatpush2.xpose.msra.mxu0 0.0
    %4892 = vmatprep.subr.mxu0 0.0
    %4893 = vmatpush2.xpose.msra.mxu0 0.0
    %4894 = vmatprep.subr.mxu0 0.0
    %4895 = vmatpush2.xpose.msra.mxu0 0.0
    %4896 = vmatprep.subr.mxu0 0.0
    %4897 = vmatpush2.xpose.msra.mxu0 0.0
    %4898 = vmatprep.subr.mxu0 0.0
    %4899 = vmatpush2.xpose.msra.mxu0 0.0
    %4900 = vmatprep.subr.mxu0 0.0
    %4901 = vmatpush2.xpose.msra.mxu0 0.0
    %4902 = vmatprep.subr.mxu0 0.0
    %4903 = vmatpush2.xpose.msra.mxu0 0.0
    %4904 = vmatprep.subr.mxu0 0.0
    %4905 = vmatpush2.xpose.msra.mxu0 0.0
    %4906 = vmatprep.subr.mxu0 0.0
    %4907 = vmatpush2.xpose.msra.mxu0 0.0
    %4908 = vmatprep.subr.mxu0 0.0
    %4909 = vmatpush2.xpose.msra.mxu0 0.0
    %4910 = vmatprep.subr.mxu0 0.0
    %4911 = vmatpush2.xpose.msra.mxu0 0.0
    %4912 = vmatprep.subr.mxu0 0.0
    %4913 = vmatpush2.xpose.msra.mxu0 0.0
    %4914 = vmatprep.subr.mxu0 0.0
    %4915 = vmatpush2.xpose.msra.mxu0 0.0
    %4916 = vmatprep.subr.mxu0 0.0
    %4917 = vmatpush2.xpose.msra.mxu0 0.0
    %4918 = vmatprep.subr.mxu0 0.0
    %4919 = vmatpush2.xpose.msra.mxu0 0.0
    %4920 = vmatprep.subr.mxu0 0.0
    %4921 = vmatpush2.xpose.msra.mxu0 0.0
    %4922 = vmatprep.mubr.f32.mxu0 0.0
    %4923 = vmatmul.mubr.f32.gmra.mxu0 %v4856
    %v4924 = vpop.f32.mrf.mxu0
    %v4925 = vadd.f32 0.0, %v4924
    %v4926 = vpop.f32.mrf.mxu0
    %4927 = vdwg.mxu0
    %v4928 = vmul.f32 %v4779, %v4925
    %4937 = vrot.lane.b32.xlu0 %v4513, 64
    %v4938 = vpop.permute.xlu0 %4937
    %4939 = vrot.lane.b32.xlu0 %v4514, 64
    %v4940 = vpop.permute.xlu0 %4939
    %4941 = vrot.lane.b32.xlu0 %v4515, 64
    %v4942 = vpop.permute.xlu0 %4941
    %4943 = vrot.lane.b32.xlu0 %v4516, 64
    %v4944 = vpop.permute.xlu0 %4943
    %4945 = vrot.lane.b32.xlu0 %v4517, 64
    %v4946 = vpop.permute.xlu0 %4945
    %4947 = vrot.lane.b32.xlu0 %v4518, 64
    %v4948 = vpop.permute.xlu0 %4947
    %4949 = vrot.lane.b32.xlu0 %v4519, 64
    %v4950 = vpop.permute.xlu0 %4949
    %4951 = vrot.lane.b32.xlu0 %v4520, 64
    %v4952 = vpop.permute.xlu0 %4951
    %v4962 = vsel %vm4780, %v4928, 0
    %4964 = vmatprep.subr.mxu0 0.0
    %4965 = vmatpush1.msra.mxu0 0.0
    %4966 = vmatprep.subr.mxu0 0.0
    %4967 = vmatpush1.msra.mxu0 0.0
    %4968 = vmatprep.subr.mxu0 0.0
    %4969 = vmatpush1.msra.mxu0 0.0
    %4970 = vmatprep.subr.mxu0 0.0
    %4971 = vmatpush1.msra.mxu0 0.0
    %4972 = vmatprep.subr.mxu0 0.0
    %4973 = vmatpush1.msra.mxu0 0.0
    %4974 = vmatprep.subr.mxu0 0.0
    %4975 = vmatpush1.msra.mxu0 0.0
    %4976 = vmatprep.subr.mxu0 0.0
    %4977 = vmatpush1.msra.mxu0 0.0
    %4978 = vmatprep.subr.mxu0 0.0
    %4979 = vmatpush1.msra.mxu0 0.0
    %4980 = vmatprep.subr.mxu0 0.0
    %4981 = vmatpush1.msra.mxu0 %v4952
    %4982 = vmatprep.subr.mxu0 0.0
    %4983 = vmatpush1.msra.mxu0 %v4950
    %4984 = vmatprep.subr.mxu0 0.0
    %4985 = vmatpush1.msra.mxu0 %v4948
    %4986 = vmatprep.subr.mxu0 0.0
    %4987 = vmatpush1.msra.mxu0 %v4946
    %4988 = vmatprep.subr.mxu0 0.0
    %4989 = vmatpush1.msra.mxu0 %v4944
    %4990 = vmatprep.subr.mxu0 0.0
    %4991 = vmatpush1.msra.mxu0 %v4942
    %4992 = vmatprep.subr.mxu0 0.0
    %4993 = vmatpush1.msra.mxu0 %v4940
    %4994 = vmatprep.subr.mxu0 0.0
    %4995 = vmatpush1.msra.mxu0 %v4938
    %4996 = vmatprep.subr.mxu0 0.0
    %4997 = vmatpush2.msra.mxu0 0.0
    %4998 = vmatprep.subr.mxu0 0.0
    %4999 = vmatpush2.msra.mxu0 0.0
    %5000 = vmatprep.subr.mxu0 0.0
    %5001 = vmatpush2.msra.mxu0 0.0
    %5002 = vmatprep.subr.mxu0 0.0
    %5003 = vmatpush2.msra.mxu0 0.0
    %5004 = vmatprep.subr.mxu0 0.0
    %5005 = vmatpush2.msra.mxu0 0.0
    %5006 = vmatprep.subr.mxu0 0.0
    %5007 = vmatpush2.msra.mxu0 0.0
    %5008 = vmatprep.subr.mxu0 0.0
    %5009 = vmatpush2.msra.mxu0 0.0
    %5010 = vmatprep.subr.mxu0 0.0
    %5011 = vmatpush2.msra.mxu0 0.0
    %5012 = vmatprep.subr.mxu0 0.0
    %5013 = vmatpush2.msra.mxu0 0.0
    %5014 = vmatprep.subr.mxu0 0.0
    %5015 = vmatpush2.msra.mxu0 0.0
    %5016 = vmatprep.subr.mxu0 0.0
    %5017 = vmatpush2.msra.mxu0 0.0
    %5018 = vmatprep.subr.mxu0 0.0
    %5019 = vmatpush2.msra.mxu0 0.0
    %5020 = vmatprep.subr.mxu0 0.0
    %5021 = vmatpush2.msra.mxu0 0.0
    %5022 = vmatprep.subr.mxu0 0.0
    %5023 = vmatpush2.msra.mxu0 0.0
    %5024 = vmatprep.subr.mxu0 0.0
    %5025 = vmatpush2.msra.mxu0 0.0
    %5026 = vmatprep.subr.mxu0 0.0
    %5027 = vmatpush2.msra.mxu0 0.0
    %5028 = vmatprep.mubr.f32.mxu0 0.0
    %5029 = vmatmul.mubr.f32.gmra.mxu0 %v4962
    %v5030 = vpop.f32.mrf.mxu0
    %v5031 = vadd.f32 0.0, %v5030
    %v5032 = vpop.f32.mrf.mxu0
    %5033 = vdwg.mxu0
    %v5034 = vmul.f32 %v4445, 0.5
    %v5035 = vmul.f32 %v4445, %v4458
    %v5036 = vmul.f32 %v4445, %v4460
    %v5037 = vmul.f32 %v4445, %v4462
    %v5038 = vmul.f32 %v4445, %v4464
    %v5039 = vmul.f32 %v4445, %v4466
    %v5040 = vmul.f32 %v4445, %v4468
    %v5041 = vmul.f32 %v4445, %v4470
    %v5042 = vmul.f32 %v4445, %v4472
    %v5043 = vmul.f32 %v4445, %v4490
    %v5044 = vmul.f32 %v4445, %v4492
    %v5045 = vmul.f32 %v4445, %v4494
    %v5046 = vmul.f32 %v4445, %v4496
    %v5047 = vmul.f32 %v4445, %v4498
    %v5048 = vmul.f32 %v4445, %v4500
    %v5049 = vmul.f32 %v4445, %v4502
    %v5050 = vmul.f32 %v4445, %v4504
    %5059 = vrot.lane.b32.xlu0 %v5035, 96
    %v5060 = vpop.permute.xlu0 %5059
    %5061 = vrot.lane.b32.xlu0 %v5036, 96
    %v5062 = vpop.permute.xlu0 %5061
    %5063 = vrot.lane.b32.xlu0 %v5037, 96
    %v5064 = vpop.permute.xlu0 %5063
    %5065 = vrot.lane.b32.xlu0 %v5038, 96
    %v5066 = vpop.permute.xlu0 %5065
    %5067 = vrot.lane.b32.xlu0 %v5039, 96
    %v5068 = vpop.permute.xlu0 %5067
    %5069 = vrot.lane.b32.xlu0 %v5040, 96
    %v5070 = vpop.permute.xlu0 %5069
    %5071 = vrot.lane.b32.xlu0 %v5041, 96
    %v5072 = vpop.permute.xlu0 %5071
    %5073 = vrot.lane.b32.xlu0 %v5042, 96
    %v5074 = vpop.permute.xlu0 %5073
    %v5076 = vsel %vm312, %v5034, 0
    %v5078 = vsel %vm312, %v5060, 0
    %v5080 = vsel %vm312, %v5062, 0
    %v5082 = vsel %vm312, %v5064, 0
    %v5084 = vsel %vm312, %v5066, 0
    %v5086 = vsel %vm312, %v5068, 0
    %v5088 = vsel %vm312, %v5070, 0
    %v5090 = vsel %vm312, %v5072, 0
    %v5092 = vsel %vm312, %v5074, 0
    %5094 = vmatprep.subr.mxu0 0.0
    %5095 = vmatpush1.xpose.msra.mxu0 0.0
    %5096 = vmatprep.subr.mxu0 0.0
    %5097 = vmatpush1.xpose.msra.mxu0 0.0
    %5098 = vmatprep.subr.mxu0 0.0
    %5099 = vmatpush1.xpose.msra.mxu0 0.0
    %5100 = vmatprep.subr.mxu0 0.0
    %5101 = vmatpush1.xpose.msra.mxu0 0.0
    %5102 = vmatprep.subr.mxu0 0.0
    %5103 = vmatpush1.xpose.msra.mxu0 0.0
    %5104 = vmatprep.subr.mxu0 0.0
    %5105 = vmatpush1.xpose.msra.mxu0 0.0
    %5106 = vmatprep.subr.mxu0 0.0
    %5107 = vmatpush1.xpose.msra.mxu0 0.0
    %5108 = vmatprep.subr.mxu0 0.0
    %5109 = vmatpush1.xpose.msra.mxu0 0.0
    %5110 = vmatprep.subr.mxu0 0.0
    %5111 = vmatpush1.xpose.msra.mxu0 %v5092
    %5112 = vmatprep.subr.mxu0 0.0
    %5113 = vmatpush1.xpose.msra.mxu0 %v5090
    %5114 = vmatprep.subr.mxu0 0.0
    %5115 = vmatpush1.xpose.msra.mxu0 %v5088
    %5116 = vmatprep.subr.mxu0 0.0
    %5117 = vmatpush1.xpose.msra.mxu0 %v5086
    %5118 = vmatprep.subr.mxu0 0.0
    %5119 = vmatpush1.xpose.msra.mxu0 %v5084
    %5120 = vmatprep.subr.mxu0 0.0
    %5121 = vmatpush1.xpose.msra.mxu0 %v5082
    %5122 = vmatprep.subr.mxu0 0.0
    %5123 = vmatpush1.xpose.msra.mxu0 %v5080
    %5124 = vmatprep.subr.mxu0 0.0
    %5125 = vmatpush1.xpose.msra.mxu0 %v5078
    %5126 = vmatprep.subr.mxu0 0.0
    %5127 = vmatpush2.xpose.msra.mxu0 0.0
    %5128 = vmatprep.subr.mxu0 0.0
    %5129 = vmatpush2.xpose.msra.mxu0 0.0
    %5130 = vmatprep.subr.mxu0 0.0
    %5131 = vmatpush2.xpose.msra.mxu0 0.0
    %5132 = vmatprep.subr.mxu0 0.0
    %5133 = vmatpush2.xpose.msra.mxu0 0.0
    %5134 = vmatprep.subr.mxu0 0.0
    %5135 = vmatpush2.xpose.msra.mxu0 0.0
    %5136 = vmatprep.subr.mxu0 0.0
    %5137 = vmatpush2.xpose.msra.mxu0 0.0
    %5138 = vmatprep.subr.mxu0 0.0
    %5139 = vmatpush2.xpose.msra.mxu0 0.0
    %5140 = vmatprep.subr.mxu0 0.0
    %5141 = vmatpush2.xpose.msra.mxu0 0.0
    %5142 = vmatprep.subr.mxu0 0.0
    %5143 = vmatpush2.xpose.msra.mxu0 0.0
    %5144 = vmatprep.subr.mxu0 0.0
    %5145 = vmatpush2.xpose.msra.mxu0 0.0
    %5146 = vmatprep.subr.mxu0 0.0
    %5147 = vmatpush2.xpose.msra.mxu0 0.0
    %5148 = vmatprep.subr.mxu0 0.0
    %5149 = vmatpush2.xpose.msra.mxu0 0.0
    %5150 = vmatprep.subr.mxu0 0.0
    %5151 = vmatpush2.xpose.msra.mxu0 0.0
    %5152 = vmatprep.subr.mxu0 0.0
    %5153 = vmatpush2.xpose.msra.mxu0 0.0
    %5154 = vmatprep.subr.mxu0 0.0
    %5155 = vmatpush2.xpose.msra.mxu0 0.0
    %5156 = vmatprep.subr.mxu0 0.0
    %5157 = vmatpush2.xpose.msra.mxu0 0.0
    %5158 = vmatprep.mubr.f32.mxu0 0.0
    %5159 = vmatmul.mubr.f32.gmra.mxu0 %v5076
    %v5160 = vpop.f32.mrf.mxu0
    %v5161 = vadd.f32 0.0, %v5160
    %v5162 = vpop.f32.mrf.mxu0
    %5163 = vdwg.mxu0
    %v5164 = vsel %vm4634, %v5161, -inf
    %5165 = vmax.xlane.f32.xlu0 %v5164
    %v5166 = vpop.xlane.xlu0 %5165
    %v5167 = vsel %vm4638, %v5161, -inf
    %5168 = vmax.xlane.f32.xlu0 %v5167
    %v5169 = vpop.xlane.xlu0 %5168
    %v5170 = vsel %vm4642, %v5161, -inf
    %5171 = vmax.xlane.f32.xlu0 %v5170
    %v5172 = vpop.xlane.xlu0 %5171
    %v5173 = vsel %vm4646, %v5161, -inf
    %5174 = vmax.xlane.f32.xlu0 %v5173
    %v5175 = vpop.xlane.xlu0 %5174
    %v5176 = vsel %vm4650, %v5161, -inf
    %5177 = vmax.xlane.f32.xlu0 %v5176
    %v5178 = vpop.xlane.xlu0 %5177
    %v5179 = vsel %vm4654, %v5161, -inf
    %5180 = vmax.xlane.f32.xlu0 %v5179
    %v5181 = vpop.xlane.xlu0 %5180
    %v5182 = vsel %vm4658, %v5161, -inf
    %5183 = vmax.xlane.f32.xlu0 %v5182
    %v5184 = vpop.xlane.xlu0 %5183
    %v5185 = vsel %vm4662, %v5161, -inf
    %5186 = vmax.xlane.f32.xlu0 %v5185
    %v5187 = vpop.xlane.xlu0 %5186
    %v5188 = vsel %vm4666, %v5166, %v5169
    %v5189 = vsel %vm4668, %v5188, %v5172
    %v5190 = vsel %vm4670, %v5189, %v5175
    %v5191 = vsel %vm4672, %v5190, %v5178
    %v5192 = vsel %vm4674, %v5191, %v5181
    %v5193 = vsel %vm4676, %v5192, %v5184
    %v5194 = vsel %vm4678, %v5193, %v5187
    %v5196 = vsel %vm4634, %v5194, 0
    %5198 = vmatprep.subr.mxu0 0.0
    %5199 = vmatpush1.xpose.msra.mxu0 0.0
    %5200 = vmatprep.subr.mxu0 0.0
    %5201 = vmatpush1.xpose.msra.mxu0 0.0
    %5202 = vmatprep.subr.mxu0 0.0
    %5203 = vmatpush1.xpose.msra.mxu0 0.0
    %5204 = vmatprep.subr.mxu0 0.0
    %5205 = vmatpush1.xpose.msra.mxu0 0.0
    %5206 = vmatprep.subr.mxu0 0.0
    %5207 = vmatpush1.xpose.msra.mxu0 0.0
    %5208 = vmatprep.subr.mxu0 0.0
    %5209 = vmatpush1.xpose.msra.mxu0 0.0
    %5210 = vmatprep.subr.mxu0 0.0
    %5211 = vmatpush1.xpose.msra.mxu0 0.0
    %5212 = vmatprep.subr.mxu0 0.0
    %5213 = vmatpush1.xpose.msra.mxu0 0.0
    %5214 = vmatprep.subr.mxu0 0.0
    %5215 = vmatpush1.xpose.msra.mxu0 %v4705
    %5216 = vmatprep.subr.mxu0 0.0
    %5217 = vmatpush1.xpose.msra.mxu0 %v4702
    %5218 = vmatprep.subr.mxu0 0.0
    %5219 = vmatpush1.xpose.msra.mxu0 %v4699
    %5220 = vmatprep.subr.mxu0 0.0
    %5221 = vmatpush1.xpose.msra.mxu0 %v4696
    %5222 = vmatprep.subr.mxu0 0.0
    %5223 = vmatpush1.xpose.msra.mxu0 %v4693
    %5224 = vmatprep.subr.mxu0 0.0
    %5225 = vmatpush1.xpose.msra.mxu0 %v4690
    %5226 = vmatprep.subr.mxu0 0.0
    %5227 = vmatpush1.xpose.msra.mxu0 %v4687
    %5228 = vmatprep.subr.mxu0 0.0
    %5229 = vmatpush1.xpose.msra.mxu0 %v4684
    %5230 = vmatprep.subr.mxu0 0.0
    %5231 = vmatpush2.xpose.msra.mxu0 0.0
    %5232 = vmatprep.subr.mxu0 0.0
    %5233 = vmatpush2.xpose.msra.mxu0 0.0
    %5234 = vmatprep.subr.mxu0 0.0
    %5235 = vmatpush2.xpose.msra.mxu0 0.0
    %5236 = vmatprep.subr.mxu0 0.0
    %5237 = vmatpush2.xpose.msra.mxu0 0.0
    %5238 = vmatprep.subr.mxu0 0.0
    %5239 = vmatpush2.xpose.msra.mxu0 0.0
    %5240 = vmatprep.subr.mxu0 0.0
    %5241 = vmatpush2.xpose.msra.mxu0 0.0
    %5242 = vmatprep.subr.mxu0 0.0
    %5243 = vmatpush2.xpose.msra.mxu0 0.0
    %5244 = vmatprep.subr.mxu0 0.0
    %5245 = vmatpush2.xpose.msra.mxu0 0.0
    %5246 = vmatprep.subr.mxu0 0.0
    %5247 = vmatpush2.xpose.msra.mxu0 0.0
    %5248 = vmatprep.subr.mxu0 0.0
    %5249 = vmatpush2.xpose.msra.mxu0 0.0
    %5250 = vmatprep.subr.mxu0 0.0
    %5251 = vmatpush2.xpose.msra.mxu0 0.0
    %5252 = vmatprep.subr.mxu0 0.0
    %5253 = vmatpush2.xpose.msra.mxu0 0.0
    %5254 = vmatprep.subr.mxu0 0.0
    %5255 = vmatpush2.xpose.msra.mxu0 0.0
    %5256 = vmatprep.subr.mxu0 0.0
    %5257 = vmatpush2.xpose.msra.mxu0 0.0
    %5258 = vmatprep.subr.mxu0 0.0
    %5259 = vmatpush2.xpose.msra.mxu0 0.0
    %5260 = vmatprep.subr.mxu0 0.0
    %5261 = vmatpush2.xpose.msra.mxu0 0.0
    %5262 = vmatprep.mubr.f32.mxu0 0.0
    %5263 = vmatmul.mubr.f32.gmra.mxu0 %v5196
    %v5264 = vpop.f32.mrf.mxu0
    %v5265 = vadd.f32 0.0, %v5264
    %v5266 = vpop.f32.mrf.mxu0
    %5267 = vdwg.mxu0
    %v5268 = vsub.f32 %v5161, %v5265
    %v5269 = vmul.f32 %v5268, 1.442695
    %v5270 = vpow.pop %v5269
    %v5272 = vsel %vm4780, %v5270, 0
    %5274 = vmatprep.subr.mxu0 0.0
    %5275 = vmatpush1.msra.mxu0 0.0
    %5276 = vmatprep.subr.mxu0 0.0
    %5277 = vmatpush1.msra.mxu0 0.0
    %5278 = vmatprep.subr.mxu0 0.0
    %5279 = vmatpush1.msra.mxu0 0.0
    %5280 = vmatprep.subr.mxu0 0.0
    %5281 = vmatpush1.msra.mxu0 0.0
    %5282 = vmatprep.subr.mxu0 0.0
    %5283 = vmatpush1.msra.mxu0 0.0
    %5284 = vmatprep.subr.mxu0 0.0
    %5285 = vmatpush1.msra.mxu0 0.0
    %5286 = vmatprep.subr.mxu0 0.0
    %5287 = vmatpush1.msra.mxu0 0.0
    %5288 = vmatprep.subr.mxu0 0.0
    %5289 = vmatpush1.msra.mxu0 0.0
    %5290 = vmatprep.subr.mxu0 0.0
    %5291 = vmatpush1.msra.mxu0 %v4355
    %5292 = vmatprep.subr.mxu0 0.0
    %5293 = vmatpush1.msra.mxu0 %v4354
    %5294 = vmatprep.subr.mxu0 0.0
    %5295 = vmatpush1.msra.mxu0 %v4353
    %5296 = vmatprep.subr.mxu0 0.0
    %5297 = vmatpush1.msra.mxu0 %v4352
    %5298 = vmatprep.subr.mxu0 0.0
    %5299 = vmatpush1.msra.mxu0 %v4351
    %5300 = vmatprep.subr.mxu0 0.0
    %5301 = vmatpush1.msra.mxu0 %v4350
    %5302 = vmatprep.subr.mxu0 0.0
    %5303 = vmatpush1.msra.mxu0 %v4349
    %5304 = vmatprep.subr.mxu0 0.0
    %5305 = vmatpush1.msra.mxu0 %v4348
    %5306 = vmatprep.subr.mxu0 0.0
    %5307 = vmatpush2.msra.mxu0 0.0
    %5308 = vmatprep.subr.mxu0 0.0
    %5309 = vmatpush2.msra.mxu0 0.0
    %5310 = vmatprep.subr.mxu0 0.0
    %5311 = vmatpush2.msra.mxu0 0.0
    %5312 = vmatprep.subr.mxu0 0.0
    %5313 = vmatpush2.msra.mxu0 0.0
    %5314 = vmatprep.subr.mxu0 0.0
    %5315 = vmatpush2.msra.mxu0 0.0
    %5316 = vmatprep.subr.mxu0 0.0
    %5317 = vmatpush2.msra.mxu0 0.0
    %5318 = vmatprep.subr.mxu0 0.0
    %5319 = vmatpush2.msra.mxu0 0.0
    %5320 = vmatprep.subr.mxu0 0.0
    %5321 = vmatpush2.msra.mxu0 0.0
    %5322 = vmatprep.subr.mxu0 0.0
    %5323 = vmatpush2.msra.mxu0 0.0
    %5324 = vmatprep.subr.mxu0 0.0
    %5325 = vmatpush2.msra.mxu0 0.0
    %5326 = vmatprep.subr.mxu0 0.0
    %5327 = vmatpush2.msra.mxu0 0.0
    %5328 = vmatprep.subr.mxu0 0.0
    %5329 = vmatpush2.msra.mxu0 0.0
    %5330 = vmatprep.subr.mxu0 0.0
    %5331 = vmatpush2.msra.mxu0 0.0
    %5332 = vmatprep.subr.mxu0 0.0
    %5333 = vmatpush2.msra.mxu0 0.0
    %5334 = vmatprep.subr.mxu0 0.0
    %5335 = vmatpush2.msra.mxu0 0.0
    %5336 = vmatprep.subr.mxu0 0.0
    %5337 = vmatpush2.msra.mxu0 0.0
    %5338 = vmatprep.mubr.f32.mxu0 0.0
    %5339 = vmatmul.mubr.f32.gmra.mxu0 %v5272
    %v5340 = vpop.f32.mrf.mxu0
    %v5341 = vadd.f32 0.0, %v5340
    %v5342 = vpop.f32.mrf.mxu0
    %5343 = vdwg.mxu0
    %v5344 = vrcp.pop %v5341
    %v5346 = vsel %vm4634, %v5344, 0
    %5348 = vmatprep.subr.mxu0 0.0
    %5349 = vmatpush1.xpose.msra.mxu0 0.0
    %5350 = vmatprep.subr.mxu0 0.0
    %5351 = vmatpush1.xpose.msra.mxu0 0.0
    %5352 = vmatprep.subr.mxu0 0.0
    %5353 = vmatpush1.xpose.msra.mxu0 0.0
    %5354 = vmatprep.subr.mxu0 0.0
    %5355 = vmatpush1.xpose.msra.mxu0 0.0
    %5356 = vmatprep.subr.mxu0 0.0
    %5357 = vmatpush1.xpose.msra.mxu0 0.0
    %5358 = vmatprep.subr.mxu0 0.0
    %5359 = vmatpush1.xpose.msra.mxu0 0.0
    %5360 = vmatprep.subr.mxu0 0.0
    %5361 = vmatpush1.xpose.msra.mxu0 0.0
    %5362 = vmatprep.subr.mxu0 0.0
    %5363 = vmatpush1.xpose.msra.mxu0 0.0
    %5364 = vmatprep.subr.mxu0 0.0
    %5365 = vmatpush1.xpose.msra.mxu0 %v4705
    %5366 = vmatprep.subr.mxu0 0.0
    %5367 = vmatpush1.xpose.msra.mxu0 %v4702
    %5368 = vmatprep.subr.mxu0 0.0
    %5369 = vmatpush1.xpose.msra.mxu0 %v4699
    %5370 = vmatprep.subr.mxu0 0.0
    %5371 = vmatpush1.xpose.msra.mxu0 %v4696
    %5372 = vmatprep.subr.mxu0 0.0
    %5373 = vmatpush1.xpose.msra.mxu0 %v4693
    %5374 = vmatprep.subr.mxu0 0.0
    %5375 = vmatpush1.xpose.msra.mxu0 %v4690
    %5376 = vmatprep.subr.mxu0 0.0
    %5377 = vmatpush1.xpose.msra.mxu0 %v4687
    %5378 = vmatprep.subr.mxu0 0.0
    %5379 = vmatpush1.xpose.msra.mxu0 %v4684
    %5380 = vmatprep.subr.mxu0 0.0
    %5381 = vmatpush2.xpose.msra.mxu0 0.0
    %5382 = vmatprep.subr.mxu0 0.0
    %5383 = vmatpush2.xpose.msra.mxu0 0.0
    %5384 = vmatprep.subr.mxu0 0.0
    %5385 = vmatpush2.xpose.msra.mxu0 0.0
    %5386 = vmatprep.subr.mxu0 0.0
    %5387 = vmatpush2.xpose.msra.mxu0 0.0
    %5388 = vmatprep.subr.mxu0 0.0
    %5389 = vmatpush2.xpose.msra.mxu0 0.0
    %5390 = vmatprep.subr.mxu0 0.0
    %5391 = vmatpush2.xpose.msra.mxu0 0.0
    %5392 = vmatprep.subr.mxu0 0.0
    %5393 = vmatpush2.xpose.msra.mxu0 0.0
    %5394 = vmatprep.subr.mxu0 0.0
    %5395 = vmatpush2.xpose.msra.mxu0 0.0
    %5396 = vmatprep.subr.mxu0 0.0
    %5397 = vmatpush2.xpose.msra.mxu0 0.0
    %5398 = vmatprep.subr.mxu0 0.0
    %5399 = vmatpush2.xpose.msra.mxu0 0.0
    %5400 = vmatprep.subr.mxu0 0.0
    %5401 = vmatpush2.xpose.msra.mxu0 0.0
    %5402 = vmatprep.subr.mxu0 0.0
    %5403 = vmatpush2.xpose.msra.mxu0 0.0
    %5404 = vmatprep.subr.mxu0 0.0
    %5405 = vmatpush2.xpose.msra.mxu0 0.0
    %5406 = vmatprep.subr.mxu0 0.0
    %5407 = vmatpush2.xpose.msra.mxu0 0.0
    %5408 = vmatprep.subr.mxu0 0.0
    %5409 = vmatpush2.xpose.msra.mxu0 0.0
    %5410 = vmatprep.subr.mxu0 0.0
    %5411 = vmatpush2.xpose.msra.mxu0 0.0
    %5412 = vmatprep.mubr.f32.mxu0 0.0
    %5413 = vmatmul.mubr.f32.gmra.mxu0 %v5346
    %v5414 = vpop.f32.mrf.mxu0
    %v5415 = vadd.f32 0.0, %v5414
    %v5416 = vpop.f32.mrf.mxu0
    %5417 = vdwg.mxu0
    %v5418 = vmul.f32 %v5270, %v5415
    %5427 = vrot.lane.b32.xlu0 %v5043, 64
    %v5428 = vpop.permute.xlu0 %5427
    %5429 = vrot.lane.b32.xlu0 %v5044, 64
    %v5430 = vpop.permute.xlu0 %5429
    %5431 = vrot.lane.b32.xlu0 %v5045, 64
    %v5432 = vpop.permute.xlu0 %5431
    %5433 = vrot.lane.b32.xlu0 %v5046, 64
    %v5434 = vpop.permute.xlu0 %5433
    %5435 = vrot.lane.b32.xlu0 %v5047, 64
    %v5436 = vpop.permute.xlu0 %5435
    %5437 = vrot.lane.b32.xlu0 %v5048, 64
    %v5438 = vpop.permute.xlu0 %5437
    %5439 = vrot.lane.b32.xlu0 %v5049, 64
    %v5440 = vpop.permute.xlu0 %5439
    %5441 = vrot.lane.b32.xlu0 %v5050, 64
    %v5442 = vpop.permute.xlu0 %5441
    %v5452 = vsel %vm4780, %v5418, 0
    %5454 = vmatprep.subr.mxu0 0.0
    %5455 = vmatpush1.msra.mxu0 0.0
    %5456 = vmatprep.subr.mxu0 0.0
    %5457 = vmatpush1.msra.mxu0 0.0
    %5458 = vmatprep.subr.mxu0 0.0
    %5459 = vmatpush1.msra.mxu0 0.0
    %5460 = vmatprep.subr.mxu0 0.0
    %5461 = vmatpush1.msra.mxu0 0.0
    %5462 = vmatprep.subr.mxu0 0.0
    %5463 = vmatpush1.msra.mxu0 0.0
    %5464 = vmatprep.subr.mxu0 0.0
    %5465 = vmatpush1.msra.mxu0 0.0
    %5466 = vmatprep.subr.mxu0 0.0
    %5467 = vmatpush1.msra.mxu0 0.0
    %5468 = vmatprep.subr.mxu0 0.0
    %5469 = vmatpush1.msra.mxu0 0.0
    %5470 = vmatprep.subr.mxu0 0.0
    %5471 = vmatpush1.msra.mxu0 %v5442
    %5472 = vmatprep.subr.mxu0 0.0
    %5473 = vmatpush1.msra.mxu0 %v5440
    %5474 = vmatprep.subr.mxu0 0.0
    %5475 = vmatpush1.msra.mxu0 %v5438
    %5476 = vmatprep.subr.mxu0 0.0
    %5477 = vmatpush1.msra.mxu0 %v5436
    %5478 = vmatprep.subr.mxu0 0.0
    %5479 = vmatpush1.msra.mxu0 %v5434
    %5480 = vmatprep.subr.mxu0 0.0
    %5481 = vmatpush1.msra.mxu0 %v5432
    %5482 = vmatprep.subr.mxu0 0.0
    %5483 = vmatpush1.msra.mxu0 %v5430
    %5484 = vmatprep.subr.mxu0 0.0
    %5485 = vmatpush1.msra.mxu0 %v5428
    %5486 = vmatprep.subr.mxu0 0.0
    %5487 = vmatpush2.msra.mxu0 0.0
    %5488 = vmatprep.subr.mxu0 0.0
    %5489 = vmatpush2.msra.mxu0 0.0
    %5490 = vmatprep.subr.mxu0 0.0
    %5491 = vmatpush2.msra.mxu0 0.0
    %5492 = vmatprep.subr.mxu0 0.0
    %5493 = vmatpush2.msra.mxu0 0.0
    %5494 = vmatprep.subr.mxu0 0.0
    %5495 = vmatpush2.msra.mxu0 0.0
    %5496 = vmatprep.subr.mxu0 0.0
    %5497 = vmatpush2.msra.mxu0 0.0
    %5498 = vmatprep.subr.mxu0 0.0
    %5499 = vmatpush2.msra.mxu0 0.0
    %5500 = vmatprep.subr.mxu0 0.0
    %5501 = vmatpush2.msra.mxu0 0.0
    %5502 = vmatprep.subr.mxu0 0.0
    %5503 = vmatpush2.msra.mxu0 0.0
    %5504 = vmatprep.subr.mxu0 0.0
    %5505 = vmatpush2.msra.mxu0 0.0
    %5506 = vmatprep.subr.mxu0 0.0
    %5507 = vmatpush2.msra.mxu0 0.0
    %5508 = vmatprep.subr.mxu0 0.0
    %5509 = vmatpush2.msra.mxu0 0.0
    %5510 = vmatprep.subr.mxu0 0.0
    %5511 = vmatpush2.msra.mxu0 0.0
    %5512 = vmatprep.subr.mxu0 0.0
    %5513 = vmatpush2.msra.mxu0 0.0
    %5514 = vmatprep.subr.mxu0 0.0
    %5515 = vmatpush2.msra.mxu0 0.0
    %5516 = vmatprep.subr.mxu0 0.0
    %5517 = vmatpush2.msra.mxu0 0.0
    %5518 = vmatprep.mubr.f32.mxu0 0.0
    %5519 = vmatmul.mubr.f32.gmra.mxu0 %v5452
    %v5520 = vpop.f32.mrf.mxu0
    %v5521 = vadd.f32 0.0, %v5520
    %v5522 = vpop.f32.mrf.mxu0
    %5523 = vdwg.mxu0
    %v5524 = vld [vmem:[#allocation13] sm:$0xff]
    %v5525 = vld [vmem:[#allocation13 + $0x8] sm:$0xff]
    %v5526 = vld [vmem:[#allocation13 + $0x10] sm:$0xff]
    %v5527 = vld [vmem:[#allocation13 + $0x18] sm:$0xff]
    %v5528 = vlaneseq
    %v5529 = vshrl.u32 %v5528, 7
    %v5530 = vsub.s32 3, %v5529
    %v5531 = vrot.slane %v143, %v5530
    %v5533 = vsel %vm312, %v5031, 0
    %v5536 = vsel %vm312, %v5521, 0
    %5538 = vmatprep.subr.mxu0 0.0
    %5539 = vmatpush1.msra.mxu0 0.0
    %5540 = vmatprep.subr.mxu0 0.0
    %5541 = vmatpush1.msra.mxu0 0.0
    %5542 = vmatprep.subr.mxu0 0.0
    %5543 = vmatpush1.msra.mxu0 0.0
    %5544 = vmatprep.subr.mxu0 0.0
    %5545 = vmatpush1.msra.mxu0 0.0
    %5546 = vmatprep.subr.mxu0 0.0
    %5547 = vmatpush1.msra.mxu0 0.0
    %5548 = vmatprep.subr.mxu0 0.0
    %5549 = vmatpush1.msra.mxu0 0.0
    %5550 = vmatprep.subr.mxu0 0.0
    %5551 = vmatpush1.msra.mxu0 0.0
    %5552 = vmatprep.subr.mxu0 0.0
    %5553 = vmatpush1.msra.mxu0 0.0
    %5554 = vmatprep.subr.mxu0 0.0
    %5555 = vmatpush1.msra.mxu0 0.0
    %5556 = vmatprep.subr.mxu0 0.0
    %5557 = vmatpush1.msra.mxu0 0.0
    %5558 = vmatprep.subr.mxu0 0.0
    %5559 = vmatpush1.msra.mxu0 0.0
    %5560 = vmatprep.subr.mxu0 0.0
    %5561 = vmatpush1.msra.mxu0 0.0
    %5562 = vmatprep.subr.mxu0 0.0
    %5563 = vmatpush1.msra.mxu0 %v5527
    %5564 = vmatprep.subr.mxu0 0.0
    %5565 = vmatpush1.msra.mxu0 %v5526
    %5566 = vmatprep.subr.mxu0 0.0
    %5567 = vmatpush1.msra.mxu0 %v5525
    %5568 = vmatprep.subr.mxu0 0.0
    %5569 = vmatpush1.msra.mxu0 %v5524
    %5570 = vmatprep.subr.mxu0 0.0
    %5571 = vmatpush2.msra.mxu0 0.0
    %5572 = vmatprep.subr.mxu0 0.0
    %5573 = vmatpush2.msra.mxu0 0.0
    %5574 = vmatprep.subr.mxu0 0.0
    %5575 = vmatpush2.msra.mxu0 0.0
    %5576 = vmatprep.subr.mxu0 0.0
    %5577 = vmatpush2.msra.mxu0 0.0
    %5578 = vmatprep.subr.mxu0 0.0
    %5579 = vmatpush2.msra.mxu0 0.0
    %5580 = vmatprep.subr.mxu0 0.0
    %5581 = vmatpush2.msra.mxu0 0.0
    %5582 = vmatprep.subr.mxu0 0.0
    %5583 = vmatpush2.msra.mxu0 0.0
    %5584 = vmatprep.subr.mxu0 0.0
    %5585 = vmatpush2.msra.mxu0 0.0
    %5586 = vmatprep.subr.mxu0 0.0
    %5587 = vmatpush2.msra.mxu0 0.0
    %5588 = vmatprep.subr.mxu0 0.0
    %5589 = vmatpush2.msra.mxu0 0.0
    %5590 = vmatprep.subr.mxu0 0.0
    %5591 = vmatpush2.msra.mxu0 0.0
    %5592 = vmatprep.subr.mxu0 0.0
    %5593 = vmatpush2.msra.mxu0 0.0
    %5594 = vmatprep.subr.mxu0 0.0
    %5595 = vmatpush2.msra.mxu0 0.0
    %5596 = vmatprep.subr.mxu0 0.0
    %5597 = vmatpush2.msra.mxu0 0.0
    %5598 = vmatprep.subr.mxu0 0.0
    %5599 = vmatpush2.msra.mxu0 0.0
    %5600 = vmatprep.subr.mxu0 0.0
    %5601 = vmatpush2.msra.mxu0 0.0
    %5602 = vmatprep.mubr.f32.mxu0 0.0
    %5603 = vmatmul.mubr.f32.gmra.mxu0 %v5533
    %v5604 = vpop.f32.mrf.mxu0
    %v5605 = vadd.f32 %v5531, %v5604
    %v5606 = vpop.f32.mrf.mxu0
    %5607 = vmatprep.mubr.f32.mxu0 0.0
    %5608 = vmatmul.mubr.f32.gmra.mxu0 %v5536
    %v5609 = vpop.f32.mrf.mxu0
    %v5610 = vadd.f32 %v5531, %v5609
    %v5611 = vpop.f32.mrf.mxu0
    %5612 = vdwg.mxu0
    %v5613 = vadd.f32 %v4021, %v5605
    %v5614 = vadd.f32 %v4043, %v5610
    %v5615 = vld [vmem:[#allocation14] sm:$0xff]
    %v5616 = vld [vmem:[#allocation14 + $0x8] sm:$0xff]
    %v5617 = vld [vmem:[#allocation14 + $0x10] sm:$0xff]
    %v5618 = vld [vmem:[#allocation14 + $0x18] sm:$0xff]
    %v5619 = vlaneseq
    %v5620 = vshrl.u32 %v5619, 7
    %v5621 = vsub.s32 4, %v5620
    %v5622 = vrot.slane %v143, %v5621
    %v5624 = vsel %vm312, %v5613, 0
    %v5627 = vsel %vm312, %v5614, 0
    %5629 = vmatprep.subr.mxu0 0.0
    %5630 = vmatpush1.msra.mxu0 0.0
    %5631 = vmatprep.subr.mxu0 0.0
    %5632 = vmatpush1.msra.mxu0 0.0
    %5633 = vmatprep.subr.mxu0 0.0
    %5634 = vmatpush1.msra.mxu0 0.0
    %5635 = vmatprep.subr.mxu0 0.0
    %5636 = vmatpush1.msra.mxu0 0.0
    %5637 = vmatprep.subr.mxu0 0.0
    %5638 = vmatpush1.msra.mxu0 0.0
    %5639 = vmatprep.subr.mxu0 0.0
    %5640 = vmatpush1.msra.mxu0 0.0
    %5641 = vmatprep.subr.mxu0 0.0
    %5642 = vmatpush1.msra.mxu0 0.0
    %5643 = vmatprep.subr.mxu0 0.0
    %5644 = vmatpush1.msra.mxu0 0.0
    %5645 = vmatprep.subr.mxu0 0.0
    %5646 = vmatpush1.msra.mxu0 0.0
    %5647 = vmatprep.subr.mxu0 0.0
    %5648 = vmatpush1.msra.mxu0 0.0
    %5649 = vmatprep.subr.mxu0 0.0
    %5650 = vmatpush1.msra.mxu0 0.0
    %5651 = vmatprep.subr.mxu0 0.0
    %5652 = vmatpush1.msra.mxu0 0.0
    %5653 = vmatprep.subr.mxu0 0.0
    %5654 = vmatpush1.msra.mxu0 %v5618
    %5655 = vmatprep.subr.mxu0 0.0
    %5656 = vmatpush1.msra.mxu0 %v5617
    %5657 = vmatprep.subr.mxu0 0.0
    %5658 = vmatpush1.msra.mxu0 %v5616
    %5659 = vmatprep.subr.mxu0 0.0
    %5660 = vmatpush1.msra.mxu0 %v5615
    %5661 = vmatprep.subr.mxu0 0.0
    %5662 = vmatpush2.msra.mxu0 0.0
    %5663 = vmatprep.subr.mxu0 0.0
    %5664 = vmatpush2.msra.mxu0 0.0
    %5665 = vmatprep.subr.mxu0 0.0
    %5666 = vmatpush2.msra.mxu0 0.0
    %5667 = vmatprep.subr.mxu0 0.0
    %5668 = vmatpush2.msra.mxu0 0.0
    %5669 = vmatprep.subr.mxu0 0.0
    %5670 = vmatpush2.msra.mxu0 0.0
    %5671 = vmatprep.subr.mxu0 0.0
    %5672 = vmatpush2.msra.mxu0 0.0
    %5673 = vmatprep.subr.mxu0 0.0
    %5674 = vmatpush2.msra.mxu0 0.0
    %5675 = vmatprep.subr.mxu0 0.0
    %5676 = vmatpush2.msra.mxu0 0.0
    %5677 = vmatprep.subr.mxu0 0.0
    %5678 = vmatpush2.msra.mxu0 0.0
    %5679 = vmatprep.subr.mxu0 0.0
    %5680 = vmatpush2.msra.mxu0 0.0
    %5681 = vmatprep.subr.mxu0 0.0
    %5682 = vmatpush2.msra.mxu0 0.0
    %5683 = vmatprep.subr.mxu0 0.0
    %5684 = vmatpush2.msra.mxu0 0.0
    %5685 = vmatprep.subr.mxu0 0.0
    %5686 = vmatpush2.msra.mxu0 0.0
    %5687 = vmatprep.subr.mxu0 0.0
    %5688 = vmatpush2.msra.mxu0 0.0
    %5689 = vmatprep.subr.mxu0 0.0
    %5690 = vmatpush2.msra.mxu0 0.0
    %5691 = vmatprep.subr.mxu0 0.0
    %5692 = vmatpush2.msra.mxu0 0.0
    %5693 = vmatprep.mubr.f32.mxu0 0.0
    %5694 = vmatmul.mubr.f32.gmra.mxu0 %v5624
    %v5695 = vpop.f32.mrf.mxu0
    %v5696 = vadd.f32 %v5622, %v5695
    %v5697 = vpop.f32.mrf.mxu0
    %5698 = vmatprep.mubr.f32.mxu0 0.0
    %5699 = vmatmul.mubr.f32.gmra.mxu0 %v5627
    %v5700 = vpop.f32.mrf.mxu0
    %v5701 = vadd.f32 %v5622, %v5700
    %v5702 = vpop.f32.mrf.mxu0
    %5703 = vdwg.mxu0
    %v5704 = vsel %vm312, %v5696, 0.0
    %5705 = vadd.xlane.f32.xlu0 %v5704
    %v5706 = vpop.xlane.xlu0 %5705
    %v5707 = vsel %vm312, %v5701, 0.0
    %5708 = vadd.xlane.f32.xlu0 %v5707
    %v5709 = vpop.xlane.xlu0 %5708
    %v5710 = vmul.f32 %v5706, %v260
    %v5711 = vmul.f32 %v5709, %v260
    %v5712 = vsub.f32 %v5696, %v5710
    %v5713 = vsub.f32 %v5701, %v5711
    %v5714 = vmul.f32 %v5712, %v5712
    %v5715 = vmul.f32 %v5713, %v5713
    %v5716 = vsel %vm312, %v5714, 0.0
    %5717 = vadd.xlane.f32.xlu0 %v5716
    %v5718 = vpop.xlane.xlu0 %5717
    %v5719 = vsel %vm312, %v5715, 0.0
    %5720 = vadd.xlane.f32.xlu0 %v5719
    %v5721 = vpop.xlane.xlu0 %5720
    %v5722 = vmul.f32 %v5718, %v260
    %v5723 = vmul.f32 %v5721, %v260
    %v5724 = vadd.f32 %v5722, 1e-05
    %v5725 = vadd.f32 %v5723, 1e-05
    %v5726 = vrsqrt.pop %v5724
    %v5727 = vrsqrt.pop %v5725
    %v5728 = vmul.f32 %v5712, %v5726
    %v5729 = vmul.f32 %v5713, %v5727
    %v5730 = vlaneseq
    %v5731 = vshrl.u32 %v5730, 7
    %v5732 = vsub.s32 5, %v5731
    %v5733 = vrot.slane %v143, %v5732
    %v5734 = vmul.f32 %v5728, %v5733
    %v5735 = vmul.f32 %v5729, %v5733
    %v5736 = vlaneseq
    %v5737 = vshrl.u32 %v5736, 7
    %v5738 = vsub.s32 6, %v5737
    %v5739 = vrot.slane %v143, %v5738
    %v5740 = vadd.f32 %v5734, %v5739
    %v5741 = vadd.f32 %v5735, %v5739
    %v5742 = vmul.f32 %v5740, 0.5
    %v5743 = vmul.f32 %v5741, 0.5
    %v5744 = vmul.f32 %v5740, 0.70710677
    %v5745 = vmul.f32 %v5741, 0.70710677
    %v5746 = vand.u32 2147483647, %v5744
    %v5747 = vand.u32 2147483647, %v5745
    %v5748 = vmul.f32 %v5746, 0.3275911
    %v5749 = vmul.f32 %v5747, 0.3275911
    %v5750 = vadd.f32 %v5748, 1.0
    %v5751 = vadd.f32 %v5749, 1.0
    %v5752 = vrcp.pop %v5750
    %v5753 = vmul.f32 1.0, %v5752
    %v5754 = vrcp.pop %v5751
    %v5755 = vmul.f32 1.0, %v5754
    %v5756 = vmul.f32 %v5753, 1.0614054
    %v5757 = vmul.f32 %v5755, 1.0614054
    %v5758 = vadd.f32 %v5756, -1.4531521
    %v5759 = vadd.f32 %v5757, -1.4531521
    %v5760 = vmul.f32 %v5758, %v5753
    %v5761 = vmul.f32 %v5759, %v5755
    %v5762 = vadd.f32 %v5760, 1.4214138
    %v5763 = vadd.f32 %v5761, 1.4214138
    %v5764 = vmul.f32 %v5762, %v5753
    %v5765 = vmul.f32 %v5763, %v5755
    %v5766 = vadd.f32 %v5764, -0.28449672
    %v5767 = vadd.f32 %v5765, -0.28449672
    %v5768 = vmul.f32 %v5766, %v5753
    %v5769 = vmul.f32 %v5767, %v5755
    %v5770 = vadd.f32 %v5768, 0.2548296
    %v5771 = vadd.f32 %v5769, 0.2548296
    %v5772 = vmul.f32 %v5770, %v5753
    %v5773 = vmul.f32 %v5771, %v5755
    %v5774 = vsub.f32 0.0, %v5746
    %v5775 = vsub.f32 0.0, %v5747
    %v5776 = vmul.f32 %v5774, %v5746
    %v5777 = vmul.f32 %v5775, %v5747
    %v5778 = vmul.f32 %v5776, 1.442695
    %v5779 = vpow.pop %v5778
    %v5780 = vmul.f32 %v5777, 1.442695
    %v5781 = vpow.pop %v5780
    %v5782 = vmul.f32 %v5772, %v5779
    %v5783 = vmul.f32 %v5773, %v5781
    %v5784 = vsub.f32 1.0, %v5782
    %v5785 = vsub.f32 1.0, %v5783
    %vm5786 = vcmp.ge.f32.partialorder %v5744, 0.0
    %vm5787 = vcmp.ge.f32.partialorder %v5745, 0.0
    %v5788 = vsub.f32 0.0, %v5784
    %v5789 = vsub.f32 0.0, %v5785
    %v5790 = vsel %vm5786, %v5784, %v5788
    %v5791 = vsel %vm5787, %v5785, %v5789
    %v5792 = vadd.f32 %v5790, 1.0
    %v5793 = vadd.f32 %v5791, 1.0
    %v5794 = vmul.f32 %v5742, %v5792
    %v5795 = vmul.f32 %v5743, %v5793
    %v5796 = vld [vmem:[%s10] sm:$0xff]
    %v5797 = vld [vmem:[%s10 + $0x8] sm:$0xff]
    %v5798 = vld [vmem:[%s10 + $0x10] sm:$0xff]
    %v5799 = vld [vmem:[%s10 + $0x18] sm:$0xff]
    %v5800 = vld [vmem:[%s11] sm:$0x1]
    %v5802 = vlaneseq
    %v5803 = vshrl.u32 %v5802, 7
    %v5804 = vsub.s32 0, %v5803
    %v5805 = vrot.slane %v5800, %v5804
    %v5808 = vsel %vm312, %v5794, 0
    %v5811 = vsel %vm312, %v5795, 0
    %5813 = vmatprep.subr.mxu0 0.0
    %5814 = vmatpush1.msra.mxu0 0.0
    %5815 = vmatprep.subr.mxu0 0.0
    %5816 = vmatpush1.msra.mxu0 0.0
    %5817 = vmatprep.subr.mxu0 0.0
    %5818 = vmatpush1.msra.mxu0 0.0
    %5819 = vmatprep.subr.mxu0 0.0
    %5820 = vmatpush1.msra.mxu0 0.0
    %5821 = vmatprep.subr.mxu0 0.0
    %5822 = vmatpush1.msra.mxu0 0.0
    %5823 = vmatprep.subr.mxu0 0.0
    %5824 = vmatpush1.msra.mxu0 0.0
    %5825 = vmatprep.subr.mxu0 0.0
    %5826 = vmatpush1.msra.mxu0 0.0
    %5827 = vmatprep.subr.mxu0 0.0
    %5828 = vmatpush1.msra.mxu0 0.0
    %5829 = vmatprep.subr.mxu0 0.0
    %5830 = vmatpush1.msra.mxu0 0.0
    %5831 = vmatprep.subr.mxu0 0.0
    %5832 = vmatpush1.msra.mxu0 0.0
    %5833 = vmatprep.subr.mxu0 0.0
    %5834 = vmatpush1.msra.mxu0 0.0
    %5835 = vmatprep.subr.mxu0 0.0
    %5836 = vmatpush1.msra.mxu0 0.0
    %5837 = vmatprep.subr.mxu0 0.0
    %5838 = vmatpush1.msra.mxu0 %v5799
    %5839 = vmatprep.subr.mxu0 0.0
    %5840 = vmatpush1.msra.mxu0 %v5798
    %5841 = vmatprep.subr.mxu0 0.0
    %5842 = vmatpush1.msra.mxu0 %v5797
    %5843 = vmatprep.subr.mxu0 0.0
    %5844 = vmatpush1.msra.mxu0 %v5796
    %5845 = vmatprep.subr.mxu0 0.0
    %5846 = vmatpush2.msra.mxu0 0.0
    %5847 = vmatprep.subr.mxu0 0.0
    %5848 = vmatpush2.msra.mxu0 0.0
    %5849 = vmatprep.subr.mxu0 0.0
    %5850 = vmatpush2.msra.mxu0 0.0
    %5851 = vmatprep.subr.mxu0 0.0
    %5852 = vmatpush2.msra.mxu0 0.0
    %5853 = vmatprep.subr.mxu0 0.0
    %5854 = vmatpush2.msra.mxu0 0.0
    %5855 = vmatprep.subr.mxu0 0.0
    %5856 = vmatpush2.msra.mxu0 0.0
    %5857 = vmatprep.subr.mxu0 0.0
    %5858 = vmatpush2.msra.mxu0 0.0
    %5859 = vmatprep.subr.mxu0 0.0
    %5860 = vmatpush2.msra.mxu0 0.0
    %5861 = vmatprep.subr.mxu0 0.0
    %5862 = vmatpush2.msra.mxu0 0.0
    %5863 = vmatprep.subr.mxu0 0.0
    %5864 = vmatpush2.msra.mxu0 0.0
    %5865 = vmatprep.subr.mxu0 0.0
    %5866 = vmatpush2.msra.mxu0 0.0
    %5867 = vmatprep.subr.mxu0 0.0
    %5868 = vmatpush2.msra.mxu0 0.0
    %5869 = vmatprep.subr.mxu0 0.0
    %5870 = vmatpush2.msra.mxu0 0.0
    %5871 = vmatprep.subr.mxu0 0.0
    %5872 = vmatpush2.msra.mxu0 0.0
    %5873 = vmatprep.subr.mxu0 0.0
    %5874 = vmatpush2.msra.mxu0 0.0
    %5875 = vmatprep.subr.mxu0 0.0
    %5876 = vmatpush2.msra.mxu0 0.0
    %5877 = vmatprep.mubr.f32.mxu0 0.0
    %5878 = vmatmul.mubr.f32.gmra.mxu0 %v5808
    %v5879 = vpop.f32.mrf.mxu0
    %v5880 = vadd.f32 %v5805, %v5879
    %v5881 = vpop.f32.mrf.mxu0
    %5882 = vmatprep.mubr.f32.mxu0 0.0
    %5883 = vmatmul.mubr.f32.gmra.mxu0 %v5811
    %v5884 = vpop.f32.mrf.mxu0
    %v5885 = vadd.f32 %v5805, %v5884
    %v5886 = vpop.f32.mrf.mxu0
    %5887 = vdwg.mxu0
    %5888 = vst.msk [vmem:[#allocation16] sm:$0xff] %vm4634, %v5880
    %s5889 = scalar_lea.vmem [#allocation16], 8
    %5890 = vst.msk [vmem:[%s5889] sm:$0xff] %vm4634, %v5885
    // Predicated region
    $region82: #{tpu_custom_call.1} parent=1 // pred_check
      _
    $region83: #{tpu_custom_call.1} parent=1 // pred_check_branch
      %5892 = sbr.rel (0) target = $region85
    $region84: #{tpu_custom_call.1} parent=1 // pred_region
      %s5894 = ssub.s32 256, 256
      %5895 = vsyncadd [#allocation4], %s5894
      %s5896 = sshll.u32 [#allocation16], 4
      %s5897 = int_to_ptr.vmem [resolvable:$true] %s5896
      %5902 = dma.vmem_to_hbm [thread:$0]  %s5897, 256, %s12, [#allocation4], 128, 128, 8
    $region85: #{tpu_custom_call.1} parent=1 // pred_fallthru
      _
    // Predicated region
    $region86: #{tpu_custom_call.1} parent=1 // pred_check
      _
    $region87: #{tpu_custom_call.1} parent=1 // pred_check_branch
      %5904 = sbr.rel (0) target = $region89
    $region88: #{tpu_custom_call.1} parent=1 // pred_region
      %5905 = dma.done [#allocation4], 256
    $region89: #{tpu_custom_call.1} parent=1 // pred_fallthru
      _
    %5906 = vsyncpa [#allocation3], 1
    %5907 = vsyncpa [#allocation6], 1
    %5908 = vsyncpa [#allocation9], 1
    %5909 = vsyncpa [#allocation12], 1
    %5910 = vsyncpa [#allocation15], 1
    %5911 = vsyncpa [#allocation4], 1

</llo_original>
